<compile_context>
chip_gen: v7x
topology: tpu7x:2x2x1
jax: 0.10.0
libtpu: 0.0.40
codegen_flags: <defaults>
</compile_context>

<pallas_src>
import functools

import jax
import jax.numpy as jnp
from jax.experimental import pallas as pl
from jax.experimental.pallas import tpu as pltpu

_COMPUTE = jnp.bfloat16          # MXU input dtype; accumulation is always f32.


def _vmem_limit_bytes():
    """Per-generation scoped-VMEM limit (~75% of capacity, capped at 100 MiB)."""
    try:
        cap = int(pltpu.get_tpu_info().vmem_capacity_bytes)
    except Exception:            # conservative fallback (v7x floor: 64 MiB/TC)
        cap = 64 * 1024 * 1024
    return max(min((cap * 3) // 4, 100 * 1024 * 1024), 32 * 1024 * 1024)


# ------------------------------ kernel helpers ------------------------------

def _lrelu(y):
    return jnp.where(y >= 0.0, y, 0.1 * y)


def _conv3x3(src, w, b, width, mv):
    """3x3 VALID conv on a flat (M, Ci) bf16 value: one K=9*Ci MXU matmul.

    An im2col slab (mv, 9*Ci) is built from 9 static slices (tap order dy,dx)
    and multiplied by the (9*Ci, Co) weight once; bias folded into the single
    epilogue add.  Accumulation stays in the MXU (f32).
    """
    shifts = [dy * width + dx for dy in range(3) for dx in range(3)]
    slab = jnp.concatenate([src[s:s + mv, :] for s in shifts], axis=-1)
    return jnp.dot(slab, w, preferred_element_type=jnp.float32) + b


# ------------------------------ Pallas kernels ------------------------------

def _stage1_kernel(x_ref, w1_ref, b1_ref, w2_ref, b2_ref, o_ref, *,
                   width, mv1, mv2):
    """conv1a -> lrelu -> conv1b -> lrelu (UNetConv without SE)."""
    x = x_ref[...]
    t = _lrelu(_conv3x3(x, w1_ref[...], b1_ref[...], width, mv1)).astype(_COMPUTE)
    y = _lrelu(_conv3x3(t, w2_ref[...], b2_ref[...], width, mv2))
    o_ref[...] = y.astype(o_ref.dtype)


def _stage2_kernel(pd_ref, wd_ref, bd_ref, w2a_ref, b2a_ref, w2b_ref, b2b_ref,
                   s1w_ref, s1b_ref, s2w_ref, s2b_ref, wup_ref, bup_ref,
                   o_ref, *, width, mva, mvb, inv_n):
    """conv1_down -> lrelu -> conv2a/b -> lrelu -> SE -> conv2_up -> lrelu."""
    # conv1_down (2x2 s2) fed with space-to-depth patches + LeakyReLU
    x2 = jnp.dot(pd_ref[...], wd_ref[...],
                 preferred_element_type=jnp.float32) + bd_ref[...]
    x2 = _lrelu(x2).astype(_COMPUTE)                                   # (m2, 64)
    # conv2a / conv2b
    t2 = _lrelu(_conv3x3(x2, w2a_ref[...], b2a_ref[...], width, mva)).astype(_COMPUTE)
    y = _lrelu(_conv3x3(t2, w2b_ref[...], b2b_ref[...], width, mvb))   # f32 (mvb, 64)
    # SEBlock: masked global mean.  The column mask (kills the flat-layout
    # wrap-around columns) is built in-kernel from an iota; invalid rows are
    # already excluded by the mvb truncation.
    col = jax.lax.broadcasted_iota(jnp.int32, (mvb, 1), 0) % width
    mask = (col < (width - 4)).astype(jnp.float32)
    mean = jnp.sum(y * mask, axis=0, keepdims=True) * inv_n            # (1, 64)
    hid = jnp.maximum(
        jnp.dot(mean, s1w_ref[...], preferred_element_type=jnp.float32) + s1b_ref[...],
        0.0)
    g = jnp.dot(hid, s2w_ref[...], preferred_element_type=jnp.float32) + s2b_ref[...]
    gate = 1.0 / (1.0 + jnp.exp(-g))                                   # sigmoid
    y = (y * gate).astype(_COMPUTE)
    # conv2_up (ConvTranspose 2x2 s2) as a sub-pixel matmul + LeakyReLU
    yu = jnp.dot(y, wup_ref[...], preferred_element_type=jnp.float32) + bup_ref[...]
    o_ref[...] = _lrelu(yu).astype(o_ref.dtype)


def _stage3_kernel(xa_ref, xb_ref, w3_ref, b3_ref, wb_ref, bb_ref, o_ref, *,
                   width, mv3, mb):
    """(x1 + x2) -> conv3 -> lrelu -> conv_bottom (sub-pixel transposed conv)."""
    xs = xa_ref[...] + xb_ref[...]                                      # bf16 add
    x3 = _lrelu(_conv3x3(xs, w3_ref[...], b3_ref[...], width, mv3)).astype(_COMPUTE)
    o_ref[...] = _conv3x3(x3, wb_ref[...], bb_ref[...], width, mb).astype(o_ref.dtype)


# ----------------------------- pallas_call glue ------------------------------

def _spec(shape, batched):
    nd = len(shape)
    if batched:   # block = one batch element, batch dim squeezed in-kernel
        return pl.BlockSpec((None,) + tuple(shape[1:]),
                            lambda i, _nd=nd: (i,) + (0,) * (_nd - 1))
    return pl.BlockSpec(tuple(shape), lambda i, _nd=nd: (0,) * _nd)


def _call(kernel_fn, inputs, batched, out_shape, grid_n):
    return pl.pallas_call(
        kernel_fn,
        out_shape=out_shape,
        grid=(grid_n,),
        in_specs=[_spec(a.shape, b) for a, b in zip(inputs, batched)],
        out_specs=_spec(out_shape.shape, True),
        compiler_params=pltpu.CompilerParams(
            dimension_semantics=("parallel",),
            vmem_limit_bytes=_vmem_limit_bytes()),
    )(*inputs)


# ------------------------------ plain-JAX glue -------------------------------

def _space_to_depth2(x):
    """(N,H,W,C), H,W even -> (N,(H/2)*(W/2),4C); channel order (dy, dx, c)."""
    n, h, w, c = x.shape
    cols = [x[:, dy::2, dx::2, :] for dy in range(2) for dx in range(2)]
    return jnp.concatenate(cols, axis=-1).reshape(n, (h // 2) * (w // 2), 4 * c)


def _depth_to_space2(y, c):
    """(N,h,w,4C) with channel order (ry, rx, c) -> (N,2h,2w,C)."""
    n, h, w, _ = y.shape
    y = y.reshape(n, h, w, 2, 2, c)
    y = jnp.transpose(y, (0, 1, 3, 2, 4, 5))
    return y.reshape(n, 2 * h, 2 * w, c)


def _unflat_crop(y, rows, stride, cols):
    """Flat (N,Mv,C) on a `stride`-wide grid -> dense (N,rows,cols,C)."""
    n, mv, c = y.shape
    y = jnp.pad(y, ((0, 0), (0, rows * stride - mv), (0, 0)))
    return y.reshape(n, rows, stride, c)[:, :, :cols, :]


# -------------------------------- parameters --------------------------------

def init_params(key, in_ch=3, out_ch=3):
    keys = iter(jax.random.split(key, 32))

    def kaiming(shape, fan_out):
        return jnp.sqrt(2.0 / fan_out) * jax.random.normal(next(keys), shape, jnp.float32)

    def conv_w(ci, co):   # 3x3 conv -> (9*ci, co) bf16, row order (dy, dx, ci)
        return kaiming((3, 3, ci, co), co * 9).reshape(9 * ci, co).astype(_COMPUTE)

    def bias(co):
        return 0.01 * jax.random.normal(next(keys), (1, co), jnp.float32)

    p = {}
    p["c1a_w"], p["c1a_b"] = conv_w(in_ch, 32), bias(32)
    p["c1b_w"], p["c1b_b"] = conv_w(32, 64), bias(64)
    # conv1_down Conv2d(64,64,2,2,0); rows ordered (dy, dx, ci) = space-to-depth order
    p["down_w"] = kaiming((2, 2, 64, 64), 64 * 4).reshape(256, 64).astype(_COMPUTE)
    p["down_b"] = bias(64)
    p["c2a_w"], p["c2a_b"] = conv_w(64, 128), bias(128)
    p["c2b_w"], p["c2b_b"] = conv_w(128, 64), bias(64)
    # SEBlock(64, reduction=8, bias=True): 1x1 convs 64->8->64 (tiny, kept f32)
    p["se1_w"], p["se1_b"] = kaiming((64, 8), 8), bias(8)
    p["se2_w"], p["se2_b"] = kaiming((8, 64), 64), bias(64)
    # conv2_up ConvTranspose2d(64,64,2,2,0) as sub-pixel matmul; cols = (ry, rx, co)
    p["up_w"] = kaiming((64, 2, 2, 64), 64 * 4).reshape(64, 256).astype(_COMPUTE)
    p["up_b"] = jnp.tile(bias(64), (1, 4))
    p["c3_w"], p["c3_b"] = conv_w(64, 64), bias(64)
    # conv_bottom ConvTranspose2d(64,out,4,2,3) folded into one 3x3 sub-pixel
    # conv: out[2a+ry, 2b+rx] = sum_{u,v} x3[a+ry+u, b+rx+v] . W[:,:,KY[ry][u],KY[rx][v]]
    wpt = kaiming((64, out_ch, 4, 4), 64 * 16)              # (cin, cout, ky, kx)
    ktap = ((3, 1), (2, 0))
    wbig = jnp.zeros((3, 3, 64, 4 * out_ch), jnp.float32)
    for ry in range(2):
        for rx in range(2):
            ph = 2 * ry + rx
            for u in range(2):
                for v in range(2):
                    wbig = wbig.at[ry + u, rx + v, :,
                                   ph * out_ch:(ph + 1) * out_ch].set(
                        wpt[:, :, ktap[ry][u], ktap[rx][v]])
    p["bot_w"] = wbig.reshape(9 * 64, 4 * out_ch).astype(_COMPUTE)
    p["bot_b"] = jnp.tile(bias(out_ch), (1, 4))
    return p


# ------------------------------ UNet1 forward --------------------------------

def unet1_forward(x_nchw, p):
    """UNet1(in_ch, out_ch, deconv=True).forward; input/output NCHW float32."""
    n, cin, h, w = x_nchw.shape
    assert h % 2 == 0 and w % 2 == 0 and h >= 18 and w >= 18, \
        "UNet1 tiles must be even and at least 18x18"
    out_ch = p["bot_w"].shape[-1] // 4
    x = jnp.transpose(x_nchw, (0, 2, 3, 1)).astype(_COMPUTE).reshape(n, h * w, cin)

    # ---- stage 1: conv1a -> lrelu -> conv1b -> lrelu ------------------------
    mv1 = h * w - 2 * w - 2
    mv2 = mv1 - 2 * w - 2
    y1 = _call(
        functools.partial(_stage1_kernel, width=w, mv1=mv1, mv2=mv2),
        [x, p["c1a_w"], p["c1a_b"], p["c1b_w"], p["c1b_b"]],
        [True, False, False, False, False],
        jax.ShapeDtypeStruct((n, mv2, 64), _COMPUTE), n)
    h1, w1 = h - 4, w - 4
    x1 = _unflat_crop(y1, h1, w, w1)                         # (n, h1, w1, 64)

    # ---- stage 2: conv1_down -> conv2(a,b) -> SE -> conv2_up ----------------
    h2, w2 = h1 // 2, w1 // 2
    m2 = h2 * w2
    pd = _space_to_depth2(x1)                                # (n, m2, 256)
    mva = m2 - 2 * w2 - 2
    mvb = mva - 2 * w2 - 2
    inv_n = 1.0 / float((h2 - 4) * (w2 - 4))
    y2 = _call(
        functools.partial(_stage2_kernel, width=w2, mva=mva, mvb=mvb, inv_n=inv_n),
        [pd, p["down_w"], p["down_b"], p["c2a_w"], p["c2a_b"],
         p["c2b_w"], p["c2b_b"], p["se1_w"], p["se1_b"], p["se2_w"],
         p["se2_b"], p["up_w"], p["up_b"]],
        [True] + [False] * 12,
        jax.ShapeDtypeStruct((n, mvb, 256), _COMPUTE), n)
    x2u = _depth_to_space2(_unflat_crop(y2, h2 - 4, w2, w2 - 4), 64)

    # ---- stage 3: (x1 + x2) -> conv3 -> lrelu -> conv_bottom ----------------
    x1c = x1[:, 4:-4, 4:-4, :]                               # (n, h-12, w-12, 64)
    h3, w3 = h - 12, w - 12
    m3 = h3 * w3
    mv3 = m3 - 2 * w3 - 2
    mb = m3 - 4 * w3 - 4
    y3 = _call(
        functools.partial(_stage3_kernel, width=w3, mv3=mv3, mb=mb),
        [x1c.reshape(n, m3, 64), x2u.reshape(n, m3, 64),
         p["c3_w"], p["c3_b"], p["bot_w"], p["bot_b"]],
        [True, True, False, False, False, False],
        jax.ShapeDtypeStruct((n, mb, 4 * out_ch), _COMPUTE), n)
    z = _depth_to_space2(_unflat_crop(y3, h3 - 4, w3, w3 - 4), out_ch)
    return jnp.transpose(z, (0, 3, 1, 2)).astype(jnp.float32)


# ------------------------------------ main -----------------------------------

if __name__ == "__main__":
    key = jax.random.PRNGKey(0)
    kx, kp = jax.random.split(key)

    # NCHW like the PyTorch module: batch=2, in_channels=3, spatial=20x20
    # (smallest comfortable even size; output = (N, 3, 2H-32, 2W-32) = (2,3,8,8)).
    x = jax.random.normal(kx, (2, 3, 20, 20), jnp.float32)
    params = init_params(kp, in_ch=3, out_ch=3)

    fwd = jax.jit(unet1_forward)
    out = jax.block_until_ready(fwd(x, params))

    assert out.shape == (2, 3, 8, 8), out.shape
    assert bool(jnp.all(jnp.isfinite(out)))
    print("KERNEL_OK")
</pallas_src>

<mosaic_0001>
module attributes {stable_mosaic.version = 11 : i64} {
  func.func @_stage1_kernel(%arg0: i32, %arg1: memref<1x400x3xbf16, #tpu.memory_space<vmem>>, %arg2: memref<27x32xbf16, #tpu.memory_space<vmem>>, %arg3: memref<1x32xf32, #tpu.memory_space<vmem>>, %arg4: memref<288x64xbf16, #tpu.memory_space<vmem>>, %arg5: memref<1x64xf32, #tpu.memory_space<vmem>>, %arg6: memref<1x316x64xbf16, #tpu.memory_space<vmem>>) attributes {dimension_semantics = [#tpu.dimension_semantics<parallel>], iteration_bounds = array<i64: 2>, scalar_prefetch = 0 : i64, scratch_operands = 0 : i64, tpu.core_type = #tpu.core_type<tc>, window_params = [{transform_indices = @transform_0, window_bounds = array<i64: 1, 400, 3>}, {pipeline_mode = #tpu.pipeline_mode<synchronous>, transform_indices = @transform_1, window_bounds = array<i64: 27, 32>}, {pipeline_mode = #tpu.pipeline_mode<synchronous>, transform_indices = @transform_2, window_bounds = array<i64: 1, 32>}, {pipeline_mode = #tpu.pipeline_mode<synchronous>, transform_indices = @transform_3, window_bounds = array<i64: 288, 64>}, {pipeline_mode = #tpu.pipeline_mode<synchronous>, transform_indices = @transform_4, window_bounds = array<i64: 1, 64>}, {transform_indices = @transform_5, window_bounds = array<i64: 1, 316, 64>}]} {
    %c0 = arith.constant 0 : index
    %c0_0 = arith.constant 0 : index
    %c0_1 = arith.constant 0 : index
    %0 = vector.load %arg1[%c0, %c0_0, %c0_1] : memref<1x400x3xbf16, #tpu.memory_space<vmem>>, vector<1x400x3xbf16>
    %1 = vector.shape_cast %0 : vector<1x400x3xbf16> to vector<400x3xbf16>
    %c0_2 = arith.constant 0 : index
    %c0_3 = arith.constant 0 : index
    %2 = vector.load %arg2[%c0_2, %c0_3] : memref<27x32xbf16, #tpu.memory_space<vmem>>, vector<27x32xbf16>
    %c0_4 = arith.constant 0 : index
    %c0_5 = arith.constant 0 : index
    %3 = vector.load %arg3[%c0_4, %c0_5] : memref<1x32xf32, #tpu.memory_space<vmem>>, vector<1x32xf32>
    %4 = vector.extract_strided_slice %1 {offsets = [0, 0], sizes = [358, 3], strides = [1, 1]} : vector<400x3xbf16> to vector<358x3xbf16>
    %5 = vector.extract_strided_slice %1 {offsets = [1, 0], sizes = [358, 3], strides = [1, 1]} : vector<400x3xbf16> to vector<358x3xbf16>
    %6 = vector.extract_strided_slice %1 {offsets = [2, 0], sizes = [358, 3], strides = [1, 1]} : vector<400x3xbf16> to vector<358x3xbf16>
    %7 = vector.extract_strided_slice %1 {offsets = [20, 0], sizes = [358, 3], strides = [1, 1]} : vector<400x3xbf16> to vector<358x3xbf16>
    %8 = vector.extract_strided_slice %1 {offsets = [21, 0], sizes = [358, 3], strides = [1, 1]} : vector<400x3xbf16> to vector<358x3xbf16>
    %9 = vector.extract_strided_slice %1 {offsets = [22, 0], sizes = [358, 3], strides = [1, 1]} : vector<400x3xbf16> to vector<358x3xbf16>
    %10 = vector.extract_strided_slice %1 {offsets = [40, 0], sizes = [358, 3], strides = [1, 1]} : vector<400x3xbf16> to vector<358x3xbf16>
    %11 = vector.extract_strided_slice %1 {offsets = [41, 0], sizes = [358, 3], strides = [1, 1]} : vector<400x3xbf16> to vector<358x3xbf16>
    %12 = vector.extract_strided_slice %1 {offsets = [42, 0], sizes = [358, 3], strides = [1, 1]} : vector<400x3xbf16> to vector<358x3xbf16>
    %13 = tpu.concatenate %4, %5, %6, %7, %8, %9, %10, %11, %12 in 1 : vector<358x3xbf16>, vector<358x3xbf16>, vector<358x3xbf16>, vector<358x3xbf16>, vector<358x3xbf16>, vector<358x3xbf16>, vector<358x3xbf16>, vector<358x3xbf16>, vector<358x3xbf16> -> vector<358x27xbf16>
    %cst = arith.constant dense<0.000000e+00> : vector<358x32xf32>
    %14 = tpu.matmul %13, %2, %cst {dimension_numbers = #tpu.dot_dimension_numbers<[1], [0], [0], [1], [0, 0, 1, 1], [], []>} : vector<358x27xbf16>, vector<27x32xbf16>, vector<358x32xf32> -> vector<358x32xf32>
    %15 = vector.broadcast %3 : vector<1x32xf32> to vector<358x32xf32>
    %16 = arith.addf %14, %15 : vector<358x32xf32>
    %cst_6 = arith.constant 0.000000e+00 : f32
    %17 = vector.broadcast %cst_6 : f32 to vector<358x32xf32>
    %18 = arith.cmpf oge, %16, %17 : vector<358x32xf32>
    %cst_7 = arith.constant 1.000000e-01 : f32
    %19 = vector.broadcast %cst_7 : f32 to vector<358x32xf32>
    %20 = arith.mulf %19, %16 : vector<358x32xf32>
    %21 = arith.select %18, %16, %20 : vector<358x32xi1>, vector<358x32xf32>
    %22 = arith.truncf %21 : vector<358x32xf32> to vector<358x32xbf16>
    %c0_8 = arith.constant 0 : index
    %c0_9 = arith.constant 0 : index
    %23 = vector.load %arg4[%c0_8, %c0_9] : memref<288x64xbf16, #tpu.memory_space<vmem>>, vector<288x64xbf16>
    %c0_10 = arith.constant 0 : index
    %c0_11 = arith.constant 0 : index
    %24 = vector.load %arg5[%c0_10, %c0_11] : memref<1x64xf32, #tpu.memory_space<vmem>>, vector<1x64xf32>
    %25 = vector.extract_strided_slice %22 {offsets = [0, 0], sizes = [316, 32], strides = [1, 1]} : vector<358x32xbf16> to vector<316x32xbf16>
    %26 = vector.extract_strided_slice %22 {offsets = [1, 0], sizes = [316, 32], strides = [1, 1]} : vector<358x32xbf16> to vector<316x32xbf16>
    %27 = vector.extract_strided_slice %22 {offsets = [2, 0], sizes = [316, 32], strides = [1, 1]} : vector<358x32xbf16> to vector<316x32xbf16>
    %28 = vector.extract_strided_slice %22 {offsets = [20, 0], sizes = [316, 32], strides = [1, 1]} : vector<358x32xbf16> to vector<316x32xbf16>
    %29 = vector.extract_strided_slice %22 {offsets = [21, 0], sizes = [316, 32], strides = [1, 1]} : vector<358x32xbf16> to vector<316x32xbf16>
    %30 = vector.extract_strided_slice %22 {offsets = [22, 0], sizes = [316, 32], strides = [1, 1]} : vector<358x32xbf16> to vector<316x32xbf16>
    %31 = vector.extract_strided_slice %22 {offsets = [40, 0], sizes = [316, 32], strides = [1, 1]} : vector<358x32xbf16> to vector<316x32xbf16>
    %32 = vector.extract_strided_slice %22 {offsets = [41, 0], sizes = [316, 32], strides = [1, 1]} : vector<358x32xbf16> to vector<316x32xbf16>
    %33 = vector.extract_strided_slice %22 {offsets = [42, 0], sizes = [316, 32], strides = [1, 1]} : vector<358x32xbf16> to vector<316x32xbf16>
    %34 = tpu.concatenate %25, %26, %27, %28, %29, %30, %31, %32, %33 in 1 : vector<316x32xbf16>, vector<316x32xbf16>, vector<316x32xbf16>, vector<316x32xbf16>, vector<316x32xbf16>, vector<316x32xbf16>, vector<316x32xbf16>, vector<316x32xbf16>, vector<316x32xbf16> -> vector<316x288xbf16>
    %cst_12 = arith.constant dense<0.000000e+00> : vector<316x64xf32>
    %35 = tpu.matmul %34, %23, %cst_12 {dimension_numbers = #tpu.dot_dimension_numbers<[1], [0], [0], [1], [0, 0, 1, 1], [], []>} : vector<316x288xbf16>, vector<288x64xbf16>, vector<316x64xf32> -> vector<316x64xf32>
    %36 = vector.broadcast %24 : vector<1x64xf32> to vector<316x64xf32>
    %37 = arith.addf %35, %36 : vector<316x64xf32>
    %cst_13 = arith.constant 0.000000e+00 : f32
    %38 = vector.broadcast %cst_13 : f32 to vector<316x64xf32>
    %39 = arith.cmpf oge, %37, %38 : vector<316x64xf32>
    %cst_14 = arith.constant 1.000000e-01 : f32
    %40 = vector.broadcast %cst_14 : f32 to vector<316x64xf32>
    %41 = arith.mulf %40, %37 : vector<316x64xf32>
    %42 = arith.select %39, %37, %41 : vector<316x64xi1>, vector<316x64xf32>
    %43 = arith.truncf %42 : vector<316x64xf32> to vector<316x64xbf16>
    %c0_15 = arith.constant 0 : index
    %c0_16 = arith.constant 0 : index
    %c0_17 = arith.constant 0 : index
    %44 = vector.load %arg6[%c0_15, %c0_16, %c0_17] : memref<1x316x64xbf16, #tpu.memory_space<vmem>>, vector<1x316x64xbf16>
    %45 = vector.shape_cast %44 : vector<1x316x64xbf16> to vector<316x64xbf16>
    %46 = vector.shape_cast %43 : vector<316x64xbf16> to vector<1x316x64xbf16>
    tpu.vector_store %arg6[%c0_15, %c0_16, %c0_17], %46 {strides = array<i32>} : memref<1x316x64xbf16, #tpu.memory_space<vmem>>, vector<1x316x64xbf16>,
    return
  }
  func.func @transform_0(%arg0: i32) -> (i32, i32, i32) {
    %c0_i32 = arith.constant 0 : i32
    %c0_i32_0 = arith.constant 0 : i32
    %c0_i32_1 = arith.constant 0 : i32
    return %arg0, %c0_i32, %c0_i32_0 : i32, i32, i32
  }
  func.func @transform_1(%arg0: i32) -> (i32, i32) {
    %c0_i32 = arith.constant 0 : i32
    %c0_i32_0 = arith.constant 0 : i32
    %c0_i32_1 = arith.constant 0 : i32
    return %c0_i32, %c0_i32_0 : i32, i32
  }
  func.func @transform_2(%arg0: i32) -> (i32, i32) {
    %c0_i32 = arith.constant 0 : i32
    %c0_i32_0 = arith.constant 0 : i32
    %c0_i32_1 = arith.constant 0 : i32
    return %c0_i32, %c0_i32_0 : i32, i32
  }
  func.func @transform_3(%arg0: i32) -> (i32, i32) {
    %c0_i32 = arith.constant 0 : i32
    %c0_i32_0 = arith.constant 0 : i32
    %c0_i32_1 = arith.constant 0 : i32
    return %c0_i32, %c0_i32_0 : i32, i32
  }
  func.func @transform_4(%arg0: i32) -> (i32, i32) {
    %c0_i32 = arith.constant 0 : i32
    %c0_i32_0 = arith.constant 0 : i32
    %c0_i32_1 = arith.constant 0 : i32
    return %c0_i32, %c0_i32_0 : i32, i32
  }
  func.func @transform_5(%arg0: i32) -> (i32, i32, i32) {
    %c0_i32 = arith.constant 0 : i32
    %c0_i32_0 = arith.constant 0 : i32
    %c0_i32_1 = arith.constant 0 : i32
    return %arg0, %c0_i32, %c0_i32_0 : i32, i32, i32
  }
}

module attributes {stable_mosaic.version = 11 : i64} {
  func.func @_stage2_kernel(%arg0: i32, %arg1: memref<1x64x256xbf16, #tpu.memory_space<vmem>>, %arg2: memref<256x64xbf16, #tpu.memory_space<vmem>>, %arg3: memref<1x64xf32, #tpu.memory_space<vmem>>, %arg4: memref<576x128xbf16, #tpu.memory_space<vmem>>, %arg5: memref<1x128xf32, #tpu.memory_space<vmem>>, %arg6: memref<1152x64xbf16, #tpu.memory_space<vmem>>, %arg7: memref<1x64xf32, #tpu.memory_space<vmem>>, %arg8: memref<64x8xf32, #tpu.memory_space<vmem>>, %arg9: memref<1x8xf32, #tpu.memory_space<vmem>>, %arg10: memref<8x64xf32, #tpu.memory_space<vmem>>, %arg11: memref<1x64xf32, #tpu.memory_space<vmem>>, %arg12: memref<64x256xbf16, #tpu.memory_space<vmem>>, %arg13: memref<1x256xf32, #tpu.memory_space<vmem>>, %arg14: memref<1x28x256xbf16, #tpu.memory_space<vmem>>) attributes {dimension_semantics = [#tpu.dimension_semantics<parallel>], iteration_bounds = array<i64: 2>, scalar_prefetch = 0 : i64, scratch_operands = 0 : i64, tpu.core_type = #tpu.core_type<tc>, window_params = [{transform_indices = @transform_0, window_bounds = array<i64: 1, 64, 256>}, {pipeline_mode = #tpu.pipeline_mode<synchronous>, transform_indices = @transform_1, window_bounds = array<i64: 256, 64>}, {pipeline_mode = #tpu.pipeline_mode<synchronous>, transform_indices = @transform_2, window_bounds = array<i64: 1, 64>}, {pipeline_mode = #tpu.pipeline_mode<synchronous>, transform_indices = @transform_3, window_bounds = array<i64: 576, 128>}, {pipeline_mode = #tpu.pipeline_mode<synchronous>, transform_indices = @transform_4, window_bounds = array<i64: 1, 128>}, {pipeline_mode = #tpu.pipeline_mode<synchronous>, transform_indices = @transform_5, window_bounds = array<i64: 1152, 64>}, {pipeline_mode = #tpu.pipeline_mode<synchronous>, transform_indices = @transform_6, window_bounds = array<i64: 1, 64>}, {pipeline_mode = #tpu.pipeline_mode<synchronous>, transform_indices = @transform_7, window_bounds = array<i64: 64, 8>}, {pipeline_mode = #tpu.pipeline_mode<synchronous>, transform_indices = @transform_8, window_bounds = array<i64: 1, 8>}, {pipeline_mode = #tpu.pipeline_mode<synchronous>, transform_indices = @transform_9, window_bounds = array<i64: 8, 64>}, {pipeline_mode = #tpu.pipeline_mode<synchronous>, transform_indices = @transform_10, window_bounds = array<i64: 1, 64>}, {pipeline_mode = #tpu.pipeline_mode<synchronous>, transform_indices = @transform_11, window_bounds = array<i64: 64, 256>}, {pipeline_mode = #tpu.pipeline_mode<synchronous>, transform_indices = @transform_12, window_bounds = array<i64: 1, 256>}, {transform_indices = @transform_13, window_bounds = array<i64: 1, 28, 256>}]} {
    %c0 = arith.constant 0 : index
    %c0_0 = arith.constant 0 : index
    %c0_1 = arith.constant 0 : index
    %0 = vector.load %arg1[%c0, %c0_0, %c0_1] : memref<1x64x256xbf16, #tpu.memory_space<vmem>>, vector<1x64x256xbf16>
    %1 = vector.shape_cast %0 : vector<1x64x256xbf16> to vector<64x256xbf16>
    %c0_2 = arith.constant 0 : index
    %c0_3 = arith.constant 0 : index
    %2 = vector.load %arg2[%c0_2, %c0_3] : memref<256x64xbf16, #tpu.memory_space<vmem>>, vector<256x64xbf16>
    %cst = arith.constant dense<0.000000e+00> : vector<64x64xf32>
    %3 = tpu.matmul %1, %2, %cst {dimension_numbers = #tpu.dot_dimension_numbers<[1], [0], [0], [1], [0, 0, 1, 1], [], []>} : vector<64x256xbf16>, vector<256x64xbf16>, vector<64x64xf32> -> vector<64x64xf32>
    %c0_4 = arith.constant 0 : index
    %c0_5 = arith.constant 0 : index
    %4 = vector.load %arg3[%c0_4, %c0_5] : memref<1x64xf32, #tpu.memory_space<vmem>>, vector<1x64xf32>
    %5 = vector.broadcast %4 : vector<1x64xf32> to vector<64x64xf32>
    %6 = arith.addf %3, %5 : vector<64x64xf32>
    %cst_6 = arith.constant 0.000000e+00 : f32
    %7 = vector.broadcast %cst_6 : f32 to vector<64x64xf32>
    %8 = arith.cmpf oge, %6, %7 : vector<64x64xf32>
    %cst_7 = arith.constant 1.000000e-01 : f32
    %9 = vector.broadcast %cst_7 : f32 to vector<64x64xf32>
    %10 = arith.mulf %9, %6 : vector<64x64xf32>
    %11 = arith.select %8, %6, %10 : vector<64x64xi1>, vector<64x64xf32>
    %12 = arith.truncf %11 : vector<64x64xf32> to vector<64x64xbf16>
    %c0_8 = arith.constant 0 : index
    %c0_9 = arith.constant 0 : index
    %13 = vector.load %arg4[%c0_8, %c0_9] : memref<576x128xbf16, #tpu.memory_space<vmem>>, vector<576x128xbf16>
    %c0_10 = arith.constant 0 : index
    %c0_11 = arith.constant 0 : index
    %14 = vector.load %arg5[%c0_10, %c0_11] : memref<1x128xf32, #tpu.memory_space<vmem>>, vector<1x128xf32>
    %15 = vector.extract_strided_slice %12 {offsets = [0, 0], sizes = [46, 64], strides = [1, 1]} : vector<64x64xbf16> to vector<46x64xbf16>
    %16 = vector.extract_strided_slice %12 {offsets = [1, 0], sizes = [46, 64], strides = [1, 1]} : vector<64x64xbf16> to vector<46x64xbf16>
    %17 = vector.extract_strided_slice %12 {offsets = [2, 0], sizes = [46, 64], strides = [1, 1]} : vector<64x64xbf16> to vector<46x64xbf16>
    %18 = vector.extract_strided_slice %12 {offsets = [8, 0], sizes = [46, 64], strides = [1, 1]} : vector<64x64xbf16> to vector<46x64xbf16>
    %19 = vector.extract_strided_slice %12 {offsets = [9, 0], sizes = [46, 64], strides = [1, 1]} : vector<64x64xbf16> to vector<46x64xbf16>
    %20 = vector.extract_strided_slice %12 {offsets = [10, 0], sizes = [46, 64], strides = [1, 1]} : vector<64x64xbf16> to vector<46x64xbf16>
    %21 = vector.extract_strided_slice %12 {offsets = [16, 0], sizes = [46, 64], strides = [1, 1]} : vector<64x64xbf16> to vector<46x64xbf16>
    %22 = vector.extract_strided_slice %12 {offsets = [17, 0], sizes = [46, 64], strides = [1, 1]} : vector<64x64xbf16> to vector<46x64xbf16>
    %23 = vector.extract_strided_slice %12 {offsets = [18, 0], sizes = [46, 64], strides = [1, 1]} : vector<64x64xbf16> to vector<46x64xbf16>
    %24 = tpu.concatenate %15, %16, %17, %18, %19, %20, %21, %22, %23 in 1 : vector<46x64xbf16>, vector<46x64xbf16>, vector<46x64xbf16>, vector<46x64xbf16>, vector<46x64xbf16>, vector<46x64xbf16>, vector<46x64xbf16>, vector<46x64xbf16>, vector<46x64xbf16> -> vector<46x576xbf16>
    %cst_12 = arith.constant dense<0.000000e+00> : vector<46x128xf32>
    %25 = tpu.matmul %24, %13, %cst_12 {dimension_numbers = #tpu.dot_dimension_numbers<[1], [0], [0], [1], [0, 0, 1, 1], [], []>} : vector<46x576xbf16>, vector<576x128xbf16>, vector<46x128xf32> -> vector<46x128xf32>
    %26 = vector.broadcast %14 : vector<1x128xf32> to vector<46x128xf32>
    %27 = arith.addf %25, %26 : vector<46x128xf32>
    %cst_13 = arith.constant 0.000000e+00 : f32
    %28 = vector.broadcast %cst_13 : f32 to vector<46x128xf32>
    %29 = arith.cmpf oge, %27, %28 : vector<46x128xf32>
    %cst_14 = arith.constant 1.000000e-01 : f32
    %30 = vector.broadcast %cst_14 : f32 to vector<46x128xf32>
    %31 = arith.mulf %30, %27 : vector<46x128xf32>
    %32 = arith.select %29, %27, %31 : vector<46x128xi1>, vector<46x128xf32>
    %33 = arith.truncf %32 : vector<46x128xf32> to vector<46x128xbf16>
    %c0_15 = arith.constant 0 : index
    %c0_16 = arith.constant 0 : index
    %34 = vector.load %arg6[%c0_15, %c0_16] : memref<1152x64xbf16, #tpu.memory_space<vmem>>, vector<1152x64xbf16>
    %c0_17 = arith.constant 0 : index
    %c0_18 = arith.constant 0 : index
    %35 = vector.load %arg7[%c0_17, %c0_18] : memref<1x64xf32, #tpu.memory_space<vmem>>, vector<1x64xf32>
    %36 = vector.extract_strided_slice %33 {offsets = [0, 0], sizes = [28, 128], strides = [1, 1]} : vector<46x128xbf16> to vector<28x128xbf16>
    %37 = vector.extract_strided_slice %33 {offsets = [1, 0], sizes = [28, 128], strides = [1, 1]} : vector<46x128xbf16> to vector<28x128xbf16>
    %38 = vector.extract_strided_slice %33 {offsets = [2, 0], sizes = [28, 128], strides = [1, 1]} : vector<46x128xbf16> to vector<28x128xbf16>
    %39 = vector.extract_strided_slice %33 {offsets = [8, 0], sizes = [28, 128], strides = [1, 1]} : vector<46x128xbf16> to vector<28x128xbf16>
    %40 = vector.extract_strided_slice %33 {offsets = [9, 0], sizes = [28, 128], strides = [1, 1]} : vector<46x128xbf16> to vector<28x128xbf16>
    %41 = vector.extract_strided_slice %33 {offsets = [10, 0], sizes = [28, 128], strides = [1, 1]} : vector<46x128xbf16> to vector<28x128xbf16>
    %42 = vector.extract_strided_slice %33 {offsets = [16, 0], sizes = [28, 128], strides = [1, 1]} : vector<46x128xbf16> to vector<28x128xbf16>
    %43 = vector.extract_strided_slice %33 {offsets = [17, 0], sizes = [28, 128], strides = [1, 1]} : vector<46x128xbf16> to vector<28x128xbf16>
    %44 = vector.extract_strided_slice %33 {offsets = [18, 0], sizes = [28, 128], strides = [1, 1]} : vector<46x128xbf16> to vector<28x128xbf16>
    %45 = tpu.concatenate %36, %37, %38, %39, %40, %41, %42, %43, %44 in 1 : vector<28x128xbf16>, vector<28x128xbf16>, vector<28x128xbf16>, vector<28x128xbf16>, vector<28x128xbf16>, vector<28x128xbf16>, vector<28x128xbf16>, vector<28x128xbf16>, vector<28x128xbf16> -> vector<28x1152xbf16>
    %cst_19 = arith.constant dense<0.000000e+00> : vector<28x64xf32>
    %46 = tpu.matmul %45, %34, %cst_19 {dimension_numbers = #tpu.dot_dimension_numbers<[1], [0], [0], [1], [0, 0, 1, 1], [], []>} : vector<28x1152xbf16>, vector<1152x64xbf16>, vector<28x64xf32> -> vector<28x64xf32>
    %47 = vector.broadcast %35 : vector<1x64xf32> to vector<28x64xf32>
    %48 = arith.addf %46, %47 : vector<28x64xf32>
    %cst_20 = arith.constant 0.000000e+00 : f32
    %49 = vector.broadcast %cst_20 : f32 to vector<28x64xf32>
    %50 = arith.cmpf oge, %48, %49 : vector<28x64xf32>
    %cst_21 = arith.constant 1.000000e-01 : f32
    %51 = vector.broadcast %cst_21 : f32 to vector<28x64xf32>
    %52 = arith.mulf %51, %48 : vector<28x64xf32>
    %53 = arith.select %50, %48, %52 : vector<28x64xi1>, vector<28x64xf32>
    %54 = tpu.iota {dimensions = array<i32: 0>} : vector<28x1xi32>
    %c8_i32 = arith.constant 8 : i32
    %c0_i32 = arith.constant 0 : i32
    %55 = arith.cmpi eq, %c8_i32, %c0_i32 : i32
    %c1_i32 = arith.constant 1 : i32
    %56 = arith.select %55, %c1_i32, %c8_i32 : i32
    %57 = vector.broadcast %56 : i32 to vector<28x1xi32>
    %58 = arith.remsi %54, %57 : vector<28x1xi32>
    %c0_i32_22 = arith.constant 0 : i32
    %59 = vector.broadcast %c0_i32_22 : i32 to vector<28x1xi32>
    %60 = arith.cmpi ne, %58, %59 : vector<28x1xi32>
    %c0_i32_23 = arith.constant 0 : i32
    %61 = vector.broadcast %c0_i32_23 : i32 to vector<28x1xi32>
    %62 = arith.cmpi slt, %58, %61 : vector<28x1xi32>
    %c0_i32_24 = arith.constant 0 : i32
    %63 = arith.cmpi slt, %56, %c0_i32_24 : i32
    %64 = vector.broadcast %63 : i1 to vector<28x1xi1>
    %65 = vector.broadcast %64 : vector<28x1xi1> to vector<28x1xi1>
    %66 = arith.xori %62, %65 : vector<28x1xi1>
    %67 = arith.andi %66, %60 : vector<28x1xi1>
    %68 = vector.broadcast %56 : i32 to vector<28x1xi32>
    %69 = arith.addi %58, %68 : vector<28x1xi32>
    %70 = arith.select %67, %69, %58 : vector<28x1xi1>, vector<28x1xi32>
    %c4_i32 = arith.constant 4 : i32
    %71 = vector.broadcast %c4_i32 : i32 to vector<28x1xi32>
    %72 = arith.cmpi slt, %70, %71 : vector<28x1xi32>
    %73 = arith.extui %72 : vector<28x1xi1> to vector<28x1xi32>
    %74 = arith.sitofp %73 : vector<28x1xi32> to vector<28x1xf32>
    %75 = vector.broadcast %74 : vector<28x1xf32> to vector<28x64xf32>
    %76 = arith.mulf %53, %75 : vector<28x64xf32>
    %cst_25 = arith.constant dense<0.000000e+00> : vector<64xf32>
    %77 = vector.multi_reduction <add>, %76, %cst_25 [0] : vector<28x64xf32> to vector<64xf32>
    %78 = vector.shape_cast %77 : vector<64xf32> to vector<1x64xf32>
    %cst_26 = arith.constant 6.250000e-02 : f32
    %79 = vector.broadcast %cst_26 : f32 to vector<1x64xf32>
    %80 = arith.mulf %78, %79 : vector<1x64xf32>
    %c0_27 = arith.constant 0 : index
    %c0_28 = arith.constant 0 : index
    %81 = vector.load %arg8[%c0_27, %c0_28] : memref<64x8xf32, #tpu.memory_space<vmem>>, vector<64x8xf32>
    %cst_29 = arith.constant dense<0.000000e+00> : vector<1x8xf32>
    %82 = tpu.matmul %80, %81, %cst_29 {dimension_numbers = #tpu.dot_dimension_numbers<[1], [0], [0], [1], [0, 0, 1, 1], [], []>} : vector<1x64xf32>, vector<64x8xf32>, vector<1x8xf32> -> vector<1x8xf32>
    %c0_30 = arith.constant 0 : index
    %c0_31 = arith.constant 0 : index
    %83 = vector.load %arg9[%c0_30, %c0_31] : memref<1x8xf32, #tpu.memory_space<vmem>>, vector<1x8xf32>
    %84 = arith.addf %82, %83 : vector<1x8xf32>
    %cst_32 = arith.constant 0.000000e+00 : f32
    %85 = vector.broadcast %cst_32 : f32 to vector<1x8xf32>
    %86 = arith.maximumf %84, %85 : vector<1x8xf32>
    %c0_33 = arith.constant 0 : index
    %c0_34 = arith.constant 0 : index
    %87 = vector.load %arg10[%c0_33, %c0_34] : memref<8x64xf32, #tpu.memory_space<vmem>>, vector<8x64xf32>
    %cst_35 = arith.constant dense<0.000000e+00> : vector<1x64xf32>
    %88 = tpu.matmul %86, %87, %cst_35 {dimension_numbers = #tpu.dot_dimension_numbers<[1], [0], [0], [1], [0, 0, 1, 1], [], []>} : vector<1x8xf32>, vector<8x64xf32>, vector<1x64xf32> -> vector<1x64xf32>
    %c0_36 = arith.constant 0 : index
    %c0_37 = arith.constant 0 : index
    %89 = vector.load %arg11[%c0_36, %c0_37] : memref<1x64xf32, #tpu.memory_space<vmem>>, vector<1x64xf32>
    %90 = arith.addf %88, %89 : vector<1x64xf32>
    %cst_38 = arith.constant 0.000000e+00 : f32
    %91 = vector.broadcast %cst_38 : f32 to vector<1x64xf32>
    %92 = arith.subf %91, %90 : vector<1x64xf32>
    %93 = math.exp %92 : vector<1x64xf32>
    %cst_39 = arith.constant 1.000000e+00 : f32
    %94 = vector.broadcast %cst_39 : f32 to vector<1x64xf32>
    %95 = arith.addf %94, %93 : vector<1x64xf32>
    %cst_40 = arith.constant 1.000000e+00 : f32
    %96 = vector.broadcast %cst_40 : f32 to vector<1x64xf32>
    %97 = arith.divf %96, %95 : vector<1x64xf32>
    %98 = vector.broadcast %97 : vector<1x64xf32> to vector<28x64xf32>
    %99 = arith.mulf %53, %98 : vector<28x64xf32>
    %100 = arith.truncf %99 : vector<28x64xf32> to vector<28x64xbf16>
    %c0_41 = arith.constant 0 : index
    %c0_42 = arith.constant 0 : index
    %101 = vector.load %arg12[%c0_41, %c0_42] : memref<64x256xbf16, #tpu.memory_space<vmem>>, vector<64x256xbf16>
    %cst_43 = arith.constant dense<0.000000e+00> : vector<28x256xf32>
    %102 = tpu.matmul %100, %101, %cst_43 {dimension_numbers = #tpu.dot_dimension_numbers<[1], [0], [0], [1], [0, 0, 1, 1], [], []>} : vector<28x64xbf16>, vector<64x256xbf16>, vector<28x256xf32> -> vector<28x256xf32>
    %c0_44 = arith.constant 0 : index
    %c0_45 = arith.constant 0 : index
    %103 = vector.load %arg13[%c0_44, %c0_45] : memref<1x256xf32, #tpu.memory_space<vmem>>, vector<1x256xf32>
    %104 = vector.broadcast %103 : vector<1x256xf32> to vector<28x256xf32>
    %105 = arith.addf %102, %104 : vector<28x256xf32>
    %cst_46 = arith.constant 0.000000e+00 : f32
    %106 = vector.broadcast %cst_46 : f32 to vector<28x256xf32>
    %107 = arith.cmpf oge, %105, %106 : vector<28x256xf32>
    %cst_47 = arith.constant 1.000000e-01 : f32
    %108 = vector.broadcast %cst_47 : f32 to vector<28x256xf32>
    %109 = arith.mulf %108, %105 : vector<28x256xf32>
    %110 = arith.select %107, %105, %109 : vector<28x256xi1>, vector<28x256xf32>
    %111 = arith.truncf %110 : vector<28x256xf32> to vector<28x256xbf16>
    %c0_48 = arith.constant 0 : index
    %c0_49 = arith.constant 0 : index
    %c0_50 = arith.constant 0 : index
    %112 = vector.load %arg14[%c0_48, %c0_49, %c0_50] : memref<1x28x256xbf16, #tpu.memory_space<vmem>>, vector<1x28x256xbf16>
    %113 = vector.shape_cast %112 : vector<1x28x256xbf16> to vector<28x256xbf16>
    %114 = vector.shape_cast %111 : vector<28x256xbf16> to vector<1x28x256xbf16>
    tpu.vector_store %arg14[%c0_48, %c0_49, %c0_50], %114 {strides = array<i32>} : memref<1x28x256xbf16, #tpu.memory_space<vmem>>, vector<1x28x256xbf16>,
    return
  }
  func.func @transform_0(%arg0: i32) -> (i32, i32, i32) {
    %c0_i32 = arith.constant 0 : i32
    %c0_i32_0 = arith.constant 0 : i32
    %c0_i32_1 = arith.constant 0 : i32
    return %arg0, %c0_i32, %c0_i32_0 : i32, i32, i32
  }
  func.func @transform_1(%arg0: i32) -> (i32, i32) {
    %c0_i32 = arith.constant 0 : i32
    %c0_i32_0 = arith.constant 0 : i32
    %c0_i32_1 = arith.constant 0 : i32
    return %c0_i32, %c0_i32_0 : i32, i32
  }
  func.func @transform_2(%arg0: i32) -> (i32, i32) {
    %c0_i32 = arith.constant 0 : i32
    %c0_i32_0 = arith.constant 0 : i32
    %c0_i32_1 = arith.constant 0 : i32
    return %c0_i32, %c0_i32_0 : i32, i32
  }
  func.func @transform_3(%arg0: i32) -> (i32, i32) {
    %c0_i32 = arith.constant 0 : i32
    %c0_i32_0 = arith.constant 0 : i32
    %c0_i32_1 = arith.constant 0 : i32
    return %c0_i32, %c0_i32_0 : i32, i32
  }
  func.func @transform_4(%arg0: i32) -> (i32, i32) {
    %c0_i32 = arith.constant 0 : i32
    %c0_i32_0 = arith.constant 0 : i32
    %c0_i32_1 = arith.constant 0 : i32
    return %c0_i32, %c0_i32_0 : i32, i32
  }
  func.func @transform_5(%arg0: i32) -> (i32, i32) {
    %c0_i32 = arith.constant 0 : i32
    %c0_i32_0 = arith.constant 0 : i32
    %c0_i32_1 = arith.constant 0 : i32
    return %c0_i32, %c0_i32_0 : i32, i32
  }
  func.func @transform_6(%arg0: i32) -> (i32, i32) {
    %c0_i32 = arith.constant 0 : i32
    %c0_i32_0 = arith.constant 0 : i32
    %c0_i32_1 = arith.constant 0 : i32
    return %c0_i32, %c0_i32_0 : i32, i32
  }
  func.func @transform_7(%arg0: i32) -> (i32, i32) {
    %c0_i32 = arith.constant 0 : i32
    %c0_i32_0 = arith.constant 0 : i32
    %c0_i32_1 = arith.constant 0 : i32
    return %c0_i32, %c0_i32_0 : i32, i32
  }
  func.func @transform_8(%arg0: i32) -> (i32, i32) {
    %c0_i32 = arith.constant 0 : i32
    %c0_i32_0 = arith.constant 0 : i32
    %c0_i32_1 = arith.constant 0 : i32
    return %c0_i32, %c0_i32_0 : i32, i32
  }
  func.func @transform_9(%arg0: i32) -> (i32, i32) {
    %c0_i32 = arith.constant 0 : i32
    %c0_i32_0 = arith.constant 0 : i32
    %c0_i32_1 = arith.constant 0 : i32
    return %c0_i32, %c0_i32_0 : i32, i32
  }
  func.func @transform_10(%arg0: i32) -> (i32, i32) {
    %c0_i32 = arith.constant 0 : i32
    %c0_i32_0 = arith.constant 0 : i32
    %c0_i32_1 = arith.constant 0 : i32
    return %c0_i32, %c0_i32_0 : i32, i32
  }
  func.func @transform_11(%arg0: i32) -> (i32, i32) {
    %c0_i32 = arith.constant 0 : i32
    %c0_i32_0 = arith.constant 0 : i32
    %c0_i32_1 = arith.constant 0 : i32
    return %c0_i32, %c0_i32_0 : i32, i32
  }
  func.func @transform_12(%arg0: i32) -> (i32, i32) {
    %c0_i32 = arith.constant 0 : i32
    %c0_i32_0 = arith.constant 0 : i32
    %c0_i32_1 = arith.constant 0 : i32
    return %c0_i32, %c0_i32_0 : i32, i32
  }
  func.func @transform_13(%arg0: i32) -> (i32, i32, i32) {
    %c0_i32 = arith.constant 0 : i32
    %c0_i32_0 = arith.constant 0 : i32
    %c0_i32_1 = arith.constant 0 : i32
    return %arg0, %c0_i32, %c0_i32_0 : i32, i32, i32
  }
}

module attributes {stable_mosaic.version = 11 : i64} {
  func.func @_stage3_kernel(%arg0: i32, %arg1: memref<1x64x64xbf16, #tpu.memory_space<vmem>>, %arg2: memref<1x64x64xbf16, #tpu.memory_space<vmem>>, %arg3: memref<576x64xbf16, #tpu.memory_space<vmem>>, %arg4: memref<1x64xf32, #tpu.memory_space<vmem>>, %arg5: memref<576x12xbf16, #tpu.memory_space<vmem>>, %arg6: memref<1x12xf32, #tpu.memory_space<vmem>>, %arg7: memref<1x28x12xbf16, #tpu.memory_space<vmem>>) attributes {dimension_semantics = [#tpu.dimension_semantics<parallel>], iteration_bounds = array<i64: 2>, scalar_prefetch = 0 : i64, scratch_operands = 0 : i64, tpu.core_type = #tpu.core_type<tc>, window_params = [{transform_indices = @transform_0, window_bounds = array<i64: 1, 64, 64>}, {transform_indices = @transform_1, window_bounds = array<i64: 1, 64, 64>}, {pipeline_mode = #tpu.pipeline_mode<synchronous>, transform_indices = @transform_2, window_bounds = array<i64: 576, 64>}, {pipeline_mode = #tpu.pipeline_mode<synchronous>, transform_indices = @transform_3, window_bounds = array<i64: 1, 64>}, {pipeline_mode = #tpu.pipeline_mode<synchronous>, transform_indices = @transform_4, window_bounds = array<i64: 576, 12>}, {pipeline_mode = #tpu.pipeline_mode<synchronous>, transform_indices = @transform_5, window_bounds = array<i64: 1, 12>}, {transform_indices = @transform_6, window_bounds = array<i64: 1, 28, 12>}]} {
    %c0 = arith.constant 0 : index
    %c0_0 = arith.constant 0 : index
    %c0_1 = arith.constant 0 : index
    %0 = vector.load %arg1[%c0, %c0_0, %c0_1] : memref<1x64x64xbf16, #tpu.memory_space<vmem>>, vector<1x64x64xbf16>
    %1 = vector.shape_cast %0 : vector<1x64x64xbf16> to vector<64x64xbf16>
    %c0_2 = arith.constant 0 : index
    %c0_3 = arith.constant 0 : index
    %c0_4 = arith.constant 0 : index
    %2 = vector.load %arg2[%c0_2, %c0_3, %c0_4] : memref<1x64x64xbf16, #tpu.memory_space<vmem>>, vector<1x64x64xbf16>
    %3 = vector.shape_cast %2 : vector<1x64x64xbf16> to vector<64x64xbf16>
    %4 = arith.addf %1, %3 : vector<64x64xbf16>
    %c0_5 = arith.constant 0 : index
    %c0_6 = arith.constant 0 : index
    %5 = vector.load %arg3[%c0_5, %c0_6] : memref<576x64xbf16, #tpu.memory_space<vmem>>, vector<576x64xbf16>
    %c0_7 = arith.constant 0 : index
    %c0_8 = arith.constant 0 : index
    %6 = vector.load %arg4[%c0_7, %c0_8] : memref<1x64xf32, #tpu.memory_space<vmem>>, vector<1x64xf32>
    %7 = vector.extract_strided_slice %4 {offsets = [0, 0], sizes = [46, 64], strides = [1, 1]} : vector<64x64xbf16> to vector<46x64xbf16>
    %8 = vector.extract_strided_slice %4 {offsets = [1, 0], sizes = [46, 64], strides = [1, 1]} : vector<64x64xbf16> to vector<46x64xbf16>
    %9 = vector.extract_strided_slice %4 {offsets = [2, 0], sizes = [46, 64], strides = [1, 1]} : vector<64x64xbf16> to vector<46x64xbf16>
    %10 = vector.extract_strided_slice %4 {offsets = [8, 0], sizes = [46, 64], strides = [1, 1]} : vector<64x64xbf16> to vector<46x64xbf16>
    %11 = vector.extract_strided_slice %4 {offsets = [9, 0], sizes = [46, 64], strides = [1, 1]} : vector<64x64xbf16> to vector<46x64xbf16>
    %12 = vector.extract_strided_slice %4 {offsets = [10, 0], sizes = [46, 64], strides = [1, 1]} : vector<64x64xbf16> to vector<46x64xbf16>
    %13 = vector.extract_strided_slice %4 {offsets = [16, 0], sizes = [46, 64], strides = [1, 1]} : vector<64x64xbf16> to vector<46x64xbf16>
    %14 = vector.extract_strided_slice %4 {offsets = [17, 0], sizes = [46, 64], strides = [1, 1]} : vector<64x64xbf16> to vector<46x64xbf16>
    %15 = vector.extract_strided_slice %4 {offsets = [18, 0], sizes = [46, 64], strides = [1, 1]} : vector<64x64xbf16> to vector<46x64xbf16>
    %16 = tpu.concatenate %7, %8, %9, %10, %11, %12, %13, %14, %15 in 1 : vector<46x64xbf16>, vector<46x64xbf16>, vector<46x64xbf16>, vector<46x64xbf16>, vector<46x64xbf16>, vector<46x64xbf16>, vector<46x64xbf16>, vector<46x64xbf16>, vector<46x64xbf16> -> vector<46x576xbf16>
    %cst = arith.constant dense<0.000000e+00> : vector<46x64xf32>
    %17 = tpu.matmul %16, %5, %cst {dimension_numbers = #tpu.dot_dimension_numbers<[1], [0], [0], [1], [0, 0, 1, 1], [], []>} : vector<46x576xbf16>, vector<576x64xbf16>, vector<46x64xf32> -> vector<46x64xf32>
    %18 = vector.broadcast %6 : vector<1x64xf32> to vector<46x64xf32>
    %19 = arith.addf %17, %18 : vector<46x64xf32>
    %cst_9 = arith.constant 0.000000e+00 : f32
    %20 = vector.broadcast %cst_9 : f32 to vector<46x64xf32>
    %21 = arith.cmpf oge, %19, %20 : vector<46x64xf32>
    %cst_10 = arith.constant 1.000000e-01 : f32
    %22 = vector.broadcast %cst_10 : f32 to vector<46x64xf32>
    %23 = arith.mulf %22, %19 : vector<46x64xf32>
    %24 = arith.select %21, %19, %23 : vector<46x64xi1>, vector<46x64xf32>
    %25 = arith.truncf %24 : vector<46x64xf32> to vector<46x64xbf16>
    %c0_11 = arith.constant 0 : index
    %c0_12 = arith.constant 0 : index
    %26 = vector.load %arg5[%c0_11, %c0_12] : memref<576x12xbf16, #tpu.memory_space<vmem>>, vector<576x12xbf16>
    %c0_13 = arith.constant 0 : index
    %c0_14 = arith.constant 0 : index
    %27 = vector.load %arg6[%c0_13, %c0_14] : memref<1x12xf32, #tpu.memory_space<vmem>>, vector<1x12xf32>
    %28 = vector.extract_strided_slice %25 {offsets = [0, 0], sizes = [28, 64], strides = [1, 1]} : vector<46x64xbf16> to vector<28x64xbf16>
    %29 = vector.extract_strided_slice %25 {offsets = [1, 0], sizes = [28, 64], strides = [1, 1]} : vector<46x64xbf16> to vector<28x64xbf16>
    %30 = vector.extract_strided_slice %25 {offsets = [2, 0], sizes = [28, 64], strides = [1, 1]} : vector<46x64xbf16> to vector<28x64xbf16>
    %31 = vector.extract_strided_slice %25 {offsets = [8, 0], sizes = [28, 64], strides = [1, 1]} : vector<46x64xbf16> to vector<28x64xbf16>
    %32 = vector.extract_strided_slice %25 {offsets = [9, 0], sizes = [28, 64], strides = [1, 1]} : vector<46x64xbf16> to vector<28x64xbf16>
    %33 = vector.extract_strided_slice %25 {offsets = [10, 0], sizes = [28, 64], strides = [1, 1]} : vector<46x64xbf16> to vector<28x64xbf16>
    %34 = vector.extract_strided_slice %25 {offsets = [16, 0], sizes = [28, 64], strides = [1, 1]} : vector<46x64xbf16> to vector<28x64xbf16>
    %35 = vector.extract_strided_slice %25 {offsets = [17, 0], sizes = [28, 64], strides = [1, 1]} : vector<46x64xbf16> to vector<28x64xbf16>
    %36 = vector.extract_strided_slice %25 {offsets = [18, 0], sizes = [28, 64], strides = [1, 1]} : vector<46x64xbf16> to vector<28x64xbf16>
    %37 = tpu.concatenate %28, %29, %30, %31, %32, %33, %34, %35, %36 in 1 : vector<28x64xbf16>, vector<28x64xbf16>, vector<28x64xbf16>, vector<28x64xbf16>, vector<28x64xbf16>, vector<28x64xbf16>, vector<28x64xbf16>, vector<28x64xbf16>, vector<28x64xbf16> -> vector<28x576xbf16>
    %cst_15 = arith.constant dense<0.000000e+00> : vector<28x12xf32>
    %38 = tpu.matmul %37, %26, %cst_15 {dimension_numbers = #tpu.dot_dimension_numbers<[1], [0], [0], [1], [0, 0, 1, 1], [], []>} : vector<28x576xbf16>, vector<576x12xbf16>, vector<28x12xf32> -> vector<28x12xf32>
    %39 = vector.broadcast %27 : vector<1x12xf32> to vector<28x12xf32>
    %40 = arith.addf %38, %39 : vector<28x12xf32>
    %41 = arith.truncf %40 : vector<28x12xf32> to vector<28x12xbf16>
    %c0_16 = arith.constant 0 : index
    %c0_17 = arith.constant 0 : index
    %c0_18 = arith.constant 0 : index
    %42 = vector.load %arg7[%c0_16, %c0_17, %c0_18] : memref<1x28x12xbf16, #tpu.memory_space<vmem>>, vector<1x28x12xbf16>
    %43 = vector.shape_cast %42 : vector<1x28x12xbf16> to vector<28x12xbf16>
    %44 = vector.shape_cast %41 : vector<28x12xbf16> to vector<1x28x12xbf16>
    tpu.vector_store %arg7[%c0_16, %c0_17, %c0_18], %44 {strides = array<i32>} : memref<1x28x12xbf16, #tpu.memory_space<vmem>>, vector<1x28x12xbf16>,
    return
  }
  func.func @transform_0(%arg0: i32) -> (i32, i32, i32) {
    %c0_i32 = arith.constant 0 : i32
    %c0_i32_0 = arith.constant 0 : i32
    %c0_i32_1 = arith.constant 0 : i32
    return %arg0, %c0_i32, %c0_i32_0 : i32, i32, i32
  }
  func.func @transform_1(%arg0: i32) -> (i32, i32, i32) {
    %c0_i32 = arith.constant 0 : i32
    %c0_i32_0 = arith.constant 0 : i32
    %c0_i32_1 = arith.constant 0 : i32
    return %arg0, %c0_i32, %c0_i32_0 : i32, i32, i32
  }
  func.func @transform_2(%arg0: i32) -> (i32, i32) {
    %c0_i32 = arith.constant 0 : i32
    %c0_i32_0 = arith.constant 0 : i32
    %c0_i32_1 = arith.constant 0 : i32
    return %c0_i32, %c0_i32_0 : i32, i32
  }
  func.func @transform_3(%arg0: i32) -> (i32, i32) {
    %c0_i32 = arith.constant 0 : i32
    %c0_i32_0 = arith.constant 0 : i32
    %c0_i32_1 = arith.constant 0 : i32
    return %c0_i32, %c0_i32_0 : i32, i32
  }
  func.func @transform_4(%arg0: i32) -> (i32, i32) {
    %c0_i32 = arith.constant 0 : i32
    %c0_i32_0 = arith.constant 0 : i32
    %c0_i32_1 = arith.constant 0 : i32
    return %c0_i32, %c0_i32_0 : i32, i32
  }
  func.func @transform_5(%arg0: i32) -> (i32, i32) {
    %c0_i32 = arith.constant 0 : i32
    %c0_i32_0 = arith.constant 0 : i32
    %c0_i32_1 = arith.constant 0 : i32
    return %c0_i32, %c0_i32_0 : i32, i32
  }
  func.func @transform_6(%arg0: i32) -> (i32, i32, i32) {
    %c0_i32 = arith.constant 0 : i32
    %c0_i32_0 = arith.constant 0 : i32
    %c0_i32_1 = arith.constant 0 : i32
    return %arg0, %c0_i32, %c0_i32_0 : i32, i32, i32
  }
}

</mosaic_0001>

<llo_original>
// kernel: unet1_forward.3
$region0: #{unet1_forward.3}
  #allocation0 [shape = 'u32[]', space=smem, size = 0x4, offset = 0x4, fixed_abs, tag = 'smem constant byte address 0x4 - core index']
  #allocation1 [shape = 'u32[144,128]{1,0:T(1,128)}', space=vmem, size = 0x12000, scoped, tag = 'internal scratch']
  %s0 = inlined_call_operand.vmem [shape: bf16[2,400,3], index: 0, kind: input, shape index: {}]
  %s1 = inlined_call_operand.vmem [shape: bf16[27,32], index: 1, kind: input, shape index: {}]
  %s2 = inlined_call_operand.vmem [shape: f32[1,32], index: 2, kind: input, shape index: {}]
  %s3 = inlined_call_operand.vmem [shape: bf16[288,64], index: 3, kind: input, shape index: {}]
  %s4 = inlined_call_operand.vmem [shape: f32[1,64], index: 4, kind: input, shape index: {}]
  %s5 = inlined_call_operand.vmem [shape: bf16[2,316,64], index: 5, kind: output, shape index: {}]
  %s6 = sld [smem:[#allocation0]]
  $region53: #{unet1_forward.3} parent=0
    _
  %s8 = ssub.s32 1, %s6
  %s9 = scalar_select 0, %s8, %s6
  loop: start=0, step=1, limit=4
  $region2: #{unet1_forward.3} parent=0 // loop_pre_header
    _
  $region3: #{unet1_forward.3} parent=0 // loop_header
    %s11 = sphi 0, %s15
    %p12 = scmp.ge.s32.totalorder %s11, 4
    %s21 = sphi 0, %s23
    %s24 = sphi 0, %s21
    %s25 = sphi 0, %s24
    %s41 = sphi 0, %s25
    %s45 = sphi 0, %s45
    %s47 = sphi 0, %s45
    %s48 = sphi 0, %s47
    %s62 = sphi 0, %s48
    %s66 = sphi 0, %s66
    %s68 = sphi 0, %s66
    %s69 = sphi 0, %s68
    %s83 = sphi 0, %s69
    %s87 = sphi 0, %s87
    %s89 = sphi 0, %s87
    %s90 = sphi 0, %s89
    %s104 = sphi 0, %s90
    %s108 = sphi 0, %s108
    %s110 = sphi 0, %s108
    %s111 = sphi 0, %s110
    %s125 = sphi 0, %s111
    %s131 = sphi 0, %s133
    %s134 = sphi 0, %s131
    %s135 = sphi 0, %s134
    %s151 = sphi 0, %s135
  $region4: #{unet1_forward.3} parent=0 // loop_header_branch
    %14 = sbr.rel (%p12) target = $region8
  $region5: #{unet1_forward.3} parent=0 // loop_body
    %s16 = ssub.s32 %s11, 1
    %s17 = ssub.s32 %s11, 2
    %s18 = sadd.s32 %s11, 1
    %s19 = ssub.s32 %s11, %s18
    %p20 = scmp.eq.s32.totalorder %s19, 0
    %s22 = sadd.s32 %s21, 1
    %s23 = scalar_select %p20, %s21, %s22
    %p26 = pneg %p20
    %p27 = scmp.eq.s32.totalorder %s11, 1
    %p28 = por %p26, %p27
    %p29 = scmp.ne.s32.totalorder %s21, %s24
    %p30 = scmp.eq.s32.totalorder %s11, 0
    %p31 = por %p29, %p30
    %p32 = scmp.ne.s32.totalorder %s21, %s24
    %p33 = scmp.eq.s32.totalorder %s16, 1
    %p34 = por %p32, %p33
    %p35 = scmp.ne.s32.totalorder %s24, %s25
    %p36 = scmp.eq.s32.totalorder %s16, 0
    %p37 = por %p35, %p36
    %p38 = scmp.ne.s32.totalorder %s24, %s25
    %p39 = scmp.eq.s32.totalorder %s17, 1
    %p40 = por %p38, %p39
    %p42 = scmp.ne.s32.totalorder %s25, %s41
    %p43 = scmp.eq.s32.totalorder %s17, 0
    %p44 = por %p42, %p43
    %s46 = sadd.s32 %s45, 1
    %p49 = scmp.eq.s32.totalorder %s11, 1
    %p50 = scmp.ne.s32.totalorder %s45, %s47
    %p51 = scmp.eq.s32.totalorder %s11, 0
    %p52 = por %p50, %p51
    %p53 = scmp.ne.s32.totalorder %s45, %s47
    %p54 = scmp.eq.s32.totalorder %s16, 1
    %p55 = por %p53, %p54
    %p56 = scmp.ne.s32.totalorder %s47, %s48
    %p57 = scmp.eq.s32.totalorder %s16, 0
    %p58 = por %p56, %p57
    %p59 = scmp.ne.s32.totalorder %s47, %s48
    %p60 = scmp.eq.s32.totalorder %s17, 1
    %p61 = por %p59, %p60
    %p63 = scmp.ne.s32.totalorder %s48, %s62
    %p64 = scmp.eq.s32.totalorder %s17, 0
    %p65 = por %p63, %p64
    %s67 = sadd.s32 %s66, 1
    %p70 = scmp.eq.s32.totalorder %s11, 1
    %p71 = scmp.ne.s32.totalorder %s66, %s68
    %p72 = scmp.eq.s32.totalorder %s11, 0
    %p73 = por %p71, %p72
    %p74 = scmp.ne.s32.totalorder %s66, %s68
    %p75 = scmp.eq.s32.totalorder %s16, 1
    %p76 = por %p74, %p75
    %p77 = scmp.ne.s32.totalorder %s68, %s69
    %p78 = scmp.eq.s32.totalorder %s16, 0
    %p79 = por %p77, %p78
    %p80 = scmp.ne.s32.totalorder %s68, %s69
    %p81 = scmp.eq.s32.totalorder %s17, 1
    %p82 = por %p80, %p81
    %p84 = scmp.ne.s32.totalorder %s69, %s83
    %p85 = scmp.eq.s32.totalorder %s17, 0
    %p86 = por %p84, %p85
    %s88 = sadd.s32 %s87, 1
    %p91 = scmp.eq.s32.totalorder %s11, 1
    %p92 = scmp.ne.s32.totalorder %s87, %s89
    %p93 = scmp.eq.s32.totalorder %s11, 0
    %p94 = por %p92, %p93
    %p95 = scmp.ne.s32.totalorder %s87, %s89
    %p96 = scmp.eq.s32.totalorder %s16, 1
    %p97 = por %p95, %p96
    %p98 = scmp.ne.s32.totalorder %s89, %s90
    %p99 = scmp.eq.s32.totalorder %s16, 0
    %p100 = por %p98, %p99
    %p101 = scmp.ne.s32.totalorder %s89, %s90
    %p102 = scmp.eq.s32.totalorder %s17, 1
    %p103 = por %p101, %p102
    %p105 = scmp.ne.s32.totalorder %s90, %s104
    %p106 = scmp.eq.s32.totalorder %s17, 0
    %p107 = por %p105, %p106
    %s109 = sadd.s32 %s108, 1
    %p112 = scmp.eq.s32.totalorder %s11, 1
    %p113 = scmp.ne.s32.totalorder %s108, %s110
    %p114 = scmp.eq.s32.totalorder %s11, 0
    %p115 = por %p113, %p114
    %p116 = scmp.ne.s32.totalorder %s108, %s110
    %p117 = scmp.eq.s32.totalorder %s16, 1
    %p118 = por %p116, %p117
    %p119 = scmp.ne.s32.totalorder %s110, %s111
    %p120 = scmp.eq.s32.totalorder %s16, 0
    %p121 = por %p119, %p120
    %p122 = scmp.ne.s32.totalorder %s110, %s111
    %p123 = scmp.eq.s32.totalorder %s17, 1
    %p124 = por %p122, %p123
    %p126 = scmp.ne.s32.totalorder %s111, %s125
    %p127 = scmp.eq.s32.totalorder %s17, 0
    %p128 = por %p126, %p127
    %s129 = ssub.s32 %s11, %s18
    %p130 = scmp.eq.s32.totalorder %s129, 0
    %s132 = sadd.s32 %s131, 1
    %s133 = scalar_select %p130, %s131, %s132
    %p136 = pneg %p130
    %p137 = scmp.eq.s32.totalorder %s11, 1
    %p138 = por %p136, %p137
    %p139 = scmp.ne.s32.totalorder %s131, %s134
    %p140 = scmp.eq.s32.totalorder %s11, 0
    %p141 = por %p139, %p140
    %p142 = scmp.ne.s32.totalorder %s131, %s134
    %p143 = scmp.eq.s32.totalorder %s16, 1
    %p144 = por %p142, %p143
    %p145 = scmp.ne.s32.totalorder %s134, %s135
    %p146 = scmp.eq.s32.totalorder %s16, 0
    %p147 = por %p145, %p146
    %p148 = scmp.ne.s32.totalorder %s134, %s135
    %p149 = scmp.eq.s32.totalorder %s17, 1
    %p150 = por %p148, %p149
    %p152 = scmp.ne.s32.totalorder %s135, %s151
    %p153 = scmp.eq.s32.totalorder %s17, 0
    %p154 = por %p152, %p153
    %p155 = scmp.le.s32.totalorder 1, %s11
    %p156 = scmp.lt.s32.totalorder %s11, 3
    %p157 = pnand %p155, %p156
    %p158 = pneg %p157
    // Predicated region
    $region9: #{unet1_forward.3} parent=5 // pred_check
      _
    $region10: #{unet1_forward.3} parent=5 // pred_check_branch
      %160 = sbr.rel (%p157) target = $region12
    $region11: #{unet1_forward.3} parent=5 // pred_region
      %s161 = ssub.s32 %s11, 1
      // Predicated region
      $region13: #{unet1_forward.3} parent=11 // pred_check
        %p162 = pneg %p58
      $region14: #{unet1_forward.3} parent=11 // pred_check_branch
        %164 = sbr.rel (%p162) target = $region16
      $region15: #{unet1_forward.3} parent=11 // pred_region
        _
      $region16: #{unet1_forward.3} parent=11 // pred_fallthru
        _
      // Predicated region
      $region17: #{unet1_forward.3} parent=11 // pred_check
        %p165 = pneg %p79
      $region18: #{unet1_forward.3} parent=11 // pred_check_branch
        %167 = sbr.rel (%p165) target = $region20
      $region19: #{unet1_forward.3} parent=11 // pred_region
        _
      $region20: #{unet1_forward.3} parent=11 // pred_fallthru
        _
      // Predicated region
      $region21: #{unet1_forward.3} parent=11 // pred_check
        %p168 = pneg %p100
      $region22: #{unet1_forward.3} parent=11 // pred_check_branch
        %170 = sbr.rel (%p168) target = $region24
      $region23: #{unet1_forward.3} parent=11 // pred_region
        _
      $region24: #{unet1_forward.3} parent=11 // pred_fallthru
        _
      // Predicated region
      $region25: #{unet1_forward.3} parent=11 // pred_check
        %p171 = pneg %p121
      $region26: #{unet1_forward.3} parent=11 // pred_check_branch
        %173 = sbr.rel (%p171) target = $region28
      $region27: #{unet1_forward.3} parent=11 // pred_region
        _
      $region28: #{unet1_forward.3} parent=11 // pred_fallthru
        _
    $region12: #{unet1_forward.3} parent=5 // pred_fallthru
      _
    %p174 = scmp.lt.s32.totalorder %s11, 2
    // Predicated region
    $region29: #{unet1_forward.3} parent=5 // pred_check
      %p175 = pneg %p174
    $region30: #{unet1_forward.3} parent=5 // pred_check_branch
      %177 = sbr.rel (%p175) target = $region32
    $region31: #{unet1_forward.3} parent=5 // pred_region
      // Predicated region
      $region33: #{unet1_forward.3} parent=31 // pred_check
        %p178 = pneg %p31
      $region34: #{unet1_forward.3} parent=31 // pred_check_branch
        %180 = sbr.rel (%p178) target = $region36
      $region35: #{unet1_forward.3} parent=31 // pred_region
        %p181 = scmp.lt.s32.totalorder %s11, 1
        %s182 = scalar_select %p181, %s11, 1
        %s183 = smul.addr %s182, 50
        %s184 = smul.addr %s183, 4
        %s185 = scalar_lea.vmem %s0, %s184
      $region36: #{unet1_forward.3} parent=31 // pred_fallthru
        _
    $region32: #{unet1_forward.3} parent=5 // pred_fallthru
      _
    %p186 = scmp.le.s32.totalorder 1, %s11
    %p187 = scmp.lt.s32.totalorder %s11, 3
    %p188 = pnand %p186, %p187
    %p189 = pneg %p188
    // Predicated region
    $region37: #{unet1_forward.3} parent=5 // pred_check
      _
    $region38: #{unet1_forward.3} parent=5 // pred_check_branch
      %191 = sbr.rel (%p188) target = $region40
    $region39: #{unet1_forward.3} parent=5 // pred_region
      %s192 = ssub.s32 %s11, 1
      %p193 = scmp.lt.s32.totalorder %s16, 1
      %s194 = scalar_select %p193, %s16, 1
      %s195 = smul.addr %s194, 50
      %s196 = smul.addr %s195, 4
      %s197 = scalar_lea.vmem %s0, %s196
      %p198 = pneg %p37
      %p199 = pneg %p34
      %p200 = pneg %p58
      %p201 = pneg %p55
      %p202 = pneg %p79
      %p203 = pneg %p76
      %p204 = pneg %p100
      %p205 = pneg %p97
      %p206 = pneg %p121
      %p207 = pneg %p118
      %p208 = pneg %p147
      %p209 = pneg %p144
      %p210 = scmp.lt.s32.totalorder %s16, 1
      %s211 = scalar_select %p210, %s16, 1
      %s212 = smul.addr %s211, 40
      %s213 = smul.addr %s212, 4
      %s214 = scalar_lea.vmem %s5, %s213
      %p215 = scmp.lt.s32.totalorder %s16, 1
      %s216 = scalar_select %p215, %s16, 1
      %s217 = smul.addr %s216, 50
      %s218 = smul.addr %s217, 4
      %s219 = scalar_lea.vmem %s0, %s218
      %p220 = scmp.lt.s32.totalorder %s16, 1
      %s221 = scalar_select %p220, %s16, 1
      %s222 = smul.addr %s221, 40
      %s223 = smul.addr %s222, 4
      %s224 = scalar_lea.vmem %s5, %s223
      %v226 = vld [vmem:[%s219] sm:$0xf]
      %v227 = vld [vmem:[%s219 + $0x4] sm:$0xf]
      %v228 = vld [vmem:[%s219 + $0x8] sm:$0xf]
      %v229 = vld [vmem:[%s219 + $0xc] sm:$0xf]
      %v230 = vld [vmem:[%s219 + $0x10] sm:$0xf]
      %v231 = vld [vmem:[%s219 + $0x14] sm:$0xf]
      %v232 = vld [vmem:[%s219 + $0x18] sm:$0xf]
      %v233 = vld [vmem:[%s219 + $0x1c] sm:$0xf]
      %v234 = vld [vmem:[%s219 + $0x20] sm:$0xf]
      %v235 = vld [vmem:[%s219 + $0x24] sm:$0xf]
      %v236 = vld [vmem:[%s219 + $0x28] sm:$0xf]
      %v237 = vld [vmem:[%s219 + $0x2c] sm:$0xf]
      %v238 = vld [vmem:[%s219 + $0x30] sm:$0xf]
      %v239 = vld [vmem:[%s219 + $0x34] sm:$0xf]
      %v240 = vld [vmem:[%s219 + $0x38] sm:$0xf]
      %v241 = vld [vmem:[%s219 + $0x3c] sm:$0xf]
      %v242 = vld [vmem:[%s219 + $0x40] sm:$0xf]
      %v243 = vld [vmem:[%s219 + $0x44] sm:$0xf]
      %v244 = vld [vmem:[%s219 + $0x48] sm:$0xf]
      %v245 = vld [vmem:[%s219 + $0x4c] sm:$0xf]
      %v246 = vld [vmem:[%s219 + $0x50] sm:$0xf]
      %v247 = vld [vmem:[%s219 + $0x54] sm:$0xf]
      %v248 = vld [vmem:[%s219 + $0x58] sm:$0xf]
      %v249 = vld [vmem:[%s219 + $0x5c] sm:$0xf]
      %v250 = vld [vmem:[%s219 + $0x60] sm:$0xf]
      %v251 = vld [vmem:[%s219 + $0x64] sm:$0xf]
      %v252 = vld [vmem:[%s219 + $0x68] sm:$0xf]
      %v253 = vld [vmem:[%s219 + $0x6c] sm:$0xf]
      %v254 = vld [vmem:[%s219 + $0x70] sm:$0xf]
      %v255 = vld [vmem:[%s219 + $0x74] sm:$0xf]
      %v256 = vld [vmem:[%s219 + $0x78] sm:$0xf]
      %v257 = vld [vmem:[%s219 + $0x7c] sm:$0xf]
      %v258 = vld [vmem:[%s219 + $0x80] sm:$0xf]
      %v259 = vld [vmem:[%s219 + $0x84] sm:$0xf]
      %v260 = vld [vmem:[%s219 + $0x88] sm:$0xf]
      %v261 = vld [vmem:[%s219 + $0x8c] sm:$0xf]
      %v262 = vld [vmem:[%s219 + $0x90] sm:$0xf]
      %v263 = vld [vmem:[%s219 + $0x94] sm:$0xf]
      %v264 = vld [vmem:[%s219 + $0x98] sm:$0xf]
      %v265 = vld [vmem:[%s219 + $0x9c] sm:$0xf]
      %v266 = vld [vmem:[%s219 + $0xa0] sm:$0xf]
      %v267 = vld [vmem:[%s219 + $0xa4] sm:$0xf]
      %v268 = vld [vmem:[%s219 + $0xa8] sm:$0xf]
      %v269 = vld [vmem:[%s219 + $0xac] sm:$0xf]
      %v270 = vld [vmem:[%s219 + $0xb0] sm:$0xf]
      %v271 = vld [vmem:[%s219 + $0xb4] sm:$0xf]
      %v272 = vld [vmem:[%s219 + $0xb8] sm:$0xf]
      %v273 = vld [vmem:[%s219 + $0xbc] sm:$0xf]
      %v274 = vld [vmem:[%s219 + $0xc0] sm:$0xf]
      %v275 = vld [vmem:[%s219 + $0xc4] sm:$0xf]
      %v276 = vld [vmem:[%s1] sm:$0xf]
      %v277 = vld [vmem:[%s1 + $0x4] sm:$0xf]
      %v278 = vld [vmem:[%s1 + $0x8] sm:$0xf]
      %v279 = vld [vmem:[%s1 + $0xc] sm:$0x3]
      %v280 = vld [vmem:[%s2] sm:$0x1]
      %v326 = vunpack.c.l.b16 %v226
      %v327 = vunpack.c.l.b16 %v227
      %v328 = vunpack.c.l.b16 %v228
      %v329 = vunpack.c.l.b16 %v229
      %v330 = vunpack.c.l.b16 %v230
      %v331 = vunpack.c.l.b16 %v231
      %v332 = vunpack.c.l.b16 %v232
      %v333 = vunpack.c.l.b16 %v233
      %v334 = vunpack.c.l.b16 %v234
      %v335 = vunpack.c.l.b16 %v235
      %v336 = vunpack.c.l.b16 %v236
      %v337 = vunpack.c.l.b16 %v237
      %v338 = vunpack.c.l.b16 %v238
      %v339 = vunpack.c.l.b16 %v239
      %v340 = vunpack.c.l.b16 %v240
      %v341 = vunpack.c.l.b16 %v241
      %v342 = vunpack.c.l.b16 %v242
      %v343 = vunpack.c.l.b16 %v243
      %v344 = vunpack.c.l.b16 %v244
      %v345 = vunpack.c.l.b16 %v245
      %v346 = vunpack.c.l.b16 %v246
      %v347 = vunpack.c.l.b16 %v247
      %v348 = vunpack.c.l.b16 %v248
      %v349 = vunpack.c.l.b16 %v249
      %v350 = vunpack.c.l.b16 %v250
      %v351 = vunpack.c.l.b16 %v251
      %v352 = vunpack.c.l.b16 %v252
      %v353 = vunpack.c.l.b16 %v253
      %v354 = vunpack.c.l.b16 %v254
      %v355 = vunpack.c.l.b16 %v255
      %v356 = vunpack.c.l.b16 %v256
      %v357 = vunpack.c.l.b16 %v257
      %v358 = vunpack.c.l.b16 %v258
      %v359 = vunpack.c.l.b16 %v259
      %v360 = vunpack.c.l.b16 %v260
      %v361 = vunpack.c.l.b16 %v261
      %v362 = vunpack.c.l.b16 %v262
      %v363 = vunpack.c.l.b16 %v263
      %v364 = vunpack.c.l.b16 %v264
      %v365 = vunpack.c.l.b16 %v265
      %v366 = vunpack.c.l.b16 %v266
      %v367 = vunpack.c.l.b16 %v267
      %v368 = vunpack.c.l.b16 %v268
      %v369 = vunpack.c.l.b16 %v269
      %v370 = vunpack.c.l.b16 %v270
      %v371 = vpack.c.b16 %v327, %v326
      %v372 = vpack.c.b16 %v329, %v328
      %v373 = vpack.c.b16 %v331, %v330
      %v374 = vpack.c.b16 %v333, %v332
      %v375 = vpack.c.b16 %v335, %v334
      %v376 = vpack.c.b16 %v337, %v336
      %v377 = vpack.c.b16 %v339, %v338
      %v378 = vpack.c.b16 %v341, %v340
      %v379 = vpack.c.b16 %v343, %v342
      %v380 = vpack.c.b16 %v345, %v344
      %v381 = vpack.c.b16 %v347, %v346
      %v382 = vpack.c.b16 %v349, %v348
      %v383 = vpack.c.b16 %v351, %v350
      %v384 = vpack.c.b16 %v353, %v352
      %v385 = vpack.c.b16 %v355, %v354
      %v386 = vpack.c.b16 %v357, %v356
      %v387 = vpack.c.b16 %v359, %v358
      %v388 = vpack.c.b16 %v361, %v360
      %v389 = vpack.c.b16 %v363, %v362
      %v390 = vpack.c.b16 %v365, %v364
      %v391 = vpack.c.b16 %v367, %v366
      %v392 = vpack.c.b16 %v369, %v368
      %v393 = vpack.c.b16 %v370, %v370
      %vm394 = vsmask.f32 7424
      %v396 = vshrl.u32 %v371, 16
      %v398 = vshll.u32 %v371, 16
      %v400 = vrot.slane %v398, 1
      %v401 = vor.u32 %v396, %v400
      %v403 = vshll.u32 %v372, 16
      %v405 = vrot.slane %v403, 1
      %v406 = vsel %vm394, %v401, %v405
      %v407 = vshrl.u32 %v372, 16
      %v409 = vor.u32 %v407, %v405
      %v411 = vshll.u32 %v373, 16
      %v413 = vrot.slane %v411, 1
      %v414 = vsel %vm394, %v409, %v413
      %v415 = vshrl.u32 %v373, 16
      %v417 = vor.u32 %v415, %v413
      %v419 = vshll.u32 %v374, 16
      %v421 = vrot.slane %v419, 1
      %v422 = vsel %vm394, %v417, %v421
      %v423 = vshrl.u32 %v374, 16
      %v425 = vor.u32 %v423, %v421
      %v427 = vshll.u32 %v375, 16
      %v429 = vrot.slane %v427, 1
      %v430 = vsel %vm394, %v425, %v429
      %v431 = vshrl.u32 %v375, 16
      %v433 = vor.u32 %v431, %v429
      %v435 = vshll.u32 %v376, 16
      %v437 = vrot.slane %v435, 1
      %v438 = vsel %vm394, %v433, %v437
      %v439 = vshrl.u32 %v376, 16
      %v441 = vor.u32 %v439, %v437
      %v443 = vshll.u32 %v377, 16
      %v445 = vrot.slane %v443, 1
      %v446 = vsel %vm394, %v441, %v445
      %v447 = vshrl.u32 %v377, 16
      %v449 = vor.u32 %v447, %v445
      %v451 = vshll.u32 %v378, 16
      %v453 = vrot.slane %v451, 1
      %v454 = vsel %vm394, %v449, %v453
      %v455 = vshrl.u32 %v378, 16
      %v457 = vor.u32 %v455, %v453
      %v459 = vshll.u32 %v379, 16
      %v461 = vrot.slane %v459, 1
      %v462 = vsel %vm394, %v457, %v461
      %v463 = vshrl.u32 %v379, 16
      %v465 = vor.u32 %v463, %v461
      %v467 = vshll.u32 %v380, 16
      %v469 = vrot.slane %v467, 1
      %v470 = vsel %vm394, %v465, %v469
      %v471 = vshrl.u32 %v380, 16
      %v473 = vor.u32 %v471, %v469
      %v475 = vshll.u32 %v381, 16
      %v477 = vrot.slane %v475, 1
      %v478 = vsel %vm394, %v473, %v477
      %v479 = vshrl.u32 %v381, 16
      %v481 = vor.u32 %v479, %v477
      %v483 = vshll.u32 %v382, 16
      %v485 = vrot.slane %v483, 1
      %v486 = vsel %vm394, %v481, %v485
      %v487 = vshrl.u32 %v382, 16
      %v489 = vor.u32 %v487, %v485
      %v491 = vshll.u32 %v383, 16
      %v493 = vrot.slane %v491, 1
      %v494 = vsel %vm394, %v489, %v493
      %v495 = vshrl.u32 %v383, 16
      %v497 = vor.u32 %v495, %v493
      %v499 = vshll.u32 %v384, 16
      %v501 = vrot.slane %v499, 1
      %v502 = vsel %vm394, %v497, %v501
      %v503 = vshrl.u32 %v384, 16
      %v505 = vor.u32 %v503, %v501
      %v507 = vshll.u32 %v385, 16
      %v509 = vrot.slane %v507, 1
      %v510 = vsel %vm394, %v505, %v509
      %v511 = vshrl.u32 %v385, 16
      %v513 = vor.u32 %v511, %v509
      %v515 = vshll.u32 %v386, 16
      %v517 = vrot.slane %v515, 1
      %v518 = vsel %vm394, %v513, %v517
      %v519 = vshrl.u32 %v386, 16
      %v521 = vor.u32 %v519, %v517
      %v523 = vshll.u32 %v387, 16
      %v525 = vrot.slane %v523, 1
      %v526 = vsel %vm394, %v521, %v525
      %v527 = vshrl.u32 %v387, 16
      %v529 = vor.u32 %v527, %v525
      %v531 = vshll.u32 %v388, 16
      %v533 = vrot.slane %v531, 1
      %v534 = vsel %vm394, %v529, %v533
      %v535 = vshrl.u32 %v388, 16
      %v537 = vor.u32 %v535, %v533
      %v539 = vshll.u32 %v389, 16
      %v541 = vrot.slane %v539, 1
      %v542 = vsel %vm394, %v537, %v541
      %v543 = vshrl.u32 %v389, 16
      %v545 = vor.u32 %v543, %v541
      %v547 = vshll.u32 %v390, 16
      %v549 = vrot.slane %v547, 1
      %v550 = vsel %vm394, %v545, %v549
      %v551 = vshrl.u32 %v390, 16
      %v553 = vor.u32 %v551, %v549
      %v555 = vshll.u32 %v391, 16
      %v557 = vrot.slane %v555, 1
      %v558 = vsel %vm394, %v553, %v557
      %v559 = vshrl.u32 %v391, 16
      %v561 = vor.u32 %v559, %v557
      %v563 = vshll.u32 %v392, 16
      %v565 = vrot.slane %v563, 1
      %v566 = vsel %vm394, %v561, %v565
      %v567 = vshrl.u32 %v392, 16
      %v569 = vor.u32 %v567, %v565
      %v571 = vshll.u32 %v393, 16
      %v573 = vrot.slane %v571, 1
      %v574 = vsel %vm394, %v569, %v573
      %v575 = vshrl.u32 %v393, 16
      %v577 = vor.u32 %v575, %v573
      %578 = vrot.lane.b32.xlu0 %v406, 3
      %v579 = vpop.permute.xlu0 %578
      %580 = vrot.lane.b32.xlu0 %v414, 3
      %v581 = vpop.permute.xlu0 %580
      %582 = vrot.lane.b32.xlu0 %v422, 3
      %v583 = vpop.permute.xlu0 %582
      %584 = vrot.lane.b32.xlu0 %v430, 3
      %v585 = vpop.permute.xlu0 %584
      %586 = vrot.lane.b32.xlu0 %v438, 3
      %v587 = vpop.permute.xlu0 %586
      %588 = vrot.lane.b32.xlu0 %v446, 3
      %v589 = vpop.permute.xlu0 %588
      %590 = vrot.lane.b32.xlu0 %v454, 3
      %v591 = vpop.permute.xlu0 %590
      %592 = vrot.lane.b32.xlu0 %v462, 3
      %v593 = vpop.permute.xlu0 %592
      %594 = vrot.lane.b32.xlu0 %v470, 3
      %v595 = vpop.permute.xlu0 %594
      %596 = vrot.lane.b32.xlu0 %v478, 3
      %v597 = vpop.permute.xlu0 %596
      %598 = vrot.lane.b32.xlu0 %v486, 3
      %v599 = vpop.permute.xlu0 %598
      %600 = vrot.lane.b32.xlu0 %v494, 3
      %v601 = vpop.permute.xlu0 %600
      %602 = vrot.lane.b32.xlu0 %v502, 3
      %v603 = vpop.permute.xlu0 %602
      %604 = vrot.lane.b32.xlu0 %v510, 3
      %v605 = vpop.permute.xlu0 %604
      %606 = vrot.lane.b32.xlu0 %v518, 3
      %v607 = vpop.permute.xlu0 %606
      %608 = vrot.lane.b32.xlu0 %v526, 3
      %v609 = vpop.permute.xlu0 %608
      %610 = vrot.lane.b32.xlu0 %v534, 3
      %v611 = vpop.permute.xlu0 %610
      %612 = vrot.lane.b32.xlu0 %v542, 3
      %v613 = vpop.permute.xlu0 %612
      %614 = vrot.lane.b32.xlu0 %v550, 3
      %v615 = vpop.permute.xlu0 %614
      %616 = vrot.lane.b32.xlu0 %v558, 3
      %v617 = vpop.permute.xlu0 %616
      %618 = vrot.lane.b32.xlu0 %v566, 3
      %v619 = vpop.permute.xlu0 %618
      %620 = vrot.lane.b32.xlu0 %v574, 3
      %v621 = vpop.permute.xlu0 %620
      %622 = vrot.lane.b32.xlu0 %v577, 3
      %v623 = vpop.permute.xlu0 %622
      %vm624 = vcmask 1046528
      %v625 = vrot.slane %v371, 1
      %v626 = vrot.slane %v372, 1
      %v627 = vsel %vm624, %v625, %v626
      %v628 = vrot.slane %v373, 1
      %v629 = vsel %vm624, %v626, %v628
      %v630 = vrot.slane %v374, 1
      %v631 = vsel %vm624, %v628, %v630
      %v632 = vrot.slane %v375, 1
      %v633 = vsel %vm624, %v630, %v632
      %v634 = vrot.slane %v376, 1
      %v635 = vsel %vm624, %v632, %v634
      %v636 = vrot.slane %v377, 1
      %v637 = vsel %vm624, %v634, %v636
      %v638 = vrot.slane %v378, 1
      %v639 = vsel %vm624, %v636, %v638
      %v640 = vrot.slane %v379, 1
      %v641 = vsel %vm624, %v638, %v640
      %v642 = vrot.slane %v380, 1
      %v643 = vsel %vm624, %v640, %v642
      %v644 = vrot.slane %v381, 1
      %v645 = vsel %vm624, %v642, %v644
      %v646 = vrot.slane %v382, 1
      %v647 = vsel %vm624, %v644, %v646
      %v648 = vrot.slane %v383, 1
      %v649 = vsel %vm624, %v646, %v648
      %v650 = vrot.slane %v384, 1
      %v651 = vsel %vm624, %v648, %v650
      %v652 = vrot.slane %v385, 1
      %v653 = vsel %vm624, %v650, %v652
      %v654 = vrot.slane %v386, 1
      %v655 = vsel %vm624, %v652, %v654
      %v656 = vrot.slane %v387, 1
      %v657 = vsel %vm624, %v654, %v656
      %v658 = vrot.slane %v388, 1
      %v659 = vsel %vm624, %v656, %v658
      %v660 = vrot.slane %v389, 1
      %v661 = vsel %vm624, %v658, %v660
      %v662 = vrot.slane %v390, 1
      %v663 = vsel %vm624, %v660, %v662
      %v664 = vrot.slane %v391, 1
      %v665 = vsel %vm624, %v662, %v664
      %v666 = vrot.slane %v392, 1
      %v667 = vsel %vm624, %v664, %v666
      %v668 = vrot.slane %v393, 1
      %v669 = vsel %vm624, %v666, %v668
      %670 = vrot.lane.b32.xlu0 %v627, 6
      %v671 = vpop.permute.xlu0 %670
      %672 = vrot.lane.b32.xlu0 %v629, 6
      %v673 = vpop.permute.xlu0 %672
      %674 = vrot.lane.b32.xlu0 %v631, 6
      %v675 = vpop.permute.xlu0 %674
      %676 = vrot.lane.b32.xlu0 %v633, 6
      %v677 = vpop.permute.xlu0 %676
      %678 = vrot.lane.b32.xlu0 %v635, 6
      %v679 = vpop.permute.xlu0 %678
      %680 = vrot.lane.b32.xlu0 %v637, 6
      %v681 = vpop.permute.xlu0 %680
      %682 = vrot.lane.b32.xlu0 %v639, 6
      %v683 = vpop.permute.xlu0 %682
      %684 = vrot.lane.b32.xlu0 %v641, 6
      %v685 = vpop.permute.xlu0 %684
      %686 = vrot.lane.b32.xlu0 %v643, 6
      %v687 = vpop.permute.xlu0 %686
      %688 = vrot.lane.b32.xlu0 %v645, 6
      %v689 = vpop.permute.xlu0 %688
      %690 = vrot.lane.b32.xlu0 %v647, 6
      %v691 = vpop.permute.xlu0 %690
      %692 = vrot.lane.b32.xlu0 %v649, 6
      %v693 = vpop.permute.xlu0 %692
      %694 = vrot.lane.b32.xlu0 %v651, 6
      %v695 = vpop.permute.xlu0 %694
      %696 = vrot.lane.b32.xlu0 %v653, 6
      %v697 = vpop.permute.xlu0 %696
      %698 = vrot.lane.b32.xlu0 %v655, 6
      %v699 = vpop.permute.xlu0 %698
      %700 = vrot.lane.b32.xlu0 %v657, 6
      %v701 = vpop.permute.xlu0 %700
      %702 = vrot.lane.b32.xlu0 %v659, 6
      %v703 = vpop.permute.xlu0 %702
      %704 = vrot.lane.b32.xlu0 %v661, 6
      %v705 = vpop.permute.xlu0 %704
      %706 = vrot.lane.b32.xlu0 %v663, 6
      %v707 = vpop.permute.xlu0 %706
      %708 = vrot.lane.b32.xlu0 %v665, 6
      %v709 = vpop.permute.xlu0 %708
      %710 = vrot.lane.b32.xlu0 %v667, 6
      %v711 = vpop.permute.xlu0 %710
      %712 = vrot.lane.b32.xlu0 %v669, 6
      %v713 = vpop.permute.xlu0 %712
      %714 = vrot.lane.b32.xlu0 %v668, 6
      %v715 = vpop.permute.xlu0 %714
      %v719 = vunpack.c.l.b16 %v271
      %v720 = vunpack.c.l.b16 %v272
      %v721 = vunpack.c.l.b16 %v273
      %v722 = vpack.c.b16 %v719, %v370
      %v723 = vpack.c.b16 %v721, %v720
      %vm724 = vcmask 1045504
      %v725 = vrot.slane %v372, 2
      %v726 = vrot.slane %v373, 2
      %v727 = vsel %vm724, %v725, %v726
      %v728 = vrot.slane %v374, 2
      %v729 = vsel %vm724, %v726, %v728
      %v730 = vrot.slane %v375, 2
      %v731 = vsel %vm724, %v728, %v730
      %v732 = vrot.slane %v376, 2
      %v733 = vsel %vm724, %v730, %v732
      %v734 = vrot.slane %v377, 2
      %v735 = vsel %vm724, %v732, %v734
      %v736 = vrot.slane %v378, 2
      %v737 = vsel %vm724, %v734, %v736
      %v738 = vrot.slane %v379, 2
      %v739 = vsel %vm724, %v736, %v738
      %v740 = vrot.slane %v380, 2
      %v741 = vsel %vm724, %v738, %v740
      %v742 = vrot.slane %v381, 2
      %v743 = vsel %vm724, %v740, %v742
      %v744 = vrot.slane %v382, 2
      %v745 = vsel %vm724, %v742, %v744
      %v746 = vrot.slane %v383, 2
      %v747 = vsel %vm724, %v744, %v746
      %v748 = vrot.slane %v384, 2
      %v749 = vsel %vm724, %v746, %v748
      %v750 = vrot.slane %v385, 2
      %v751 = vsel %vm724, %v748, %v750
      %v752 = vrot.slane %v386, 2
      %v753 = vsel %vm724, %v750, %v752
      %v754 = vrot.slane %v387, 2
      %v755 = vsel %vm724, %v752, %v754
      %v756 = vrot.slane %v388, 2
      %v757 = vsel %vm724, %v754, %v756
      %v758 = vrot.slane %v389, 2
      %v759 = vsel %vm724, %v756, %v758
      %v760 = vrot.slane %v390, 2
      %v761 = vsel %vm724, %v758, %v760
      %v762 = vrot.slane %v391, 2
      %v763 = vsel %vm724, %v760, %v762
      %v764 = vrot.slane %v392, 2
      %v765 = vsel %vm724, %v762, %v764
      %v766 = vrot.slane %v722, 2
      %v767 = vsel %vm724, %v764, %v766
      %v768 = vrot.slane %v723, 2
      %v769 = vsel %vm724, %v766, %v768
      %770 = vrot.lane.b32.xlu0 %v727, 9
      %v771 = vpop.permute.xlu0 %770
      %772 = vrot.lane.b32.xlu0 %v729, 9
      %v773 = vpop.permute.xlu0 %772
      %774 = vrot.lane.b32.xlu0 %v731, 9
      %v775 = vpop.permute.xlu0 %774
      %776 = vrot.lane.b32.xlu0 %v733, 9
      %v777 = vpop.permute.xlu0 %776
      %778 = vrot.lane.b32.xlu0 %v735, 9
      %v779 = vpop.permute.xlu0 %778
      %780 = vrot.lane.b32.xlu0 %v737, 9
      %v781 = vpop.permute.xlu0 %780
      %782 = vrot.lane.b32.xlu0 %v739, 9
      %v783 = vpop.permute.xlu0 %782
      %784 = vrot.lane.b32.xlu0 %v741, 9
      %v785 = vpop.permute.xlu0 %784
      %786 = vrot.lane.b32.xlu0 %v743, 9
      %v787 = vpop.permute.xlu0 %786
      %788 = vrot.lane.b32.xlu0 %v745, 9
      %v789 = vpop.permute.xlu0 %788
      %790 = vrot.lane.b32.xlu0 %v747, 9
      %v791 = vpop.permute.xlu0 %790
      %792 = vrot.lane.b32.xlu0 %v749, 9
      %v793 = vpop.permute.xlu0 %792
      %794 = vrot.lane.b32.xlu0 %v751, 9
      %v795 = vpop.permute.xlu0 %794
      %796 = vrot.lane.b32.xlu0 %v753, 9
      %v797 = vpop.permute.xlu0 %796
      %798 = vrot.lane.b32.xlu0 %v755, 9
      %v799 = vpop.permute.xlu0 %798
      %800 = vrot.lane.b32.xlu0 %v757, 9
      %v801 = vpop.permute.xlu0 %800
      %802 = vrot.lane.b32.xlu0 %v759, 9
      %v803 = vpop.permute.xlu0 %802
      %804 = vrot.lane.b32.xlu0 %v761, 9
      %v805 = vpop.permute.xlu0 %804
      %806 = vrot.lane.b32.xlu0 %v763, 9
      %v807 = vpop.permute.xlu0 %806
      %808 = vrot.lane.b32.xlu0 %v765, 9
      %v809 = vpop.permute.xlu0 %808
      %810 = vrot.lane.b32.xlu0 %v767, 9
      %v811 = vpop.permute.xlu0 %810
      %812 = vrot.lane.b32.xlu0 %v769, 9
      %v813 = vpop.permute.xlu0 %812
      %814 = vrot.lane.b32.xlu0 %v768, 9
      %v815 = vpop.permute.xlu0 %814
      %vm816 = vsmask.f32 5376
      %v817 = vrot.slane %v407, 2
      %v818 = vrot.slane %v403, 3
      %v819 = vor.u32 %v817, %v818
      %v820 = vrot.slane %v415, 2
      %v821 = vrot.slane %v411, 3
      %v822 = vor.u32 %v820, %v821
      %v823 = vsel %vm816, %v819, %v822
      %v824 = vrot.slane %v423, 2
      %v825 = vrot.slane %v419, 3
      %v826 = vor.u32 %v824, %v825
      %v827 = vsel %vm816, %v822, %v826
      %v828 = vrot.slane %v431, 2
      %v829 = vrot.slane %v427, 3
      %v830 = vor.u32 %v828, %v829
      %v831 = vsel %vm816, %v826, %v830
      %v832 = vrot.slane %v439, 2
      %v833 = vrot.slane %v435, 3
      %v834 = vor.u32 %v832, %v833
      %v835 = vsel %vm816, %v830, %v834
      %v836 = vrot.slane %v447, 2
      %v837 = vrot.slane %v443, 3
      %v838 = vor.u32 %v836, %v837
      %v839 = vsel %vm816, %v834, %v838
      %v840 = vrot.slane %v455, 2
      %v841 = vrot.slane %v451, 3
      %v842 = vor.u32 %v840, %v841
      %v843 = vsel %vm816, %v838, %v842
      %v844 = vrot.slane %v463, 2
      %v845 = vrot.slane %v459, 3
      %v846 = vor.u32 %v844, %v845
      %v847 = vsel %vm816, %v842, %v846
      %v848 = vrot.slane %v471, 2
      %v849 = vrot.slane %v467, 3
      %v850 = vor.u32 %v848, %v849
      %v851 = vsel %vm816, %v846, %v850
      %v852 = vrot.slane %v479, 2
      %v853 = vrot.slane %v475, 3
      %v854 = vor.u32 %v852, %v853
      %v855 = vsel %vm816, %v850, %v854
      %v856 = vrot.slane %v487, 2
      %v857 = vrot.slane %v483, 3
      %v858 = vor.u32 %v856, %v857
      %v859 = vsel %vm816, %v854, %v858
      %v860 = vrot.slane %v495, 2
      %v861 = vrot.slane %v491, 3
      %v862 = vor.u32 %v860, %v861
      %v863 = vsel %vm816, %v858, %v862
      %v864 = vrot.slane %v503, 2
      %v865 = vrot.slane %v499, 3
      %v866 = vor.u32 %v864, %v865
      %v867 = vsel %vm816, %v862, %v866
      %v868 = vrot.slane %v511, 2
      %v869 = vrot.slane %v507, 3
      %v870 = vor.u32 %v868, %v869
      %v871 = vsel %vm816, %v866, %v870
      %v872 = vrot.slane %v519, 2
      %v873 = vrot.slane %v515, 3
      %v874 = vor.u32 %v872, %v873
      %v875 = vsel %vm816, %v870, %v874
      %v876 = vrot.slane %v527, 2
      %v877 = vrot.slane %v523, 3
      %v878 = vor.u32 %v876, %v877
      %v879 = vsel %vm816, %v874, %v878
      %v880 = vrot.slane %v535, 2
      %v881 = vrot.slane %v531, 3
      %v882 = vor.u32 %v880, %v881
      %v883 = vsel %vm816, %v878, %v882
      %v884 = vrot.slane %v543, 2
      %v885 = vrot.slane %v539, 3
      %v886 = vor.u32 %v884, %v885
      %v887 = vsel %vm816, %v882, %v886
      %v888 = vrot.slane %v551, 2
      %v889 = vrot.slane %v547, 3
      %v890 = vor.u32 %v888, %v889
      %v891 = vsel %vm816, %v886, %v890
      %v892 = vrot.slane %v559, 2
      %v893 = vrot.slane %v555, 3
      %v894 = vor.u32 %v892, %v893
      %v895 = vsel %vm816, %v890, %v894
      %v896 = vrot.slane %v567, 2
      %v897 = vrot.slane %v563, 3
      %v898 = vor.u32 %v896, %v897
      %v899 = vsel %vm816, %v894, %v898
      %v901 = vshrl.u32 %v722, 16
      %v903 = vrot.slane %v901, 2
      %v904 = vshll.u32 %v722, 16
      %v906 = vrot.slane %v904, 3
      %v907 = vor.u32 %v903, %v906
      %v908 = vsel %vm816, %v898, %v907
      %v910 = vshrl.u32 %v723, 16
      %v912 = vrot.slane %v910, 2
      %v913 = vshll.u32 %v723, 16
      %v915 = vrot.slane %v913, 3
      %v916 = vor.u32 %v912, %v915
      %v917 = vsel %vm816, %v907, %v916
      %918 = vrot.lane.b32.xlu0 %v823, 12
      %v919 = vpop.permute.xlu0 %918
      %920 = vrot.lane.b32.xlu0 %v827, 12
      %v921 = vpop.permute.xlu0 %920
      %922 = vrot.lane.b32.xlu0 %v831, 12
      %v923 = vpop.permute.xlu0 %922
      %924 = vrot.lane.b32.xlu0 %v835, 12
      %v925 = vpop.permute.xlu0 %924
      %926 = vrot.lane.b32.xlu0 %v839, 12
      %v927 = vpop.permute.xlu0 %926
      %928 = vrot.lane.b32.xlu0 %v843, 12
      %v929 = vpop.permute.xlu0 %928
      %930 = vrot.lane.b32.xlu0 %v847, 12
      %v931 = vpop.permute.xlu0 %930
      %932 = vrot.lane.b32.xlu0 %v851, 12
      %v933 = vpop.permute.xlu0 %932
      %934 = vrot.lane.b32.xlu0 %v855, 12
      %v935 = vpop.permute.xlu0 %934
      %936 = vrot.lane.b32.xlu0 %v859, 12
      %v937 = vpop.permute.xlu0 %936
      %938 = vrot.lane.b32.xlu0 %v863, 12
      %v939 = vpop.permute.xlu0 %938
      %940 = vrot.lane.b32.xlu0 %v867, 12
      %v941 = vpop.permute.xlu0 %940
      %942 = vrot.lane.b32.xlu0 %v871, 12
      %v943 = vpop.permute.xlu0 %942
      %944 = vrot.lane.b32.xlu0 %v875, 12
      %v945 = vpop.permute.xlu0 %944
      %946 = vrot.lane.b32.xlu0 %v879, 12
      %v947 = vpop.permute.xlu0 %946
      %948 = vrot.lane.b32.xlu0 %v883, 12
      %v949 = vpop.permute.xlu0 %948
      %950 = vrot.lane.b32.xlu0 %v887, 12
      %v951 = vpop.permute.xlu0 %950
      %952 = vrot.lane.b32.xlu0 %v891, 12
      %v953 = vpop.permute.xlu0 %952
      %954 = vrot.lane.b32.xlu0 %v895, 12
      %v955 = vpop.permute.xlu0 %954
      %956 = vrot.lane.b32.xlu0 %v899, 12
      %v957 = vpop.permute.xlu0 %956
      %958 = vrot.lane.b32.xlu0 %v908, 12
      %v959 = vpop.permute.xlu0 %958
      %960 = vrot.lane.b32.xlu0 %v917, 12
      %v961 = vpop.permute.xlu0 %960
      %962 = vrot.lane.b32.xlu0 %v916, 12
      %v963 = vpop.permute.xlu0 %962
      %vm964 = vcmask 1044480
      %v965 = vrot.slane %v372, 3
      %v966 = vrot.slane %v373, 3
      %v967 = vsel %vm964, %v965, %v966
      %v968 = vrot.slane %v374, 3
      %v969 = vsel %vm964, %v966, %v968
      %v970 = vrot.slane %v375, 3
      %v971 = vsel %vm964, %v968, %v970
      %v972 = vrot.slane %v376, 3
      %v973 = vsel %vm964, %v970, %v972
      %v974 = vrot.slane %v377, 3
      %v975 = vsel %vm964, %v972, %v974
      %v976 = vrot.slane %v378, 3
      %v977 = vsel %vm964, %v974, %v976
      %v978 = vrot.slane %v379, 3
      %v979 = vsel %vm964, %v976, %v978
      %v980 = vrot.slane %v380, 3
      %v981 = vsel %vm964, %v978, %v980
      %v982 = vrot.slane %v381, 3
      %v983 = vsel %vm964, %v980, %v982
      %v984 = vrot.slane %v382, 3
      %v985 = vsel %vm964, %v982, %v984
      %v986 = vrot.slane %v383, 3
      %v987 = vsel %vm964, %v984, %v986
      %v988 = vrot.slane %v384, 3
      %v989 = vsel %vm964, %v986, %v988
      %v990 = vrot.slane %v385, 3
      %v991 = vsel %vm964, %v988, %v990
      %v992 = vrot.slane %v386, 3
      %v993 = vsel %vm964, %v990, %v992
      %v994 = vrot.slane %v387, 3
      %v995 = vsel %vm964, %v992, %v994
      %v996 = vrot.slane %v388, 3
      %v997 = vsel %vm964, %v994, %v996
      %v998 = vrot.slane %v389, 3
      %v999 = vsel %vm964, %v996, %v998
      %v1000 = vrot.slane %v390, 3
      %v1001 = vsel %vm964, %v998, %v1000
      %v1002 = vrot.slane %v391, 3
      %v1003 = vsel %vm964, %v1000, %v1002
      %v1004 = vrot.slane %v392, 3
      %v1005 = vsel %vm964, %v1002, %v1004
      %v1006 = vrot.slane %v722, 3
      %v1007 = vsel %vm964, %v1004, %v1006
      %v1008 = vrot.slane %v723, 3
      %v1009 = vsel %vm964, %v1006, %v1008
      %1010 = vrot.lane.b32.xlu0 %v967, 15
      %v1011 = vpop.permute.xlu0 %1010
      %1012 = vrot.lane.b32.xlu0 %v969, 15
      %v1013 = vpop.permute.xlu0 %1012
      %1014 = vrot.lane.b32.xlu0 %v971, 15
      %v1015 = vpop.permute.xlu0 %1014
      %1016 = vrot.lane.b32.xlu0 %v973, 15
      %v1017 = vpop.permute.xlu0 %1016
      %1018 = vrot.lane.b32.xlu0 %v975, 15
      %v1019 = vpop.permute.xlu0 %1018
      %1020 = vrot.lane.b32.xlu0 %v977, 15
      %v1021 = vpop.permute.xlu0 %1020
      %1022 = vrot.lane.b32.xlu0 %v979, 15
      %v1023 = vpop.permute.xlu0 %1022
      %1024 = vrot.lane.b32.xlu0 %v981, 15
      %v1025 = vpop.permute.xlu0 %1024
      %1026 = vrot.lane.b32.xlu0 %v983, 15
      %v1027 = vpop.permute.xlu0 %1026
      %1028 = vrot.lane.b32.xlu0 %v985, 15
      %v1029 = vpop.permute.xlu0 %1028
      %1030 = vrot.lane.b32.xlu0 %v987, 15
      %v1031 = vpop.permute.xlu0 %1030
      %1032 = vrot.lane.b32.xlu0 %v989, 15
      %v1033 = vpop.permute.xlu0 %1032
      %1034 = vrot.lane.b32.xlu0 %v991, 15
      %v1035 = vpop.permute.xlu0 %1034
      %1036 = vrot.lane.b32.xlu0 %v993, 15
      %v1037 = vpop.permute.xlu0 %1036
      %1038 = vrot.lane.b32.xlu0 %v995, 15
      %v1039 = vpop.permute.xlu0 %1038
      %1040 = vrot.lane.b32.xlu0 %v997, 15
      %v1041 = vpop.permute.xlu0 %1040
      %1042 = vrot.lane.b32.xlu0 %v999, 15
      %v1043 = vpop.permute.xlu0 %1042
      %1044 = vrot.lane.b32.xlu0 %v1001, 15
      %v1045 = vpop.permute.xlu0 %1044
      %1046 = vrot.lane.b32.xlu0 %v1003, 15
      %v1047 = vpop.permute.xlu0 %1046
      %1048 = vrot.lane.b32.xlu0 %v1005, 15
      %v1049 = vpop.permute.xlu0 %1048
      %1050 = vrot.lane.b32.xlu0 %v1007, 15
      %v1051 = vpop.permute.xlu0 %1050
      %1052 = vrot.lane.b32.xlu0 %v1009, 15
      %v1053 = vpop.permute.xlu0 %1052
      %1054 = vrot.lane.b32.xlu0 %v1008, 15
      %v1055 = vpop.permute.xlu0 %1054
      %v1058 = vunpack.c.l.b16 %v274
      %v1059 = vunpack.c.l.b16 %v275
      %v1060 = vpack.c.b16 %v332, %v331
      %v1061 = vpack.c.b16 %v334, %v333
      %v1062 = vpack.c.b16 %v336, %v335
      %v1063 = vpack.c.b16 %v338, %v337
      %v1064 = vpack.c.b16 %v340, %v339
      %v1065 = vpack.c.b16 %v342, %v341
      %v1066 = vpack.c.b16 %v344, %v343
      %v1067 = vpack.c.b16 %v346, %v345
      %v1068 = vpack.c.b16 %v348, %v347
      %v1069 = vpack.c.b16 %v350, %v349
      %v1070 = vpack.c.b16 %v352, %v351
      %v1071 = vpack.c.b16 %v354, %v353
      %v1072 = vpack.c.b16 %v356, %v355
      %v1073 = vpack.c.b16 %v358, %v357
      %v1074 = vpack.c.b16 %v360, %v359
      %v1075 = vpack.c.b16 %v362, %v361
      %v1076 = vpack.c.b16 %v364, %v363
      %v1077 = vpack.c.b16 %v366, %v365
      %v1078 = vpack.c.b16 %v368, %v367
      %v1079 = vpack.c.b16 %v370, %v369
      %v1080 = vpack.c.b16 %v720, %v719
      %v1081 = vpack.c.b16 %v1058, %v721
      %v1082 = vpack.c.b16 %v1059, %v1059
      %1083 = vrot.lane.b32.xlu0 %v1060, 18
      %v1084 = vpop.permute.xlu0 %1083
      %1085 = vrot.lane.b32.xlu0 %v1061, 18
      %v1086 = vpop.permute.xlu0 %1085
      %1087 = vrot.lane.b32.xlu0 %v1062, 18
      %v1088 = vpop.permute.xlu0 %1087
      %1089 = vrot.lane.b32.xlu0 %v1063, 18
      %v1090 = vpop.permute.xlu0 %1089
      %1091 = vrot.lane.b32.xlu0 %v1064, 18
      %v1092 = vpop.permute.xlu0 %1091
      %1093 = vrot.lane.b32.xlu0 %v1065, 18
      %v1094 = vpop.permute.xlu0 %1093
      %1095 = vrot.lane.b32.xlu0 %v1066, 18
      %v1096 = vpop.permute.xlu0 %1095
      %1097 = vrot.lane.b32.xlu0 %v1067, 18
      %v1098 = vpop.permute.xlu0 %1097
      %1099 = vrot.lane.b32.xlu0 %v1068, 18
      %v1100 = vpop.permute.xlu0 %1099
      %1101 = vrot.lane.b32.xlu0 %v1069, 18
      %v1102 = vpop.permute.xlu0 %1101
      %1103 = vrot.lane.b32.xlu0 %v1070, 18
      %v1104 = vpop.permute.xlu0 %1103
      %1105 = vrot.lane.b32.xlu0 %v1071, 18
      %v1106 = vpop.permute.xlu0 %1105
      %1107 = vrot.lane.b32.xlu0 %v1072, 18
      %v1108 = vpop.permute.xlu0 %1107
      %1109 = vrot.lane.b32.xlu0 %v1073, 18
      %v1110 = vpop.permute.xlu0 %1109
      %1111 = vrot.lane.b32.xlu0 %v1074, 18
      %v1112 = vpop.permute.xlu0 %1111
      %1113 = vrot.lane.b32.xlu0 %v1075, 18
      %v1114 = vpop.permute.xlu0 %1113
      %1115 = vrot.lane.b32.xlu0 %v1076, 18
      %v1116 = vpop.permute.xlu0 %1115
      %1117 = vrot.lane.b32.xlu0 %v1077, 18
      %v1118 = vpop.permute.xlu0 %1117
      %1119 = vrot.lane.b32.xlu0 %v1078, 18
      %v1120 = vpop.permute.xlu0 %1119
      %1121 = vrot.lane.b32.xlu0 %v1079, 18
      %v1122 = vpop.permute.xlu0 %1121
      %1123 = vrot.lane.b32.xlu0 %v1080, 18
      %v1124 = vpop.permute.xlu0 %1123
      %1125 = vrot.lane.b32.xlu0 %v1081, 18
      %v1126 = vpop.permute.xlu0 %1125
      %1127 = vrot.lane.b32.xlu0 %v1082, 18
      %v1128 = vpop.permute.xlu0 %1127
      %v1130 = vshrl.u32 %v1060, 16
      %v1132 = vshll.u32 %v1060, 16
      %v1134 = vrot.slane %v1132, 1
      %v1135 = vor.u32 %v1130, %v1134
      %v1137 = vshll.u32 %v1061, 16
      %v1139 = vrot.slane %v1137, 1
      %v1140 = vsel %vm394, %v1135, %v1139
      %v1141 = vshrl.u32 %v1061, 16
      %v1143 = vor.u32 %v1141, %v1139
      %v1145 = vshll.u32 %v1062, 16
      %v1147 = vrot.slane %v1145, 1
      %v1148 = vsel %vm394, %v1143, %v1147
      %v1149 = vshrl.u32 %v1062, 16
      %v1151 = vor.u32 %v1149, %v1147
      %v1153 = vshll.u32 %v1063, 16
      %v1155 = vrot.slane %v1153, 1
      %v1156 = vsel %vm394, %v1151, %v1155
      %v1157 = vshrl.u32 %v1063, 16
      %v1159 = vor.u32 %v1157, %v1155
      %v1161 = vshll.u32 %v1064, 16
      %v1163 = vrot.slane %v1161, 1
      %v1164 = vsel %vm394, %v1159, %v1163
      %v1165 = vshrl.u32 %v1064, 16
      %v1167 = vor.u32 %v1165, %v1163
      %v1169 = vshll.u32 %v1065, 16
      %v1171 = vrot.slane %v1169, 1
      %v1172 = vsel %vm394, %v1167, %v1171
      %v1173 = vshrl.u32 %v1065, 16
      %v1175 = vor.u32 %v1173, %v1171
      %v1177 = vshll.u32 %v1066, 16
      %v1179 = vrot.slane %v1177, 1
      %v1180 = vsel %vm394, %v1175, %v1179
      %v1181 = vshrl.u32 %v1066, 16
      %v1183 = vor.u32 %v1181, %v1179
      %v1185 = vshll.u32 %v1067, 16
      %v1187 = vrot.slane %v1185, 1
      %v1188 = vsel %vm394, %v1183, %v1187
      %v1189 = vshrl.u32 %v1067, 16
      %v1191 = vor.u32 %v1189, %v1187
      %v1193 = vshll.u32 %v1068, 16
      %v1195 = vrot.slane %v1193, 1
      %v1196 = vsel %vm394, %v1191, %v1195
      %v1197 = vshrl.u32 %v1068, 16
      %v1199 = vor.u32 %v1197, %v1195
      %v1201 = vshll.u32 %v1069, 16
      %v1203 = vrot.slane %v1201, 1
      %v1204 = vsel %vm394, %v1199, %v1203
      %v1205 = vshrl.u32 %v1069, 16
      %v1207 = vor.u32 %v1205, %v1203
      %v1209 = vshll.u32 %v1070, 16
      %v1211 = vrot.slane %v1209, 1
      %v1212 = vsel %vm394, %v1207, %v1211
      %v1213 = vshrl.u32 %v1070, 16
      %v1215 = vor.u32 %v1213, %v1211
      %v1217 = vshll.u32 %v1071, 16
      %v1219 = vrot.slane %v1217, 1
      %v1220 = vsel %vm394, %v1215, %v1219
      %v1221 = vshrl.u32 %v1071, 16
      %v1223 = vor.u32 %v1221, %v1219
      %v1225 = vshll.u32 %v1072, 16
      %v1227 = vrot.slane %v1225, 1
      %v1228 = vsel %vm394, %v1223, %v1227
      %v1229 = vshrl.u32 %v1072, 16
      %v1231 = vor.u32 %v1229, %v1227
      %v1233 = vshll.u32 %v1073, 16
      %v1235 = vrot.slane %v1233, 1
      %v1236 = vsel %vm394, %v1231, %v1235
      %v1237 = vshrl.u32 %v1073, 16
      %v1239 = vor.u32 %v1237, %v1235
      %v1241 = vshll.u32 %v1074, 16
      %v1243 = vrot.slane %v1241, 1
      %v1244 = vsel %vm394, %v1239, %v1243
      %v1245 = vshrl.u32 %v1074, 16
      %v1247 = vor.u32 %v1245, %v1243
      %v1249 = vshll.u32 %v1075, 16
      %v1251 = vrot.slane %v1249, 1
      %v1252 = vsel %vm394, %v1247, %v1251
      %v1253 = vshrl.u32 %v1075, 16
      %v1255 = vor.u32 %v1253, %v1251
      %v1257 = vshll.u32 %v1076, 16
      %v1259 = vrot.slane %v1257, 1
      %v1260 = vsel %vm394, %v1255, %v1259
      %v1261 = vshrl.u32 %v1076, 16
      %v1263 = vor.u32 %v1261, %v1259
      %v1265 = vshll.u32 %v1077, 16
      %v1267 = vrot.slane %v1265, 1
      %v1268 = vsel %vm394, %v1263, %v1267
      %v1269 = vshrl.u32 %v1077, 16
      %v1271 = vor.u32 %v1269, %v1267
      %v1273 = vshll.u32 %v1078, 16
      %v1275 = vrot.slane %v1273, 1
      %v1276 = vsel %vm394, %v1271, %v1275
      %v1277 = vshrl.u32 %v1078, 16
      %v1279 = vor.u32 %v1277, %v1275
      %v1281 = vshll.u32 %v1079, 16
      %v1283 = vrot.slane %v1281, 1
      %v1284 = vsel %vm394, %v1279, %v1283
      %v1285 = vshrl.u32 %v1079, 16
      %v1287 = vor.u32 %v1285, %v1283
      %v1289 = vshll.u32 %v1080, 16
      %v1291 = vrot.slane %v1289, 1
      %v1292 = vsel %vm394, %v1287, %v1291
      %v1293 = vshrl.u32 %v1080, 16
      %v1295 = vor.u32 %v1293, %v1291
      %v1297 = vshll.u32 %v1081, 16
      %v1299 = vrot.slane %v1297, 1
      %v1300 = vsel %vm394, %v1295, %v1299
      %v1301 = vshrl.u32 %v1081, 16
      %v1303 = vor.u32 %v1301, %v1299
      %v1305 = vshll.u32 %v1082, 16
      %v1307 = vrot.slane %v1305, 1
      %v1308 = vsel %vm394, %v1303, %v1307
      %v1309 = vshrl.u32 %v1082, 16
      %v1311 = vor.u32 %v1309, %v1307
      %1312 = vrot.lane.b32.xlu0 %v1140, 21
      %v1313 = vpop.permute.xlu0 %1312
      %1314 = vrot.lane.b32.xlu0 %v1148, 21
      %v1315 = vpop.permute.xlu0 %1314
      %1316 = vrot.lane.b32.xlu0 %v1156, 21
      %v1317 = vpop.permute.xlu0 %1316
      %1318 = vrot.lane.b32.xlu0 %v1164, 21
      %v1319 = vpop.permute.xlu0 %1318
      %1320 = vrot.lane.b32.xlu0 %v1172, 21
      %v1321 = vpop.permute.xlu0 %1320
      %1322 = vrot.lane.b32.xlu0 %v1180, 21
      %v1323 = vpop.permute.xlu0 %1322
      %1324 = vrot.lane.b32.xlu0 %v1188, 21
      %v1325 = vpop.permute.xlu0 %1324
      %1326 = vrot.lane.b32.xlu0 %v1196, 21
      %v1327 = vpop.permute.xlu0 %1326
      %1328 = vrot.lane.b32.xlu0 %v1204, 21
      %v1329 = vpop.permute.xlu0 %1328
      %1330 = vrot.lane.b32.xlu0 %v1212, 21
      %v1331 = vpop.permute.xlu0 %1330
      %1332 = vrot.lane.b32.xlu0 %v1220, 21
      %v1333 = vpop.permute.xlu0 %1332
      %1334 = vrot.lane.b32.xlu0 %v1228, 21
      %v1335 = vpop.permute.xlu0 %1334
      %1336 = vrot.lane.b32.xlu0 %v1236, 21
      %v1337 = vpop.permute.xlu0 %1336
      %1338 = vrot.lane.b32.xlu0 %v1244, 21
      %v1339 = vpop.permute.xlu0 %1338
      %1340 = vrot.lane.b32.xlu0 %v1252, 21
      %v1341 = vpop.permute.xlu0 %1340
      %1342 = vrot.lane.b32.xlu0 %v1260, 21
      %v1343 = vpop.permute.xlu0 %1342
      %1344 = vrot.lane.b32.xlu0 %v1268, 21
      %v1345 = vpop.permute.xlu0 %1344
      %1346 = vrot.lane.b32.xlu0 %v1276, 21
      %v1347 = vpop.permute.xlu0 %1346
      %1348 = vrot.lane.b32.xlu0 %v1284, 21
      %v1349 = vpop.permute.xlu0 %1348
      %1350 = vrot.lane.b32.xlu0 %v1292, 21
      %v1351 = vpop.permute.xlu0 %1350
      %1352 = vrot.lane.b32.xlu0 %v1300, 21
      %v1353 = vpop.permute.xlu0 %1352
      %1354 = vrot.lane.b32.xlu0 %v1308, 21
      %v1355 = vpop.permute.xlu0 %1354
      %1356 = vrot.lane.b32.xlu0 %v1311, 21
      %v1357 = vpop.permute.xlu0 %1356
      %v1358 = vrot.slane %v1060, 1
      %v1359 = vrot.slane %v1061, 1
      %v1360 = vsel %vm624, %v1358, %v1359
      %v1361 = vrot.slane %v1062, 1
      %v1362 = vsel %vm624, %v1359, %v1361
      %v1363 = vrot.slane %v1063, 1
      %v1364 = vsel %vm624, %v1361, %v1363
      %v1365 = vrot.slane %v1064, 1
      %v1366 = vsel %vm624, %v1363, %v1365
      %v1367 = vrot.slane %v1065, 1
      %v1368 = vsel %vm624, %v1365, %v1367
      %v1369 = vrot.slane %v1066, 1
      %v1370 = vsel %vm624, %v1367, %v1369
      %v1371 = vrot.slane %v1067, 1
      %v1372 = vsel %vm624, %v1369, %v1371
      %v1373 = vrot.slane %v1068, 1
      %v1374 = vsel %vm624, %v1371, %v1373
      %v1375 = vrot.slane %v1069, 1
      %v1376 = vsel %vm624, %v1373, %v1375
      %v1377 = vrot.slane %v1070, 1
      %v1378 = vsel %vm624, %v1375, %v1377
      %v1379 = vrot.slane %v1071, 1
      %v1380 = vsel %vm624, %v1377, %v1379
      %v1381 = vrot.slane %v1072, 1
      %v1382 = vsel %vm624, %v1379, %v1381
      %v1383 = vrot.slane %v1073, 1
      %v1384 = vsel %vm624, %v1381, %v1383
      %v1385 = vrot.slane %v1074, 1
      %v1386 = vsel %vm624, %v1383, %v1385
      %v1387 = vrot.slane %v1075, 1
      %v1388 = vsel %vm624, %v1385, %v1387
      %v1389 = vrot.slane %v1076, 1
      %v1390 = vsel %vm624, %v1387, %v1389
      %v1391 = vrot.slane %v1077, 1
      %v1392 = vsel %vm624, %v1389, %v1391
      %v1393 = vrot.slane %v1078, 1
      %v1394 = vsel %vm624, %v1391, %v1393
      %v1395 = vrot.slane %v1079, 1
      %v1396 = vsel %vm624, %v1393, %v1395
      %v1397 = vrot.slane %v1080, 1
      %v1398 = vsel %vm624, %v1395, %v1397
      %v1399 = vrot.slane %v1081, 1
      %v1400 = vsel %vm624, %v1397, %v1399
      %v1401 = vrot.slane %v1082, 1
      %v1402 = vsel %vm624, %v1399, %v1401
      %1403 = vrot.lane.b32.xlu0 %v1360, 24
      %v1404 = vpop.permute.xlu0 %1403
      %1405 = vrot.lane.b32.xlu0 %v1362, 24
      %v1406 = vpop.permute.xlu0 %1405
      %1407 = vrot.lane.b32.xlu0 %v1364, 24
      %v1408 = vpop.permute.xlu0 %1407
      %1409 = vrot.lane.b32.xlu0 %v1366, 24
      %v1410 = vpop.permute.xlu0 %1409
      %1411 = vrot.lane.b32.xlu0 %v1368, 24
      %v1412 = vpop.permute.xlu0 %1411
      %1413 = vrot.lane.b32.xlu0 %v1370, 24
      %v1414 = vpop.permute.xlu0 %1413
      %1415 = vrot.lane.b32.xlu0 %v1372, 24
      %v1416 = vpop.permute.xlu0 %1415
      %1417 = vrot.lane.b32.xlu0 %v1374, 24
      %v1418 = vpop.permute.xlu0 %1417
      %1419 = vrot.lane.b32.xlu0 %v1376, 24
      %v1420 = vpop.permute.xlu0 %1419
      %1421 = vrot.lane.b32.xlu0 %v1378, 24
      %v1422 = vpop.permute.xlu0 %1421
      %1423 = vrot.lane.b32.xlu0 %v1380, 24
      %v1424 = vpop.permute.xlu0 %1423
      %1425 = vrot.lane.b32.xlu0 %v1382, 24
      %v1426 = vpop.permute.xlu0 %1425
      %1427 = vrot.lane.b32.xlu0 %v1384, 24
      %v1428 = vpop.permute.xlu0 %1427
      %1429 = vrot.lane.b32.xlu0 %v1386, 24
      %v1430 = vpop.permute.xlu0 %1429
      %1431 = vrot.lane.b32.xlu0 %v1388, 24
      %v1432 = vpop.permute.xlu0 %1431
      %1433 = vrot.lane.b32.xlu0 %v1390, 24
      %v1434 = vpop.permute.xlu0 %1433
      %1435 = vrot.lane.b32.xlu0 %v1392, 24
      %v1436 = vpop.permute.xlu0 %1435
      %1437 = vrot.lane.b32.xlu0 %v1394, 24
      %v1438 = vpop.permute.xlu0 %1437
      %1439 = vrot.lane.b32.xlu0 %v1396, 24
      %v1440 = vpop.permute.xlu0 %1439
      %1441 = vrot.lane.b32.xlu0 %v1398, 24
      %v1442 = vpop.permute.xlu0 %1441
      %1443 = vrot.lane.b32.xlu0 %v1400, 24
      %v1444 = vpop.permute.xlu0 %1443
      %1445 = vrot.lane.b32.xlu0 %v1402, 24
      %v1446 = vpop.permute.xlu0 %1445
      %1447 = vrot.lane.b32.xlu0 %v1401, 24
      %v1448 = vpop.permute.xlu0 %1447
      %vm1449 = vcmask 23552
      %v1451 = vsel %vm1449, %v371, %v579
      %v1453 = vsel %vm1449, %v372, %v581
      %v1455 = vsel %vm1449, %v373, %v583
      %v1457 = vsel %vm1449, %v374, %v585
      %v1459 = vsel %vm1449, %v375, %v587
      %v1461 = vsel %vm1449, %v376, %v589
      %v1463 = vsel %vm1449, %v377, %v591
      %v1465 = vsel %vm1449, %v378, %v593
      %v1467 = vsel %vm1449, %v379, %v595
      %v1469 = vsel %vm1449, %v380, %v597
      %v1471 = vsel %vm1449, %v381, %v599
      %v1473 = vsel %vm1449, %v382, %v601
      %v1475 = vsel %vm1449, %v383, %v603
      %v1477 = vsel %vm1449, %v384, %v605
      %v1479 = vsel %vm1449, %v385, %v607
      %v1481 = vsel %vm1449, %v386, %v609
      %v1483 = vsel %vm1449, %v387, %v611
      %v1485 = vsel %vm1449, %v388, %v613
      %v1487 = vsel %vm1449, %v389, %v615
      %v1489 = vsel %vm1449, %v390, %v617
      %v1491 = vsel %vm1449, %v391, %v619
      %v1493 = vsel %vm1449, %v392, %v621
      %v1495 = vsel %vm1449, %v393, %v623
      %vm1496 = vcmask 48128
      %v1498 = vsel %vm1496, %v1451, %v671
      %v1500 = vsel %vm1496, %v1453, %v673
      %v1502 = vsel %vm1496, %v1455, %v675
      %v1504 = vsel %vm1496, %v1457, %v677
      %v1506 = vsel %vm1496, %v1459, %v679
      %v1508 = vsel %vm1496, %v1461, %v681
      %v1510 = vsel %vm1496, %v1463, %v683
      %v1512 = vsel %vm1496, %v1465, %v685
      %v1514 = vsel %vm1496, %v1467, %v687
      %v1516 = vsel %vm1496, %v1469, %v689
      %v1518 = vsel %vm1496, %v1471, %v691
      %v1520 = vsel %vm1496, %v1473, %v693
      %v1522 = vsel %vm1496, %v1475, %v695
      %v1524 = vsel %vm1496, %v1477, %v697
      %v1526 = vsel %vm1496, %v1479, %v699
      %v1528 = vsel %vm1496, %v1481, %v701
      %v1530 = vsel %vm1496, %v1483, %v703
      %v1532 = vsel %vm1496, %v1485, %v705
      %v1534 = vsel %vm1496, %v1487, %v707
      %v1536 = vsel %vm1496, %v1489, %v709
      %v1538 = vsel %vm1496, %v1491, %v711
      %v1540 = vsel %vm1496, %v1493, %v713
      %v1542 = vsel %vm1496, %v1495, %v715
      %vm1543 = vcmask 72704
      %v1545 = vsel %vm1543, %v1498, %v771
      %v1547 = vsel %vm1543, %v1500, %v773
      %v1549 = vsel %vm1543, %v1502, %v775
      %v1551 = vsel %vm1543, %v1504, %v777
      %v1553 = vsel %vm1543, %v1506, %v779
      %v1555 = vsel %vm1543, %v1508, %v781
      %v1557 = vsel %vm1543, %v1510, %v783
      %v1559 = vsel %vm1543, %v1512, %v785
      %v1561 = vsel %vm1543, %v1514, %v787
      %v1563 = vsel %vm1543, %v1516, %v789
      %v1565 = vsel %vm1543, %v1518, %v791
      %v1567 = vsel %vm1543, %v1520, %v793
      %v1569 = vsel %vm1543, %v1522, %v795
      %v1571 = vsel %vm1543, %v1524, %v797
      %v1573 = vsel %vm1543, %v1526, %v799
      %v1575 = vsel %vm1543, %v1528, %v801
      %v1577 = vsel %vm1543, %v1530, %v803
      %v1579 = vsel %vm1543, %v1532, %v805
      %v1581 = vsel %vm1543, %v1534, %v807
      %v1583 = vsel %vm1543, %v1536, %v809
      %v1585 = vsel %vm1543, %v1538, %v811
      %v1587 = vsel %vm1543, %v1540, %v813
      %v1589 = vsel %vm1543, %v1542, %v815
      %vm1590 = vcmask 97280
      %v1592 = vsel %vm1590, %v1545, %v919
      %v1594 = vsel %vm1590, %v1547, %v921
      %v1596 = vsel %vm1590, %v1549, %v923
      %v1598 = vsel %vm1590, %v1551, %v925
      %v1600 = vsel %vm1590, %v1553, %v927
      %v1602 = vsel %vm1590, %v1555, %v929
      %v1604 = vsel %vm1590, %v1557, %v931
      %v1606 = vsel %vm1590, %v1559, %v933
      %v1608 = vsel %vm1590, %v1561, %v935
      %v1610 = vsel %vm1590, %v1563, %v937
      %v1612 = vsel %vm1590, %v1565, %v939
      %v1614 = vsel %vm1590, %v1567, %v941
      %v1616 = vsel %vm1590, %v1569, %v943
      %v1618 = vsel %vm1590, %v1571, %v945
      %v1620 = vsel %vm1590, %v1573, %v947
      %v1622 = vsel %vm1590, %v1575, %v949
      %v1624 = vsel %vm1590, %v1577, %v951
      %v1626 = vsel %vm1590, %v1579, %v953
      %v1628 = vsel %vm1590, %v1581, %v955
      %v1630 = vsel %vm1590, %v1583, %v957
      %v1632 = vsel %vm1590, %v1585, %v959
      %v1634 = vsel %vm1590, %v1587, %v961
      %v1636 = vsel %vm1590, %v1589, %v963
      %vm1637 = vcmask 121856
      %v1639 = vsel %vm1637, %v1592, %v1011
      %v1641 = vsel %vm1637, %v1594, %v1013
      %v1643 = vsel %vm1637, %v1596, %v1015
      %v1645 = vsel %vm1637, %v1598, %v1017
      %v1647 = vsel %vm1637, %v1600, %v1019
      %v1649 = vsel %vm1637, %v1602, %v1021
      %v1651 = vsel %vm1637, %v1604, %v1023
      %v1653 = vsel %vm1637, %v1606, %v1025
      %v1655 = vsel %vm1637, %v1608, %v1027
      %v1657 = vsel %vm1637, %v1610, %v1029
      %v1659 = vsel %vm1637, %v1612, %v1031
      %v1661 = vsel %vm1637, %v1614, %v1033
      %v1663 = vsel %vm1637, %v1616, %v1035
      %v1665 = vsel %vm1637, %v1618, %v1037
      %v1667 = vsel %vm1637, %v1620, %v1039
      %v1669 = vsel %vm1637, %v1622, %v1041
      %v1671 = vsel %vm1637, %v1624, %v1043
      %v1673 = vsel %vm1637, %v1626, %v1045
      %v1675 = vsel %vm1637, %v1628, %v1047
      %v1677 = vsel %vm1637, %v1630, %v1049
      %v1679 = vsel %vm1637, %v1632, %v1051
      %v1681 = vsel %vm1637, %v1634, %v1053
      %v1683 = vsel %vm1637, %v1636, %v1055
      %vm1684 = vcmask 146432
      %v1686 = vsel %vm1684, %v1639, %v1084
      %v1688 = vsel %vm1684, %v1641, %v1086
      %v1690 = vsel %vm1684, %v1643, %v1088
      %v1692 = vsel %vm1684, %v1645, %v1090
      %v1694 = vsel %vm1684, %v1647, %v1092
      %v1696 = vsel %vm1684, %v1649, %v1094
      %v1698 = vsel %vm1684, %v1651, %v1096
      %v1700 = vsel %vm1684, %v1653, %v1098
      %v1702 = vsel %vm1684, %v1655, %v1100
      %v1704 = vsel %vm1684, %v1657, %v1102
      %v1706 = vsel %vm1684, %v1659, %v1104
      %v1708 = vsel %vm1684, %v1661, %v1106
      %v1710 = vsel %vm1684, %v1663, %v1108
      %v1712 = vsel %vm1684, %v1665, %v1110
      %v1714 = vsel %vm1684, %v1667, %v1112
      %v1716 = vsel %vm1684, %v1669, %v1114
      %v1718 = vsel %vm1684, %v1671, %v1116
      %v1720 = vsel %vm1684, %v1673, %v1118
      %v1722 = vsel %vm1684, %v1675, %v1120
      %v1724 = vsel %vm1684, %v1677, %v1122
      %v1726 = vsel %vm1684, %v1679, %v1124
      %v1728 = vsel %vm1684, %v1681, %v1126
      %v1730 = vsel %vm1684, %v1683, %v1128
      %vm1731 = vcmask 171008
      %v1733 = vsel %vm1731, %v1686, %v1313
      %v1735 = vsel %vm1731, %v1688, %v1315
      %v1737 = vsel %vm1731, %v1690, %v1317
      %v1739 = vsel %vm1731, %v1692, %v1319
      %v1741 = vsel %vm1731, %v1694, %v1321
      %v1743 = vsel %vm1731, %v1696, %v1323
      %v1745 = vsel %vm1731, %v1698, %v1325
      %v1747 = vsel %vm1731, %v1700, %v1327
      %v1749 = vsel %vm1731, %v1702, %v1329
      %v1751 = vsel %vm1731, %v1704, %v1331
      %v1753 = vsel %vm1731, %v1706, %v1333
      %v1755 = vsel %vm1731, %v1708, %v1335
      %v1757 = vsel %vm1731, %v1710, %v1337
      %v1759 = vsel %vm1731, %v1712, %v1339
      %v1761 = vsel %vm1731, %v1714, %v1341
      %v1763 = vsel %vm1731, %v1716, %v1343
      %v1765 = vsel %vm1731, %v1718, %v1345
      %v1767 = vsel %vm1731, %v1720, %v1347
      %v1769 = vsel %vm1731, %v1722, %v1349
      %v1771 = vsel %vm1731, %v1724, %v1351
      %v1773 = vsel %vm1731, %v1726, %v1353
      %v1775 = vsel %vm1731, %v1728, %v1355
      %v1777 = vsel %vm1731, %v1730, %v1357
      %vm1778 = vcmask 195584
      %v1780 = vsel %vm1778, %v1733, %v1404
      %v1782 = vsel %vm1778, %v1735, %v1406
      %v1784 = vsel %vm1778, %v1737, %v1408
      %v1786 = vsel %vm1778, %v1739, %v1410
      %v1788 = vsel %vm1778, %v1741, %v1412
      %v1790 = vsel %vm1778, %v1743, %v1414
      %v1792 = vsel %vm1778, %v1745, %v1416
      %v1794 = vsel %vm1778, %v1747, %v1418
      %v1796 = vsel %vm1778, %v1749, %v1420
      %v1798 = vsel %vm1778, %v1751, %v1422
      %v1800 = vsel %vm1778, %v1753, %v1424
      %v1802 = vsel %vm1778, %v1755, %v1426
      %v1804 = vsel %vm1778, %v1757, %v1428
      %v1806 = vsel %vm1778, %v1759, %v1430
      %v1808 = vsel %vm1778, %v1761, %v1432
      %v1810 = vsel %vm1778, %v1763, %v1434
      %v1812 = vsel %vm1778, %v1765, %v1436
      %v1814 = vsel %vm1778, %v1767, %v1438
      %v1816 = vsel %vm1778, %v1769, %v1440
      %v1818 = vsel %vm1778, %v1771, %v1442
      %v1820 = vsel %vm1778, %v1773, %v1444
      %v1822 = vsel %vm1778, %v1775, %v1446
      %v1824 = vsel %vm1778, %v1777, %v1448
      %v1826 = vlaneseq
      %v1827 = vshrl.u32 %v1826, 7
      %v1828 = vsub.s32 0, %v1827
      %v1829 = vrot.slane %v280, %v1828
      %v1835 = vunpack.c.l.b16 %v276
      %v1836 = vunpack.c.l.b16 %v277
      %v1837 = vunpack.c.l.b16 %v278
      %v1838 = vunpack.c.l.b16 %v279
      %v1839 = vpack.c.b16 %v1836, %v1835
      %v1840 = vpack.c.b16 %v1838, %v1837
      %vm1842 = vcmask 220160
      %v1843 = vsel %vm1842, %v1780, 0
      %v1845 = vsel %vm1842, %v1782, 0
      %v1847 = vsel %vm1842, %v1784, 0
      %v1849 = vsel %vm1842, %v1786, 0
      %v1851 = vsel %vm1842, %v1788, 0
      %v1853 = vsel %vm1842, %v1790, 0
      %v1855 = vsel %vm1842, %v1792, 0
      %v1857 = vsel %vm1842, %v1794, 0
      %v1859 = vsel %vm1842, %v1796, 0
      %v1861 = vsel %vm1842, %v1798, 0
      %v1863 = vsel %vm1842, %v1800, 0
      %v1865 = vsel %vm1842, %v1802, 0
      %v1867 = vsel %vm1842, %v1804, 0
      %v1869 = vsel %vm1842, %v1806, 0
      %v1871 = vsel %vm1842, %v1808, 0
      %v1873 = vsel %vm1842, %v1810, 0
      %v1875 = vsel %vm1842, %v1812, 0
      %v1877 = vsel %vm1842, %v1814, 0
      %v1879 = vsel %vm1842, %v1816, 0
      %v1881 = vsel %vm1842, %v1818, 0
      %v1883 = vsel %vm1842, %v1820, 0
      %v1885 = vsel %vm1842, %v1822, 0
      %v1887 = vsel %vm1842, %v1824, 0
      %vm1889 = vcmask 1044480
      %vm1890 = vcmask 1045504
      %v1891 = vsel %vm1889, 4294967295, 65535
      %v1892 = vsel %vm1890, %v1891, 0
      %v1894 = vand.u32 %v1840, %v1892
      %1896 = vmatprep.subr.bf16.mxu0 0
      %1897 = vmatpush1.bf16.msra.mxu0 %v1839
      %1898 = vmatprep.subr.bf16.mxu0 0
      %1899 = vmatpush1.bf16.msra.mxu0 %v1894
      %1900 = vmatprep.subr.bf16.mxu0 0
      %1901 = vmatpush1.bf16.msra.mxu0 0
      %1902 = vmatprep.subr.bf16.mxu0 0
      %1903 = vmatpush1.bf16.msra.mxu0 0
      %1904 = vmatprep.subr.bf16.mxu0 0
      %1905 = vmatpush1.bf16.msra.mxu0 0
      %1906 = vmatprep.subr.bf16.mxu0 0
      %1907 = vmatpush1.bf16.msra.mxu0 0
      %1908 = vmatprep.subr.bf16.mxu0 0
      %1909 = vmatpush1.bf16.msra.mxu0 0
      %1910 = vmatprep.subr.bf16.mxu0 0
      %1911 = vmatpush1.bf16.msra.mxu0 0
      %1912 = vmatprep.subr.bf16.mxu0 0
      %1913 = vmatpush1.bf16.msra.mxu0 0
      %1914 = vmatprep.subr.bf16.mxu0 0
      %1915 = vmatpush1.bf16.msra.mxu0 0
      %1916 = vmatprep.subr.bf16.mxu0 0
      %1917 = vmatpush1.bf16.msra.mxu0 0
      %1918 = vmatprep.subr.bf16.mxu0 0
      %1919 = vmatpush1.bf16.msra.mxu0 0
      %1920 = vmatprep.subr.bf16.mxu0 0
      %1921 = vmatpush1.bf16.msra.mxu0 0
      %1922 = vmatprep.subr.bf16.mxu0 0
      %1923 = vmatpush1.bf16.msra.mxu0 0
      %1924 = vmatprep.subr.bf16.mxu0 0
      %1925 = vmatpush1.bf16.msra.mxu0 0
      %1926 = vmatprep.subr.bf16.mxu0 0
      %1927 = vmatpush1.bf16.msra.mxu0 0
      %1928 = vmatprep.mubr.bf16.mxu0 0
      %1929 = vmatmul.mubr.bf16.gmra.mrb[0].mxu0 %v1843
      %v1930 = vpop.f32.mrb[0].mxu0
      %v1931 = vadd.f32 %v1829, %v1930
      %v1932 = vpop.f32.mrb[0].mxu0
      %v1933 = vpop.f32.mrb[0].mxu0
      %v1934 = vadd.f32 %v1829, %v1933
      %v1935 = vpop.f32.mrb[0].mxu0
      %1936 = vmatprep.mubr.bf16.mxu0 0
      %1937 = vmatmul.mubr.bf16.gmra.mrb[0].mxu0 %v1845
      %v1938 = vpop.f32.mrb[0].mxu0
      %v1939 = vadd.f32 %v1829, %v1938
      %v1940 = vpop.f32.mrb[0].mxu0
      %v1941 = vpop.f32.mrb[0].mxu0
      %v1942 = vadd.f32 %v1829, %v1941
      %v1943 = vpop.f32.mrb[0].mxu0
      %1944 = vmatprep.mubr.bf16.mxu0 0
      %1945 = vmatmul.mubr.bf16.gmra.mrb[0].mxu0 %v1847
      %v1946 = vpop.f32.mrb[0].mxu0
      %v1947 = vadd.f32 %v1829, %v1946
      %v1948 = vpop.f32.mrb[0].mxu0
      %v1949 = vpop.f32.mrb[0].mxu0
      %v1950 = vadd.f32 %v1829, %v1949
      %v1951 = vpop.f32.mrb[0].mxu0
      %1952 = vmatprep.mubr.bf16.mxu0 0
      %1953 = vmatmul.mubr.bf16.gmra.mrb[0].mxu0 %v1849
      %v1954 = vpop.f32.mrb[0].mxu0
      %v1955 = vadd.f32 %v1829, %v1954
      %v1956 = vpop.f32.mrb[0].mxu0
      %v1957 = vpop.f32.mrb[0].mxu0
      %v1958 = vadd.f32 %v1829, %v1957
      %v1959 = vpop.f32.mrb[0].mxu0
      %1960 = vmatprep.mubr.bf16.mxu0 0
      %1961 = vmatmul.mubr.bf16.gmra.mrb[0].mxu0 %v1851
      %v1962 = vpop.f32.mrb[0].mxu0
      %v1963 = vadd.f32 %v1829, %v1962
      %v1964 = vpop.f32.mrb[0].mxu0
      %v1965 = vpop.f32.mrb[0].mxu0
      %v1966 = vadd.f32 %v1829, %v1965
      %v1967 = vpop.f32.mrb[0].mxu0
      %1968 = vmatprep.mubr.bf16.mxu0 0
      %1969 = vmatmul.mubr.bf16.gmra.mrb[0].mxu0 %v1853
      %v1970 = vpop.f32.mrb[0].mxu0
      %v1971 = vadd.f32 %v1829, %v1970
      %v1972 = vpop.f32.mrb[0].mxu0
      %v1973 = vpop.f32.mrb[0].mxu0
      %v1974 = vadd.f32 %v1829, %v1973
      %v1975 = vpop.f32.mrb[0].mxu0
      %1976 = vmatprep.mubr.bf16.mxu0 0
      %1977 = vmatmul.mubr.bf16.gmra.mrb[0].mxu0 %v1855
      %v1978 = vpop.f32.mrb[0].mxu0
      %v1979 = vadd.f32 %v1829, %v1978
      %v1980 = vpop.f32.mrb[0].mxu0
      %v1981 = vpop.f32.mrb[0].mxu0
      %v1982 = vadd.f32 %v1829, %v1981
      %v1983 = vpop.f32.mrb[0].mxu0
      %1984 = vmatprep.mubr.bf16.mxu0 0
      %1985 = vmatmul.mubr.bf16.gmra.mrb[0].mxu0 %v1857
      %v1986 = vpop.f32.mrb[0].mxu0
      %v1987 = vadd.f32 %v1829, %v1986
      %v1988 = vpop.f32.mrb[0].mxu0
      %v1989 = vpop.f32.mrb[0].mxu0
      %v1990 = vadd.f32 %v1829, %v1989
      %v1991 = vpop.f32.mrb[0].mxu0
      %1992 = vmatprep.mubr.bf16.mxu0 0
      %1993 = vmatmul.mubr.bf16.gmra.mrb[0].mxu0 %v1859
      %v1994 = vpop.f32.mrb[0].mxu0
      %v1995 = vadd.f32 %v1829, %v1994
      %v1996 = vpop.f32.mrb[0].mxu0
      %v1997 = vpop.f32.mrb[0].mxu0
      %v1998 = vadd.f32 %v1829, %v1997
      %v1999 = vpop.f32.mrb[0].mxu0
      %2000 = vmatprep.mubr.bf16.mxu0 0
      %2001 = vmatmul.mubr.bf16.gmra.mrb[0].mxu0 %v1861
      %v2002 = vpop.f32.mrb[0].mxu0
      %v2003 = vadd.f32 %v1829, %v2002
      %v2004 = vpop.f32.mrb[0].mxu0
      %v2005 = vpop.f32.mrb[0].mxu0
      %v2006 = vadd.f32 %v1829, %v2005
      %v2007 = vpop.f32.mrb[0].mxu0
      %2008 = vmatprep.mubr.bf16.mxu0 0
      %2009 = vmatmul.mubr.bf16.gmra.mrb[0].mxu0 %v1863
      %v2010 = vpop.f32.mrb[0].mxu0
      %v2011 = vadd.f32 %v1829, %v2010
      %v2012 = vpop.f32.mrb[0].mxu0
      %v2013 = vpop.f32.mrb[0].mxu0
      %v2014 = vadd.f32 %v1829, %v2013
      %v2015 = vpop.f32.mrb[0].mxu0
      %2016 = vmatprep.mubr.bf16.mxu0 0
      %2017 = vmatmul.mubr.bf16.gmra.mrb[0].mxu0 %v1865
      %v2018 = vpop.f32.mrb[0].mxu0
      %v2019 = vadd.f32 %v1829, %v2018
      %v2020 = vpop.f32.mrb[0].mxu0
      %v2021 = vpop.f32.mrb[0].mxu0
      %v2022 = vadd.f32 %v1829, %v2021
      %v2023 = vpop.f32.mrb[0].mxu0
      %2024 = vmatprep.mubr.bf16.mxu0 0
      %2025 = vmatmul.mubr.bf16.gmra.mrb[0].mxu0 %v1867
      %v2026 = vpop.f32.mrb[0].mxu0
      %v2027 = vadd.f32 %v1829, %v2026
      %v2028 = vpop.f32.mrb[0].mxu0
      %v2029 = vpop.f32.mrb[0].mxu0
      %v2030 = vadd.f32 %v1829, %v2029
      %v2031 = vpop.f32.mrb[0].mxu0
      %2032 = vmatprep.mubr.bf16.mxu0 0
      %2033 = vmatmul.mubr.bf16.gmra.mrb[0].mxu0 %v1869
      %v2034 = vpop.f32.mrb[0].mxu0
      %v2035 = vadd.f32 %v1829, %v2034
      %v2036 = vpop.f32.mrb[0].mxu0
      %v2037 = vpop.f32.mrb[0].mxu0
      %v2038 = vadd.f32 %v1829, %v2037
      %v2039 = vpop.f32.mrb[0].mxu0
      %2040 = vmatprep.mubr.bf16.mxu0 0
      %2041 = vmatmul.mubr.bf16.gmra.mrb[0].mxu0 %v1871
      %v2042 = vpop.f32.mrb[0].mxu0
      %v2043 = vadd.f32 %v1829, %v2042
      %v2044 = vpop.f32.mrb[0].mxu0
      %v2045 = vpop.f32.mrb[0].mxu0
      %v2046 = vadd.f32 %v1829, %v2045
      %v2047 = vpop.f32.mrb[0].mxu0
      %2048 = vmatprep.mubr.bf16.mxu0 0
      %2049 = vmatmul.mubr.bf16.gmra.mrb[0].mxu0 %v1873
      %v2050 = vpop.f32.mrb[0].mxu0
      %v2051 = vadd.f32 %v1829, %v2050
      %v2052 = vpop.f32.mrb[0].mxu0
      %v2053 = vpop.f32.mrb[0].mxu0
      %v2054 = vadd.f32 %v1829, %v2053
      %v2055 = vpop.f32.mrb[0].mxu0
      %2056 = vmatprep.mubr.bf16.mxu0 0
      %2057 = vmatmul.mubr.bf16.gmra.mrb[0].mxu0 %v1875
      %v2058 = vpop.f32.mrb[0].mxu0
      %v2059 = vadd.f32 %v1829, %v2058
      %v2060 = vpop.f32.mrb[0].mxu0
      %v2061 = vpop.f32.mrb[0].mxu0
      %v2062 = vadd.f32 %v1829, %v2061
      %v2063 = vpop.f32.mrb[0].mxu0
      %2064 = vmatprep.mubr.bf16.mxu0 0
      %2065 = vmatmul.mubr.bf16.gmra.mrb[0].mxu0 %v1877
      %v2066 = vpop.f32.mrb[0].mxu0
      %v2067 = vadd.f32 %v1829, %v2066
      %v2068 = vpop.f32.mrb[0].mxu0
      %v2069 = vpop.f32.mrb[0].mxu0
      %v2070 = vadd.f32 %v1829, %v2069
      %v2071 = vpop.f32.mrb[0].mxu0
      %2072 = vmatprep.mubr.bf16.mxu0 0
      %2073 = vmatmul.mubr.bf16.gmra.mrb[0].mxu0 %v1879
      %v2074 = vpop.f32.mrb[0].mxu0
      %v2075 = vadd.f32 %v1829, %v2074
      %v2076 = vpop.f32.mrb[0].mxu0
      %v2077 = vpop.f32.mrb[0].mxu0
      %v2078 = vadd.f32 %v1829, %v2077
      %v2079 = vpop.f32.mrb[0].mxu0
      %2080 = vmatprep.mubr.bf16.mxu0 0
      %2081 = vmatmul.mubr.bf16.gmra.mrb[0].mxu0 %v1881
      %v2082 = vpop.f32.mrb[0].mxu0
      %v2083 = vadd.f32 %v1829, %v2082
      %v2084 = vpop.f32.mrb[0].mxu0
      %v2085 = vpop.f32.mrb[0].mxu0
      %v2086 = vadd.f32 %v1829, %v2085
      %v2087 = vpop.f32.mrb[0].mxu0
      %2088 = vmatprep.mubr.bf16.mxu0 0
      %2089 = vmatmul.mubr.bf16.gmra.mrb[0].mxu0 %v1883
      %v2090 = vpop.f32.mrb[0].mxu0
      %v2091 = vadd.f32 %v1829, %v2090
      %v2092 = vpop.f32.mrb[0].mxu0
      %v2093 = vpop.f32.mrb[0].mxu0
      %v2094 = vadd.f32 %v1829, %v2093
      %v2095 = vpop.f32.mrb[0].mxu0
      %2096 = vmatprep.mubr.bf16.mxu0 0
      %2097 = vmatmul.mubr.bf16.gmra.mrb[0].mxu0 %v1885
      %v2098 = vpop.f32.mrb[0].mxu0
      %v2099 = vadd.f32 %v1829, %v2098
      %v2100 = vpop.f32.mrb[0].mxu0
      %v2101 = vpop.f32.mrb[0].mxu0
      %v2102 = vadd.f32 %v1829, %v2101
      %v2103 = vpop.f32.mrb[0].mxu0
      %2104 = vmatprep.mubr.bf16.mxu0 0
      %2105 = vmatmul.mubr.bf16.gmra.mrb[0].mxu0 %v1887
      %v2106 = vpop.f32.mrb[0].mxu0
      %v2107 = vadd.f32 %v1829, %v2106
      %v2108 = vpop.f32.mrb[0].mxu0
      %v2109 = vpop.f32.mrb[0].mxu0
      %v2110 = vpop.f32.mrb[0].mxu0
      %2111 = vdwg.mxu0
      %vm2112 = vcmp.ge.f32.partialorder %v1931, 0.0
      %vm2113 = vcmp.ge.f32.partialorder %v1934, 0.0
      %vm2114 = vcmp.ge.f32.partialorder %v1939, 0.0
      %vm2115 = vcmp.ge.f32.partialorder %v1942, 0.0
      %vm2116 = vcmp.ge.f32.partialorder %v1947, 0.0
      %vm2117 = vcmp.ge.f32.partialorder %v1950, 0.0
      %vm2118 = vcmp.ge.f32.partialorder %v1955, 0.0
      %vm2119 = vcmp.ge.f32.partialorder %v1958, 0.0
      %vm2120 = vcmp.ge.f32.partialorder %v1963, 0.0
      %vm2121 = vcmp.ge.f32.partialorder %v1966, 0.0
      %vm2122 = vcmp.ge.f32.partialorder %v1971, 0.0
      %vm2123 = vcmp.ge.f32.partialorder %v1974, 0.0
      %vm2124 = vcmp.ge.f32.partialorder %v1979, 0.0
      %vm2125 = vcmp.ge.f32.partialorder %v1982, 0.0
      %vm2126 = vcmp.ge.f32.partialorder %v1987, 0.0
      %vm2127 = vcmp.ge.f32.partialorder %v1990, 0.0
      %vm2128 = vcmp.ge.f32.partialorder %v1995, 0.0
      %vm2129 = vcmp.ge.f32.partialorder %v1998, 0.0
      %vm2130 = vcmp.ge.f32.partialorder %v2003, 0.0
      %vm2131 = vcmp.ge.f32.partialorder %v2006, 0.0
      %vm2132 = vcmp.ge.f32.partialorder %v2011, 0.0
      %vm2133 = vcmp.ge.f32.partialorder %v2014, 0.0
      %vm2134 = vcmp.ge.f32.partialorder %v2019, 0.0
      %vm2135 = vcmp.ge.f32.partialorder %v2022, 0.0
      %vm2136 = vcmp.ge.f32.partialorder %v2027, 0.0
      %vm2137 = vcmp.ge.f32.partialorder %v2030, 0.0
      %vm2138 = vcmp.ge.f32.partialorder %v2035, 0.0
      %vm2139 = vcmp.ge.f32.partialorder %v2038, 0.0
      %vm2140 = vcmp.ge.f32.partialorder %v2043, 0.0
      %vm2141 = vcmp.ge.f32.partialorder %v2046, 0.0
      %vm2142 = vcmp.ge.f32.partialorder %v2051, 0.0
      %vm2143 = vcmp.ge.f32.partialorder %v2054, 0.0
      %vm2144 = vcmp.ge.f32.partialorder %v2059, 0.0
      %vm2145 = vcmp.ge.f32.partialorder %v2062, 0.0
      %vm2146 = vcmp.ge.f32.partialorder %v2067, 0.0
      %vm2147 = vcmp.ge.f32.partialorder %v2070, 0.0
      %vm2148 = vcmp.ge.f32.partialorder %v2075, 0.0
      %vm2149 = vcmp.ge.f32.partialorder %v2078, 0.0
      %vm2150 = vcmp.ge.f32.partialorder %v2083, 0.0
      %vm2151 = vcmp.ge.f32.partialorder %v2086, 0.0
      %vm2152 = vcmp.ge.f32.partialorder %v2091, 0.0
      %vm2153 = vcmp.ge.f32.partialorder %v2094, 0.0
      %vm2154 = vcmp.ge.f32.partialorder %v2099, 0.0
      %vm2155 = vcmp.ge.f32.partialorder %v2102, 0.0
      %vm2156 = vcmp.ge.f32.partialorder %v2107, 0.0
      %v2157 = vmul.f32 %v1931, 0.1
      %v2158 = vmul.f32 %v1934, 0.1
      %v2159 = vmul.f32 %v1939, 0.1
      %v2160 = vmul.f32 %v1942, 0.1
      %v2161 = vmul.f32 %v1947, 0.1
      %v2162 = vmul.f32 %v1950, 0.1
      %v2163 = vmul.f32 %v1955, 0.1
      %v2164 = vmul.f32 %v1958, 0.1
      %v2165 = vmul.f32 %v1963, 0.1
      %v2166 = vmul.f32 %v1966, 0.1
      %v2167 = vmul.f32 %v1971, 0.1
      %v2168 = vmul.f32 %v1974, 0.1
      %v2169 = vmul.f32 %v1979, 0.1
      %v2170 = vmul.f32 %v1982, 0.1
      %v2171 = vmul.f32 %v1987, 0.1
      %v2172 = vmul.f32 %v1990, 0.1
      %v2173 = vmul.f32 %v1995, 0.1
      %v2174 = vmul.f32 %v1998, 0.1
      %v2175 = vmul.f32 %v2003, 0.1
      %v2176 = vmul.f32 %v2006, 0.1
      %v2177 = vmul.f32 %v2011, 0.1
      %v2178 = vmul.f32 %v2014, 0.1
      %v2179 = vmul.f32 %v2019, 0.1
      %v2180 = vmul.f32 %v2022, 0.1
      %v2181 = vmul.f32 %v2027, 0.1
      %v2182 = vmul.f32 %v2030, 0.1
      %v2183 = vmul.f32 %v2035, 0.1
      %v2184 = vmul.f32 %v2038, 0.1
      %v2185 = vmul.f32 %v2043, 0.1
      %v2186 = vmul.f32 %v2046, 0.1
      %v2187 = vmul.f32 %v2051, 0.1
      %v2188 = vmul.f32 %v2054, 0.1
      %v2189 = vmul.f32 %v2059, 0.1
      %v2190 = vmul.f32 %v2062, 0.1
      %v2191 = vmul.f32 %v2067, 0.1
      %v2192 = vmul.f32 %v2070, 0.1
      %v2193 = vmul.f32 %v2075, 0.1
      %v2194 = vmul.f32 %v2078, 0.1
      %v2195 = vmul.f32 %v2083, 0.1
      %v2196 = vmul.f32 %v2086, 0.1
      %v2197 = vmul.f32 %v2091, 0.1
      %v2198 = vmul.f32 %v2094, 0.1
      %v2199 = vmul.f32 %v2099, 0.1
      %v2200 = vmul.f32 %v2102, 0.1
      %v2201 = vmul.f32 %v2107, 0.1
      %v2202 = vsel %vm2112, %v1931, %v2157
      %v2203 = vsel %vm2113, %v1934, %v2158
      %v2204 = vsel %vm2114, %v1939, %v2159
      %v2205 = vsel %vm2115, %v1942, %v2160
      %v2206 = vsel %vm2116, %v1947, %v2161
      %v2207 = vsel %vm2117, %v1950, %v2162
      %v2208 = vsel %vm2118, %v1955, %v2163
      %v2209 = vsel %vm2119, %v1958, %v2164
      %v2210 = vsel %vm2120, %v1963, %v2165
      %v2211 = vsel %vm2121, %v1966, %v2166
      %v2212 = vsel %vm2122, %v1971, %v2167
      %v2213 = vsel %vm2123, %v1974, %v2168
      %v2214 = vsel %vm2124, %v1979, %v2169
      %v2215 = vsel %vm2125, %v1982, %v2170
      %v2216 = vsel %vm2126, %v1987, %v2171
      %v2217 = vsel %vm2127, %v1990, %v2172
      %v2218 = vsel %vm2128, %v1995, %v2173
      %v2219 = vsel %vm2129, %v1998, %v2174
      %v2220 = vsel %vm2130, %v2003, %v2175
      %v2221 = vsel %vm2131, %v2006, %v2176
      %v2222 = vsel %vm2132, %v2011, %v2177
      %v2223 = vsel %vm2133, %v2014, %v2178
      %v2224 = vsel %vm2134, %v2019, %v2179
      %v2225 = vsel %vm2135, %v2022, %v2180
      %v2226 = vsel %vm2136, %v2027, %v2181
      %v2227 = vsel %vm2137, %v2030, %v2182
      %v2228 = vsel %vm2138, %v2035, %v2183
      %v2229 = vsel %vm2139, %v2038, %v2184
      %v2230 = vsel %vm2140, %v2043, %v2185
      %v2231 = vsel %vm2141, %v2046, %v2186
      %v2232 = vsel %vm2142, %v2051, %v2187
      %v2233 = vsel %vm2143, %v2054, %v2188
      %v2234 = vsel %vm2144, %v2059, %v2189
      %v2235 = vsel %vm2145, %v2062, %v2190
      %v2236 = vsel %vm2146, %v2067, %v2191
      %v2237 = vsel %vm2147, %v2070, %v2192
      %v2238 = vsel %vm2148, %v2075, %v2193
      %v2239 = vsel %vm2149, %v2078, %v2194
      %v2240 = vsel %vm2150, %v2083, %v2195
      %v2241 = vsel %vm2151, %v2086, %v2196
      %v2242 = vsel %vm2152, %v2091, %v2197
      %v2243 = vsel %vm2153, %v2094, %v2198
      %v2244 = vsel %vm2154, %v2099, %v2199
      %v2245 = vsel %vm2155, %v2102, %v2200
      %v2246 = vsel %vm2156, %v2107, %v2201
      %v2247 = vpack.c.bf16 %v2203, %v2202
      %v2248 = vpack.c.bf16 %v2205, %v2204
      %v2249 = vpack.c.bf16 %v2207, %v2206
      %v2250 = vpack.c.bf16 %v2209, %v2208
      %v2251 = vpack.c.bf16 %v2211, %v2210
      %v2252 = vpack.c.bf16 %v2213, %v2212
      %v2253 = vpack.c.bf16 %v2215, %v2214
      %v2254 = vpack.c.bf16 %v2217, %v2216
      %v2255 = vpack.c.bf16 %v2219, %v2218
      %v2256 = vpack.c.bf16 %v2221, %v2220
      %v2257 = vpack.c.bf16 %v2223, %v2222
      %v2258 = vpack.c.bf16 %v2225, %v2224
      %v2259 = vpack.c.bf16 %v2227, %v2226
      %v2260 = vpack.c.bf16 %v2229, %v2228
      %v2261 = vpack.c.bf16 %v2231, %v2230
      %v2262 = vpack.c.bf16 %v2233, %v2232
      %v2263 = vpack.c.bf16 %v2235, %v2234
      %v2264 = vpack.c.bf16 %v2237, %v2236
      %v2265 = vpack.c.bf16 %v2239, %v2238
      %v2266 = vpack.c.bf16 %v2241, %v2240
      %v2267 = vpack.c.bf16 %v2243, %v2242
      %v2268 = vpack.c.bf16 %v2245, %v2244
      %v2269 = vpack.c.bf16 %v2246, %v2246
      %v2270 = vld [vmem:[%s3] sm:$0xf]
      %v2271 = vld [vmem:[%s3 + $0x4] sm:$0xf]
      %v2272 = vld [vmem:[%s3 + $0x8] sm:$0xf]
      %v2273 = vld [vmem:[%s3 + $0xc] sm:$0xf]
      %v2274 = vld [vmem:[%s3 + $0x10] sm:$0xf]
      %v2275 = vld [vmem:[%s3 + $0x14] sm:$0xf]
      %v2276 = vld [vmem:[%s3 + $0x18] sm:$0xf]
      %v2277 = vld [vmem:[%s3 + $0x1c] sm:$0xf]
      %v2278 = vld [vmem:[%s3 + $0x20] sm:$0xf]
      %v2279 = vld [vmem:[%s3 + $0x24] sm:$0xf]
      %v2280 = vld [vmem:[%s3 + $0x28] sm:$0xf]
      %v2281 = vld [vmem:[%s3 + $0x2c] sm:$0xf]
      %v2282 = vld [vmem:[%s3 + $0x30] sm:$0xf]
      %v2283 = vld [vmem:[%s3 + $0x34] sm:$0xf]
      %v2284 = vld [vmem:[%s3 + $0x38] sm:$0xf]
      %v2285 = vld [vmem:[%s3 + $0x3c] sm:$0xf]
      %v2286 = vld [vmem:[%s3 + $0x40] sm:$0xf]
      %v2287 = vld [vmem:[%s3 + $0x44] sm:$0xf]
      %v2288 = vld [vmem:[%s3 + $0x48] sm:$0xf]
      %v2289 = vld [vmem:[%s3 + $0x4c] sm:$0xf]
      %v2290 = vld [vmem:[%s3 + $0x50] sm:$0xf]
      %v2291 = vld [vmem:[%s3 + $0x54] sm:$0xf]
      %v2292 = vld [vmem:[%s3 + $0x58] sm:$0xf]
      %v2293 = vld [vmem:[%s3 + $0x5c] sm:$0xf]
      %v2294 = vld [vmem:[%s3 + $0x60] sm:$0xf]
      %v2295 = vld [vmem:[%s3 + $0x64] sm:$0xf]
      %v2296 = vld [vmem:[%s3 + $0x68] sm:$0xf]
      %v2297 = vld [vmem:[%s3 + $0x6c] sm:$0xf]
      %v2298 = vld [vmem:[%s3 + $0x70] sm:$0xf]
      %v2299 = vld [vmem:[%s3 + $0x74] sm:$0xf]
      %v2300 = vld [vmem:[%s3 + $0x78] sm:$0xf]
      %v2301 = vld [vmem:[%s3 + $0x7c] sm:$0xf]
      %v2302 = vld [vmem:[%s3 + $0x80] sm:$0xf]
      %v2303 = vld [vmem:[%s3 + $0x84] sm:$0xf]
      %v2304 = vld [vmem:[%s3 + $0x88] sm:$0xf]
      %v2305 = vld [vmem:[%s3 + $0x8c] sm:$0xf]
      %v2306 = vld [vmem:[%s4] sm:$0x1]
      %v2308 = vshrl.u32 %v2247, 16
      %v2310 = vshll.u32 %v2247, 16
      %v2312 = vrot.slane %v2310, 1
      %v2313 = vor.u32 %v2308, %v2312
      %v2315 = vshll.u32 %v2248, 16
      %v2317 = vrot.slane %v2315, 1
      %v2318 = vsel %vm394, %v2313, %v2317
      %v2319 = vshrl.u32 %v2248, 16
      %v2321 = vor.u32 %v2319, %v2317
      %v2323 = vshll.u32 %v2249, 16
      %v2325 = vrot.slane %v2323, 1
      %v2326 = vsel %vm394, %v2321, %v2325
      %v2327 = vshrl.u32 %v2249, 16
      %v2329 = vor.u32 %v2327, %v2325
      %v2331 = vshll.u32 %v2250, 16
      %v2333 = vrot.slane %v2331, 1
      %v2334 = vsel %vm394, %v2329, %v2333
      %v2335 = vshrl.u32 %v2250, 16
      %v2337 = vor.u32 %v2335, %v2333
      %v2339 = vshll.u32 %v2251, 16
      %v2341 = vrot.slane %v2339, 1
      %v2342 = vsel %vm394, %v2337, %v2341
      %v2343 = vshrl.u32 %v2251, 16
      %v2345 = vor.u32 %v2343, %v2341
      %v2347 = vshll.u32 %v2252, 16
      %v2349 = vrot.slane %v2347, 1
      %v2350 = vsel %vm394, %v2345, %v2349
      %v2351 = vshrl.u32 %v2252, 16
      %v2353 = vor.u32 %v2351, %v2349
      %v2355 = vshll.u32 %v2253, 16
      %v2357 = vrot.slane %v2355, 1
      %v2358 = vsel %vm394, %v2353, %v2357
      %v2359 = vshrl.u32 %v2253, 16
      %v2361 = vor.u32 %v2359, %v2357
      %v2363 = vshll.u32 %v2254, 16
      %v2365 = vrot.slane %v2363, 1
      %v2366 = vsel %vm394, %v2361, %v2365
      %v2367 = vshrl.u32 %v2254, 16
      %v2369 = vor.u32 %v2367, %v2365
      %v2371 = vshll.u32 %v2255, 16
      %v2373 = vrot.slane %v2371, 1
      %v2374 = vsel %vm394, %v2369, %v2373
      %v2375 = vshrl.u32 %v2255, 16
      %v2377 = vor.u32 %v2375, %v2373
      %v2379 = vshll.u32 %v2256, 16
      %v2381 = vrot.slane %v2379, 1
      %v2382 = vsel %vm394, %v2377, %v2381
      %v2383 = vshrl.u32 %v2256, 16
      %v2385 = vor.u32 %v2383, %v2381
      %v2387 = vshll.u32 %v2257, 16
      %v2389 = vrot.slane %v2387, 1
      %v2390 = vsel %vm394, %v2385, %v2389
      %v2391 = vshrl.u32 %v2257, 16
      %v2393 = vor.u32 %v2391, %v2389
      %v2395 = vshll.u32 %v2258, 16
      %v2397 = vrot.slane %v2395, 1
      %v2398 = vsel %vm394, %v2393, %v2397
      %v2399 = vshrl.u32 %v2258, 16
      %v2401 = vor.u32 %v2399, %v2397
      %v2403 = vshll.u32 %v2259, 16
      %v2405 = vrot.slane %v2403, 1
      %v2406 = vsel %vm394, %v2401, %v2405
      %v2407 = vshrl.u32 %v2259, 16
      %v2409 = vor.u32 %v2407, %v2405
      %v2411 = vshll.u32 %v2260, 16
      %v2413 = vrot.slane %v2411, 1
      %v2414 = vsel %vm394, %v2409, %v2413
      %v2415 = vshrl.u32 %v2260, 16
      %v2417 = vor.u32 %v2415, %v2413
      %v2419 = vshll.u32 %v2261, 16
      %v2421 = vrot.slane %v2419, 1
      %v2422 = vsel %vm394, %v2417, %v2421
      %v2423 = vshrl.u32 %v2261, 16
      %v2425 = vor.u32 %v2423, %v2421
      %v2427 = vshll.u32 %v2262, 16
      %v2429 = vrot.slane %v2427, 1
      %v2430 = vsel %vm394, %v2425, %v2429
      %v2431 = vshrl.u32 %v2262, 16
      %v2433 = vor.u32 %v2431, %v2429
      %v2435 = vshll.u32 %v2263, 16
      %v2437 = vrot.slane %v2435, 1
      %v2438 = vsel %vm394, %v2433, %v2437
      %v2439 = vshrl.u32 %v2263, 16
      %v2441 = vor.u32 %v2439, %v2437
      %v2443 = vshll.u32 %v2264, 16
      %v2445 = vrot.slane %v2443, 1
      %v2446 = vsel %vm394, %v2441, %v2445
      %v2447 = vshrl.u32 %v2264, 16
      %v2449 = vor.u32 %v2447, %v2445
      %v2451 = vshll.u32 %v2265, 16
      %v2453 = vrot.slane %v2451, 1
      %v2454 = vsel %vm394, %v2449, %v2453
      %v2455 = vshrl.u32 %v2265, 16
      %v2457 = vor.u32 %v2455, %v2453
      %v2459 = vshll.u32 %v2266, 16
      %v2461 = vrot.slane %v2459, 1
      %v2462 = vsel %vm394, %v2457, %v2461
      %v2463 = vshrl.u32 %v2266, 16
      %v2465 = vor.u32 %v2463, %v2461
      %2466 = vrot.lane.b32.xlu0 %v2318, 32
      %v2467 = vpop.permute.xlu0 %2466
      %2468 = vrot.lane.b32.xlu0 %v2326, 32
      %v2469 = vpop.permute.xlu0 %2468
      %2470 = vrot.lane.b32.xlu0 %v2334, 32
      %v2471 = vpop.permute.xlu0 %2470
      %2472 = vrot.lane.b32.xlu0 %v2342, 32
      %v2473 = vpop.permute.xlu0 %2472
      %2474 = vrot.lane.b32.xlu0 %v2350, 32
      %v2475 = vpop.permute.xlu0 %2474
      %2476 = vrot.lane.b32.xlu0 %v2358, 32
      %v2477 = vpop.permute.xlu0 %2476
      %2478 = vrot.lane.b32.xlu0 %v2366, 32
      %v2479 = vpop.permute.xlu0 %2478
      %2480 = vrot.lane.b32.xlu0 %v2374, 32
      %v2481 = vpop.permute.xlu0 %2480
      %2482 = vrot.lane.b32.xlu0 %v2382, 32
      %v2483 = vpop.permute.xlu0 %2482
      %2484 = vrot.lane.b32.xlu0 %v2390, 32
      %v2485 = vpop.permute.xlu0 %2484
      %2486 = vrot.lane.b32.xlu0 %v2398, 32
      %v2487 = vpop.permute.xlu0 %2486
      %2488 = vrot.lane.b32.xlu0 %v2406, 32
      %v2489 = vpop.permute.xlu0 %2488
      %2490 = vrot.lane.b32.xlu0 %v2414, 32
      %v2491 = vpop.permute.xlu0 %2490
      %2492 = vrot.lane.b32.xlu0 %v2422, 32
      %v2493 = vpop.permute.xlu0 %2492
      %2494 = vrot.lane.b32.xlu0 %v2430, 32
      %v2495 = vpop.permute.xlu0 %2494
      %2496 = vrot.lane.b32.xlu0 %v2438, 32
      %v2497 = vpop.permute.xlu0 %2496
      %2498 = vrot.lane.b32.xlu0 %v2446, 32
      %v2499 = vpop.permute.xlu0 %2498
      %2500 = vrot.lane.b32.xlu0 %v2454, 32
      %v2501 = vpop.permute.xlu0 %2500
      %2502 = vrot.lane.b32.xlu0 %v2462, 32
      %v2503 = vpop.permute.xlu0 %2502
      %2504 = vrot.lane.b32.xlu0 %v2465, 32
      %v2505 = vpop.permute.xlu0 %2504
      %v2526 = vrot.slane %v2247, 1
      %v2527 = vrot.slane %v2248, 1
      %v2528 = vsel %vm624, %v2526, %v2527
      %v2529 = vrot.slane %v2249, 1
      %v2530 = vsel %vm624, %v2527, %v2529
      %v2531 = vrot.slane %v2250, 1
      %v2532 = vsel %vm624, %v2529, %v2531
      %v2533 = vrot.slane %v2251, 1
      %v2534 = vsel %vm624, %v2531, %v2533
      %v2535 = vrot.slane %v2252, 1
      %v2536 = vsel %vm624, %v2533, %v2535
      %v2537 = vrot.slane %v2253, 1
      %v2538 = vsel %vm624, %v2535, %v2537
      %v2539 = vrot.slane %v2254, 1
      %v2540 = vsel %vm624, %v2537, %v2539
      %v2541 = vrot.slane %v2255, 1
      %v2542 = vsel %vm624, %v2539, %v2541
      %v2543 = vrot.slane %v2256, 1
      %v2544 = vsel %vm624, %v2541, %v2543
      %v2545 = vrot.slane %v2257, 1
      %v2546 = vsel %vm624, %v2543, %v2545
      %v2547 = vrot.slane %v2258, 1
      %v2548 = vsel %vm624, %v2545, %v2547
      %v2549 = vrot.slane %v2259, 1
      %v2550 = vsel %vm624, %v2547, %v2549
      %v2551 = vrot.slane %v2260, 1
      %v2552 = vsel %vm624, %v2549, %v2551
      %v2553 = vrot.slane %v2261, 1
      %v2554 = vsel %vm624, %v2551, %v2553
      %v2555 = vrot.slane %v2262, 1
      %v2556 = vsel %vm624, %v2553, %v2555
      %v2557 = vrot.slane %v2263, 1
      %v2558 = vsel %vm624, %v2555, %v2557
      %v2559 = vrot.slane %v2264, 1
      %v2560 = vsel %vm624, %v2557, %v2559
      %v2561 = vrot.slane %v2265, 1
      %v2562 = vsel %vm624, %v2559, %v2561
      %v2563 = vrot.slane %v2266, 1
      %v2564 = vsel %vm624, %v2561, %v2563
      %2565 = vrot.lane.b32.xlu0 %v2528, 64
      %v2566 = vpop.permute.xlu0 %2565
      %2567 = vrot.lane.b32.xlu0 %v2530, 64
      %v2568 = vpop.permute.xlu0 %2567
      %2569 = vrot.lane.b32.xlu0 %v2532, 64
      %v2570 = vpop.permute.xlu0 %2569
      %2571 = vrot.lane.b32.xlu0 %v2534, 64
      %v2572 = vpop.permute.xlu0 %2571
      %2573 = vrot.lane.b32.xlu0 %v2536, 64
      %v2574 = vpop.permute.xlu0 %2573
      %2575 = vrot.lane.b32.xlu0 %v2538, 64
      %v2576 = vpop.permute.xlu0 %2575
      %2577 = vrot.lane.b32.xlu0 %v2540, 64
      %v2578 = vpop.permute.xlu0 %2577
      %2579 = vrot.lane.b32.xlu0 %v2542, 64
      %v2580 = vpop.permute.xlu0 %2579
      %2581 = vrot.lane.b32.xlu0 %v2544, 64
      %v2582 = vpop.permute.xlu0 %2581
      %2583 = vrot.lane.b32.xlu0 %v2546, 64
      %v2584 = vpop.permute.xlu0 %2583
      %2585 = vrot.lane.b32.xlu0 %v2548, 64
      %v2586 = vpop.permute.xlu0 %2585
      %2587 = vrot.lane.b32.xlu0 %v2550, 64
      %v2588 = vpop.permute.xlu0 %2587
      %2589 = vrot.lane.b32.xlu0 %v2552, 64
      %v2590 = vpop.permute.xlu0 %2589
      %2591 = vrot.lane.b32.xlu0 %v2554, 64
      %v2592 = vpop.permute.xlu0 %2591
      %2593 = vrot.lane.b32.xlu0 %v2556, 64
      %v2594 = vpop.permute.xlu0 %2593
      %2595 = vrot.lane.b32.xlu0 %v2558, 64
      %v2596 = vpop.permute.xlu0 %2595
      %2597 = vrot.lane.b32.xlu0 %v2560, 64
      %v2598 = vpop.permute.xlu0 %2597
      %2599 = vrot.lane.b32.xlu0 %v2562, 64
      %v2600 = vpop.permute.xlu0 %2599
      %2601 = vrot.lane.b32.xlu0 %v2564, 64
      %v2602 = vpop.permute.xlu0 %2601
      %2603 = vrot.lane.b32.xlu0 %v2563, 64
      %v2604 = vpop.permute.xlu0 %2603
      %v2606 = vrot.slane %v2248, 2
      %v2607 = vrot.slane %v2249, 2
      %v2608 = vsel %vm724, %v2606, %v2607
      %v2609 = vrot.slane %v2250, 2
      %v2610 = vsel %vm724, %v2607, %v2609
      %v2611 = vrot.slane %v2251, 2
      %v2612 = vsel %vm724, %v2609, %v2611
      %v2613 = vrot.slane %v2252, 2
      %v2614 = vsel %vm724, %v2611, %v2613
      %v2615 = vrot.slane %v2253, 2
      %v2616 = vsel %vm724, %v2613, %v2615
      %v2617 = vrot.slane %v2254, 2
      %v2618 = vsel %vm724, %v2615, %v2617
      %v2619 = vrot.slane %v2255, 2
      %v2620 = vsel %vm724, %v2617, %v2619
      %v2621 = vrot.slane %v2256, 2
      %v2622 = vsel %vm724, %v2619, %v2621
      %v2623 = vrot.slane %v2257, 2
      %v2624 = vsel %vm724, %v2621, %v2623
      %v2625 = vrot.slane %v2258, 2
      %v2626 = vsel %vm724, %v2623, %v2625
      %v2627 = vrot.slane %v2259, 2
      %v2628 = vsel %vm724, %v2625, %v2627
      %v2629 = vrot.slane %v2260, 2
      %v2630 = vsel %vm724, %v2627, %v2629
      %v2631 = vrot.slane %v2261, 2
      %v2632 = vsel %vm724, %v2629, %v2631
      %v2633 = vrot.slane %v2262, 2
      %v2634 = vsel %vm724, %v2631, %v2633
      %v2635 = vrot.slane %v2263, 2
      %v2636 = vsel %vm724, %v2633, %v2635
      %v2637 = vrot.slane %v2264, 2
      %v2638 = vsel %vm724, %v2635, %v2637
      %v2639 = vrot.slane %v2265, 2
      %v2640 = vsel %vm724, %v2637, %v2639
      %v2641 = vrot.slane %v2266, 2
      %v2642 = vsel %vm724, %v2639, %v2641
      %v2643 = vrot.slane %v2267, 2
      %v2644 = vsel %vm724, %v2641, %v2643
      %2645 = vrot.lane.b32.xlu0 %v2608, 96
      %v2646 = vpop.permute.xlu0 %2645
      %2647 = vrot.lane.b32.xlu0 %v2610, 96
      %v2648 = vpop.permute.xlu0 %2647
      %2649 = vrot.lane.b32.xlu0 %v2612, 96
      %v2650 = vpop.permute.xlu0 %2649
      %2651 = vrot.lane.b32.xlu0 %v2614, 96
      %v2652 = vpop.permute.xlu0 %2651
      %2653 = vrot.lane.b32.xlu0 %v2616, 96
      %v2654 = vpop.permute.xlu0 %2653
      %2655 = vrot.lane.b32.xlu0 %v2618, 96
      %v2656 = vpop.permute.xlu0 %2655
      %2657 = vrot.lane.b32.xlu0 %v2620, 96
      %v2658 = vpop.permute.xlu0 %2657
      %2659 = vrot.lane.b32.xlu0 %v2622, 96
      %v2660 = vpop.permute.xlu0 %2659
      %2661 = vrot.lane.b32.xlu0 %v2624, 96
      %v2662 = vpop.permute.xlu0 %2661
      %2663 = vrot.lane.b32.xlu0 %v2626, 96
      %v2664 = vpop.permute.xlu0 %2663
      %2665 = vrot.lane.b32.xlu0 %v2628, 96
      %v2666 = vpop.permute.xlu0 %2665
      %2667 = vrot.lane.b32.xlu0 %v2630, 96
      %v2668 = vpop.permute.xlu0 %2667
      %2669 = vrot.lane.b32.xlu0 %v2632, 96
      %v2670 = vpop.permute.xlu0 %2669
      %2671 = vrot.lane.b32.xlu0 %v2634, 96
      %v2672 = vpop.permute.xlu0 %2671
      %2673 = vrot.lane.b32.xlu0 %v2636, 96
      %v2674 = vpop.permute.xlu0 %2673
      %2675 = vrot.lane.b32.xlu0 %v2638, 96
      %v2676 = vpop.permute.xlu0 %2675
      %2677 = vrot.lane.b32.xlu0 %v2640, 96
      %v2678 = vpop.permute.xlu0 %2677
      %2679 = vrot.lane.b32.xlu0 %v2642, 96
      %v2680 = vpop.permute.xlu0 %2679
      %2681 = vrot.lane.b32.xlu0 %v2644, 96
      %v2682 = vpop.permute.xlu0 %2681
      %2683 = vrot.lane.b32.xlu0 %v2643, 96
      %v2684 = vpop.permute.xlu0 %2683
      %v2685 = vrot.slane %v2319, 2
      %v2686 = vrot.slane %v2315, 3
      %v2687 = vor.u32 %v2685, %v2686
      %v2688 = vrot.slane %v2327, 2
      %v2689 = vrot.slane %v2323, 3
      %v2690 = vor.u32 %v2688, %v2689
      %v2691 = vsel %vm816, %v2687, %v2690
      %v2692 = vrot.slane %v2335, 2
      %v2693 = vrot.slane %v2331, 3
      %v2694 = vor.u32 %v2692, %v2693
      %v2695 = vsel %vm816, %v2690, %v2694
      %v2696 = vrot.slane %v2343, 2
      %v2697 = vrot.slane %v2339, 3
      %v2698 = vor.u32 %v2696, %v2697
      %v2699 = vsel %vm816, %v2694, %v2698
      %v2700 = vrot.slane %v2351, 2
      %v2701 = vrot.slane %v2347, 3
      %v2702 = vor.u32 %v2700, %v2701
      %v2703 = vsel %vm816, %v2698, %v2702
      %v2704 = vrot.slane %v2359, 2
      %v2705 = vrot.slane %v2355, 3
      %v2706 = vor.u32 %v2704, %v2705
      %v2707 = vsel %vm816, %v2702, %v2706
      %v2708 = vrot.slane %v2367, 2
      %v2709 = vrot.slane %v2363, 3
      %v2710 = vor.u32 %v2708, %v2709
      %v2711 = vsel %vm816, %v2706, %v2710
      %v2712 = vrot.slane %v2375, 2
      %v2713 = vrot.slane %v2371, 3
      %v2714 = vor.u32 %v2712, %v2713
      %v2715 = vsel %vm816, %v2710, %v2714
      %v2716 = vrot.slane %v2383, 2
      %v2717 = vrot.slane %v2379, 3
      %v2718 = vor.u32 %v2716, %v2717
      %v2719 = vsel %vm816, %v2714, %v2718
      %v2720 = vrot.slane %v2391, 2
      %v2721 = vrot.slane %v2387, 3
      %v2722 = vor.u32 %v2720, %v2721
      %v2723 = vsel %vm816, %v2718, %v2722
      %v2724 = vrot.slane %v2399, 2
      %v2725 = vrot.slane %v2395, 3
      %v2726 = vor.u32 %v2724, %v2725
      %v2727 = vsel %vm816, %v2722, %v2726
      %v2728 = vrot.slane %v2407, 2
      %v2729 = vrot.slane %v2403, 3
      %v2730 = vor.u32 %v2728, %v2729
      %v2731 = vsel %vm816, %v2726, %v2730
      %v2732 = vrot.slane %v2415, 2
      %v2733 = vrot.slane %v2411, 3
      %v2734 = vor.u32 %v2732, %v2733
      %v2735 = vsel %vm816, %v2730, %v2734
      %v2736 = vrot.slane %v2423, 2
      %v2737 = vrot.slane %v2419, 3
      %v2738 = vor.u32 %v2736, %v2737
      %v2739 = vsel %vm816, %v2734, %v2738
      %v2740 = vrot.slane %v2431, 2
      %v2741 = vrot.slane %v2427, 3
      %v2742 = vor.u32 %v2740, %v2741
      %v2743 = vsel %vm816, %v2738, %v2742
      %v2744 = vrot.slane %v2439, 2
      %v2745 = vrot.slane %v2435, 3
      %v2746 = vor.u32 %v2744, %v2745
      %v2747 = vsel %vm816, %v2742, %v2746
      %v2748 = vrot.slane %v2447, 2
      %v2749 = vrot.slane %v2443, 3
      %v2750 = vor.u32 %v2748, %v2749
      %v2751 = vsel %vm816, %v2746, %v2750
      %v2752 = vrot.slane %v2455, 2
      %v2753 = vrot.slane %v2451, 3
      %v2754 = vor.u32 %v2752, %v2753
      %v2755 = vsel %vm816, %v2750, %v2754
      %v2756 = vrot.slane %v2463, 2
      %v2757 = vrot.slane %v2459, 3
      %v2758 = vor.u32 %v2756, %v2757
      %v2759 = vsel %vm816, %v2754, %v2758
      %v2761 = vshrl.u32 %v2267, 16
      %v2763 = vrot.slane %v2761, 2
      %v2764 = vshll.u32 %v2267, 16
      %v2766 = vrot.slane %v2764, 3
      %v2767 = vor.u32 %v2763, %v2766
      %v2768 = vsel %vm816, %v2758, %v2767
      %v2770 = vshll.u32 %v2268, 16
      %v2772 = vrot.slane %v2770, 3
      %v2773 = vsel %vm816, %v2767, %v2772
      %v2775 = vrot.slane %v2248, 3
      %v2776 = vrot.slane %v2249, 3
      %v2777 = vsel %vm964, %v2775, %v2776
      %v2778 = vrot.slane %v2250, 3
      %v2779 = vsel %vm964, %v2776, %v2778
      %v2780 = vrot.slane %v2251, 3
      %v2781 = vsel %vm964, %v2778, %v2780
      %v2782 = vrot.slane %v2252, 3
      %v2783 = vsel %vm964, %v2780, %v2782
      %v2784 = vrot.slane %v2253, 3
      %v2785 = vsel %vm964, %v2782, %v2784
      %v2786 = vrot.slane %v2254, 3
      %v2787 = vsel %vm964, %v2784, %v2786
      %v2788 = vrot.slane %v2255, 3
      %v2789 = vsel %vm964, %v2786, %v2788
      %v2790 = vrot.slane %v2256, 3
      %v2791 = vsel %vm964, %v2788, %v2790
      %v2792 = vrot.slane %v2257, 3
      %v2793 = vsel %vm964, %v2790, %v2792
      %v2794 = vrot.slane %v2258, 3
      %v2795 = vsel %vm964, %v2792, %v2794
      %v2796 = vrot.slane %v2259, 3
      %v2797 = vsel %vm964, %v2794, %v2796
      %v2798 = vrot.slane %v2260, 3
      %v2799 = vsel %vm964, %v2796, %v2798
      %v2800 = vrot.slane %v2261, 3
      %v2801 = vsel %vm964, %v2798, %v2800
      %v2802 = vrot.slane %v2262, 3
      %v2803 = vsel %vm964, %v2800, %v2802
      %v2804 = vrot.slane %v2263, 3
      %v2805 = vsel %vm964, %v2802, %v2804
      %v2806 = vrot.slane %v2264, 3
      %v2807 = vsel %vm964, %v2804, %v2806
      %v2808 = vrot.slane %v2265, 3
      %v2809 = vsel %vm964, %v2806, %v2808
      %v2810 = vrot.slane %v2266, 3
      %v2811 = vsel %vm964, %v2808, %v2810
      %v2812 = vrot.slane %v2267, 3
      %v2813 = vsel %vm964, %v2810, %v2812
      %v2814 = vrot.slane %v2268, 3
      %v2815 = vsel %vm964, %v2812, %v2814
      %2816 = vrot.lane.b32.xlu0 %v2777, 32
      %v2817 = vpop.permute.xlu0 %2816
      %2818 = vrot.lane.b32.xlu0 %v2779, 32
      %v2819 = vpop.permute.xlu0 %2818
      %2820 = vrot.lane.b32.xlu0 %v2781, 32
      %v2821 = vpop.permute.xlu0 %2820
      %2822 = vrot.lane.b32.xlu0 %v2783, 32
      %v2823 = vpop.permute.xlu0 %2822
      %2824 = vrot.lane.b32.xlu0 %v2785, 32
      %v2825 = vpop.permute.xlu0 %2824
      %2826 = vrot.lane.b32.xlu0 %v2787, 32
      %v2827 = vpop.permute.xlu0 %2826
      %2828 = vrot.lane.b32.xlu0 %v2789, 32
      %v2829 = vpop.permute.xlu0 %2828
      %2830 = vrot.lane.b32.xlu0 %v2791, 32
      %v2831 = vpop.permute.xlu0 %2830
      %2832 = vrot.lane.b32.xlu0 %v2793, 32
      %v2833 = vpop.permute.xlu0 %2832
      %2834 = vrot.lane.b32.xlu0 %v2795, 32
      %v2835 = vpop.permute.xlu0 %2834
      %2836 = vrot.lane.b32.xlu0 %v2797, 32
      %v2837 = vpop.permute.xlu0 %2836
      %2838 = vrot.lane.b32.xlu0 %v2799, 32
      %v2839 = vpop.permute.xlu0 %2838
      %2840 = vrot.lane.b32.xlu0 %v2801, 32
      %v2841 = vpop.permute.xlu0 %2840
      %2842 = vrot.lane.b32.xlu0 %v2803, 32
      %v2843 = vpop.permute.xlu0 %2842
      %2844 = vrot.lane.b32.xlu0 %v2805, 32
      %v2845 = vpop.permute.xlu0 %2844
      %2846 = vrot.lane.b32.xlu0 %v2807, 32
      %v2847 = vpop.permute.xlu0 %2846
      %2848 = vrot.lane.b32.xlu0 %v2809, 32
      %v2849 = vpop.permute.xlu0 %2848
      %2850 = vrot.lane.b32.xlu0 %v2811, 32
      %v2851 = vpop.permute.xlu0 %2850
      %2852 = vrot.lane.b32.xlu0 %v2813, 32
      %v2853 = vpop.permute.xlu0 %2852
      %2854 = vrot.lane.b32.xlu0 %v2815, 32
      %v2855 = vpop.permute.xlu0 %2854
      %vm2857 = vcmask 1043456
      %v2858 = vrot.slane %v2249, 4
      %v2859 = vrot.slane %v2250, 4
      %v2860 = vsel %vm2857, %v2858, %v2859
      %v2861 = vrot.slane %v2251, 4
      %v2862 = vsel %vm2857, %v2859, %v2861
      %v2863 = vrot.slane %v2252, 4
      %v2864 = vsel %vm2857, %v2861, %v2863
      %v2865 = vrot.slane %v2253, 4
      %v2866 = vsel %vm2857, %v2863, %v2865
      %v2867 = vrot.slane %v2254, 4
      %v2868 = vsel %vm2857, %v2865, %v2867
      %v2869 = vrot.slane %v2255, 4
      %v2870 = vsel %vm2857, %v2867, %v2869
      %v2871 = vrot.slane %v2256, 4
      %v2872 = vsel %vm2857, %v2869, %v2871
      %v2873 = vrot.slane %v2257, 4
      %v2874 = vsel %vm2857, %v2871, %v2873
      %v2875 = vrot.slane %v2258, 4
      %v2876 = vsel %vm2857, %v2873, %v2875
      %v2877 = vrot.slane %v2259, 4
      %v2878 = vsel %vm2857, %v2875, %v2877
      %v2879 = vrot.slane %v2260, 4
      %v2880 = vsel %vm2857, %v2877, %v2879
      %v2881 = vrot.slane %v2261, 4
      %v2882 = vsel %vm2857, %v2879, %v2881
      %v2883 = vrot.slane %v2262, 4
      %v2884 = vsel %vm2857, %v2881, %v2883
      %v2885 = vrot.slane %v2263, 4
      %v2886 = vsel %vm2857, %v2883, %v2885
      %v2887 = vrot.slane %v2264, 4
      %v2888 = vsel %vm2857, %v2885, %v2887
      %v2889 = vrot.slane %v2265, 4
      %v2890 = vsel %vm2857, %v2887, %v2889
      %v2891 = vrot.slane %v2266, 4
      %v2892 = vsel %vm2857, %v2889, %v2891
      %v2893 = vrot.slane %v2267, 4
      %v2894 = vsel %vm2857, %v2891, %v2893
      %v2895 = vrot.slane %v2268, 4
      %v2896 = vsel %vm2857, %v2893, %v2895
      %v2897 = vrot.slane %v2269, 4
      %v2898 = vsel %vm2857, %v2895, %v2897
      %2899 = vrot.lane.b32.xlu0 %v2860, 64
      %v2900 = vpop.permute.xlu0 %2899
      %2901 = vrot.lane.b32.xlu0 %v2862, 64
      %v2902 = vpop.permute.xlu0 %2901
      %2903 = vrot.lane.b32.xlu0 %v2864, 64
      %v2904 = vpop.permute.xlu0 %2903
      %2905 = vrot.lane.b32.xlu0 %v2866, 64
      %v2906 = vpop.permute.xlu0 %2905
      %2907 = vrot.lane.b32.xlu0 %v2868, 64
      %v2908 = vpop.permute.xlu0 %2907
      %2909 = vrot.lane.b32.xlu0 %v2870, 64
      %v2910 = vpop.permute.xlu0 %2909
      %2911 = vrot.lane.b32.xlu0 %v2872, 64
      %v2912 = vpop.permute.xlu0 %2911
      %2913 = vrot.lane.b32.xlu0 %v2874, 64
      %v2914 = vpop.permute.xlu0 %2913
      %2915 = vrot.lane.b32.xlu0 %v2876, 64
      %v2916 = vpop.permute.xlu0 %2915
      %2917 = vrot.lane.b32.xlu0 %v2878, 64
      %v2918 = vpop.permute.xlu0 %2917
      %2919 = vrot.lane.b32.xlu0 %v2880, 64
      %v2920 = vpop.permute.xlu0 %2919
      %2921 = vrot.lane.b32.xlu0 %v2882, 64
      %v2922 = vpop.permute.xlu0 %2921
      %2923 = vrot.lane.b32.xlu0 %v2884, 64
      %v2924 = vpop.permute.xlu0 %2923
      %2925 = vrot.lane.b32.xlu0 %v2886, 64
      %v2926 = vpop.permute.xlu0 %2925
      %2927 = vrot.lane.b32.xlu0 %v2888, 64
      %v2928 = vpop.permute.xlu0 %2927
      %2929 = vrot.lane.b32.xlu0 %v2890, 64
      %v2930 = vpop.permute.xlu0 %2929
      %2931 = vrot.lane.b32.xlu0 %v2892, 64
      %v2932 = vpop.permute.xlu0 %2931
      %2933 = vrot.lane.b32.xlu0 %v2894, 64
      %v2934 = vpop.permute.xlu0 %2933
      %2935 = vrot.lane.b32.xlu0 %v2896, 64
      %v2936 = vpop.permute.xlu0 %2935
      %2937 = vrot.lane.b32.xlu0 %v2898, 64
      %v2938 = vpop.permute.xlu0 %2937
      %vm2939 = vsmask.f32 3328
      %v2940 = vrot.slane %v2327, 4
      %v2941 = vrot.slane %v2323, 5
      %v2942 = vor.u32 %v2940, %v2941
      %v2943 = vrot.slane %v2335, 4
      %v2944 = vrot.slane %v2331, 5
      %v2945 = vor.u32 %v2943, %v2944
      %v2946 = vsel %vm2939, %v2942, %v2945
      %v2947 = vrot.slane %v2343, 4
      %v2948 = vrot.slane %v2339, 5
      %v2949 = vor.u32 %v2947, %v2948
      %v2950 = vsel %vm2939, %v2945, %v2949
      %v2951 = vrot.slane %v2351, 4
      %v2952 = vrot.slane %v2347, 5
      %v2953 = vor.u32 %v2951, %v2952
      %v2954 = vsel %vm2939, %v2949, %v2953
      %v2955 = vrot.slane %v2359, 4
      %v2956 = vrot.slane %v2355, 5
      %v2957 = vor.u32 %v2955, %v2956
      %v2958 = vsel %vm2939, %v2953, %v2957
      %v2959 = vrot.slane %v2367, 4
      %v2960 = vrot.slane %v2363, 5
      %v2961 = vor.u32 %v2959, %v2960
      %v2962 = vsel %vm2939, %v2957, %v2961
      %v2963 = vrot.slane %v2375, 4
      %v2964 = vrot.slane %v2371, 5
      %v2965 = vor.u32 %v2963, %v2964
      %v2966 = vsel %vm2939, %v2961, %v2965
      %v2967 = vrot.slane %v2383, 4
      %v2968 = vrot.slane %v2379, 5
      %v2969 = vor.u32 %v2967, %v2968
      %v2970 = vsel %vm2939, %v2965, %v2969
      %v2971 = vrot.slane %v2391, 4
      %v2972 = vrot.slane %v2387, 5
      %v2973 = vor.u32 %v2971, %v2972
      %v2974 = vsel %vm2939, %v2969, %v2973
      %v2975 = vrot.slane %v2399, 4
      %v2976 = vrot.slane %v2395, 5
      %v2977 = vor.u32 %v2975, %v2976
      %v2978 = vsel %vm2939, %v2973, %v2977
      %v2979 = vrot.slane %v2407, 4
      %v2980 = vrot.slane %v2403, 5
      %v2981 = vor.u32 %v2979, %v2980
      %v2982 = vsel %vm2939, %v2977, %v2981
      %v2983 = vrot.slane %v2415, 4
      %v2984 = vrot.slane %v2411, 5
      %v2985 = vor.u32 %v2983, %v2984
      %v2986 = vsel %vm2939, %v2981, %v2985
      %v2987 = vrot.slane %v2423, 4
      %v2988 = vrot.slane %v2419, 5
      %v2989 = vor.u32 %v2987, %v2988
      %v2990 = vsel %vm2939, %v2985, %v2989
      %v2991 = vrot.slane %v2431, 4
      %v2992 = vrot.slane %v2427, 5
      %v2993 = vor.u32 %v2991, %v2992
      %v2994 = vsel %vm2939, %v2989, %v2993
      %v2995 = vrot.slane %v2439, 4
      %v2996 = vrot.slane %v2435, 5
      %v2997 = vor.u32 %v2995, %v2996
      %v2998 = vsel %vm2939, %v2993, %v2997
      %v2999 = vrot.slane %v2447, 4
      %v3000 = vrot.slane %v2443, 5
      %v3001 = vor.u32 %v2999, %v3000
      %v3002 = vsel %vm2939, %v2997, %v3001
      %v3003 = vrot.slane %v2455, 4
      %v3004 = vrot.slane %v2451, 5
      %v3005 = vor.u32 %v3003, %v3004
      %v3006 = vsel %vm2939, %v3001, %v3005
      %v3007 = vrot.slane %v2463, 4
      %v3008 = vrot.slane %v2459, 5
      %v3009 = vor.u32 %v3007, %v3008
      %v3010 = vsel %vm2939, %v3005, %v3009
      %v3011 = vrot.slane %v2761, 4
      %v3012 = vrot.slane %v2764, 5
      %v3013 = vor.u32 %v3011, %v3012
      %v3014 = vsel %vm2939, %v3009, %v3013
      %v3015 = vshrl.u32 %v2268, 16
      %v3017 = vrot.slane %v3015, 4
      %v3018 = vrot.slane %v2770, 5
      %v3019 = vor.u32 %v3017, %v3018
      %v3020 = vsel %vm2939, %v3013, %v3019
      %v3022 = vshrl.u32 %v2269, 16
      %v3024 = vrot.slane %v3022, 4
      %v3025 = vshll.u32 %v2269, 16
      %v3027 = vrot.slane %v3025, 5
      %v3028 = vor.u32 %v3024, %v3027
      %v3029 = vsel %vm2939, %v3019, %v3028
      %3030 = vrot.lane.b32.xlu0 %v2946, 96
      %v3031 = vpop.permute.xlu0 %3030
      %3032 = vrot.lane.b32.xlu0 %v2950, 96
      %v3033 = vpop.permute.xlu0 %3032
      %3034 = vrot.lane.b32.xlu0 %v2954, 96
      %v3035 = vpop.permute.xlu0 %3034
      %3036 = vrot.lane.b32.xlu0 %v2958, 96
      %v3037 = vpop.permute.xlu0 %3036
      %3038 = vrot.lane.b32.xlu0 %v2962, 96
      %v3039 = vpop.permute.xlu0 %3038
      %3040 = vrot.lane.b32.xlu0 %v2966, 96
      %v3041 = vpop.permute.xlu0 %3040
      %3042 = vrot.lane.b32.xlu0 %v2970, 96
      %v3043 = vpop.permute.xlu0 %3042
      %3044 = vrot.lane.b32.xlu0 %v2974, 96
      %v3045 = vpop.permute.xlu0 %3044
      %3046 = vrot.lane.b32.xlu0 %v2978, 96
      %v3047 = vpop.permute.xlu0 %3046
      %3048 = vrot.lane.b32.xlu0 %v2982, 96
      %v3049 = vpop.permute.xlu0 %3048
      %3050 = vrot.lane.b32.xlu0 %v2986, 96
      %v3051 = vpop.permute.xlu0 %3050
      %3052 = vrot.lane.b32.xlu0 %v2990, 96
      %v3053 = vpop.permute.xlu0 %3052
      %3054 = vrot.lane.b32.xlu0 %v2994, 96
      %v3055 = vpop.permute.xlu0 %3054
      %3056 = vrot.lane.b32.xlu0 %v2998, 96
      %v3057 = vpop.permute.xlu0 %3056
      %3058 = vrot.lane.b32.xlu0 %v3002, 96
      %v3059 = vpop.permute.xlu0 %3058
      %3060 = vrot.lane.b32.xlu0 %v3006, 96
      %v3061 = vpop.permute.xlu0 %3060
      %3062 = vrot.lane.b32.xlu0 %v3010, 96
      %v3063 = vpop.permute.xlu0 %3062
      %3064 = vrot.lane.b32.xlu0 %v3014, 96
      %v3065 = vpop.permute.xlu0 %3064
      %3066 = vrot.lane.b32.xlu0 %v3020, 96
      %v3067 = vpop.permute.xlu0 %3066
      %3068 = vrot.lane.b32.xlu0 %v3029, 96
      %v3069 = vpop.permute.xlu0 %3068
      %vm3070 = vcmask 1042432
      %v3071 = vrot.slane %v2249, 5
      %v3072 = vrot.slane %v2250, 5
      %v3073 = vsel %vm3070, %v3071, %v3072
      %v3074 = vrot.slane %v2251, 5
      %v3075 = vsel %vm3070, %v3072, %v3074
      %v3076 = vrot.slane %v2252, 5
      %v3077 = vsel %vm3070, %v3074, %v3076
      %v3078 = vrot.slane %v2253, 5
      %v3079 = vsel %vm3070, %v3076, %v3078
      %v3080 = vrot.slane %v2254, 5
      %v3081 = vsel %vm3070, %v3078, %v3080
      %v3082 = vrot.slane %v2255, 5
      %v3083 = vsel %vm3070, %v3080, %v3082
      %v3084 = vrot.slane %v2256, 5
      %v3085 = vsel %vm3070, %v3082, %v3084
      %v3086 = vrot.slane %v2257, 5
      %v3087 = vsel %vm3070, %v3084, %v3086
      %v3088 = vrot.slane %v2258, 5
      %v3089 = vsel %vm3070, %v3086, %v3088
      %v3090 = vrot.slane %v2259, 5
      %v3091 = vsel %vm3070, %v3088, %v3090
      %v3092 = vrot.slane %v2260, 5
      %v3093 = vsel %vm3070, %v3090, %v3092
      %v3094 = vrot.slane %v2261, 5
      %v3095 = vsel %vm3070, %v3092, %v3094
      %v3096 = vrot.slane %v2262, 5
      %v3097 = vsel %vm3070, %v3094, %v3096
      %v3098 = vrot.slane %v2263, 5
      %v3099 = vsel %vm3070, %v3096, %v3098
      %v3100 = vrot.slane %v2264, 5
      %v3101 = vsel %vm3070, %v3098, %v3100
      %v3102 = vrot.slane %v2265, 5
      %v3103 = vsel %vm3070, %v3100, %v3102
      %v3104 = vrot.slane %v2266, 5
      %v3105 = vsel %vm3070, %v3102, %v3104
      %v3106 = vrot.slane %v2267, 5
      %v3107 = vsel %vm3070, %v3104, %v3106
      %v3108 = vrot.slane %v2268, 5
      %v3109 = vsel %vm3070, %v3106, %v3108
      %v3110 = vrot.slane %v2269, 5
      %v3111 = vsel %vm3070, %v3108, %v3110
      %vm3112 = vcmask 261120
      %v3114 = vsel %vm3112, %v2247, %v2467
      %v3116 = vsel %vm3112, %v2248, %v2469
      %v3118 = vsel %vm3112, %v2249, %v2471
      %v3120 = vsel %vm3112, %v2250, %v2473
      %v3122 = vsel %vm3112, %v2251, %v2475
      %v3124 = vsel %vm3112, %v2252, %v2477
      %v3126 = vsel %vm3112, %v2253, %v2479
      %v3128 = vsel %vm3112, %v2254, %v2481
      %v3130 = vsel %vm3112, %v2255, %v2483
      %v3132 = vsel %vm3112, %v2256, %v2485
      %v3134 = vsel %vm3112, %v2257, %v2487
      %v3136 = vsel %vm3112, %v2258, %v2489
      %v3138 = vsel %vm3112, %v2259, %v2491
      %v3140 = vsel %vm3112, %v2260, %v2493
      %v3142 = vsel %vm3112, %v2261, %v2495
      %v3144 = vsel %vm3112, %v2262, %v2497
      %v3146 = vsel %vm3112, %v2263, %v2499
      %v3148 = vsel %vm3112, %v2264, %v2501
      %v3150 = vsel %vm3112, %v2265, %v2503
      %v3152 = vsel %vm3112, %v2266, %v2505
      %vm3153 = vcmask 523264
      %v3155 = vsel %vm3153, %v3114, %v2566
      %v3157 = vsel %vm3153, %v3116, %v2568
      %v3159 = vsel %vm3153, %v3118, %v2570
      %v3161 = vsel %vm3153, %v3120, %v2572
      %v3163 = vsel %vm3153, %v3122, %v2574
      %v3165 = vsel %vm3153, %v3124, %v2576
      %v3167 = vsel %vm3153, %v3126, %v2578
      %v3169 = vsel %vm3153, %v3128, %v2580
      %v3171 = vsel %vm3153, %v3130, %v2582
      %v3173 = vsel %vm3153, %v3132, %v2584
      %v3175 = vsel %vm3153, %v3134, %v2586
      %v3177 = vsel %vm3153, %v3136, %v2588
      %v3179 = vsel %vm3153, %v3138, %v2590
      %v3181 = vsel %vm3153, %v3140, %v2592
      %v3183 = vsel %vm3153, %v3142, %v2594
      %v3185 = vsel %vm3153, %v3144, %v2596
      %v3187 = vsel %vm3153, %v3146, %v2598
      %v3189 = vsel %vm3153, %v3148, %v2600
      %v3191 = vsel %vm3153, %v3150, %v2602
      %v3193 = vsel %vm3153, %v3152, %v2604
      %vm3194 = vcmask 785408
      %v3196 = vsel %vm3194, %v3155, %v2646
      %v3199 = vsel %vm3194, %v3157, %v2648
      %v3202 = vsel %vm3194, %v3159, %v2650
      %v3205 = vsel %vm3194, %v3161, %v2652
      %v3208 = vsel %vm3194, %v3163, %v2654
      %v3211 = vsel %vm3194, %v3165, %v2656
      %v3214 = vsel %vm3194, %v3167, %v2658
      %v3217 = vsel %vm3194, %v3169, %v2660
      %v3220 = vsel %vm3194, %v3171, %v2662
      %v3223 = vsel %vm3194, %v3173, %v2664
      %v3226 = vsel %vm3194, %v3175, %v2666
      %v3229 = vsel %vm3194, %v3177, %v2668
      %v3232 = vsel %vm3194, %v3179, %v2670
      %v3235 = vsel %vm3194, %v3181, %v2672
      %v3238 = vsel %vm3194, %v3183, %v2674
      %v3241 = vsel %vm3194, %v3185, %v2676
      %v3244 = vsel %vm3194, %v3187, %v2678
      %v3247 = vsel %vm3194, %v3189, %v2680
      %v3250 = vsel %vm3194, %v3191, %v2682
      %v3253 = vsel %vm3194, %v3193, %v2684
      %v3257 = vsel %vm3112, %v2691, %v2817
      %v3260 = vsel %vm3112, %v2695, %v2819
      %v3263 = vsel %vm3112, %v2699, %v2821
      %v3266 = vsel %vm3112, %v2703, %v2823
      %v3269 = vsel %vm3112, %v2707, %v2825
      %v3272 = vsel %vm3112, %v2711, %v2827
      %v3275 = vsel %vm3112, %v2715, %v2829
      %v3278 = vsel %vm3112, %v2719, %v2831
      %v3281 = vsel %vm3112, %v2723, %v2833
      %v3284 = vsel %vm3112, %v2727, %v2835
      %v3287 = vsel %vm3112, %v2731, %v2837
      %v3290 = vsel %vm3112, %v2735, %v2839
      %v3293 = vsel %vm3112, %v2739, %v2841
      %v3296 = vsel %vm3112, %v2743, %v2843
      %v3299 = vsel %vm3112, %v2747, %v2845
      %v3302 = vsel %vm3112, %v2751, %v2847
      %v3305 = vsel %vm3112, %v2755, %v2849
      %v3308 = vsel %vm3112, %v2759, %v2851
      %v3311 = vsel %vm3112, %v2768, %v2853
      %v3314 = vsel %vm3112, %v2773, %v2855
      %v3316 = vsel %vm3153, %v3257, %v2900
      %v3318 = vsel %vm3153, %v3260, %v2902
      %v3320 = vsel %vm3153, %v3263, %v2904
      %v3322 = vsel %vm3153, %v3266, %v2906
      %v3324 = vsel %vm3153, %v3269, %v2908
      %v3326 = vsel %vm3153, %v3272, %v2910
      %v3328 = vsel %vm3153, %v3275, %v2912
      %v3330 = vsel %vm3153, %v3278, %v2914
      %v3332 = vsel %vm3153, %v3281, %v2916
      %v3334 = vsel %vm3153, %v3284, %v2918
      %v3336 = vsel %vm3153, %v3287, %v2920
      %v3338 = vsel %vm3153, %v3290, %v2922
      %v3340 = vsel %vm3153, %v3293, %v2924
      %v3342 = vsel %vm3153, %v3296, %v2926
      %v3344 = vsel %vm3153, %v3299, %v2928
      %v3346 = vsel %vm3153, %v3302, %v2930
      %v3348 = vsel %vm3153, %v3305, %v2932
      %v3350 = vsel %vm3153, %v3308, %v2934
      %v3352 = vsel %vm3153, %v3311, %v2936
      %v3354 = vsel %vm3153, %v3314, %v2938
      %v3356 = vsel %vm3194, %v3316, %v3031
      %v3359 = vsel %vm3194, %v3318, %v3033
      %v3362 = vsel %vm3194, %v3320, %v3035
      %v3365 = vsel %vm3194, %v3322, %v3037
      %v3368 = vsel %vm3194, %v3324, %v3039
      %v3371 = vsel %vm3194, %v3326, %v3041
      %v3374 = vsel %vm3194, %v3328, %v3043
      %v3377 = vsel %vm3194, %v3330, %v3045
      %v3380 = vsel %vm3194, %v3332, %v3047
      %v3383 = vsel %vm3194, %v3334, %v3049
      %v3386 = vsel %vm3194, %v3336, %v3051
      %v3389 = vsel %vm3194, %v3338, %v3053
      %v3392 = vsel %vm3194, %v3340, %v3055
      %v3395 = vsel %vm3194, %v3342, %v3057
      %v3398 = vsel %vm3194, %v3344, %v3059
      %v3401 = vsel %vm3194, %v3346, %v3061
      %v3404 = vsel %vm3194, %v3348, %v3063
      %v3407 = vsel %vm3194, %v3350, %v3065
      %v3410 = vsel %vm3194, %v3352, %v3067
      %v3413 = vsel %vm3194, %v3354, %v3069
      %v3416 = vlaneseq
      %v3417 = vshrl.u32 %v3416, 7
      %v3418 = vsub.s32 0, %v3417
      %v3419 = vrot.slane %v2306, %v3418
      %v3457 = vunpack.c.l.b16 %v2270
      %v3458 = vunpack.c.l.b16 %v2271
      %v3459 = vunpack.c.l.b16 %v2272
      %v3460 = vunpack.c.l.b16 %v2273
      %v3461 = vunpack.c.l.b16 %v2274
      %v3462 = vunpack.c.l.b16 %v2275
      %v3463 = vunpack.c.l.b16 %v2276
      %v3464 = vunpack.c.l.b16 %v2277
      %v3465 = vunpack.c.l.b16 %v2278
      %v3466 = vunpack.c.l.b16 %v2279
      %v3467 = vunpack.c.l.b16 %v2280
      %v3468 = vunpack.c.l.b16 %v2281
      %v3469 = vunpack.c.l.b16 %v2282
      %v3470 = vunpack.c.l.b16 %v2283
      %v3471 = vunpack.c.l.b16 %v2284
      %v3472 = vunpack.c.l.b16 %v2285
      %v3473 = vunpack.c.l.b16 %v2286
      %v3474 = vunpack.c.l.b16 %v2287
      %v3475 = vunpack.c.l.b16 %v2288
      %v3476 = vunpack.c.l.b16 %v2289
      %v3477 = vunpack.c.l.b16 %v2290
      %v3478 = vunpack.c.l.b16 %v2291
      %v3479 = vunpack.c.l.b16 %v2292
      %v3480 = vunpack.c.l.b16 %v2293
      %v3481 = vunpack.c.l.b16 %v2294
      %v3482 = vunpack.c.l.b16 %v2295
      %v3483 = vunpack.c.l.b16 %v2296
      %v3484 = vunpack.c.l.b16 %v2297
      %v3485 = vunpack.c.l.b16 %v2298
      %v3486 = vunpack.c.l.b16 %v2299
      %v3487 = vunpack.c.l.b16 %v2300
      %v3488 = vunpack.c.l.b16 %v2301
      %v3489 = vunpack.c.l.b16 %v2302
      %v3490 = vunpack.c.l.b16 %v2303
      %v3491 = vunpack.c.l.b16 %v2304
      %v3492 = vunpack.c.l.b16 %v2305
      %v3493 = vpack.c.b16 %v3458, %v3457
      %v3494 = vpack.c.b16 %v3460, %v3459
      %v3495 = vpack.c.b16 %v3462, %v3461
      %v3496 = vpack.c.b16 %v3464, %v3463
      %v3497 = vpack.c.b16 %v3466, %v3465
      %v3498 = vpack.c.b16 %v3468, %v3467
      %v3499 = vpack.c.b16 %v3470, %v3469
      %v3500 = vpack.c.b16 %v3472, %v3471
      %v3501 = vpack.c.b16 %v3474, %v3473
      %v3502 = vpack.c.b16 %v3476, %v3475
      %v3503 = vpack.c.b16 %v3478, %v3477
      %v3504 = vpack.c.b16 %v3480, %v3479
      %v3505 = vpack.c.b16 %v3482, %v3481
      %v3506 = vpack.c.b16 %v3484, %v3483
      %v3507 = vpack.c.b16 %v3486, %v3485
      %v3508 = vpack.c.b16 %v3488, %v3487
      %v3509 = vpack.c.b16 %v3490, %v3489
      %v3510 = vpack.c.b16 %v3492, %v3491
      %v3530 = vsel %vm3112, %v3073, 0
      %v3533 = vsel %vm3112, %v3075, 0
      %v3536 = vsel %vm3112, %v3077, 0
      %v3539 = vsel %vm3112, %v3079, 0
      %v3542 = vsel %vm3112, %v3081, 0
      %v3545 = vsel %vm3112, %v3083, 0
      %v3548 = vsel %vm3112, %v3085, 0
      %v3551 = vsel %vm3112, %v3087, 0
      %v3554 = vsel %vm3112, %v3089, 0
      %v3557 = vsel %vm3112, %v3091, 0
      %v3560 = vsel %vm3112, %v3093, 0
      %v3563 = vsel %vm3112, %v3095, 0
      %v3566 = vsel %vm3112, %v3097, 0
      %v3569 = vsel %vm3112, %v3099, 0
      %v3572 = vsel %vm3112, %v3101, 0
      %v3575 = vsel %vm3112, %v3103, 0
      %v3578 = vsel %vm3112, %v3105, 0
      %v3581 = vsel %vm3112, %v3107, 0
      %v3584 = vsel %vm3112, %v3109, 0
      %v3587 = vsel %vm3112, %v3111, 0
      %3589 = vmatprep.subr.bf16.mxu0 0
      %3590 = vmatpush1.bf16.msra.mxu0 %v3493
      %3591 = vmatprep.subr.bf16.mxu0 0
      %3592 = vmatpush1.bf16.msra.mxu0 %v3494
      %3593 = vmatprep.subr.bf16.mxu0 0
      %3594 = vmatpush1.bf16.msra.mxu0 %v3495
      %3595 = vmatprep.subr.bf16.mxu0 0
      %3596 = vmatpush1.bf16.msra.mxu0 %v3496
      %3597 = vmatprep.subr.bf16.mxu0 0
      %3598 = vmatpush1.bf16.msra.mxu0 %v3497
      %3599 = vmatprep.subr.bf16.mxu0 0
      %3600 = vmatpush1.bf16.msra.mxu0 %v3498
      %3601 = vmatprep.subr.bf16.mxu0 0
      %3602 = vmatpush1.bf16.msra.mxu0 %v3499
      %3603 = vmatprep.subr.bf16.mxu0 0
      %3604 = vmatpush1.bf16.msra.mxu0 %v3500
      %3605 = vmatprep.subr.bf16.mxu0 0
      %3606 = vmatpush1.bf16.msra.mxu0 %v3501
      %3607 = vmatprep.subr.bf16.mxu0 0
      %3608 = vmatpush1.bf16.msra.mxu0 %v3502
      %3609 = vmatprep.subr.bf16.mxu0 0
      %3610 = vmatpush1.bf16.msra.mxu0 %v3503
      %3611 = vmatprep.subr.bf16.mxu0 0
      %3612 = vmatpush1.bf16.msra.mxu0 %v3504
      %3613 = vmatprep.subr.bf16.mxu0 0
      %3614 = vmatpush1.bf16.msra.mxu0 %v3505
      %3615 = vmatprep.subr.bf16.mxu0 0
      %3616 = vmatpush1.bf16.msra.mxu0 %v3506
      %3617 = vmatprep.subr.bf16.mxu0 0
      %3618 = vmatpush1.bf16.msra.mxu0 %v3507
      %3619 = vmatprep.subr.bf16.mxu0 0
      %3620 = vmatpush1.bf16.msra.mxu0 %v3508
      %3621 = vmatprep.mubr.bf16.mxu0 %v3356
      %3622 = vmatmul.mubr.bf16.gmra.mrb[0].mxu0 %v3196
      %v3623 = vpop.f32.mrb[0].mxu0
      %v3624 = vadd.f32 %v3419, %v3623
      %v3625 = vpop.f32.mrb[0].mxu0
      %v3626 = vpop.f32.mrb[0].mxu0
      %v3627 = vadd.f32 %v3419, %v3626
      %v3628 = vpop.f32.mrb[0].mxu0
      %3629 = vmatprep.mubr.bf16.mxu0 %v3359
      %3630 = vmatmul.mubr.bf16.gmra.mrb[0].mxu0 %v3199
      %v3631 = vpop.f32.mrb[0].mxu0
      %v3632 = vadd.f32 %v3419, %v3631
      %v3633 = vpop.f32.mrb[0].mxu0
      %v3634 = vpop.f32.mrb[0].mxu0
      %v3635 = vadd.f32 %v3419, %v3634
      %v3636 = vpop.f32.mrb[0].mxu0
      %3637 = vmatprep.mubr.bf16.mxu0 %v3362
      %3638 = vmatmul.mubr.bf16.gmra.mrb[0].mxu0 %v3202
      %v3639 = vpop.f32.mrb[0].mxu0
      %v3640 = vadd.f32 %v3419, %v3639
      %v3641 = vpop.f32.mrb[0].mxu0
      %v3642 = vpop.f32.mrb[0].mxu0
      %v3643 = vadd.f32 %v3419, %v3642
      %v3644 = vpop.f32.mrb[0].mxu0
      %3645 = vmatprep.mubr.bf16.mxu0 %v3365
      %3646 = vmatmul.mubr.bf16.gmra.mrb[0].mxu0 %v3205
      %v3647 = vpop.f32.mrb[0].mxu0
      %v3648 = vadd.f32 %v3419, %v3647
      %v3649 = vpop.f32.mrb[0].mxu0
      %v3650 = vpop.f32.mrb[0].mxu0
      %v3651 = vadd.f32 %v3419, %v3650
      %v3652 = vpop.f32.mrb[0].mxu0
      %3653 = vmatprep.mubr.bf16.mxu0 %v3368
      %3654 = vmatmul.mubr.bf16.gmra.mrb[0].mxu0 %v3208
      %v3655 = vpop.f32.mrb[0].mxu0
      %v3656 = vadd.f32 %v3419, %v3655
      %v3657 = vpop.f32.mrb[0].mxu0
      %v3658 = vpop.f32.mrb[0].mxu0
      %v3659 = vadd.f32 %v3419, %v3658
      %v3660 = vpop.f32.mrb[0].mxu0
      %3661 = vmatprep.mubr.bf16.mxu0 %v3371
      %3662 = vmatmul.mubr.bf16.gmra.mrb[0].mxu0 %v3211
      %v3663 = vpop.f32.mrb[0].mxu0
      %v3664 = vadd.f32 %v3419, %v3663
      %v3665 = vpop.f32.mrb[0].mxu0
      %v3666 = vpop.f32.mrb[0].mxu0
      %v3667 = vadd.f32 %v3419, %v3666
      %v3668 = vpop.f32.mrb[0].mxu0
      %3669 = vmatprep.mubr.bf16.mxu0 %v3374
      %3670 = vmatmul.mubr.bf16.gmra.mrb[0].mxu0 %v3214
      %v3671 = vpop.f32.mrb[0].mxu0
      %v3672 = vadd.f32 %v3419, %v3671
      %v3673 = vpop.f32.mrb[0].mxu0
      %v3674 = vpop.f32.mrb[0].mxu0
      %v3675 = vadd.f32 %v3419, %v3674
      %v3676 = vpop.f32.mrb[0].mxu0
      %3677 = vmatprep.mubr.bf16.mxu0 %v3377
      %3678 = vmatmul.mubr.bf16.gmra.mrb[0].mxu0 %v3217
      %v3679 = vpop.f32.mrb[0].mxu0
      %v3680 = vadd.f32 %v3419, %v3679
      %v3681 = vpop.f32.mrb[0].mxu0
      %v3682 = vpop.f32.mrb[0].mxu0
      %v3683 = vadd.f32 %v3419, %v3682
      %v3684 = vpop.f32.mrb[0].mxu0
      %3685 = vmatprep.mubr.bf16.mxu0 %v3380
      %3686 = vmatmul.mubr.bf16.gmra.mrb[0].mxu0 %v3220
      %v3687 = vpop.f32.mrb[0].mxu0
      %v3688 = vadd.f32 %v3419, %v3687
      %v3689 = vpop.f32.mrb[0].mxu0
      %v3690 = vpop.f32.mrb[0].mxu0
      %v3691 = vadd.f32 %v3419, %v3690
      %v3692 = vpop.f32.mrb[0].mxu0
      %3693 = vmatprep.mubr.bf16.mxu0 %v3383
      %3694 = vmatmul.mubr.bf16.gmra.mrb[0].mxu0 %v3223
      %v3695 = vpop.f32.mrb[0].mxu0
      %v3696 = vadd.f32 %v3419, %v3695
      %v3697 = vpop.f32.mrb[0].mxu0
      %v3698 = vpop.f32.mrb[0].mxu0
      %v3699 = vadd.f32 %v3419, %v3698
      %v3700 = vpop.f32.mrb[0].mxu0
      %3701 = vmatprep.mubr.bf16.mxu0 %v3386
      %3702 = vmatmul.mubr.bf16.gmra.mrb[0].mxu0 %v3226
      %v3703 = vpop.f32.mrb[0].mxu0
      %v3704 = vadd.f32 %v3419, %v3703
      %v3705 = vpop.f32.mrb[0].mxu0
      %v3706 = vpop.f32.mrb[0].mxu0
      %v3707 = vadd.f32 %v3419, %v3706
      %v3708 = vpop.f32.mrb[0].mxu0
      %3709 = vmatprep.mubr.bf16.mxu0 %v3389
      %3710 = vmatmul.mubr.bf16.gmra.mrb[0].mxu0 %v3229
      %v3711 = vpop.f32.mrb[0].mxu0
      %v3712 = vadd.f32 %v3419, %v3711
      %v3713 = vpop.f32.mrb[0].mxu0
      %v3714 = vpop.f32.mrb[0].mxu0
      %v3715 = vadd.f32 %v3419, %v3714
      %v3716 = vpop.f32.mrb[0].mxu0
      %3717 = vmatprep.mubr.bf16.mxu0 %v3392
      %3718 = vmatmul.mubr.bf16.gmra.mrb[0].mxu0 %v3232
      %v3719 = vpop.f32.mrb[0].mxu0
      %v3720 = vadd.f32 %v3419, %v3719
      %v3721 = vpop.f32.mrb[0].mxu0
      %v3722 = vpop.f32.mrb[0].mxu0
      %v3723 = vadd.f32 %v3419, %v3722
      %v3724 = vpop.f32.mrb[0].mxu0
      %3725 = vmatprep.mubr.bf16.mxu0 %v3395
      %3726 = vmatmul.mubr.bf16.gmra.mrb[0].mxu0 %v3235
      %v3727 = vpop.f32.mrb[0].mxu0
      %v3728 = vadd.f32 %v3419, %v3727
      %v3729 = vpop.f32.mrb[0].mxu0
      %v3730 = vpop.f32.mrb[0].mxu0
      %v3731 = vadd.f32 %v3419, %v3730
      %v3732 = vpop.f32.mrb[0].mxu0
      %3733 = vmatprep.mubr.bf16.mxu0 %v3398
      %3734 = vmatmul.mubr.bf16.gmra.mrb[0].mxu0 %v3238
      %v3735 = vpop.f32.mrb[0].mxu0
      %v3736 = vadd.f32 %v3419, %v3735
      %v3737 = vpop.f32.mrb[0].mxu0
      %v3738 = vpop.f32.mrb[0].mxu0
      %v3739 = vadd.f32 %v3419, %v3738
      %v3740 = vpop.f32.mrb[0].mxu0
      %3741 = vmatprep.mubr.bf16.mxu0 %v3401
      %3742 = vmatmul.mubr.bf16.gmra.mrb[0].mxu0 %v3241
      %v3743 = vpop.f32.mrb[0].mxu0
      %v3744 = vadd.f32 %v3419, %v3743
      %v3745 = vpop.f32.mrb[0].mxu0
      %v3746 = vpop.f32.mrb[0].mxu0
      %v3747 = vadd.f32 %v3419, %v3746
      %v3748 = vpop.f32.mrb[0].mxu0
      %3749 = vmatprep.mubr.bf16.mxu0 %v3404
      %3750 = vmatmul.mubr.bf16.gmra.mrb[0].mxu0 %v3244
      %v3751 = vpop.f32.mrb[0].mxu0
      %v3752 = vadd.f32 %v3419, %v3751
      %v3753 = vpop.f32.mrb[0].mxu0
      %v3754 = vpop.f32.mrb[0].mxu0
      %v3755 = vadd.f32 %v3419, %v3754
      %v3756 = vpop.f32.mrb[0].mxu0
      %3757 = vmatprep.mubr.bf16.mxu0 %v3407
      %3758 = vmatmul.mubr.bf16.gmra.mrb[0].mxu0 %v3247
      %v3759 = vpop.f32.mrb[0].mxu0
      %v3760 = vadd.f32 %v3419, %v3759
      %v3761 = vpop.f32.mrb[0].mxu0
      %v3762 = vpop.f32.mrb[0].mxu0
      %v3763 = vadd.f32 %v3419, %v3762
      %v3764 = vpop.f32.mrb[0].mxu0
      %3765 = vmatprep.mubr.bf16.mxu0 %v3410
      %3766 = vmatmul.mubr.bf16.gmra.mrb[0].mxu0 %v3250
      %v3767 = vpop.f32.mrb[0].mxu0
      %v3768 = vadd.f32 %v3419, %v3767
      %v3769 = vpop.f32.mrb[0].mxu0
      %v3770 = vpop.f32.mrb[0].mxu0
      %v3771 = vadd.f32 %v3419, %v3770
      %v3772 = vpop.f32.mrb[0].mxu0
      %3773 = vmatprep.mubr.bf16.mxu0 %v3413
      %3774 = vmatmul.mubr.bf16.gmra.mrb[0].mxu0 %v3253
      %v3775 = vpop.f32.mrb[0].mxu0
      %v3776 = vadd.f32 %v3419, %v3775
      %v3777 = vpop.f32.mrb[0].mxu0
      %v3778 = vpop.f32.mrb[0].mxu0
      %v3779 = vadd.f32 %v3419, %v3778
      %v3780 = vpop.f32.mrb[0].mxu0
      %3781 = vdwg.mxu0
      %3782 = vmatprep.subr.bf16.mxu0 0
      %3783 = vmatpush1.bf16.msra.mxu0 %v3509
      %3784 = vmatprep.subr.bf16.mxu0 0
      %3785 = vmatpush1.bf16.msra.mxu0 %v3510
      %3786 = vmatprep.subr.bf16.mxu0 0
      %3787 = vmatpush1.bf16.msra.mxu0 0
      %3788 = vmatprep.subr.bf16.mxu0 0
      %3789 = vmatpush1.bf16.msra.mxu0 0
      %3790 = vmatprep.subr.bf16.mxu0 0
      %3791 = vmatpush1.bf16.msra.mxu0 0
      %3792 = vmatprep.subr.bf16.mxu0 0
      %3793 = vmatpush1.bf16.msra.mxu0 0
      %3794 = vmatprep.subr.bf16.mxu0 0
      %3795 = vmatpush1.bf16.msra.mxu0 0
      %3796 = vmatprep.subr.bf16.mxu0 0
      %3797 = vmatpush1.bf16.msra.mxu0 0
      %3798 = vmatprep.subr.bf16.mxu0 0
      %3799 = vmatpush1.bf16.msra.mxu0 0
      %3800 = vmatprep.subr.bf16.mxu0 0
      %3801 = vmatpush1.bf16.msra.mxu0 0
      %3802 = vmatprep.subr.bf16.mxu0 0
      %3803 = vmatpush1.bf16.msra.mxu0 0
      %3804 = vmatprep.subr.bf16.mxu0 0
      %3805 = vmatpush1.bf16.msra.mxu0 0
      %3806 = vmatprep.subr.bf16.mxu0 0
      %3807 = vmatpush1.bf16.msra.mxu0 0
      %3808 = vmatprep.subr.bf16.mxu0 0
      %3809 = vmatpush1.bf16.msra.mxu0 0
      %3810 = vmatprep.subr.bf16.mxu0 0
      %3811 = vmatpush1.bf16.msra.mxu0 0
      %3812 = vmatprep.subr.bf16.mxu0 0
      %3813 = vmatpush1.bf16.msra.mxu0 0
      %3814 = vmatprep.mubr.bf16.mxu0 0
      %3815 = vmatmul.mubr.bf16.gmra.mrb[0].mxu0 %v3530
      %v3816 = vpop.f32.mrb[0].mxu0
      %v3817 = vadd.f32 %v3624, %v3816
      %v3818 = vpop.f32.mrb[0].mxu0
      %v3819 = vpop.f32.mrb[0].mxu0
      %v3820 = vadd.f32 %v3627, %v3819
      %v3821 = vpop.f32.mrb[0].mxu0
      %3822 = vmatprep.mubr.bf16.mxu0 0
      %3823 = vmatmul.mubr.bf16.gmra.mrb[0].mxu0 %v3533
      %v3824 = vpop.f32.mrb[0].mxu0
      %v3825 = vadd.f32 %v3632, %v3824
      %v3826 = vpop.f32.mrb[0].mxu0
      %v3827 = vpop.f32.mrb[0].mxu0
      %v3828 = vadd.f32 %v3635, %v3827
      %v3829 = vpop.f32.mrb[0].mxu0
      %3830 = vmatprep.mubr.bf16.mxu0 0
      %3831 = vmatmul.mubr.bf16.gmra.mrb[0].mxu0 %v3536
      %v3832 = vpop.f32.mrb[0].mxu0
      %v3833 = vadd.f32 %v3640, %v3832
      %v3834 = vpop.f32.mrb[0].mxu0
      %v3835 = vpop.f32.mrb[0].mxu0
      %v3836 = vadd.f32 %v3643, %v3835
      %v3837 = vpop.f32.mrb[0].mxu0
      %3838 = vmatprep.mubr.bf16.mxu0 0
      %3839 = vmatmul.mubr.bf16.gmra.mrb[0].mxu0 %v3539
      %v3840 = vpop.f32.mrb[0].mxu0
      %v3841 = vadd.f32 %v3648, %v3840
      %v3842 = vpop.f32.mrb[0].mxu0
      %v3843 = vpop.f32.mrb[0].mxu0
      %v3844 = vadd.f32 %v3651, %v3843
      %v3845 = vpop.f32.mrb[0].mxu0
      %3846 = vmatprep.mubr.bf16.mxu0 0
      %3847 = vmatmul.mubr.bf16.gmra.mrb[0].mxu0 %v3542
      %v3848 = vpop.f32.mrb[0].mxu0
      %v3849 = vadd.f32 %v3656, %v3848
      %v3850 = vpop.f32.mrb[0].mxu0
      %v3851 = vpop.f32.mrb[0].mxu0
      %v3852 = vadd.f32 %v3659, %v3851
      %v3853 = vpop.f32.mrb[0].mxu0
      %3854 = vmatprep.mubr.bf16.mxu0 0
      %3855 = vmatmul.mubr.bf16.gmra.mrb[0].mxu0 %v3545
      %v3856 = vpop.f32.mrb[0].mxu0
      %v3857 = vadd.f32 %v3664, %v3856
      %v3858 = vpop.f32.mrb[0].mxu0
      %v3859 = vpop.f32.mrb[0].mxu0
      %v3860 = vadd.f32 %v3667, %v3859
      %v3861 = vpop.f32.mrb[0].mxu0
      %3862 = vmatprep.mubr.bf16.mxu0 0
      %3863 = vmatmul.mubr.bf16.gmra.mrb[0].mxu0 %v3548
      %v3864 = vpop.f32.mrb[0].mxu0
      %v3865 = vadd.f32 %v3672, %v3864
      %v3866 = vpop.f32.mrb[0].mxu0
      %v3867 = vpop.f32.mrb[0].mxu0
      %v3868 = vadd.f32 %v3675, %v3867
      %v3869 = vpop.f32.mrb[0].mxu0
      %3870 = vmatprep.mubr.bf16.mxu0 0
      %3871 = vmatmul.mubr.bf16.gmra.mrb[0].mxu0 %v3551
      %v3872 = vpop.f32.mrb[0].mxu0
      %v3873 = vadd.f32 %v3680, %v3872
      %v3874 = vpop.f32.mrb[0].mxu0
      %v3875 = vpop.f32.mrb[0].mxu0
      %v3876 = vadd.f32 %v3683, %v3875
      %v3877 = vpop.f32.mrb[0].mxu0
      %3878 = vmatprep.mubr.bf16.mxu0 0
      %3879 = vmatmul.mubr.bf16.gmra.mrb[0].mxu0 %v3554
      %v3880 = vpop.f32.mrb[0].mxu0
      %v3881 = vadd.f32 %v3688, %v3880
      %v3882 = vpop.f32.mrb[0].mxu0
      %v3883 = vpop.f32.mrb[0].mxu0
      %v3884 = vadd.f32 %v3691, %v3883
      %v3885 = vpop.f32.mrb[0].mxu0
      %3886 = vmatprep.mubr.bf16.mxu0 0
      %3887 = vmatmul.mubr.bf16.gmra.mrb[0].mxu0 %v3557
      %v3888 = vpop.f32.mrb[0].mxu0
      %v3889 = vadd.f32 %v3696, %v3888
      %v3890 = vpop.f32.mrb[0].mxu0
      %v3891 = vpop.f32.mrb[0].mxu0
      %v3892 = vadd.f32 %v3699, %v3891
      %v3893 = vpop.f32.mrb[0].mxu0
      %3894 = vmatprep.mubr.bf16.mxu0 0
      %3895 = vmatmul.mubr.bf16.gmra.mrb[0].mxu0 %v3560
      %v3896 = vpop.f32.mrb[0].mxu0
      %v3897 = vadd.f32 %v3704, %v3896
      %v3898 = vpop.f32.mrb[0].mxu0
      %v3899 = vpop.f32.mrb[0].mxu0
      %v3900 = vadd.f32 %v3707, %v3899
      %v3901 = vpop.f32.mrb[0].mxu0
      %3902 = vmatprep.mubr.bf16.mxu0 0
      %3903 = vmatmul.mubr.bf16.gmra.mrb[0].mxu0 %v3563
      %v3904 = vpop.f32.mrb[0].mxu0
      %v3905 = vadd.f32 %v3712, %v3904
      %v3906 = vpop.f32.mrb[0].mxu0
      %v3907 = vpop.f32.mrb[0].mxu0
      %v3908 = vadd.f32 %v3715, %v3907
      %v3909 = vpop.f32.mrb[0].mxu0
      %3910 = vmatprep.mubr.bf16.mxu0 0
      %3911 = vmatmul.mubr.bf16.gmra.mrb[0].mxu0 %v3566
      %v3912 = vpop.f32.mrb[0].mxu0
      %v3913 = vadd.f32 %v3720, %v3912
      %v3914 = vpop.f32.mrb[0].mxu0
      %v3915 = vpop.f32.mrb[0].mxu0
      %v3916 = vadd.f32 %v3723, %v3915
      %v3917 = vpop.f32.mrb[0].mxu0
      %3918 = vmatprep.mubr.bf16.mxu0 0
      %3919 = vmatmul.mubr.bf16.gmra.mrb[0].mxu0 %v3569
      %v3920 = vpop.f32.mrb[0].mxu0
      %v3921 = vadd.f32 %v3728, %v3920
      %v3922 = vpop.f32.mrb[0].mxu0
      %v3923 = vpop.f32.mrb[0].mxu0
      %v3924 = vadd.f32 %v3731, %v3923
      %v3925 = vpop.f32.mrb[0].mxu0
      %3926 = vmatprep.mubr.bf16.mxu0 0
      %3927 = vmatmul.mubr.bf16.gmra.mrb[0].mxu0 %v3572
      %v3928 = vpop.f32.mrb[0].mxu0
      %v3929 = vadd.f32 %v3736, %v3928
      %v3930 = vpop.f32.mrb[0].mxu0
      %v3931 = vpop.f32.mrb[0].mxu0
      %v3932 = vadd.f32 %v3739, %v3931
      %v3933 = vpop.f32.mrb[0].mxu0
      %3934 = vmatprep.mubr.bf16.mxu0 0
      %3935 = vmatmul.mubr.bf16.gmra.mrb[0].mxu0 %v3575
      %v3936 = vpop.f32.mrb[0].mxu0
      %v3937 = vadd.f32 %v3744, %v3936
      %v3938 = vpop.f32.mrb[0].mxu0
      %v3939 = vpop.f32.mrb[0].mxu0
      %v3940 = vadd.f32 %v3747, %v3939
      %v3941 = vpop.f32.mrb[0].mxu0
      %3942 = vmatprep.mubr.bf16.mxu0 0
      %3943 = vmatmul.mubr.bf16.gmra.mrb[0].mxu0 %v3578
      %v3944 = vpop.f32.mrb[0].mxu0
      %v3945 = vadd.f32 %v3752, %v3944
      %v3946 = vpop.f32.mrb[0].mxu0
      %v3947 = vpop.f32.mrb[0].mxu0
      %v3948 = vadd.f32 %v3755, %v3947
      %v3949 = vpop.f32.mrb[0].mxu0
      %3950 = vmatprep.mubr.bf16.mxu0 0
      %3951 = vmatmul.mubr.bf16.gmra.mrb[0].mxu0 %v3581
      %v3952 = vpop.f32.mrb[0].mxu0
      %v3953 = vadd.f32 %v3760, %v3952
      %v3954 = vpop.f32.mrb[0].mxu0
      %v3955 = vpop.f32.mrb[0].mxu0
      %v3956 = vadd.f32 %v3763, %v3955
      %v3957 = vpop.f32.mrb[0].mxu0
      %3958 = vmatprep.mubr.bf16.mxu0 0
      %3959 = vmatmul.mubr.bf16.gmra.mrb[0].mxu0 %v3584
      %v3960 = vpop.f32.mrb[0].mxu0
      %v3961 = vadd.f32 %v3768, %v3960
      %v3962 = vpop.f32.mrb[0].mxu0
      %v3963 = vpop.f32.mrb[0].mxu0
      %v3964 = vadd.f32 %v3771, %v3963
      %v3965 = vpop.f32.mrb[0].mxu0
      %3966 = vmatprep.mubr.bf16.mxu0 0
      %3967 = vmatmul.mubr.bf16.gmra.mrb[0].mxu0 %v3587
      %v3968 = vpop.f32.mrb[0].mxu0
      %v3969 = vadd.f32 %v3776, %v3968
      %v3970 = vpop.f32.mrb[0].mxu0
      %v3971 = vpop.f32.mrb[0].mxu0
      %v3972 = vadd.f32 %v3779, %v3971
      %v3973 = vpop.f32.mrb[0].mxu0
      %3974 = vdwg.mxu0
      %vm3975 = vcmp.ge.f32.partialorder %v3817, 0.0
      %vm3976 = vcmp.ge.f32.partialorder %v3820, 0.0
      %vm3977 = vcmp.ge.f32.partialorder %v3825, 0.0
      %vm3978 = vcmp.ge.f32.partialorder %v3828, 0.0
      %vm3979 = vcmp.ge.f32.partialorder %v3833, 0.0
      %vm3980 = vcmp.ge.f32.partialorder %v3836, 0.0
      %vm3981 = vcmp.ge.f32.partialorder %v3841, 0.0
      %vm3982 = vcmp.ge.f32.partialorder %v3844, 0.0
      %vm3983 = vcmp.ge.f32.partialorder %v3849, 0.0
      %vm3984 = vcmp.ge.f32.partialorder %v3852, 0.0
      %vm3985 = vcmp.ge.f32.partialorder %v3857, 0.0
      %vm3986 = vcmp.ge.f32.partialorder %v3860, 0.0
      %vm3987 = vcmp.ge.f32.partialorder %v3865, 0.0
      %vm3988 = vcmp.ge.f32.partialorder %v3868, 0.0
      %vm3989 = vcmp.ge.f32.partialorder %v3873, 0.0
      %vm3990 = vcmp.ge.f32.partialorder %v3876, 0.0
      %vm3991 = vcmp.ge.f32.partialorder %v3881, 0.0
      %vm3992 = vcmp.ge.f32.partialorder %v3884, 0.0
      %vm3993 = vcmp.ge.f32.partialorder %v3889, 0.0
      %vm3994 = vcmp.ge.f32.partialorder %v3892, 0.0
      %vm3995 = vcmp.ge.f32.partialorder %v3897, 0.0
      %vm3996 = vcmp.ge.f32.partialorder %v3900, 0.0
      %vm3997 = vcmp.ge.f32.partialorder %v3905, 0.0
      %vm3998 = vcmp.ge.f32.partialorder %v3908, 0.0
      %vm3999 = vcmp.ge.f32.partialorder %v3913, 0.0
      %vm4000 = vcmp.ge.f32.partialorder %v3916, 0.0
      %vm4001 = vcmp.ge.f32.partialorder %v3921, 0.0
      %vm4002 = vcmp.ge.f32.partialorder %v3924, 0.0
      %vm4003 = vcmp.ge.f32.partialorder %v3929, 0.0
      %vm4004 = vcmp.ge.f32.partialorder %v3932, 0.0
      %vm4005 = vcmp.ge.f32.partialorder %v3937, 0.0
      %vm4006 = vcmp.ge.f32.partialorder %v3940, 0.0
      %vm4007 = vcmp.ge.f32.partialorder %v3945, 0.0
      %vm4008 = vcmp.ge.f32.partialorder %v3948, 0.0
      %vm4009 = vcmp.ge.f32.partialorder %v3953, 0.0
      %vm4010 = vcmp.ge.f32.partialorder %v3956, 0.0
      %vm4011 = vcmp.ge.f32.partialorder %v3961, 0.0
      %vm4012 = vcmp.ge.f32.partialorder %v3964, 0.0
      %vm4013 = vcmp.ge.f32.partialorder %v3969, 0.0
      %vm4014 = vcmp.ge.f32.partialorder %v3972, 0.0
      %v4015 = vmul.f32 %v3817, 0.1
      %v4016 = vmul.f32 %v3820, 0.1
      %v4017 = vmul.f32 %v3825, 0.1
      %v4018 = vmul.f32 %v3828, 0.1
      %v4019 = vmul.f32 %v3833, 0.1
      %v4020 = vmul.f32 %v3836, 0.1
      %v4021 = vmul.f32 %v3841, 0.1
      %v4022 = vmul.f32 %v3844, 0.1
      %v4023 = vmul.f32 %v3849, 0.1
      %v4024 = vmul.f32 %v3852, 0.1
      %v4025 = vmul.f32 %v3857, 0.1
      %v4026 = vmul.f32 %v3860, 0.1
      %v4027 = vmul.f32 %v3865, 0.1
      %v4028 = vmul.f32 %v3868, 0.1
      %v4029 = vmul.f32 %v3873, 0.1
      %v4030 = vmul.f32 %v3876, 0.1
      %v4031 = vmul.f32 %v3881, 0.1
      %v4032 = vmul.f32 %v3884, 0.1
      %v4033 = vmul.f32 %v3889, 0.1
      %v4034 = vmul.f32 %v3892, 0.1
      %v4035 = vmul.f32 %v3897, 0.1
      %v4036 = vmul.f32 %v3900, 0.1
      %v4037 = vmul.f32 %v3905, 0.1
      %v4038 = vmul.f32 %v3908, 0.1
      %v4039 = vmul.f32 %v3913, 0.1
      %v4040 = vmul.f32 %v3916, 0.1
      %v4041 = vmul.f32 %v3921, 0.1
      %v4042 = vmul.f32 %v3924, 0.1
      %v4043 = vmul.f32 %v3929, 0.1
      %v4044 = vmul.f32 %v3932, 0.1
      %v4045 = vmul.f32 %v3937, 0.1
      %v4046 = vmul.f32 %v3940, 0.1
      %v4047 = vmul.f32 %v3945, 0.1
      %v4048 = vmul.f32 %v3948, 0.1
      %v4049 = vmul.f32 %v3953, 0.1
      %v4050 = vmul.f32 %v3956, 0.1
      %v4051 = vmul.f32 %v3961, 0.1
      %v4052 = vmul.f32 %v3964, 0.1
      %v4053 = vmul.f32 %v3969, 0.1
      %v4054 = vmul.f32 %v3972, 0.1
      %v4055 = vsel %vm3975, %v3817, %v4015
      %v4056 = vsel %vm3976, %v3820, %v4016
      %v4057 = vsel %vm3977, %v3825, %v4017
      %v4058 = vsel %vm3978, %v3828, %v4018
      %v4059 = vsel %vm3979, %v3833, %v4019
      %v4060 = vsel %vm3980, %v3836, %v4020
      %v4061 = vsel %vm3981, %v3841, %v4021
      %v4062 = vsel %vm3982, %v3844, %v4022
      %v4063 = vsel %vm3983, %v3849, %v4023
      %v4064 = vsel %vm3984, %v3852, %v4024
      %v4065 = vsel %vm3985, %v3857, %v4025
      %v4066 = vsel %vm3986, %v3860, %v4026
      %v4067 = vsel %vm3987, %v3865, %v4027
      %v4068 = vsel %vm3988, %v3868, %v4028
      %v4069 = vsel %vm3989, %v3873, %v4029
      %v4070 = vsel %vm3990, %v3876, %v4030
      %v4071 = vsel %vm3991, %v3881, %v4031
      %v4072 = vsel %vm3992, %v3884, %v4032
      %v4073 = vsel %vm3993, %v3889, %v4033
      %v4074 = vsel %vm3994, %v3892, %v4034
      %v4075 = vsel %vm3995, %v3897, %v4035
      %v4076 = vsel %vm3996, %v3900, %v4036
      %v4077 = vsel %vm3997, %v3905, %v4037
      %v4078 = vsel %vm3998, %v3908, %v4038
      %v4079 = vsel %vm3999, %v3913, %v4039
      %v4080 = vsel %vm4000, %v3916, %v4040
      %v4081 = vsel %vm4001, %v3921, %v4041
      %v4082 = vsel %vm4002, %v3924, %v4042
      %v4083 = vsel %vm4003, %v3929, %v4043
      %v4084 = vsel %vm4004, %v3932, %v4044
      %v4085 = vsel %vm4005, %v3937, %v4045
      %v4086 = vsel %vm4006, %v3940, %v4046
      %v4087 = vsel %vm4007, %v3945, %v4047
      %v4088 = vsel %vm4008, %v3948, %v4048
      %v4089 = vsel %vm4009, %v3953, %v4049
      %v4090 = vsel %vm4010, %v3956, %v4050
      %v4091 = vsel %vm4011, %v3961, %v4051
      %v4092 = vsel %vm4012, %v3964, %v4052
      %v4093 = vsel %vm4013, %v3969, %v4053
      %v4094 = vsel %vm4014, %v3972, %v4054
      %v4095 = vpack.c.bf16 %v4056, %v4055
      %v4096 = vpack.c.bf16 %v4058, %v4057
      %v4097 = vpack.c.bf16 %v4060, %v4059
      %v4098 = vpack.c.bf16 %v4062, %v4061
      %v4099 = vpack.c.bf16 %v4064, %v4063
      %v4100 = vpack.c.bf16 %v4066, %v4065
      %v4101 = vpack.c.bf16 %v4068, %v4067
      %v4102 = vpack.c.bf16 %v4070, %v4069
      %v4103 = vpack.c.bf16 %v4072, %v4071
      %v4104 = vpack.c.bf16 %v4074, %v4073
      %v4105 = vpack.c.bf16 %v4076, %v4075
      %v4106 = vpack.c.bf16 %v4078, %v4077
      %v4107 = vpack.c.bf16 %v4080, %v4079
      %v4108 = vpack.c.bf16 %v4082, %v4081
      %v4109 = vpack.c.bf16 %v4084, %v4083
      %v4110 = vpack.c.bf16 %v4086, %v4085
      %v4111 = vpack.c.bf16 %v4088, %v4087
      %v4112 = vpack.c.bf16 %v4090, %v4089
      %v4113 = vpack.c.bf16 %v4092, %v4091
      %v4114 = vpack.c.bf16 %v4094, %v4093
      %v4135 = vunpack.c.l.b16 %v4095
      %v4136 = vunpack.c.h.b16 %v4095
      %v4137 = vunpack.c.l.b16 %v4096
      %v4138 = vunpack.c.h.b16 %v4096
      %v4139 = vunpack.c.l.b16 %v4097
      %v4140 = vunpack.c.h.b16 %v4097
      %v4141 = vunpack.c.l.b16 %v4098
      %v4142 = vunpack.c.h.b16 %v4098
      %v4143 = vunpack.c.l.b16 %v4099
      %v4144 = vunpack.c.h.b16 %v4099
      %v4145 = vunpack.c.l.b16 %v4100
      %v4146 = vunpack.c.h.b16 %v4100
      %v4147 = vunpack.c.l.b16 %v4101
      %v4148 = vunpack.c.h.b16 %v4101
      %v4149 = vunpack.c.l.b16 %v4102
      %v4150 = vunpack.c.h.b16 %v4102
      %v4151 = vunpack.c.l.b16 %v4103
      %v4152 = vunpack.c.h.b16 %v4103
      %v4153 = vunpack.c.l.b16 %v4104
      %v4154 = vunpack.c.h.b16 %v4104
      %v4155 = vunpack.c.l.b16 %v4105
      %v4156 = vunpack.c.h.b16 %v4105
      %v4157 = vunpack.c.l.b16 %v4106
      %v4158 = vunpack.c.h.b16 %v4106
      %v4159 = vunpack.c.l.b16 %v4107
      %v4160 = vunpack.c.h.b16 %v4107
      %v4161 = vunpack.c.l.b16 %v4108
      %v4162 = vunpack.c.h.b16 %v4108
      %v4163 = vunpack.c.l.b16 %v4109
      %v4164 = vunpack.c.h.b16 %v4109
      %v4165 = vunpack.c.l.b16 %v4110
      %v4166 = vunpack.c.h.b16 %v4110
      %v4167 = vunpack.c.l.b16 %v4111
      %v4168 = vunpack.c.h.b16 %v4111
      %v4169 = vunpack.c.l.b16 %v4112
      %v4170 = vunpack.c.h.b16 %v4112
      %v4171 = vunpack.c.l.b16 %v4113
      %v4172 = vunpack.c.h.b16 %v4113
      %v4173 = vunpack.c.l.b16 %v4114
      %v4174 = vunpack.c.h.b16 %v4114
      %v4175 = vpack.c.b16 %v4135, %v4135
      %v4176 = vpack.c.b16 %v4136, %v4136
      %v4177 = vpack.c.b16 %v4137, %v4137
      %v4178 = vpack.c.b16 %v4138, %v4138
      %v4179 = vpack.c.b16 %v4139, %v4139
      %v4180 = vpack.c.b16 %v4140, %v4140
      %v4181 = vpack.c.b16 %v4141, %v4141
      %v4182 = vpack.c.b16 %v4142, %v4142
      %v4183 = vpack.c.b16 %v4143, %v4143
      %v4184 = vpack.c.b16 %v4144, %v4144
      %v4185 = vpack.c.b16 %v4145, %v4145
      %v4186 = vpack.c.b16 %v4146, %v4146
      %v4187 = vpack.c.b16 %v4147, %v4147
      %v4188 = vpack.c.b16 %v4148, %v4148
      %v4189 = vpack.c.b16 %v4149, %v4149
      %v4190 = vpack.c.b16 %v4150, %v4150
      %v4191 = vpack.c.b16 %v4151, %v4151
      %v4192 = vpack.c.b16 %v4152, %v4152
      %v4193 = vpack.c.b16 %v4153, %v4153
      %v4194 = vpack.c.b16 %v4154, %v4154
      %v4195 = vpack.c.b16 %v4155, %v4155
      %v4196 = vpack.c.b16 %v4156, %v4156
      %v4197 = vpack.c.b16 %v4157, %v4157
      %v4198 = vpack.c.b16 %v4158, %v4158
      %v4199 = vpack.c.b16 %v4159, %v4159
      %v4200 = vpack.c.b16 %v4160, %v4160
      %v4201 = vpack.c.b16 %v4161, %v4161
      %v4202 = vpack.c.b16 %v4162, %v4162
      %v4203 = vpack.c.b16 %v4163, %v4163
      %v4204 = vpack.c.b16 %v4164, %v4164
      %v4205 = vpack.c.b16 %v4165, %v4165
      %v4206 = vpack.c.b16 %v4166, %v4166
      %v4207 = vpack.c.b16 %v4167, %v4167
      %v4208 = vpack.c.b16 %v4168, %v4168
      %v4209 = vpack.c.b16 %v4169, %v4169
      %v4210 = vpack.c.b16 %v4170, %v4170
      %v4211 = vpack.c.b16 %v4171, %v4171
      %v4212 = vpack.c.b16 %v4172, %v4172
      %v4213 = vpack.c.b16 %v4173, %v4173
      %v4214 = vpack.c.b16 %v4174, %v4174
      %vm4255 = vcmask 519168
      %4256 = vst.msk [vmem:[%s224] sm:$0xf] %vm4255, %v4175
      %4257 = vst.msk [vmem:[%s224 + $0x4] sm:$0xf] %vm4255, %v4176
      %4258 = vst.msk [vmem:[%s224 + $0x8] sm:$0xf] %vm4255, %v4177
      %4259 = vst.msk [vmem:[%s224 + $0xc] sm:$0xf] %vm4255, %v4178
      %4260 = vst.msk [vmem:[%s224 + $0x10] sm:$0xf] %vm4255, %v4179
      %4261 = vst.msk [vmem:[%s224 + $0x14] sm:$0xf] %vm4255, %v4180
      %4262 = vst.msk [vmem:[%s224 + $0x18] sm:$0xf] %vm4255, %v4181
      %4263 = vst.msk [vmem:[%s224 + $0x1c] sm:$0xf] %vm4255, %v4182
      %4264 = vst.msk [vmem:[%s224 + $0x20] sm:$0xf] %vm4255, %v4183
      %4265 = vst.msk [vmem:[%s224 + $0x24] sm:$0xf] %vm4255, %v4184
      %4266 = vst.msk [vmem:[%s224 + $0x28] sm:$0xf] %vm4255, %v4185
      %4267 = vst.msk [vmem:[%s224 + $0x2c] sm:$0xf] %vm4255, %v4186
      %4268 = vst.msk [vmem:[%s224 + $0x30] sm:$0xf] %vm4255, %v4187
      %4269 = vst.msk [vmem:[%s224 + $0x34] sm:$0xf] %vm4255, %v4188
      %4270 = vst.msk [vmem:[%s224 + $0x38] sm:$0xf] %vm4255, %v4189
      %4271 = vst.msk [vmem:[%s224 + $0x3c] sm:$0xf] %vm4255, %v4190
      %4272 = vst.msk [vmem:[%s224 + $0x40] sm:$0xf] %vm4255, %v4191
      %4273 = vst.msk [vmem:[%s224 + $0x44] sm:$0xf] %vm4255, %v4192
      %4274 = vst.msk [vmem:[%s224 + $0x48] sm:$0xf] %vm4255, %v4193
      %4275 = vst.msk [vmem:[%s224 + $0x4c] sm:$0xf] %vm4255, %v4194
      %4276 = vst.msk [vmem:[%s224 + $0x50] sm:$0xf] %vm4255, %v4195
      %4277 = vst.msk [vmem:[%s224 + $0x54] sm:$0xf] %vm4255, %v4196
      %4278 = vst.msk [vmem:[%s224 + $0x58] sm:$0xf] %vm4255, %v4197
      %4279 = vst.msk [vmem:[%s224 + $0x5c] sm:$0xf] %vm4255, %v4198
      %4280 = vst.msk [vmem:[%s224 + $0x60] sm:$0xf] %vm4255, %v4199
      %4281 = vst.msk [vmem:[%s224 + $0x64] sm:$0xf] %vm4255, %v4200
      %4282 = vst.msk [vmem:[%s224 + $0x68] sm:$0xf] %vm4255, %v4201
      %4283 = vst.msk [vmem:[%s224 + $0x6c] sm:$0xf] %vm4255, %v4202
      %4284 = vst.msk [vmem:[%s224 + $0x70] sm:$0xf] %vm4255, %v4203
      %4285 = vst.msk [vmem:[%s224 + $0x74] sm:$0xf] %vm4255, %v4204
      %4286 = vst.msk [vmem:[%s224 + $0x78] sm:$0xf] %vm4255, %v4205
      %4287 = vst.msk [vmem:[%s224 + $0x7c] sm:$0xf] %vm4255, %v4206
      %4288 = vst.msk [vmem:[%s224 + $0x80] sm:$0xf] %vm4255, %v4207
      %4289 = vst.msk [vmem:[%s224 + $0x84] sm:$0xf] %vm4255, %v4208
      %4290 = vst.msk [vmem:[%s224 + $0x88] sm:$0xf] %vm4255, %v4209
      %4291 = vst.msk [vmem:[%s224 + $0x8c] sm:$0xf] %vm4255, %v4210
      %4292 = vst.msk [vmem:[%s224 + $0x90] sm:$0xf] %vm4255, %v4211
      %4293 = vst.msk [vmem:[%s224 + $0x94] sm:$0xf] %vm4255, %v4212
      %4294 = vst.msk [vmem:[%s224 + $0x98] sm:$0xf] %vm4255, %v4213
      %vm4295 = vcmask 517120
      %4296 = vst.msk [vmem:[%s224 + $0x9c] sm:$0x3] %vm4295, %v4214
      %p4297 = scmp.lt.s32.totalorder %s16, 1
      %s4298 = scalar_select %p4297, %s16, 1
      %s4299 = smul.addr %s4298, 40
      %s4300 = smul.addr %s4299, 4
      %s4301 = scalar_lea.vmem %s5, %s4300
      // Predicated region
      $region41: #{unet1_forward.3} parent=39 // pred_check
        %p4302 = pneg %p144
      $region42: #{unet1_forward.3} parent=39 // pred_check_branch
        %4304 = sbr.rel (%p4302) target = $region44
      $region43: #{unet1_forward.3} parent=39 // pred_region
        _
      $region44: #{unet1_forward.3} parent=39 // pred_fallthru
        _
    $region40: #{unet1_forward.3} parent=5 // pred_fallthru
      _
    %p4305 = scmp.le.s32.totalorder 2, %s11
    // Predicated region
    $region45: #{unet1_forward.3} parent=5 // pred_check
      %p4306 = pneg %p4305
    $region46: #{unet1_forward.3} parent=5 // pred_check_branch
      %4308 = sbr.rel (%p4306) target = $region48
    $region47: #{unet1_forward.3} parent=5 // pred_region
      %s4309 = ssub.s32 %s11, 2
      // Predicated region
      $region49: #{unet1_forward.3} parent=47 // pred_check
        %p4310 = pneg %p150
      $region50: #{unet1_forward.3} parent=47 // pred_check_branch
        %4312 = sbr.rel (%p4310) target = $region52
      $region51: #{unet1_forward.3} parent=47 // pred_region
        %p4313 = scmp.lt.s32.totalorder %s17, 1
        %s4314 = scalar_select %p4313, %s17, 1
        %s4315 = smul.addr %s4314, 40
        %s4316 = smul.addr %s4315, 4
        %s4317 = scalar_lea.vmem %s5, %s4316
      $region52: #{unet1_forward.3} parent=47 // pred_fallthru
        _
    $region48: #{unet1_forward.3} parent=5 // pred_fallthru
      _
  $region6: #{unet1_forward.3} parent=0 // loop_footer
    %s15 = sadd.s32 1, %s11
  $region7: #{unet1_forward.3} parent=0 // loop_footer_branch
    %10 = sbr.rel target = $region3
  $region8: #{unet1_forward.3} parent=0 // loop_exit
    _

// kernel: unet1_forward.4
$region0: #{unet1_forward.4}
  #allocation0 [shape = 'u32[]', space=smem, size = 0x4, offset = 0x4, fixed_abs, tag = 'smem constant byte address 0x4 - core index']
  #allocation1 [shape = 'u32[144,128]{1,0:T(1,128)}', space=vmem, size = 0x12000, scoped, tag = 'internal scratch']
  %s0 = inlined_call_operand.vmem [shape: bf16[2,64,256], index: 0, kind: input, shape index: {}]
  %s1 = inlined_call_operand.vmem [shape: bf16[256,64], index: 1, kind: input, shape index: {}]
  %s2 = inlined_call_operand.vmem [shape: f32[1,64], index: 2, kind: input, shape index: {}]
  %s3 = inlined_call_operand.vmem [shape: bf16[576,128], index: 3, kind: input, shape index: {}]
  %s4 = inlined_call_operand.vmem [shape: f32[1,128], index: 4, kind: input, shape index: {}]
  %s5 = inlined_call_operand.vmem [shape: bf16[1152,64], index: 5, kind: input, shape index: {}]
  %s6 = inlined_call_operand.vmem [shape: f32[1,64], index: 6, kind: input, shape index: {}]
  %s7 = inlined_call_operand.vmem [shape: f32[64,8], index: 7, kind: input, shape index: {}]
  %s8 = inlined_call_operand.vmem [shape: f32[1,8], index: 8, kind: input, shape index: {}]
  %s9 = inlined_call_operand.vmem [shape: f32[8,64], index: 9, kind: input, shape index: {}]
  %s10 = inlined_call_operand.vmem [shape: f32[1,64], index: 10, kind: input, shape index: {}]
  %s11 = inlined_call_operand.vmem [shape: bf16[64,256], index: 11, kind: input, shape index: {}]
  %s12 = inlined_call_operand.vmem [shape: f32[1,256], index: 12, kind: input, shape index: {}]
  %s13 = inlined_call_operand.vmem [shape: bf16[2,28,256], index: 13, kind: output, shape index: {}]
  %s14 = sld [smem:[#allocation0]]
  $region85: #{unet1_forward.4} parent=0
    _
  %s16 = ssub.s32 1, %s14
  %s17 = scalar_select 0, %s16, %s14
  loop: start=0, step=1, limit=4
  $region2: #{unet1_forward.4} parent=0 // loop_pre_header
    _
  $region3: #{unet1_forward.4} parent=0 // loop_header
    %s19 = sphi 0, %s23
    %p20 = scmp.ge.s32.totalorder %s19, 4
    %s29 = sphi 0, %s31
    %s32 = sphi 0, %s29
    %s33 = sphi 0, %s32
    %s49 = sphi 0, %s33
    %s53 = sphi 0, %s53
    %s55 = sphi 0, %s53
    %s56 = sphi 0, %s55
    %s70 = sphi 0, %s56
    %s74 = sphi 0, %s74
    %s76 = sphi 0, %s74
    %s77 = sphi 0, %s76
    %s91 = sphi 0, %s77
    %s95 = sphi 0, %s95
    %s97 = sphi 0, %s95
    %s98 = sphi 0, %s97
    %s112 = sphi 0, %s98
    %s116 = sphi 0, %s116
    %s118 = sphi 0, %s116
    %s119 = sphi 0, %s118
    %s133 = sphi 0, %s119
    %s137 = sphi 0, %s137
    %s139 = sphi 0, %s137
    %s140 = sphi 0, %s139
    %s154 = sphi 0, %s140
    %s158 = sphi 0, %s158
    %s160 = sphi 0, %s158
    %s161 = sphi 0, %s160
    %s175 = sphi 0, %s161
    %s179 = sphi 0, %s179
    %s181 = sphi 0, %s179
    %s182 = sphi 0, %s181
    %s196 = sphi 0, %s182
    %s200 = sphi 0, %s200
    %s202 = sphi 0, %s200
    %s203 = sphi 0, %s202
    %s217 = sphi 0, %s203
    %s221 = sphi 0, %s221
    %s223 = sphi 0, %s221
    %s224 = sphi 0, %s223
    %s238 = sphi 0, %s224
    %s242 = sphi 0, %s242
    %s244 = sphi 0, %s242
    %s245 = sphi 0, %s244
    %s259 = sphi 0, %s245
    %s263 = sphi 0, %s263
    %s265 = sphi 0, %s263
    %s266 = sphi 0, %s265
    %s280 = sphi 0, %s266
    %s284 = sphi 0, %s284
    %s286 = sphi 0, %s284
    %s287 = sphi 0, %s286
    %s301 = sphi 0, %s287
    %s307 = sphi 0, %s309
    %s310 = sphi 0, %s307
    %s311 = sphi 0, %s310
    %s327 = sphi 0, %s311
  $region4: #{unet1_forward.4} parent=0 // loop_header_branch
    %22 = sbr.rel (%p20) target = $region8
  $region5: #{unet1_forward.4} parent=0 // loop_body
    %s24 = ssub.s32 %s19, 1
    %s25 = ssub.s32 %s19, 2
    %s26 = sadd.s32 %s19, 1
    %s27 = ssub.s32 %s19, %s26
    %p28 = scmp.eq.s32.totalorder %s27, 0
    %s30 = sadd.s32 %s29, 1
    %s31 = scalar_select %p28, %s29, %s30
    %p34 = pneg %p28
    %p35 = scmp.eq.s32.totalorder %s19, 1
    %p36 = por %p34, %p35
    %p37 = scmp.ne.s32.totalorder %s29, %s32
    %p38 = scmp.eq.s32.totalorder %s19, 0
    %p39 = por %p37, %p38
    %p40 = scmp.ne.s32.totalorder %s29, %s32
    %p41 = scmp.eq.s32.totalorder %s24, 1
    %p42 = por %p40, %p41
    %p43 = scmp.ne.s32.totalorder %s32, %s33
    %p44 = scmp.eq.s32.totalorder %s24, 0
    %p45 = por %p43, %p44
    %p46 = scmp.ne.s32.totalorder %s32, %s33
    %p47 = scmp.eq.s32.totalorder %s25, 1
    %p48 = por %p46, %p47
    %p50 = scmp.ne.s32.totalorder %s33, %s49
    %p51 = scmp.eq.s32.totalorder %s25, 0
    %p52 = por %p50, %p51
    %s54 = sadd.s32 %s53, 1
    %p57 = scmp.eq.s32.totalorder %s19, 1
    %p58 = scmp.ne.s32.totalorder %s53, %s55
    %p59 = scmp.eq.s32.totalorder %s19, 0
    %p60 = por %p58, %p59
    %p61 = scmp.ne.s32.totalorder %s53, %s55
    %p62 = scmp.eq.s32.totalorder %s24, 1
    %p63 = por %p61, %p62
    %p64 = scmp.ne.s32.totalorder %s55, %s56
    %p65 = scmp.eq.s32.totalorder %s24, 0
    %p66 = por %p64, %p65
    %p67 = scmp.ne.s32.totalorder %s55, %s56
    %p68 = scmp.eq.s32.totalorder %s25, 1
    %p69 = por %p67, %p68
    %p71 = scmp.ne.s32.totalorder %s56, %s70
    %p72 = scmp.eq.s32.totalorder %s25, 0
    %p73 = por %p71, %p72
    %s75 = sadd.s32 %s74, 1
    %p78 = scmp.eq.s32.totalorder %s19, 1
    %p79 = scmp.ne.s32.totalorder %s74, %s76
    %p80 = scmp.eq.s32.totalorder %s19, 0
    %p81 = por %p79, %p80
    %p82 = scmp.ne.s32.totalorder %s74, %s76
    %p83 = scmp.eq.s32.totalorder %s24, 1
    %p84 = por %p82, %p83
    %p85 = scmp.ne.s32.totalorder %s76, %s77
    %p86 = scmp.eq.s32.totalorder %s24, 0
    %p87 = por %p85, %p86
    %p88 = scmp.ne.s32.totalorder %s76, %s77
    %p89 = scmp.eq.s32.totalorder %s25, 1
    %p90 = por %p88, %p89
    %p92 = scmp.ne.s32.totalorder %s77, %s91
    %p93 = scmp.eq.s32.totalorder %s25, 0
    %p94 = por %p92, %p93
    %s96 = sadd.s32 %s95, 1
    %p99 = scmp.eq.s32.totalorder %s19, 1
    %p100 = scmp.ne.s32.totalorder %s95, %s97
    %p101 = scmp.eq.s32.totalorder %s19, 0
    %p102 = por %p100, %p101
    %p103 = scmp.ne.s32.totalorder %s95, %s97
    %p104 = scmp.eq.s32.totalorder %s24, 1
    %p105 = por %p103, %p104
    %p106 = scmp.ne.s32.totalorder %s97, %s98
    %p107 = scmp.eq.s32.totalorder %s24, 0
    %p108 = por %p106, %p107
    %p109 = scmp.ne.s32.totalorder %s97, %s98
    %p110 = scmp.eq.s32.totalorder %s25, 1
    %p111 = por %p109, %p110
    %p113 = scmp.ne.s32.totalorder %s98, %s112
    %p114 = scmp.eq.s32.totalorder %s25, 0
    %p115 = por %p113, %p114
    %s117 = sadd.s32 %s116, 1
    %p120 = scmp.eq.s32.totalorder %s19, 1
    %p121 = scmp.ne.s32.totalorder %s116, %s118
    %p122 = scmp.eq.s32.totalorder %s19, 0
    %p123 = por %p121, %p122
    %p124 = scmp.ne.s32.totalorder %s116, %s118
    %p125 = scmp.eq.s32.totalorder %s24, 1
    %p126 = por %p124, %p125
    %p127 = scmp.ne.s32.totalorder %s118, %s119
    %p128 = scmp.eq.s32.totalorder %s24, 0
    %p129 = por %p127, %p128
    %p130 = scmp.ne.s32.totalorder %s118, %s119
    %p131 = scmp.eq.s32.totalorder %s25, 1
    %p132 = por %p130, %p131
    %p134 = scmp.ne.s32.totalorder %s119, %s133
    %p135 = scmp.eq.s32.totalorder %s25, 0
    %p136 = por %p134, %p135
    %s138 = sadd.s32 %s137, 1
    %p141 = scmp.eq.s32.totalorder %s19, 1
    %p142 = scmp.ne.s32.totalorder %s137, %s139
    %p143 = scmp.eq.s32.totalorder %s19, 0
    %p144 = por %p142, %p143
    %p145 = scmp.ne.s32.totalorder %s137, %s139
    %p146 = scmp.eq.s32.totalorder %s24, 1
    %p147 = por %p145, %p146
    %p148 = scmp.ne.s32.totalorder %s139, %s140
    %p149 = scmp.eq.s32.totalorder %s24, 0
    %p150 = por %p148, %p149
    %p151 = scmp.ne.s32.totalorder %s139, %s140
    %p152 = scmp.eq.s32.totalorder %s25, 1
    %p153 = por %p151, %p152
    %p155 = scmp.ne.s32.totalorder %s140, %s154
    %p156 = scmp.eq.s32.totalorder %s25, 0
    %p157 = por %p155, %p156
    %s159 = sadd.s32 %s158, 1
    %p162 = scmp.eq.s32.totalorder %s19, 1
    %p163 = scmp.ne.s32.totalorder %s158, %s160
    %p164 = scmp.eq.s32.totalorder %s19, 0
    %p165 = por %p163, %p164
    %p166 = scmp.ne.s32.totalorder %s158, %s160
    %p167 = scmp.eq.s32.totalorder %s24, 1
    %p168 = por %p166, %p167
    %p169 = scmp.ne.s32.totalorder %s160, %s161
    %p170 = scmp.eq.s32.totalorder %s24, 0
    %p171 = por %p169, %p170
    %p172 = scmp.ne.s32.totalorder %s160, %s161
    %p173 = scmp.eq.s32.totalorder %s25, 1
    %p174 = por %p172, %p173
    %p176 = scmp.ne.s32.totalorder %s161, %s175
    %p177 = scmp.eq.s32.totalorder %s25, 0
    %p178 = por %p176, %p177
    %s180 = sadd.s32 %s179, 1
    %p183 = scmp.eq.s32.totalorder %s19, 1
    %p184 = scmp.ne.s32.totalorder %s179, %s181
    %p185 = scmp.eq.s32.totalorder %s19, 0
    %p186 = por %p184, %p185
    %p187 = scmp.ne.s32.totalorder %s179, %s181
    %p188 = scmp.eq.s32.totalorder %s24, 1
    %p189 = por %p187, %p188
    %p190 = scmp.ne.s32.totalorder %s181, %s182
    %p191 = scmp.eq.s32.totalorder %s24, 0
    %p192 = por %p190, %p191
    %p193 = scmp.ne.s32.totalorder %s181, %s182
    %p194 = scmp.eq.s32.totalorder %s25, 1
    %p195 = por %p193, %p194
    %p197 = scmp.ne.s32.totalorder %s182, %s196
    %p198 = scmp.eq.s32.totalorder %s25, 0
    %p199 = por %p197, %p198
    %s201 = sadd.s32 %s200, 1
    %p204 = scmp.eq.s32.totalorder %s19, 1
    %p205 = scmp.ne.s32.totalorder %s200, %s202
    %p206 = scmp.eq.s32.totalorder %s19, 0
    %p207 = por %p205, %p206
    %p208 = scmp.ne.s32.totalorder %s200, %s202
    %p209 = scmp.eq.s32.totalorder %s24, 1
    %p210 = por %p208, %p209
    %p211 = scmp.ne.s32.totalorder %s202, %s203
    %p212 = scmp.eq.s32.totalorder %s24, 0
    %p213 = por %p211, %p212
    %p214 = scmp.ne.s32.totalorder %s202, %s203
    %p215 = scmp.eq.s32.totalorder %s25, 1
    %p216 = por %p214, %p215
    %p218 = scmp.ne.s32.totalorder %s203, %s217
    %p219 = scmp.eq.s32.totalorder %s25, 0
    %p220 = por %p218, %p219
    %s222 = sadd.s32 %s221, 1
    %p225 = scmp.eq.s32.totalorder %s19, 1
    %p226 = scmp.ne.s32.totalorder %s221, %s223
    %p227 = scmp.eq.s32.totalorder %s19, 0
    %p228 = por %p226, %p227
    %p229 = scmp.ne.s32.totalorder %s221, %s223
    %p230 = scmp.eq.s32.totalorder %s24, 1
    %p231 = por %p229, %p230
    %p232 = scmp.ne.s32.totalorder %s223, %s224
    %p233 = scmp.eq.s32.totalorder %s24, 0
    %p234 = por %p232, %p233
    %p235 = scmp.ne.s32.totalorder %s223, %s224
    %p236 = scmp.eq.s32.totalorder %s25, 1
    %p237 = por %p235, %p236
    %p239 = scmp.ne.s32.totalorder %s224, %s238
    %p240 = scmp.eq.s32.totalorder %s25, 0
    %p241 = por %p239, %p240
    %s243 = sadd.s32 %s242, 1
    %p246 = scmp.eq.s32.totalorder %s19, 1
    %p247 = scmp.ne.s32.totalorder %s242, %s244
    %p248 = scmp.eq.s32.totalorder %s19, 0
    %p249 = por %p247, %p248
    %p250 = scmp.ne.s32.totalorder %s242, %s244
    %p251 = scmp.eq.s32.totalorder %s24, 1
    %p252 = por %p250, %p251
    %p253 = scmp.ne.s32.totalorder %s244, %s245
    %p254 = scmp.eq.s32.totalorder %s24, 0
    %p255 = por %p253, %p254
    %p256 = scmp.ne.s32.totalorder %s244, %s245
    %p257 = scmp.eq.s32.totalorder %s25, 1
    %p258 = por %p256, %p257
    %p260 = scmp.ne.s32.totalorder %s245, %s259
    %p261 = scmp.eq.s32.totalorder %s25, 0
    %p262 = por %p260, %p261
    %s264 = sadd.s32 %s263, 1
    %p267 = scmp.eq.s32.totalorder %s19, 1
    %p268 = scmp.ne.s32.totalorder %s263, %s265
    %p269 = scmp.eq.s32.totalorder %s19, 0
    %p270 = por %p268, %p269
    %p271 = scmp.ne.s32.totalorder %s263, %s265
    %p272 = scmp.eq.s32.totalorder %s24, 1
    %p273 = por %p271, %p272
    %p274 = scmp.ne.s32.totalorder %s265, %s266
    %p275 = scmp.eq.s32.totalorder %s24, 0
    %p276 = por %p274, %p275
    %p277 = scmp.ne.s32.totalorder %s265, %s266
    %p278 = scmp.eq.s32.totalorder %s25, 1
    %p279 = por %p277, %p278
    %p281 = scmp.ne.s32.totalorder %s266, %s280
    %p282 = scmp.eq.s32.totalorder %s25, 0
    %p283 = por %p281, %p282
    %s285 = sadd.s32 %s284, 1
    %p288 = scmp.eq.s32.totalorder %s19, 1
    %p289 = scmp.ne.s32.totalorder %s284, %s286
    %p290 = scmp.eq.s32.totalorder %s19, 0
    %p291 = por %p289, %p290
    %p292 = scmp.ne.s32.totalorder %s284, %s286
    %p293 = scmp.eq.s32.totalorder %s24, 1
    %p294 = por %p292, %p293
    %p295 = scmp.ne.s32.totalorder %s286, %s287
    %p296 = scmp.eq.s32.totalorder %s24, 0
    %p297 = por %p295, %p296
    %p298 = scmp.ne.s32.totalorder %s286, %s287
    %p299 = scmp.eq.s32.totalorder %s25, 1
    %p300 = por %p298, %p299
    %p302 = scmp.ne.s32.totalorder %s287, %s301
    %p303 = scmp.eq.s32.totalorder %s25, 0
    %p304 = por %p302, %p303
    %s305 = ssub.s32 %s19, %s26
    %p306 = scmp.eq.s32.totalorder %s305, 0
    %s308 = sadd.s32 %s307, 1
    %s309 = scalar_select %p306, %s307, %s308
    %p312 = pneg %p306
    %p313 = scmp.eq.s32.totalorder %s19, 1
    %p314 = por %p312, %p313
    %p315 = scmp.ne.s32.totalorder %s307, %s310
    %p316 = scmp.eq.s32.totalorder %s19, 0
    %p317 = por %p315, %p316
    %p318 = scmp.ne.s32.totalorder %s307, %s310
    %p319 = scmp.eq.s32.totalorder %s24, 1
    %p320 = por %p318, %p319
    %p321 = scmp.ne.s32.totalorder %s310, %s311
    %p322 = scmp.eq.s32.totalorder %s24, 0
    %p323 = por %p321, %p322
    %p324 = scmp.ne.s32.totalorder %s310, %s311
    %p325 = scmp.eq.s32.totalorder %s25, 1
    %p326 = por %p324, %p325
    %p328 = scmp.ne.s32.totalorder %s311, %s327
    %p329 = scmp.eq.s32.totalorder %s25, 0
    %p330 = por %p328, %p329
    %p331 = scmp.le.s32.totalorder 1, %s19
    %p332 = scmp.lt.s32.totalorder %s19, 3
    %p333 = pnand %p331, %p332
    %p334 = pneg %p333
    // Predicated region
    $region9: #{unet1_forward.4} parent=5 // pred_check
      _
    $region10: #{unet1_forward.4} parent=5 // pred_check_branch
      %336 = sbr.rel (%p333) target = $region12
    $region11: #{unet1_forward.4} parent=5 // pred_region
      %s337 = ssub.s32 %s19, 1
      // Predicated region
      $region13: #{unet1_forward.4} parent=11 // pred_check
        %p338 = pneg %p66
      $region14: #{unet1_forward.4} parent=11 // pred_check_branch
        %340 = sbr.rel (%p338) target = $region16
      $region15: #{unet1_forward.4} parent=11 // pred_region
        _
      $region16: #{unet1_forward.4} parent=11 // pred_fallthru
        _
      // Predicated region
      $region17: #{unet1_forward.4} parent=11 // pred_check
        %p341 = pneg %p87
      $region18: #{unet1_forward.4} parent=11 // pred_check_branch
        %343 = sbr.rel (%p341) target = $region20
      $region19: #{unet1_forward.4} parent=11 // pred_region
        _
      $region20: #{unet1_forward.4} parent=11 // pred_fallthru
        _
      // Predicated region
      $region21: #{unet1_forward.4} parent=11 // pred_check
        %p344 = pneg %p108
      $region22: #{unet1_forward.4} parent=11 // pred_check_branch
        %346 = sbr.rel (%p344) target = $region24
      $region23: #{unet1_forward.4} parent=11 // pred_region
        _
      $region24: #{unet1_forward.4} parent=11 // pred_fallthru
        _
      // Predicated region
      $region25: #{unet1_forward.4} parent=11 // pred_check
        %p347 = pneg %p129
      $region26: #{unet1_forward.4} parent=11 // pred_check_branch
        %349 = sbr.rel (%p347) target = $region28
      $region27: #{unet1_forward.4} parent=11 // pred_region
        _
      $region28: #{unet1_forward.4} parent=11 // pred_fallthru
        _
      // Predicated region
      $region29: #{unet1_forward.4} parent=11 // pred_check
        %p350 = pneg %p150
      $region30: #{unet1_forward.4} parent=11 // pred_check_branch
        %352 = sbr.rel (%p350) target = $region32
      $region31: #{unet1_forward.4} parent=11 // pred_region
        _
      $region32: #{unet1_forward.4} parent=11 // pred_fallthru
        _
      // Predicated region
      $region33: #{unet1_forward.4} parent=11 // pred_check
        %p353 = pneg %p171
      $region34: #{unet1_forward.4} parent=11 // pred_check_branch
        %355 = sbr.rel (%p353) target = $region36
      $region35: #{unet1_forward.4} parent=11 // pred_region
        _
      $region36: #{unet1_forward.4} parent=11 // pred_fallthru
        _
      // Predicated region
      $region37: #{unet1_forward.4} parent=11 // pred_check
        %p356 = pneg %p192
      $region38: #{unet1_forward.4} parent=11 // pred_check_branch
        %358 = sbr.rel (%p356) target = $region40
      $region39: #{unet1_forward.4} parent=11 // pred_region
        _
      $region40: #{unet1_forward.4} parent=11 // pred_fallthru
        _
      // Predicated region
      $region41: #{unet1_forward.4} parent=11 // pred_check
        %p359 = pneg %p213
      $region42: #{unet1_forward.4} parent=11 // pred_check_branch
        %361 = sbr.rel (%p359) target = $region44
      $region43: #{unet1_forward.4} parent=11 // pred_region
        _
      $region44: #{unet1_forward.4} parent=11 // pred_fallthru
        _
      // Predicated region
      $region45: #{unet1_forward.4} parent=11 // pred_check
        %p362 = pneg %p234
      $region46: #{unet1_forward.4} parent=11 // pred_check_branch
        %364 = sbr.rel (%p362) target = $region48
      $region47: #{unet1_forward.4} parent=11 // pred_region
        _
      $region48: #{unet1_forward.4} parent=11 // pred_fallthru
        _
      // Predicated region
      $region49: #{unet1_forward.4} parent=11 // pred_check
        %p365 = pneg %p255
      $region50: #{unet1_forward.4} parent=11 // pred_check_branch
        %367 = sbr.rel (%p365) target = $region52
      $region51: #{unet1_forward.4} parent=11 // pred_region
        _
      $region52: #{unet1_forward.4} parent=11 // pred_fallthru
        _
      // Predicated region
      $region53: #{unet1_forward.4} parent=11 // pred_check
        %p368 = pneg %p276
      $region54: #{unet1_forward.4} parent=11 // pred_check_branch
        %370 = sbr.rel (%p368) target = $region56
      $region55: #{unet1_forward.4} parent=11 // pred_region
        _
      $region56: #{unet1_forward.4} parent=11 // pred_fallthru
        _
      // Predicated region
      $region57: #{unet1_forward.4} parent=11 // pred_check
        %p371 = pneg %p297
      $region58: #{unet1_forward.4} parent=11 // pred_check_branch
        %373 = sbr.rel (%p371) target = $region60
      $region59: #{unet1_forward.4} parent=11 // pred_region
        _
      $region60: #{unet1_forward.4} parent=11 // pred_fallthru
        _
    $region12: #{unet1_forward.4} parent=5 // pred_fallthru
      _
    %p374 = scmp.lt.s32.totalorder %s19, 2
    // Predicated region
    $region61: #{unet1_forward.4} parent=5 // pred_check
      %p375 = pneg %p374
    $region62: #{unet1_forward.4} parent=5 // pred_check_branch
      %377 = sbr.rel (%p375) target = $region64
    $region63: #{unet1_forward.4} parent=5 // pred_region
      // Predicated region
      $region65: #{unet1_forward.4} parent=63 // pred_check
        %p378 = pneg %p39
      $region66: #{unet1_forward.4} parent=63 // pred_check_branch
        %380 = sbr.rel (%p378) target = $region68
      $region67: #{unet1_forward.4} parent=63 // pred_region
        %p381 = scmp.lt.s32.totalorder %s19, 1
        %s382 = scalar_select %p381, %s19, 1
        %s383 = smul.addr %s382, 16
        %s384 = smul.addr %s383, 4
        %s385 = scalar_lea.vmem %s0, %s384
      $region68: #{unet1_forward.4} parent=63 // pred_fallthru
        _
    $region64: #{unet1_forward.4} parent=5 // pred_fallthru
      _
    %p386 = scmp.le.s32.totalorder 1, %s19
    %p387 = scmp.lt.s32.totalorder %s19, 3
    %p388 = pnand %p386, %p387
    %p389 = pneg %p388
    // Predicated region
    $region69: #{unet1_forward.4} parent=5 // pred_check
      _
    $region70: #{unet1_forward.4} parent=5 // pred_check_branch
      %391 = sbr.rel (%p388) target = $region72
    $region71: #{unet1_forward.4} parent=5 // pred_region
      %s392 = ssub.s32 %s19, 1
      %p393 = scmp.lt.s32.totalorder %s24, 1
      %s394 = scalar_select %p393, %s24, 1
      %s395 = smul.addr %s394, 16
      %s396 = smul.addr %s395, 4
      %s397 = scalar_lea.vmem %s0, %s396
      %p398 = pneg %p45
      %p399 = pneg %p42
      %p400 = pneg %p66
      %p401 = pneg %p63
      %p402 = pneg %p87
      %p403 = pneg %p84
      %p404 = pneg %p108
      %p405 = pneg %p105
      %p406 = pneg %p129
      %p407 = pneg %p126
      %p408 = pneg %p150
      %p409 = pneg %p147
      %p410 = pneg %p171
      %p411 = pneg %p168
      %p412 = pneg %p192
      %p413 = pneg %p189
      %p414 = pneg %p213
      %p415 = pneg %p210
      %p416 = pneg %p234
      %p417 = pneg %p231
      %p418 = pneg %p255
      %p419 = pneg %p252
      %p420 = pneg %p276
      %p421 = pneg %p273
      %p422 = pneg %p297
      %p423 = pneg %p294
      %p424 = pneg %p323
      %p425 = pneg %p320
      %p426 = scmp.lt.s32.totalorder %s24, 1
      %s427 = scalar_select %p426, %s24, 1
      %s428 = smul.addr %s427, 8
      %s429 = smul.addr %s428, 4
      %s430 = scalar_lea.vmem %s13, %s429
      %p431 = scmp.lt.s32.totalorder %s24, 1
      %s432 = scalar_select %p431, %s24, 1
      %s433 = smul.addr %s432, 16
      %s434 = smul.addr %s433, 4
      %s435 = scalar_lea.vmem %s0, %s434
      %p436 = scmp.lt.s32.totalorder %s24, 1
      %s437 = scalar_select %p436, %s24, 1
      %s438 = smul.addr %s437, 8
      %s439 = smul.addr %s438, 4
      %s440 = scalar_lea.vmem %s13, %s439
      %v442 = vld [vmem:[%s435] sm:$0xff]
      %v443 = vld [vmem:[%s435 + $0x8] sm:$0xff]
      %v444 = vld [vmem:[%s435 + $0x10] sm:$0xff]
      %v445 = vld [vmem:[%s435 + $0x18] sm:$0xff]
      %v446 = vld [vmem:[%s435 + $0x20] sm:$0xff]
      %v447 = vld [vmem:[%s435 + $0x28] sm:$0xff]
      %v448 = vld [vmem:[%s435 + $0x30] sm:$0xff]
      %v449 = vld [vmem:[%s435 + $0x38] sm:$0xff]
      %v450 = vld [vmem:[%s1] sm:$0xf]
      %v451 = vld [vmem:[%s1 + $0x4] sm:$0xf]
      %v452 = vld [vmem:[%s1 + $0x8] sm:$0xf]
      %v453 = vld [vmem:[%s1 + $0xc] sm:$0xf]
      %v454 = vld [vmem:[%s1 + $0x10] sm:$0xf]
      %v455 = vld [vmem:[%s1 + $0x14] sm:$0xf]
      %v456 = vld [vmem:[%s1 + $0x18] sm:$0xf]
      %v457 = vld [vmem:[%s1 + $0x1c] sm:$0xf]
      %v458 = vld [vmem:[%s1 + $0x20] sm:$0xf]
      %v459 = vld [vmem:[%s1 + $0x24] sm:$0xf]
      %v460 = vld [vmem:[%s1 + $0x28] sm:$0xf]
      %v461 = vld [vmem:[%s1 + $0x2c] sm:$0xf]
      %v462 = vld [vmem:[%s1 + $0x30] sm:$0xf]
      %v463 = vld [vmem:[%s1 + $0x34] sm:$0xf]
      %v464 = vld [vmem:[%s1 + $0x38] sm:$0xf]
      %v465 = vld [vmem:[%s1 + $0x3c] sm:$0xf]
      %v466 = vld [vmem:[%s1 + $0x40] sm:$0xf]
      %v467 = vld [vmem:[%s1 + $0x44] sm:$0xf]
      %v468 = vld [vmem:[%s1 + $0x48] sm:$0xf]
      %v469 = vld [vmem:[%s1 + $0x4c] sm:$0xf]
      %v470 = vld [vmem:[%s1 + $0x50] sm:$0xf]
      %v471 = vld [vmem:[%s1 + $0x54] sm:$0xf]
      %v472 = vld [vmem:[%s1 + $0x58] sm:$0xf]
      %v473 = vld [vmem:[%s1 + $0x5c] sm:$0xf]
      %v474 = vld [vmem:[%s1 + $0x60] sm:$0xf]
      %v475 = vld [vmem:[%s1 + $0x64] sm:$0xf]
      %v476 = vld [vmem:[%s1 + $0x68] sm:$0xf]
      %v477 = vld [vmem:[%s1 + $0x6c] sm:$0xf]
      %v478 = vld [vmem:[%s1 + $0x70] sm:$0xf]
      %v479 = vld [vmem:[%s1 + $0x74] sm:$0xf]
      %v480 = vld [vmem:[%s1 + $0x78] sm:$0xf]
      %v481 = vld [vmem:[%s1 + $0x7c] sm:$0xf]
      %v482 = vld [vmem:[%s2] sm:$0x1]
      %v484 = vlaneseq
      %v485 = vshrl.u32 %v484, 7
      %v486 = vsub.s32 0, %v485
      %v487 = vrot.slane %v482, %v486
      %v497 = vunpack.c.l.b16 %v442
      %v498 = vunpack.c.h.b16 %v442
      %v499 = vunpack.c.l.b16 %v443
      %v500 = vunpack.c.h.b16 %v443
      %v501 = vunpack.c.l.b16 %v444
      %v502 = vunpack.c.h.b16 %v444
      %v503 = vunpack.c.l.b16 %v445
      %v504 = vunpack.c.h.b16 %v445
      %v505 = vunpack.c.l.b16 %v446
      %v506 = vunpack.c.h.b16 %v446
      %v507 = vunpack.c.l.b16 %v447
      %v508 = vunpack.c.h.b16 %v447
      %v509 = vunpack.c.l.b16 %v448
      %v510 = vunpack.c.h.b16 %v448
      %v511 = vunpack.c.l.b16 %v449
      %v512 = vunpack.c.h.b16 %v449
      %v513 = vpack.c.b16 %v499, %v497
      %v514 = vpack.c.b16 %v500, %v498
      %v515 = vpack.c.b16 %v503, %v501
      %v516 = vpack.c.b16 %v504, %v502
      %v517 = vpack.c.b16 %v507, %v505
      %v518 = vpack.c.b16 %v508, %v506
      %v519 = vpack.c.b16 %v511, %v509
      %v520 = vpack.c.b16 %v512, %v510
      %v561 = vunpack.c.l.b16 %v450
      %v562 = vunpack.c.l.b16 %v451
      %v563 = vunpack.c.l.b16 %v452
      %v564 = vunpack.c.l.b16 %v453
      %v565 = vunpack.c.l.b16 %v454
      %v566 = vunpack.c.l.b16 %v455
      %v567 = vunpack.c.l.b16 %v456
      %v568 = vunpack.c.l.b16 %v457
      %v569 = vunpack.c.l.b16 %v458
      %v570 = vunpack.c.l.b16 %v459
      %v571 = vunpack.c.l.b16 %v460
      %v572 = vunpack.c.l.b16 %v461
      %v573 = vunpack.c.l.b16 %v462
      %v574 = vunpack.c.l.b16 %v463
      %v575 = vunpack.c.l.b16 %v464
      %v576 = vunpack.c.l.b16 %v465
      %v577 = vunpack.c.l.b16 %v466
      %v578 = vunpack.c.l.b16 %v467
      %v579 = vunpack.c.l.b16 %v468
      %v580 = vunpack.c.l.b16 %v469
      %v581 = vunpack.c.l.b16 %v470
      %v582 = vunpack.c.l.b16 %v471
      %v583 = vunpack.c.l.b16 %v472
      %v584 = vunpack.c.l.b16 %v473
      %v585 = vunpack.c.l.b16 %v474
      %v586 = vunpack.c.l.b16 %v475
      %v587 = vunpack.c.l.b16 %v476
      %v588 = vunpack.c.l.b16 %v477
      %v589 = vunpack.c.l.b16 %v478
      %v590 = vunpack.c.l.b16 %v479
      %v591 = vunpack.c.l.b16 %v480
      %v592 = vunpack.c.l.b16 %v481
      %v593 = vpack.c.b16 %v562, %v561
      %v594 = vpack.c.b16 %v564, %v563
      %v595 = vpack.c.b16 %v566, %v565
      %v596 = vpack.c.b16 %v568, %v567
      %v597 = vpack.c.b16 %v570, %v569
      %v598 = vpack.c.b16 %v572, %v571
      %v599 = vpack.c.b16 %v574, %v573
      %v600 = vpack.c.b16 %v576, %v575
      %v601 = vpack.c.b16 %v578, %v577
      %v602 = vpack.c.b16 %v580, %v579
      %v603 = vpack.c.b16 %v582, %v581
      %v604 = vpack.c.b16 %v584, %v583
      %v605 = vpack.c.b16 %v586, %v585
      %v606 = vpack.c.b16 %v588, %v587
      %v607 = vpack.c.b16 %v590, %v589
      %v608 = vpack.c.b16 %v592, %v591
      %625 = vmatprep.subr.bf16.mxu0 0
      %626 = vmatpush1.bf16.msra.mxu0 %v593
      %627 = vmatprep.subr.bf16.mxu0 0
      %628 = vmatpush1.bf16.msra.mxu0 %v594
      %629 = vmatprep.subr.bf16.mxu0 0
      %630 = vmatpush1.bf16.msra.mxu0 %v595
      %631 = vmatprep.subr.bf16.mxu0 0
      %632 = vmatpush1.bf16.msra.mxu0 %v596
      %633 = vmatprep.subr.bf16.mxu0 0
      %634 = vmatpush1.bf16.msra.mxu0 %v597
      %635 = vmatprep.subr.bf16.mxu0 0
      %636 = vmatpush1.bf16.msra.mxu0 %v598
      %637 = vmatprep.subr.bf16.mxu0 0
      %638 = vmatpush1.bf16.msra.mxu0 %v599
      %639 = vmatprep.subr.bf16.mxu0 0
      %640 = vmatpush1.bf16.msra.mxu0 %v600
      %641 = vmatprep.subr.bf16.mxu0 0
      %642 = vmatpush1.bf16.msra.mxu0 %v601
      %643 = vmatprep.subr.bf16.mxu0 0
      %644 = vmatpush1.bf16.msra.mxu0 %v602
      %645 = vmatprep.subr.bf16.mxu0 0
      %646 = vmatpush1.bf16.msra.mxu0 %v603
      %647 = vmatprep.subr.bf16.mxu0 0
      %648 = vmatpush1.bf16.msra.mxu0 %v604
      %649 = vmatprep.subr.bf16.mxu0 0
      %650 = vmatpush1.bf16.msra.mxu0 %v605
      %651 = vmatprep.subr.bf16.mxu0 0
      %652 = vmatpush1.bf16.msra.mxu0 %v606
      %653 = vmatprep.subr.bf16.mxu0 0
      %654 = vmatpush1.bf16.msra.mxu0 %v607
      %655 = vmatprep.subr.bf16.mxu0 0
      %656 = vmatpush1.bf16.msra.mxu0 %v608
      %657 = vmatprep.mubr.bf16.mxu0 %v514
      %658 = vmatmul.mubr.bf16.gmra.mrb[0].mxu0 %v513
      %v659 = vpop.f32.mrb[0].mxu0
      %v660 = vadd.f32 %v487, %v659
      %v661 = vpop.f32.mrb[0].mxu0
      %v662 = vpop.f32.mrb[0].mxu0
      %v663 = vadd.f32 %v487, %v662
      %v664 = vpop.f32.mrb[0].mxu0
      %665 = vmatprep.mubr.bf16.mxu0 %v516
      %666 = vmatmul.mubr.bf16.gmra.mrb[0].mxu0 %v515
      %v667 = vpop.f32.mrb[0].mxu0
      %v668 = vadd.f32 %v487, %v667
      %v669 = vpop.f32.mrb[0].mxu0
      %v670 = vpop.f32.mrb[0].mxu0
      %v671 = vadd.f32 %v487, %v670
      %v672 = vpop.f32.mrb[0].mxu0
      %673 = vmatprep.mubr.bf16.mxu0 %v518
      %674 = vmatmul.mubr.bf16.gmra.mrb[0].mxu0 %v517
      %v675 = vpop.f32.mrb[0].mxu0
      %v676 = vadd.f32 %v487, %v675
      %v677 = vpop.f32.mrb[0].mxu0
      %v678 = vpop.f32.mrb[0].mxu0
      %v679 = vadd.f32 %v487, %v678
      %v680 = vpop.f32.mrb[0].mxu0
      %681 = vmatprep.mubr.bf16.mxu0 %v520
      %682 = vmatmul.mubr.bf16.gmra.mrb[0].mxu0 %v519
      %v683 = vpop.f32.mrb[0].mxu0
      %v684 = vadd.f32 %v487, %v683
      %v685 = vpop.f32.mrb[0].mxu0
      %v686 = vpop.f32.mrb[0].mxu0
      %v687 = vadd.f32 %v487, %v686
      %v688 = vpop.f32.mrb[0].mxu0
      %689 = vdwg.mxu0
      %vm690 = vcmp.ge.f32.partialorder %v660, 0.0
      %vm691 = vcmp.ge.f32.partialorder %v663, 0.0
      %vm692 = vcmp.ge.f32.partialorder %v668, 0.0
      %vm693 = vcmp.ge.f32.partialorder %v671, 0.0
      %vm694 = vcmp.ge.f32.partialorder %v676, 0.0
      %vm695 = vcmp.ge.f32.partialorder %v679, 0.0
      %vm696 = vcmp.ge.f32.partialorder %v684, 0.0
      %vm697 = vcmp.ge.f32.partialorder %v687, 0.0
      %v698 = vmul.f32 %v660, 0.1
      %v699 = vmul.f32 %v663, 0.1
      %v700 = vmul.f32 %v668, 0.1
      %v701 = vmul.f32 %v671, 0.1
      %v702 = vmul.f32 %v676, 0.1
      %v703 = vmul.f32 %v679, 0.1
      %v704 = vmul.f32 %v684, 0.1
      %v705 = vmul.f32 %v687, 0.1
      %v706 = vsel %vm690, %v660, %v698
      %v707 = vsel %vm691, %v663, %v699
      %v708 = vsel %vm692, %v668, %v700
      %v709 = vsel %vm693, %v671, %v701
      %v710 = vsel %vm694, %v676, %v702
      %v711 = vsel %vm695, %v679, %v703
      %v712 = vsel %vm696, %v684, %v704
      %v713 = vsel %vm697, %v687, %v705
      %v714 = vpack.c.bf16 %v707, %v706
      %v715 = vpack.c.bf16 %v709, %v708
      %v716 = vpack.c.bf16 %v711, %v710
      %v717 = vpack.c.bf16 %v713, %v712
      %v718 = vld [vmem:[%s3] sm:$0xf]
      %v719 = vld [vmem:[%s3 + $0x4] sm:$0xf]
      %v720 = vld [vmem:[%s3 + $0x8] sm:$0xf]
      %v721 = vld [vmem:[%s3 + $0xc] sm:$0xf]
      %v722 = vld [vmem:[%s3 + $0x10] sm:$0xf]
      %v723 = vld [vmem:[%s3 + $0x14] sm:$0xf]
      %v724 = vld [vmem:[%s3 + $0x18] sm:$0xf]
      %v725 = vld [vmem:[%s3 + $0x1c] sm:$0xf]
      %v726 = vld [vmem:[%s3 + $0x20] sm:$0xf]
      %v727 = vld [vmem:[%s3 + $0x24] sm:$0xf]
      %v728 = vld [vmem:[%s3 + $0x28] sm:$0xf]
      %v729 = vld [vmem:[%s3 + $0x2c] sm:$0xf]
      %v730 = vld [vmem:[%s3 + $0x30] sm:$0xf]
      %v731 = vld [vmem:[%s3 + $0x34] sm:$0xf]
      %v732 = vld [vmem:[%s3 + $0x38] sm:$0xf]
      %v733 = vld [vmem:[%s3 + $0x3c] sm:$0xf]
      %v734 = vld [vmem:[%s3 + $0x40] sm:$0xf]
      %v735 = vld [vmem:[%s3 + $0x44] sm:$0xf]
      %v736 = vld [vmem:[%s3 + $0x48] sm:$0xf]
      %v737 = vld [vmem:[%s3 + $0x4c] sm:$0xf]
      %v738 = vld [vmem:[%s3 + $0x50] sm:$0xf]
      %v739 = vld [vmem:[%s3 + $0x54] sm:$0xf]
      %v740 = vld [vmem:[%s3 + $0x58] sm:$0xf]
      %v741 = vld [vmem:[%s3 + $0x5c] sm:$0xf]
      %v742 = vld [vmem:[%s3 + $0x60] sm:$0xf]
      %v743 = vld [vmem:[%s3 + $0x64] sm:$0xf]
      %v744 = vld [vmem:[%s3 + $0x68] sm:$0xf]
      %v745 = vld [vmem:[%s3 + $0x6c] sm:$0xf]
      %v746 = vld [vmem:[%s3 + $0x70] sm:$0xf]
      %v747 = vld [vmem:[%s3 + $0x74] sm:$0xf]
      %v748 = vld [vmem:[%s3 + $0x78] sm:$0xf]
      %v749 = vld [vmem:[%s3 + $0x7c] sm:$0xf]
      %v750 = vld [vmem:[%s3 + $0x80] sm:$0xf]
      %v751 = vld [vmem:[%s3 + $0x84] sm:$0xf]
      %v752 = vld [vmem:[%s3 + $0x88] sm:$0xf]
      %v753 = vld [vmem:[%s3 + $0x8c] sm:$0xf]
      %v754 = vld [vmem:[%s3 + $0x90] sm:$0xf]
      %v755 = vld [vmem:[%s3 + $0x94] sm:$0xf]
      %v756 = vld [vmem:[%s3 + $0x98] sm:$0xf]
      %v757 = vld [vmem:[%s3 + $0x9c] sm:$0xf]
      %v758 = vld [vmem:[%s3 + $0xa0] sm:$0xf]
      %v759 = vld [vmem:[%s3 + $0xa4] sm:$0xf]
      %v760 = vld [vmem:[%s3 + $0xa8] sm:$0xf]
      %v761 = vld [vmem:[%s3 + $0xac] sm:$0xf]
      %v762 = vld [vmem:[%s3 + $0xb0] sm:$0xf]
      %v763 = vld [vmem:[%s3 + $0xb4] sm:$0xf]
      %v764 = vld [vmem:[%s3 + $0xb8] sm:$0xf]
      %v765 = vld [vmem:[%s3 + $0xbc] sm:$0xf]
      %v766 = vld [vmem:[%s3 + $0xc0] sm:$0xf]
      %v767 = vld [vmem:[%s3 + $0xc4] sm:$0xf]
      %v768 = vld [vmem:[%s3 + $0xc8] sm:$0xf]
      %v769 = vld [vmem:[%s3 + $0xcc] sm:$0xf]
      %v770 = vld [vmem:[%s3 + $0xd0] sm:$0xf]
      %v771 = vld [vmem:[%s3 + $0xd4] sm:$0xf]
      %v772 = vld [vmem:[%s3 + $0xd8] sm:$0xf]
      %v773 = vld [vmem:[%s3 + $0xdc] sm:$0xf]
      %v774 = vld [vmem:[%s3 + $0xe0] sm:$0xf]
      %v775 = vld [vmem:[%s3 + $0xe4] sm:$0xf]
      %v776 = vld [vmem:[%s3 + $0xe8] sm:$0xf]
      %v777 = vld [vmem:[%s3 + $0xec] sm:$0xf]
      %v778 = vld [vmem:[%s3 + $0xf0] sm:$0xf]
      %v779 = vld [vmem:[%s3 + $0xf4] sm:$0xf]
      %v780 = vld [vmem:[%s3 + $0xf8] sm:$0xf]
      %v781 = vld [vmem:[%s3 + $0xfc] sm:$0xf]
      %v782 = vld [vmem:[%s3 + $0x100] sm:$0xf]
      %v783 = vld [vmem:[%s3 + $0x104] sm:$0xf]
      %v784 = vld [vmem:[%s3 + $0x108] sm:$0xf]
      %v785 = vld [vmem:[%s3 + $0x10c] sm:$0xf]
      %v786 = vld [vmem:[%s3 + $0x110] sm:$0xf]
      %v787 = vld [vmem:[%s3 + $0x114] sm:$0xf]
      %v788 = vld [vmem:[%s3 + $0x118] sm:$0xf]
      %v789 = vld [vmem:[%s3 + $0x11c] sm:$0xf]
      %v790 = vld [vmem:[%s4] sm:$0x1]
      %vm791 = vsmask.f32 7424
      %v793 = vshrl.u32 %v714, 16
      %v795 = vshll.u32 %v714, 16
      %v797 = vrot.slane %v795, 1
      %v798 = vor.u32 %v793, %v797
      %v800 = vshll.u32 %v715, 16
      %v802 = vrot.slane %v800, 1
      %v803 = vsel %vm791, %v798, %v802
      %v804 = vshrl.u32 %v715, 16
      %v806 = vor.u32 %v804, %v802
      %v808 = vshll.u32 %v716, 16
      %v810 = vrot.slane %v808, 1
      %v811 = vsel %vm791, %v806, %v810
      %v812 = vshrl.u32 %v716, 16
      %v814 = vor.u32 %v812, %v810
      %815 = vrot.lane.b32.xlu0 %v803, 64
      %v816 = vpop.permute.xlu0 %815
      %817 = vrot.lane.b32.xlu0 %v811, 64
      %v818 = vpop.permute.xlu0 %817
      %819 = vrot.lane.b32.xlu0 %v814, 64
      %v820 = vpop.permute.xlu0 %819
      %vm824 = vcmask 1046528
      %v825 = vrot.slane %v714, 1
      %v826 = vrot.slane %v715, 1
      %v827 = vsel %vm824, %v825, %v826
      %v828 = vrot.slane %v716, 1
      %v829 = vsel %vm824, %v826, %v828
      %vm831 = vcmask 1043456
      %v832 = vrot.slane %v714, 4
      %v833 = vrot.slane %v715, 4
      %v834 = vsel %vm831, %v832, %v833
      %v835 = vrot.slane %v716, 4
      %v836 = vsel %vm831, %v833, %v835
      %v837 = vrot.slane %v717, 4
      %v838 = vsel %vm831, %v835, %v837
      %839 = vrot.lane.b32.xlu0 %v834, 64
      %v840 = vpop.permute.xlu0 %839
      %841 = vrot.lane.b32.xlu0 %v836, 64
      %v842 = vpop.permute.xlu0 %841
      %843 = vrot.lane.b32.xlu0 %v838, 64
      %v844 = vpop.permute.xlu0 %843
      %vm845 = vsmask.f32 3328
      %v846 = vrot.slane %v793, 4
      %v847 = vrot.slane %v795, 5
      %v848 = vor.u32 %v846, %v847
      %v849 = vrot.slane %v804, 4
      %v850 = vrot.slane %v800, 5
      %v851 = vor.u32 %v849, %v850
      %v852 = vsel %vm845, %v848, %v851
      %v853 = vrot.slane %v812, 4
      %v854 = vrot.slane %v808, 5
      %v855 = vor.u32 %v853, %v854
      %v856 = vsel %vm845, %v851, %v855
      %v858 = vshrl.u32 %v717, 16
      %v860 = vrot.slane %v858, 4
      %v861 = vshll.u32 %v717, 16
      %v863 = vrot.slane %v861, 5
      %v864 = vor.u32 %v860, %v863
      %v865 = vsel %vm845, %v855, %v864
      %vm866 = vcmask 1042432
      %v867 = vrot.slane %v714, 5
      %v868 = vrot.slane %v715, 5
      %v869 = vsel %vm866, %v867, %v868
      %v870 = vrot.slane %v716, 5
      %v871 = vsel %vm866, %v868, %v870
      %v872 = vrot.slane %v717, 5
      %v873 = vsel %vm866, %v870, %v872
      %874 = vrot.lane.b32.xlu0 %v869, 64
      %v875 = vpop.permute.xlu0 %874
      %876 = vrot.lane.b32.xlu0 %v871, 64
      %v877 = vpop.permute.xlu0 %876
      %878 = vrot.lane.b32.xlu0 %v873, 64
      %v879 = vpop.permute.xlu0 %878
      %v880 = vrot.slane %v861, 1
      %v881 = vsel %vm791, %v814, %v880
      %v882 = vor.u32 %v858, %v880
      %883 = vrot.lane.b32.xlu0 %v881, 64
      %v884 = vpop.permute.xlu0 %883
      %885 = vrot.lane.b32.xlu0 %v882, 64
      %v886 = vpop.permute.xlu0 %885
      %v887 = vrot.slane %v717, 1
      %v888 = vsel %vm824, %v828, %v887
      %vm889 = vcmask 523264
      %v891 = vsel %vm889, %v714, %v816
      %v894 = vsel %vm889, %v715, %v818
      %v897 = vsel %vm889, %v716, %v820
      %v901 = vsel %vm889, %v827, %v840
      %v905 = vsel %vm889, %v829, %v842
      %v909 = vsel %vm889, %v828, %v844
      %v913 = vsel %vm889, %v852, %v875
      %v917 = vsel %vm889, %v856, %v877
      %v921 = vsel %vm889, %v865, %v879
      %v924 = vsel %vm889, %v716, %v884
      %v927 = vsel %vm889, %v717, %v886
      %v930 = vlaneseq
      %v931 = vshrl.u32 %v930, 7
      %v932 = vsub.s32 0, %v931
      %v933 = vrot.slane %v790, %v932
      %v1007 = vunpack.c.l.b16 %v718
      %v1008 = vunpack.c.l.b16 %v719
      %v1009 = vunpack.c.l.b16 %v720
      %v1010 = vunpack.c.l.b16 %v721
      %v1011 = vunpack.c.l.b16 %v722
      %v1012 = vunpack.c.l.b16 %v723
      %v1013 = vunpack.c.l.b16 %v724
      %v1014 = vunpack.c.l.b16 %v725
      %v1015 = vunpack.c.l.b16 %v726
      %v1016 = vunpack.c.l.b16 %v727
      %v1017 = vunpack.c.l.b16 %v728
      %v1018 = vunpack.c.l.b16 %v729
      %v1019 = vunpack.c.l.b16 %v730
      %v1020 = vunpack.c.l.b16 %v731
      %v1021 = vunpack.c.l.b16 %v732
      %v1022 = vunpack.c.l.b16 %v733
      %v1023 = vunpack.c.l.b16 %v734
      %v1024 = vunpack.c.l.b16 %v735
      %v1025 = vunpack.c.l.b16 %v736
      %v1026 = vunpack.c.l.b16 %v737
      %v1027 = vunpack.c.l.b16 %v738
      %v1028 = vunpack.c.l.b16 %v739
      %v1029 = vunpack.c.l.b16 %v740
      %v1030 = vunpack.c.l.b16 %v741
      %v1031 = vunpack.c.l.b16 %v742
      %v1032 = vunpack.c.l.b16 %v743
      %v1033 = vunpack.c.l.b16 %v744
      %v1034 = vunpack.c.l.b16 %v745
      %v1035 = vunpack.c.l.b16 %v746
      %v1036 = vunpack.c.l.b16 %v747
      %v1037 = vunpack.c.l.b16 %v748
      %v1038 = vunpack.c.l.b16 %v749
      %v1039 = vunpack.c.l.b16 %v750
      %v1040 = vunpack.c.l.b16 %v751
      %v1041 = vunpack.c.l.b16 %v752
      %v1042 = vunpack.c.l.b16 %v753
      %v1043 = vunpack.c.l.b16 %v754
      %v1044 = vunpack.c.l.b16 %v755
      %v1045 = vunpack.c.l.b16 %v756
      %v1046 = vunpack.c.l.b16 %v757
      %v1047 = vunpack.c.l.b16 %v758
      %v1048 = vunpack.c.l.b16 %v759
      %v1049 = vunpack.c.l.b16 %v760
      %v1050 = vunpack.c.l.b16 %v761
      %v1051 = vunpack.c.l.b16 %v762
      %v1052 = vunpack.c.l.b16 %v763
      %v1053 = vunpack.c.l.b16 %v764
      %v1054 = vunpack.c.l.b16 %v765
      %v1055 = vunpack.c.l.b16 %v766
      %v1056 = vunpack.c.l.b16 %v767
      %v1057 = vunpack.c.l.b16 %v768
      %v1058 = vunpack.c.l.b16 %v769
      %v1059 = vunpack.c.l.b16 %v770
      %v1060 = vunpack.c.l.b16 %v771
      %v1061 = vunpack.c.l.b16 %v772
      %v1062 = vunpack.c.l.b16 %v773
      %v1063 = vunpack.c.l.b16 %v774
      %v1064 = vunpack.c.l.b16 %v775
      %v1065 = vunpack.c.l.b16 %v776
      %v1066 = vunpack.c.l.b16 %v777
      %v1067 = vunpack.c.l.b16 %v778
      %v1068 = vunpack.c.l.b16 %v779
      %v1069 = vunpack.c.l.b16 %v780
      %v1070 = vunpack.c.l.b16 %v781
      %v1071 = vunpack.c.l.b16 %v782
      %v1072 = vunpack.c.l.b16 %v783
      %v1073 = vunpack.c.l.b16 %v784
      %v1074 = vunpack.c.l.b16 %v785
      %v1075 = vunpack.c.l.b16 %v786
      %v1076 = vunpack.c.l.b16 %v787
      %v1077 = vunpack.c.l.b16 %v788
      %v1078 = vunpack.c.l.b16 %v789
      %v1079 = vpack.c.b16 %v1008, %v1007
      %v1080 = vpack.c.b16 %v1010, %v1009
      %v1081 = vpack.c.b16 %v1012, %v1011
      %v1082 = vpack.c.b16 %v1014, %v1013
      %v1083 = vpack.c.b16 %v1016, %v1015
      %v1084 = vpack.c.b16 %v1018, %v1017
      %v1085 = vpack.c.b16 %v1020, %v1019
      %v1086 = vpack.c.b16 %v1022, %v1021
      %v1087 = vpack.c.b16 %v1024, %v1023
      %v1088 = vpack.c.b16 %v1026, %v1025
      %v1089 = vpack.c.b16 %v1028, %v1027
      %v1090 = vpack.c.b16 %v1030, %v1029
      %v1091 = vpack.c.b16 %v1032, %v1031
      %v1092 = vpack.c.b16 %v1034, %v1033
      %v1093 = vpack.c.b16 %v1036, %v1035
      %v1094 = vpack.c.b16 %v1038, %v1037
      %v1095 = vpack.c.b16 %v1040, %v1039
      %v1096 = vpack.c.b16 %v1042, %v1041
      %v1097 = vpack.c.b16 %v1044, %v1043
      %v1098 = vpack.c.b16 %v1046, %v1045
      %v1099 = vpack.c.b16 %v1048, %v1047
      %v1100 = vpack.c.b16 %v1050, %v1049
      %v1101 = vpack.c.b16 %v1052, %v1051
      %v1102 = vpack.c.b16 %v1054, %v1053
      %v1103 = vpack.c.b16 %v1056, %v1055
      %v1104 = vpack.c.b16 %v1058, %v1057
      %v1105 = vpack.c.b16 %v1060, %v1059
      %v1106 = vpack.c.b16 %v1062, %v1061
      %v1107 = vpack.c.b16 %v1064, %v1063
      %v1108 = vpack.c.b16 %v1066, %v1065
      %v1109 = vpack.c.b16 %v1068, %v1067
      %v1110 = vpack.c.b16 %v1070, %v1069
      %v1111 = vpack.c.b16 %v1072, %v1071
      %v1112 = vpack.c.b16 %v1074, %v1073
      %v1113 = vpack.c.b16 %v1076, %v1075
      %v1114 = vpack.c.b16 %v1078, %v1077
      %v1151 = vsel %vm889, %v829, 0
      %v1154 = vsel %vm889, %v888, 0
      %v1157 = vsel %vm889, %v887, 0
      %1159 = vmatprep.subr.bf16.mxu0 0
      %1160 = vmatpush1.bf16.msra.mxu0 %v1079
      %1161 = vmatprep.subr.bf16.mxu0 0
      %1162 = vmatpush1.bf16.msra.mxu0 %v1080
      %1163 = vmatprep.subr.bf16.mxu0 0
      %1164 = vmatpush1.bf16.msra.mxu0 %v1081
      %1165 = vmatprep.subr.bf16.mxu0 0
      %1166 = vmatpush1.bf16.msra.mxu0 %v1082
      %1167 = vmatprep.subr.bf16.mxu0 0
      %1168 = vmatpush1.bf16.msra.mxu0 %v1083
      %1169 = vmatprep.subr.bf16.mxu0 0
      %1170 = vmatpush1.bf16.msra.mxu0 %v1084
      %1171 = vmatprep.subr.bf16.mxu0 0
      %1172 = vmatpush1.bf16.msra.mxu0 %v1085
      %1173 = vmatprep.subr.bf16.mxu0 0
      %1174 = vmatpush1.bf16.msra.mxu0 %v1086
      %1175 = vmatprep.subr.bf16.mxu0 0
      %1176 = vmatpush1.bf16.msra.mxu0 %v1087
      %1177 = vmatprep.subr.bf16.mxu0 0
      %1178 = vmatpush1.bf16.msra.mxu0 %v1088
      %1179 = vmatprep.subr.bf16.mxu0 0
      %1180 = vmatpush1.bf16.msra.mxu0 %v1089
      %1181 = vmatprep.subr.bf16.mxu0 0
      %1182 = vmatpush1.bf16.msra.mxu0 %v1090
      %1183 = vmatprep.subr.bf16.mxu0 0
      %1184 = vmatpush1.bf16.msra.mxu0 %v1091
      %1185 = vmatprep.subr.bf16.mxu0 0
      %1186 = vmatpush1.bf16.msra.mxu0 %v1092
      %1187 = vmatprep.subr.bf16.mxu0 0
      %1188 = vmatpush1.bf16.msra.mxu0 %v1093
      %1189 = vmatprep.subr.bf16.mxu0 0
      %1190 = vmatpush1.bf16.msra.mxu0 %v1094
      %1191 = vmatprep.mubr.bf16.mxu0 %v901
      %1192 = vmatmul.mubr.bf16.gmra.mrb[0].mxu0 %v891
      %v1193 = vpop.f32.mrb[0].mxu0
      %v1194 = vadd.f32 %v933, %v1193
      %v1195 = vpop.f32.mrb[0].mxu0
      %v1196 = vpop.f32.mrb[0].mxu0
      %v1197 = vadd.f32 %v933, %v1196
      %v1198 = vpop.f32.mrb[0].mxu0
      %1199 = vmatprep.mubr.bf16.mxu0 %v905
      %1200 = vmatmul.mubr.bf16.gmra.mrb[0].mxu0 %v894
      %v1201 = vpop.f32.mrb[0].mxu0
      %v1202 = vadd.f32 %v933, %v1201
      %v1203 = vpop.f32.mrb[0].mxu0
      %v1204 = vpop.f32.mrb[0].mxu0
      %v1205 = vadd.f32 %v933, %v1204
      %v1206 = vpop.f32.mrb[0].mxu0
      %1207 = vmatprep.mubr.bf16.mxu0 %v909
      %1208 = vmatmul.mubr.bf16.gmra.mrb[0].mxu0 %v897
      %v1209 = vpop.f32.mrb[0].mxu0
      %v1210 = vadd.f32 %v933, %v1209
      %v1211 = vpop.f32.mrb[0].mxu0
      %v1212 = vpop.f32.mrb[0].mxu0
      %v1213 = vadd.f32 %v933, %v1212
      %v1214 = vpop.f32.mrb[0].mxu0
      %1215 = vdwg.mxu0
      %1216 = vmatprep.subr.bf16.mxu0 0
      %1217 = vmatpush1.bf16.msra.mxu0 %v1095
      %1218 = vmatprep.subr.bf16.mxu0 0
      %1219 = vmatpush1.bf16.msra.mxu0 %v1096
      %1220 = vmatprep.subr.bf16.mxu0 0
      %1221 = vmatpush1.bf16.msra.mxu0 %v1097
      %1222 = vmatprep.subr.bf16.mxu0 0
      %1223 = vmatpush1.bf16.msra.mxu0 %v1098
      %1224 = vmatprep.subr.bf16.mxu0 0
      %1225 = vmatpush1.bf16.msra.mxu0 %v1099
      %1226 = vmatprep.subr.bf16.mxu0 0
      %1227 = vmatpush1.bf16.msra.mxu0 %v1100
      %1228 = vmatprep.subr.bf16.mxu0 0
      %1229 = vmatpush1.bf16.msra.mxu0 %v1101
      %1230 = vmatprep.subr.bf16.mxu0 0
      %1231 = vmatpush1.bf16.msra.mxu0 %v1102
      %1232 = vmatprep.subr.bf16.mxu0 0
      %1233 = vmatpush1.bf16.msra.mxu0 %v1103
      %1234 = vmatprep.subr.bf16.mxu0 0
      %1235 = vmatpush1.bf16.msra.mxu0 %v1104
      %1236 = vmatprep.subr.bf16.mxu0 0
      %1237 = vmatpush1.bf16.msra.mxu0 %v1105
      %1238 = vmatprep.subr.bf16.mxu0 0
      %1239 = vmatpush1.bf16.msra.mxu0 %v1106
      %1240 = vmatprep.subr.bf16.mxu0 0
      %1241 = vmatpush1.bf16.msra.mxu0 %v1107
      %1242 = vmatprep.subr.bf16.mxu0 0
      %1243 = vmatpush1.bf16.msra.mxu0 %v1108
      %1244 = vmatprep.subr.bf16.mxu0 0
      %1245 = vmatpush1.bf16.msra.mxu0 %v1109
      %1246 = vmatprep.subr.bf16.mxu0 0
      %1247 = vmatpush1.bf16.msra.mxu0 %v1110
      %1248 = vmatprep.mubr.bf16.mxu0 %v894
      %1249 = vmatmul.mubr.bf16.gmra.mrb[0].mxu0 %v913
      %v1250 = vpop.f32.mrb[0].mxu0
      %v1251 = vadd.f32 %v1194, %v1250
      %v1252 = vpop.f32.mrb[0].mxu0
      %v1253 = vpop.f32.mrb[0].mxu0
      %v1254 = vadd.f32 %v1197, %v1253
      %v1255 = vpop.f32.mrb[0].mxu0
      %1256 = vmatprep.mubr.bf16.mxu0 %v924
      %1257 = vmatmul.mubr.bf16.gmra.mrb[0].mxu0 %v917
      %v1258 = vpop.f32.mrb[0].mxu0
      %v1259 = vadd.f32 %v1202, %v1258
      %v1260 = vpop.f32.mrb[0].mxu0
      %v1261 = vpop.f32.mrb[0].mxu0
      %v1262 = vadd.f32 %v1205, %v1261
      %v1263 = vpop.f32.mrb[0].mxu0
      %1264 = vmatprep.mubr.bf16.mxu0 %v927
      %1265 = vmatmul.mubr.bf16.gmra.mrb[0].mxu0 %v921
      %v1266 = vpop.f32.mrb[0].mxu0
      %v1267 = vadd.f32 %v1210, %v1266
      %v1268 = vpop.f32.mrb[0].mxu0
      %v1269 = vpop.f32.mrb[0].mxu0
      %v1270 = vadd.f32 %v1213, %v1269
      %v1271 = vpop.f32.mrb[0].mxu0
      %1272 = vdwg.mxu0
      %1273 = vmatprep.subr.bf16.mxu0 0
      %1274 = vmatpush1.bf16.msra.mxu0 %v1111
      %1275 = vmatprep.subr.bf16.mxu0 0
      %1276 = vmatpush1.bf16.msra.mxu0 %v1112
      %1277 = vmatprep.subr.bf16.mxu0 0
      %1278 = vmatpush1.bf16.msra.mxu0 %v1113
      %1279 = vmatprep.subr.bf16.mxu0 0
      %1280 = vmatpush1.bf16.msra.mxu0 %v1114
      %1281 = vmatprep.subr.bf16.mxu0 0
      %1282 = vmatpush1.bf16.msra.mxu0 0
      %1283 = vmatprep.subr.bf16.mxu0 0
      %1284 = vmatpush1.bf16.msra.mxu0 0
      %1285 = vmatprep.subr.bf16.mxu0 0
      %1286 = vmatpush1.bf16.msra.mxu0 0
      %1287 = vmatprep.subr.bf16.mxu0 0
      %1288 = vmatpush1.bf16.msra.mxu0 0
      %1289 = vmatprep.subr.bf16.mxu0 0
      %1290 = vmatpush1.bf16.msra.mxu0 0
      %1291 = vmatprep.subr.bf16.mxu0 0
      %1292 = vmatpush1.bf16.msra.mxu0 0
      %1293 = vmatprep.subr.bf16.mxu0 0
      %1294 = vmatpush1.bf16.msra.mxu0 0
      %1295 = vmatprep.subr.bf16.mxu0 0
      %1296 = vmatpush1.bf16.msra.mxu0 0
      %1297 = vmatprep.subr.bf16.mxu0 0
      %1298 = vmatpush1.bf16.msra.mxu0 0
      %1299 = vmatprep.subr.bf16.mxu0 0
      %1300 = vmatpush1.bf16.msra.mxu0 0
      %1301 = vmatprep.subr.bf16.mxu0 0
      %1302 = vmatpush1.bf16.msra.mxu0 0
      %1303 = vmatprep.subr.bf16.mxu0 0
      %1304 = vmatpush1.bf16.msra.mxu0 0
      %1305 = vmatprep.mubr.bf16.mxu0 0
      %1306 = vmatmul.mubr.bf16.gmra.mrb[0].mxu0 %v1151
      %v1307 = vpop.f32.mrb[0].mxu0
      %v1308 = vadd.f32 %v1251, %v1307
      %v1309 = vpop.f32.mrb[0].mxu0
      %v1310 = vpop.f32.mrb[0].mxu0
      %v1311 = vadd.f32 %v1254, %v1310
      %v1312 = vpop.f32.mrb[0].mxu0
      %1313 = vmatprep.mubr.bf16.mxu0 0
      %1314 = vmatmul.mubr.bf16.gmra.mrb[0].mxu0 %v1154
      %v1315 = vpop.f32.mrb[0].mxu0
      %v1316 = vadd.f32 %v1259, %v1315
      %v1317 = vpop.f32.mrb[0].mxu0
      %v1318 = vpop.f32.mrb[0].mxu0
      %v1319 = vadd.f32 %v1262, %v1318
      %v1320 = vpop.f32.mrb[0].mxu0
      %1321 = vmatprep.mubr.bf16.mxu0 0
      %1322 = vmatmul.mubr.bf16.gmra.mrb[0].mxu0 %v1157
      %v1323 = vpop.f32.mrb[0].mxu0
      %v1324 = vadd.f32 %v1267, %v1323
      %v1325 = vpop.f32.mrb[0].mxu0
      %v1326 = vpop.f32.mrb[0].mxu0
      %v1327 = vadd.f32 %v1270, %v1326
      %v1328 = vpop.f32.mrb[0].mxu0
      %1329 = vdwg.mxu0
      %vm1330 = vcmp.ge.f32.partialorder %v1308, 0.0
      %vm1331 = vcmp.ge.f32.partialorder %v1311, 0.0
      %vm1332 = vcmp.ge.f32.partialorder %v1316, 0.0
      %vm1333 = vcmp.ge.f32.partialorder %v1319, 0.0
      %vm1334 = vcmp.ge.f32.partialorder %v1324, 0.0
      %vm1335 = vcmp.ge.f32.partialorder %v1327, 0.0
      %v1336 = vmul.f32 %v1308, 0.1
      %v1337 = vmul.f32 %v1311, 0.1
      %v1338 = vmul.f32 %v1316, 0.1
      %v1339 = vmul.f32 %v1319, 0.1
      %v1340 = vmul.f32 %v1324, 0.1
      %v1341 = vmul.f32 %v1327, 0.1
      %v1342 = vsel %vm1330, %v1308, %v1336
      %v1343 = vsel %vm1331, %v1311, %v1337
      %v1344 = vsel %vm1332, %v1316, %v1338
      %v1345 = vsel %vm1333, %v1319, %v1339
      %v1346 = vsel %vm1334, %v1324, %v1340
      %v1347 = vsel %vm1335, %v1327, %v1341
      %v1348 = vpack.c.bf16 %v1343, %v1342
      %v1349 = vpack.c.bf16 %v1345, %v1344
      %v1350 = vpack.c.bf16 %v1347, %v1346
      %v1351 = vld [vmem:[%s5] sm:$0xf]
      %v1352 = vld [vmem:[%s5 + $0x4] sm:$0xf]
      %v1353 = vld [vmem:[%s5 + $0x8] sm:$0xf]
      %v1354 = vld [vmem:[%s5 + $0xc] sm:$0xf]
      %v1355 = vld [vmem:[%s5 + $0x10] sm:$0xf]
      %v1356 = vld [vmem:[%s5 + $0x14] sm:$0xf]
      %v1357 = vld [vmem:[%s5 + $0x18] sm:$0xf]
      %v1358 = vld [vmem:[%s5 + $0x1c] sm:$0xf]
      %v1359 = vld [vmem:[%s5 + $0x20] sm:$0xf]
      %v1360 = vld [vmem:[%s5 + $0x24] sm:$0xf]
      %v1361 = vld [vmem:[%s5 + $0x28] sm:$0xf]
      %v1362 = vld [vmem:[%s5 + $0x2c] sm:$0xf]
      %v1363 = vld [vmem:[%s5 + $0x30] sm:$0xf]
      %v1364 = vld [vmem:[%s5 + $0x34] sm:$0xf]
      %v1365 = vld [vmem:[%s5 + $0x38] sm:$0xf]
      %v1366 = vld [vmem:[%s5 + $0x3c] sm:$0xf]
      %v1367 = vld [vmem:[%s5 + $0x40] sm:$0xf]
      %v1368 = vld [vmem:[%s5 + $0x44] sm:$0xf]
      %v1369 = vld [vmem:[%s5 + $0x48] sm:$0xf]
      %v1370 = vld [vmem:[%s5 + $0x4c] sm:$0xf]
      %v1371 = vld [vmem:[%s5 + $0x50] sm:$0xf]
      %v1372 = vld [vmem:[%s5 + $0x54] sm:$0xf]
      %v1373 = vld [vmem:[%s5 + $0x58] sm:$0xf]
      %v1374 = vld [vmem:[%s5 + $0x5c] sm:$0xf]
      %v1375 = vld [vmem:[%s5 + $0x60] sm:$0xf]
      %v1376 = vld [vmem:[%s5 + $0x64] sm:$0xf]
      %v1377 = vld [vmem:[%s5 + $0x68] sm:$0xf]
      %v1378 = vld [vmem:[%s5 + $0x6c] sm:$0xf]
      %v1379 = vld [vmem:[%s5 + $0x70] sm:$0xf]
      %v1380 = vld [vmem:[%s5 + $0x74] sm:$0xf]
      %v1381 = vld [vmem:[%s5 + $0x78] sm:$0xf]
      %v1382 = vld [vmem:[%s5 + $0x7c] sm:$0xf]
      %v1383 = vld [vmem:[%s5 + $0x80] sm:$0xf]
      %v1384 = vld [vmem:[%s5 + $0x84] sm:$0xf]
      %v1385 = vld [vmem:[%s5 + $0x88] sm:$0xf]
      %v1386 = vld [vmem:[%s5 + $0x8c] sm:$0xf]
      %v1387 = vld [vmem:[%s5 + $0x90] sm:$0xf]
      %v1388 = vld [vmem:[%s5 + $0x94] sm:$0xf]
      %v1389 = vld [vmem:[%s5 + $0x98] sm:$0xf]
      %v1390 = vld [vmem:[%s5 + $0x9c] sm:$0xf]
      %v1391 = vld [vmem:[%s5 + $0xa0] sm:$0xf]
      %v1392 = vld [vmem:[%s5 + $0xa4] sm:$0xf]
      %v1393 = vld [vmem:[%s5 + $0xa8] sm:$0xf]
      %v1394 = vld [vmem:[%s5 + $0xac] sm:$0xf]
      %v1395 = vld [vmem:[%s5 + $0xb0] sm:$0xf]
      %v1396 = vld [vmem:[%s5 + $0xb4] sm:$0xf]
      %v1397 = vld [vmem:[%s5 + $0xb8] sm:$0xf]
      %v1398 = vld [vmem:[%s5 + $0xbc] sm:$0xf]
      %v1399 = vld [vmem:[%s5 + $0xc0] sm:$0xf]
      %v1400 = vld [vmem:[%s5 + $0xc4] sm:$0xf]
      %v1401 = vld [vmem:[%s5 + $0xc8] sm:$0xf]
      %v1402 = vld [vmem:[%s5 + $0xcc] sm:$0xf]
      %v1403 = vld [vmem:[%s5 + $0xd0] sm:$0xf]
      %v1404 = vld [vmem:[%s5 + $0xd4] sm:$0xf]
      %v1405 = vld [vmem:[%s5 + $0xd8] sm:$0xf]
      %v1406 = vld [vmem:[%s5 + $0xdc] sm:$0xf]
      %v1407 = vld [vmem:[%s5 + $0xe0] sm:$0xf]
      %v1408 = vld [vmem:[%s5 + $0xe4] sm:$0xf]
      %v1409 = vld [vmem:[%s5 + $0xe8] sm:$0xf]
      %v1410 = vld [vmem:[%s5 + $0xec] sm:$0xf]
      %v1411 = vld [vmem:[%s5 + $0xf0] sm:$0xf]
      %v1412 = vld [vmem:[%s5 + $0xf4] sm:$0xf]
      %v1413 = vld [vmem:[%s5 + $0xf8] sm:$0xf]
      %v1414 = vld [vmem:[%s5 + $0xfc] sm:$0xf]
      %v1415 = vld [vmem:[%s5 + $0x100] sm:$0xf]
      %v1416 = vld [vmem:[%s5 + $0x104] sm:$0xf]
      %v1417 = vld [vmem:[%s5 + $0x108] sm:$0xf]
      %v1418 = vld [vmem:[%s5 + $0x10c] sm:$0xf]
      %v1419 = vld [vmem:[%s5 + $0x110] sm:$0xf]
      %v1420 = vld [vmem:[%s5 + $0x114] sm:$0xf]
      %v1421 = vld [vmem:[%s5 + $0x118] sm:$0xf]
      %v1422 = vld [vmem:[%s5 + $0x11c] sm:$0xf]
      %v1423 = vld [vmem:[%s5 + $0x120] sm:$0xf]
      %v1424 = vld [vmem:[%s5 + $0x124] sm:$0xf]
      %v1425 = vld [vmem:[%s5 + $0x128] sm:$0xf]
      %v1426 = vld [vmem:[%s5 + $0x12c] sm:$0xf]
      %v1427 = vld [vmem:[%s5 + $0x130] sm:$0xf]
      %v1428 = vld [vmem:[%s5 + $0x134] sm:$0xf]
      %v1429 = vld [vmem:[%s5 + $0x138] sm:$0xf]
      %v1430 = vld [vmem:[%s5 + $0x13c] sm:$0xf]
      %v1431 = vld [vmem:[%s5 + $0x140] sm:$0xf]
      %v1432 = vld [vmem:[%s5 + $0x144] sm:$0xf]
      %v1433 = vld [vmem:[%s5 + $0x148] sm:$0xf]
      %v1434 = vld [vmem:[%s5 + $0x14c] sm:$0xf]
      %v1435 = vld [vmem:[%s5 + $0x150] sm:$0xf]
      %v1436 = vld [vmem:[%s5 + $0x154] sm:$0xf]
      %v1437 = vld [vmem:[%s5 + $0x158] sm:$0xf]
      %v1438 = vld [vmem:[%s5 + $0x15c] sm:$0xf]
      %v1439 = vld [vmem:[%s5 + $0x160] sm:$0xf]
      %v1440 = vld [vmem:[%s5 + $0x164] sm:$0xf]
      %v1441 = vld [vmem:[%s5 + $0x168] sm:$0xf]
      %v1442 = vld [vmem:[%s5 + $0x16c] sm:$0xf]
      %v1443 = vld [vmem:[%s5 + $0x170] sm:$0xf]
      %v1444 = vld [vmem:[%s5 + $0x174] sm:$0xf]
      %v1445 = vld [vmem:[%s5 + $0x178] sm:$0xf]
      %v1446 = vld [vmem:[%s5 + $0x17c] sm:$0xf]
      %v1447 = vld [vmem:[%s5 + $0x180] sm:$0xf]
      %v1448 = vld [vmem:[%s5 + $0x184] sm:$0xf]
      %v1449 = vld [vmem:[%s5 + $0x188] sm:$0xf]
      %v1450 = vld [vmem:[%s5 + $0x18c] sm:$0xf]
      %v1451 = vld [vmem:[%s5 + $0x190] sm:$0xf]
      %v1452 = vld [vmem:[%s5 + $0x194] sm:$0xf]
      %v1453 = vld [vmem:[%s5 + $0x198] sm:$0xf]
      %v1454 = vld [vmem:[%s5 + $0x19c] sm:$0xf]
      %v1455 = vld [vmem:[%s5 + $0x1a0] sm:$0xf]
      %v1456 = vld [vmem:[%s5 + $0x1a4] sm:$0xf]
      %v1457 = vld [vmem:[%s5 + $0x1a8] sm:$0xf]
      %v1458 = vld [vmem:[%s5 + $0x1ac] sm:$0xf]
      %v1459 = vld [vmem:[%s5 + $0x1b0] sm:$0xf]
      %v1460 = vld [vmem:[%s5 + $0x1b4] sm:$0xf]
      %v1461 = vld [vmem:[%s5 + $0x1b8] sm:$0xf]
      %v1462 = vld [vmem:[%s5 + $0x1bc] sm:$0xf]
      %v1463 = vld [vmem:[%s5 + $0x1c0] sm:$0xf]
      %v1464 = vld [vmem:[%s5 + $0x1c4] sm:$0xf]
      %v1465 = vld [vmem:[%s5 + $0x1c8] sm:$0xf]
      %v1466 = vld [vmem:[%s5 + $0x1cc] sm:$0xf]
      %v1467 = vld [vmem:[%s5 + $0x1d0] sm:$0xf]
      %v1468 = vld [vmem:[%s5 + $0x1d4] sm:$0xf]
      %v1469 = vld [vmem:[%s5 + $0x1d8] sm:$0xf]
      %v1470 = vld [vmem:[%s5 + $0x1dc] sm:$0xf]
      %v1471 = vld [vmem:[%s5 + $0x1e0] sm:$0xf]
      %v1472 = vld [vmem:[%s5 + $0x1e4] sm:$0xf]
      %v1473 = vld [vmem:[%s5 + $0x1e8] sm:$0xf]
      %v1474 = vld [vmem:[%s5 + $0x1ec] sm:$0xf]
      %v1475 = vld [vmem:[%s5 + $0x1f0] sm:$0xf]
      %v1476 = vld [vmem:[%s5 + $0x1f4] sm:$0xf]
      %v1477 = vld [vmem:[%s5 + $0x1f8] sm:$0xf]
      %v1478 = vld [vmem:[%s5 + $0x1fc] sm:$0xf]
      %v1479 = vld [vmem:[%s5 + $0x200] sm:$0xf]
      %v1480 = vld [vmem:[%s5 + $0x204] sm:$0xf]
      %v1481 = vld [vmem:[%s5 + $0x208] sm:$0xf]
      %v1482 = vld [vmem:[%s5 + $0x20c] sm:$0xf]
      %v1483 = vld [vmem:[%s5 + $0x210] sm:$0xf]
      %v1484 = vld [vmem:[%s5 + $0x214] sm:$0xf]
      %v1485 = vld [vmem:[%s5 + $0x218] sm:$0xf]
      %v1486 = vld [vmem:[%s5 + $0x21c] sm:$0xf]
      %v1487 = vld [vmem:[%s5 + $0x220] sm:$0xf]
      %v1488 = vld [vmem:[%s5 + $0x224] sm:$0xf]
      %v1489 = vld [vmem:[%s5 + $0x228] sm:$0xf]
      %v1490 = vld [vmem:[%s5 + $0x22c] sm:$0xf]
      %v1491 = vld [vmem:[%s5 + $0x230] sm:$0xf]
      %v1492 = vld [vmem:[%s5 + $0x234] sm:$0xf]
      %v1493 = vld [vmem:[%s5 + $0x238] sm:$0xf]
      %v1494 = vld [vmem:[%s5 + $0x23c] sm:$0xf]
      %v1495 = vld [vmem:[%s6] sm:$0x1]
      %v1497 = vshrl.u32 %v1348, 16
      %v1499 = vshll.u32 %v1348, 16
      %v1501 = vrot.slane %v1499, 1
      %v1502 = vor.u32 %v1497, %v1501
      %v1504 = vshll.u32 %v1349, 16
      %v1506 = vrot.slane %v1504, 1
      %v1507 = vsel %vm791, %v1502, %v1506
      %v1508 = vshrl.u32 %v1349, 16
      %v1510 = vor.u32 %v1508, %v1506
      %v1515 = vrot.slane %v1348, 1
      %v1516 = vrot.slane %v1349, 1
      %v1517 = vsel %vm824, %v1515, %v1516
      %v1521 = vrot.slane %v1348, 4
      %v1522 = vrot.slane %v1349, 4
      %v1523 = vsel %vm831, %v1521, %v1522
      %v1524 = vrot.slane %v1350, 4
      %v1525 = vsel %vm831, %v1522, %v1524
      %v1528 = vrot.slane %v1497, 4
      %v1529 = vrot.slane %v1499, 5
      %v1530 = vor.u32 %v1528, %v1529
      %v1531 = vrot.slane %v1508, 4
      %v1532 = vrot.slane %v1504, 5
      %v1533 = vor.u32 %v1531, %v1532
      %v1534 = vsel %vm845, %v1530, %v1533
      %v1536 = vshrl.u32 %v1350, 16
      %v1538 = vrot.slane %v1536, 4
      %v1539 = vshll.u32 %v1350, 16
      %v1541 = vrot.slane %v1539, 5
      %v1542 = vor.u32 %v1538, %v1541
      %v1543 = vsel %vm845, %v1533, %v1542
      %v1546 = vrot.slane %v1348, 5
      %v1547 = vrot.slane %v1349, 5
      %v1548 = vsel %vm866, %v1546, %v1547
      %v1549 = vrot.slane %v1350, 5
      %v1550 = vsel %vm866, %v1547, %v1549
      %v1553 = vrot.slane %v1539, 1
      %v1554 = vsel %vm791, %v1510, %v1553
      %v1555 = vor.u32 %v1536, %v1553
      %v1558 = vrot.slane %v1350, 1
      %v1559 = vsel %vm824, %v1516, %v1558
      %v1563 = vlaneseq
      %v1564 = vshrl.u32 %v1563, 7
      %v1565 = vsub.s32 0, %v1564
      %v1566 = vrot.slane %v1495, %v1565
      %v1712 = vunpack.c.l.b16 %v1351
      %v1713 = vunpack.c.l.b16 %v1352
      %v1714 = vunpack.c.l.b16 %v1353
      %v1715 = vunpack.c.l.b16 %v1354
      %v1716 = vunpack.c.l.b16 %v1355
      %v1717 = vunpack.c.l.b16 %v1356
      %v1718 = vunpack.c.l.b16 %v1357
      %v1719 = vunpack.c.l.b16 %v1358
      %v1720 = vunpack.c.l.b16 %v1359
      %v1721 = vunpack.c.l.b16 %v1360
      %v1722 = vunpack.c.l.b16 %v1361
      %v1723 = vunpack.c.l.b16 %v1362
      %v1724 = vunpack.c.l.b16 %v1363
      %v1725 = vunpack.c.l.b16 %v1364
      %v1726 = vunpack.c.l.b16 %v1365
      %v1727 = vunpack.c.l.b16 %v1366
      %v1728 = vunpack.c.l.b16 %v1367
      %v1729 = vunpack.c.l.b16 %v1368
      %v1730 = vunpack.c.l.b16 %v1369
      %v1731 = vunpack.c.l.b16 %v1370
      %v1732 = vunpack.c.l.b16 %v1371
      %v1733 = vunpack.c.l.b16 %v1372
      %v1734 = vunpack.c.l.b16 %v1373
      %v1735 = vunpack.c.l.b16 %v1374
      %v1736 = vunpack.c.l.b16 %v1375
      %v1737 = vunpack.c.l.b16 %v1376
      %v1738 = vunpack.c.l.b16 %v1377
      %v1739 = vunpack.c.l.b16 %v1378
      %v1740 = vunpack.c.l.b16 %v1379
      %v1741 = vunpack.c.l.b16 %v1380
      %v1742 = vunpack.c.l.b16 %v1381
      %v1743 = vunpack.c.l.b16 %v1382
      %v1744 = vunpack.c.l.b16 %v1383
      %v1745 = vunpack.c.l.b16 %v1384
      %v1746 = vunpack.c.l.b16 %v1385
      %v1747 = vunpack.c.l.b16 %v1386
      %v1748 = vunpack.c.l.b16 %v1387
      %v1749 = vunpack.c.l.b16 %v1388
      %v1750 = vunpack.c.l.b16 %v1389
      %v1751 = vunpack.c.l.b16 %v1390
      %v1752 = vunpack.c.l.b16 %v1391
      %v1753 = vunpack.c.l.b16 %v1392
      %v1754 = vunpack.c.l.b16 %v1393
      %v1755 = vunpack.c.l.b16 %v1394
      %v1756 = vunpack.c.l.b16 %v1395
      %v1757 = vunpack.c.l.b16 %v1396
      %v1758 = vunpack.c.l.b16 %v1397
      %v1759 = vunpack.c.l.b16 %v1398
      %v1760 = vunpack.c.l.b16 %v1399
      %v1761 = vunpack.c.l.b16 %v1400
      %v1762 = vunpack.c.l.b16 %v1401
      %v1763 = vunpack.c.l.b16 %v1402
      %v1764 = vunpack.c.l.b16 %v1403
      %v1765 = vunpack.c.l.b16 %v1404
      %v1766 = vunpack.c.l.b16 %v1405
      %v1767 = vunpack.c.l.b16 %v1406
      %v1768 = vunpack.c.l.b16 %v1407
      %v1769 = vunpack.c.l.b16 %v1408
      %v1770 = vunpack.c.l.b16 %v1409
      %v1771 = vunpack.c.l.b16 %v1410
      %v1772 = vunpack.c.l.b16 %v1411
      %v1773 = vunpack.c.l.b16 %v1412
      %v1774 = vunpack.c.l.b16 %v1413
      %v1775 = vunpack.c.l.b16 %v1414
      %v1776 = vunpack.c.l.b16 %v1415
      %v1777 = vunpack.c.l.b16 %v1416
      %v1778 = vunpack.c.l.b16 %v1417
      %v1779 = vunpack.c.l.b16 %v1418
      %v1780 = vunpack.c.l.b16 %v1419
      %v1781 = vunpack.c.l.b16 %v1420
      %v1782 = vunpack.c.l.b16 %v1421
      %v1783 = vunpack.c.l.b16 %v1422
      %v1784 = vunpack.c.l.b16 %v1423
      %v1785 = vunpack.c.l.b16 %v1424
      %v1786 = vunpack.c.l.b16 %v1425
      %v1787 = vunpack.c.l.b16 %v1426
      %v1788 = vunpack.c.l.b16 %v1427
      %v1789 = vunpack.c.l.b16 %v1428
      %v1790 = vunpack.c.l.b16 %v1429
      %v1791 = vunpack.c.l.b16 %v1430
      %v1792 = vunpack.c.l.b16 %v1431
      %v1793 = vunpack.c.l.b16 %v1432
      %v1794 = vunpack.c.l.b16 %v1433
      %v1795 = vunpack.c.l.b16 %v1434
      %v1796 = vunpack.c.l.b16 %v1435
      %v1797 = vunpack.c.l.b16 %v1436
      %v1798 = vunpack.c.l.b16 %v1437
      %v1799 = vunpack.c.l.b16 %v1438
      %v1800 = vunpack.c.l.b16 %v1439
      %v1801 = vunpack.c.l.b16 %v1440
      %v1802 = vunpack.c.l.b16 %v1441
      %v1803 = vunpack.c.l.b16 %v1442
      %v1804 = vunpack.c.l.b16 %v1443
      %v1805 = vunpack.c.l.b16 %v1444
      %v1806 = vunpack.c.l.b16 %v1445
      %v1807 = vunpack.c.l.b16 %v1446
      %v1808 = vunpack.c.l.b16 %v1447
      %v1809 = vunpack.c.l.b16 %v1448
      %v1810 = vunpack.c.l.b16 %v1449
      %v1811 = vunpack.c.l.b16 %v1450
      %v1812 = vunpack.c.l.b16 %v1451
      %v1813 = vunpack.c.l.b16 %v1452
      %v1814 = vunpack.c.l.b16 %v1453
      %v1815 = vunpack.c.l.b16 %v1454
      %v1816 = vunpack.c.l.b16 %v1455
      %v1817 = vunpack.c.l.b16 %v1456
      %v1818 = vunpack.c.l.b16 %v1457
      %v1819 = vunpack.c.l.b16 %v1458
      %v1820 = vunpack.c.l.b16 %v1459
      %v1821 = vunpack.c.l.b16 %v1460
      %v1822 = vunpack.c.l.b16 %v1461
      %v1823 = vunpack.c.l.b16 %v1462
      %v1824 = vunpack.c.l.b16 %v1463
      %v1825 = vunpack.c.l.b16 %v1464
      %v1826 = vunpack.c.l.b16 %v1465
      %v1827 = vunpack.c.l.b16 %v1466
      %v1828 = vunpack.c.l.b16 %v1467
      %v1829 = vunpack.c.l.b16 %v1468
      %v1830 = vunpack.c.l.b16 %v1469
      %v1831 = vunpack.c.l.b16 %v1470
      %v1832 = vunpack.c.l.b16 %v1471
      %v1833 = vunpack.c.l.b16 %v1472
      %v1834 = vunpack.c.l.b16 %v1473
      %v1835 = vunpack.c.l.b16 %v1474
      %v1836 = vunpack.c.l.b16 %v1475
      %v1837 = vunpack.c.l.b16 %v1476
      %v1838 = vunpack.c.l.b16 %v1477
      %v1839 = vunpack.c.l.b16 %v1478
      %v1840 = vunpack.c.l.b16 %v1479
      %v1841 = vunpack.c.l.b16 %v1480
      %v1842 = vunpack.c.l.b16 %v1481
      %v1843 = vunpack.c.l.b16 %v1482
      %v1844 = vunpack.c.l.b16 %v1483
      %v1845 = vunpack.c.l.b16 %v1484
      %v1846 = vunpack.c.l.b16 %v1485
      %v1847 = vunpack.c.l.b16 %v1486
      %v1848 = vunpack.c.l.b16 %v1487
      %v1849 = vunpack.c.l.b16 %v1488
      %v1850 = vunpack.c.l.b16 %v1489
      %v1851 = vunpack.c.l.b16 %v1490
      %v1852 = vunpack.c.l.b16 %v1491
      %v1853 = vunpack.c.l.b16 %v1492
      %v1854 = vunpack.c.l.b16 %v1493
      %v1855 = vunpack.c.l.b16 %v1494
      %v1856 = vpack.c.b16 %v1713, %v1712
      %v1857 = vpack.c.b16 %v1715, %v1714
      %v1858 = vpack.c.b16 %v1717, %v1716
      %v1859 = vpack.c.b16 %v1719, %v1718
      %v1860 = vpack.c.b16 %v1721, %v1720
      %v1861 = vpack.c.b16 %v1723, %v1722
      %v1862 = vpack.c.b16 %v1725, %v1724
      %v1863 = vpack.c.b16 %v1727, %v1726
      %v1864 = vpack.c.b16 %v1729, %v1728
      %v1865 = vpack.c.b16 %v1731, %v1730
      %v1866 = vpack.c.b16 %v1733, %v1732
      %v1867 = vpack.c.b16 %v1735, %v1734
      %v1868 = vpack.c.b16 %v1737, %v1736
      %v1869 = vpack.c.b16 %v1739, %v1738
      %v1870 = vpack.c.b16 %v1741, %v1740
      %v1871 = vpack.c.b16 %v1743, %v1742
      %v1872 = vpack.c.b16 %v1745, %v1744
      %v1873 = vpack.c.b16 %v1747, %v1746
      %v1874 = vpack.c.b16 %v1749, %v1748
      %v1875 = vpack.c.b16 %v1751, %v1750
      %v1876 = vpack.c.b16 %v1753, %v1752
      %v1877 = vpack.c.b16 %v1755, %v1754
      %v1878 = vpack.c.b16 %v1757, %v1756
      %v1879 = vpack.c.b16 %v1759, %v1758
      %v1880 = vpack.c.b16 %v1761, %v1760
      %v1881 = vpack.c.b16 %v1763, %v1762
      %v1882 = vpack.c.b16 %v1765, %v1764
      %v1883 = vpack.c.b16 %v1767, %v1766
      %v1884 = vpack.c.b16 %v1769, %v1768
      %v1885 = vpack.c.b16 %v1771, %v1770
      %v1886 = vpack.c.b16 %v1773, %v1772
      %v1887 = vpack.c.b16 %v1775, %v1774
      %v1888 = vpack.c.b16 %v1777, %v1776
      %v1889 = vpack.c.b16 %v1779, %v1778
      %v1890 = vpack.c.b16 %v1781, %v1780
      %v1891 = vpack.c.b16 %v1783, %v1782
      %v1892 = vpack.c.b16 %v1785, %v1784
      %v1893 = vpack.c.b16 %v1787, %v1786
      %v1894 = vpack.c.b16 %v1789, %v1788
      %v1895 = vpack.c.b16 %v1791, %v1790
      %v1896 = vpack.c.b16 %v1793, %v1792
      %v1897 = vpack.c.b16 %v1795, %v1794
      %v1898 = vpack.c.b16 %v1797, %v1796
      %v1899 = vpack.c.b16 %v1799, %v1798
      %v1900 = vpack.c.b16 %v1801, %v1800
      %v1901 = vpack.c.b16 %v1803, %v1802
      %v1902 = vpack.c.b16 %v1805, %v1804
      %v1903 = vpack.c.b16 %v1807, %v1806
      %v1904 = vpack.c.b16 %v1809, %v1808
      %v1905 = vpack.c.b16 %v1811, %v1810
      %v1906 = vpack.c.b16 %v1813, %v1812
      %v1907 = vpack.c.b16 %v1815, %v1814
      %v1908 = vpack.c.b16 %v1817, %v1816
      %v1909 = vpack.c.b16 %v1819, %v1818
      %v1910 = vpack.c.b16 %v1821, %v1820
      %v1911 = vpack.c.b16 %v1823, %v1822
      %v1912 = vpack.c.b16 %v1825, %v1824
      %v1913 = vpack.c.b16 %v1827, %v1826
      %v1914 = vpack.c.b16 %v1829, %v1828
      %v1915 = vpack.c.b16 %v1831, %v1830
      %v1916 = vpack.c.b16 %v1833, %v1832
      %v1917 = vpack.c.b16 %v1835, %v1834
      %v1918 = vpack.c.b16 %v1837, %v1836
      %v1919 = vpack.c.b16 %v1839, %v1838
      %v1920 = vpack.c.b16 %v1841, %v1840
      %v1921 = vpack.c.b16 %v1843, %v1842
      %v1922 = vpack.c.b16 %v1845, %v1844
      %v1923 = vpack.c.b16 %v1847, %v1846
      %v1924 = vpack.c.b16 %v1849, %v1848
      %v1925 = vpack.c.b16 %v1851, %v1850
      %v1926 = vpack.c.b16 %v1853, %v1852
      %v1927 = vpack.c.b16 %v1855, %v1854
      %2000 = vmatprep.subr.bf16.mxu0 0
      %2001 = vmatpush1.bf16.msra.mxu0 %v1856
      %2002 = vmatprep.subr.bf16.mxu0 0
      %2003 = vmatpush1.bf16.msra.mxu0 %v1857
      %2004 = vmatprep.subr.bf16.mxu0 0
      %2005 = vmatpush1.bf16.msra.mxu0 %v1858
      %2006 = vmatprep.subr.bf16.mxu0 0
      %2007 = vmatpush1.bf16.msra.mxu0 %v1859
      %2008 = vmatprep.subr.bf16.mxu0 0
      %2009 = vmatpush1.bf16.msra.mxu0 %v1860
      %2010 = vmatprep.subr.bf16.mxu0 0
      %2011 = vmatpush1.bf16.msra.mxu0 %v1861
      %2012 = vmatprep.subr.bf16.mxu0 0
      %2013 = vmatpush1.bf16.msra.mxu0 %v1862
      %2014 = vmatprep.subr.bf16.mxu0 0
      %2015 = vmatpush1.bf16.msra.mxu0 %v1863
      %2016 = vmatprep.subr.bf16.mxu0 0
      %2017 = vmatpush1.bf16.msra.mxu0 %v1864
      %2018 = vmatprep.subr.bf16.mxu0 0
      %2019 = vmatpush1.bf16.msra.mxu0 %v1865
      %2020 = vmatprep.subr.bf16.mxu0 0
      %2021 = vmatpush1.bf16.msra.mxu0 %v1866
      %2022 = vmatprep.subr.bf16.mxu0 0
      %2023 = vmatpush1.bf16.msra.mxu0 %v1867
      %2024 = vmatprep.subr.bf16.mxu0 0
      %2025 = vmatpush1.bf16.msra.mxu0 %v1868
      %2026 = vmatprep.subr.bf16.mxu0 0
      %2027 = vmatpush1.bf16.msra.mxu0 %v1869
      %2028 = vmatprep.subr.bf16.mxu0 0
      %2029 = vmatpush1.bf16.msra.mxu0 %v1870
      %2030 = vmatprep.subr.bf16.mxu0 0
      %2031 = vmatpush1.bf16.msra.mxu0 %v1871
      %2032 = vmatprep.mubr.bf16.mxu0 %v1507
      %2033 = vmatmul.mubr.bf16.gmra.mrb[0].mxu0 %v1348
      %v2034 = vpop.f32.mrb[0].mxu0
      %v2035 = vadd.f32 %v1566, %v2034
      %v2036 = vpop.f32.mrb[0].mxu0
      %v2037 = vpop.f32.mrb[0].mxu0
      %v2038 = vadd.f32 %v1566, %v2037
      %v2039 = vpop.f32.mrb[0].mxu0
      %2040 = vmatprep.mubr.bf16.mxu0 %v1510
      %2041 = vmatmul.mubr.bf16.gmra.mrb[0].mxu0 %v1349
      %v2042 = vpop.f32.mrb[0].mxu0
      %v2043 = vadd.f32 %v1566, %v2042
      %v2044 = vpop.f32.mrb[0].mxu0
      %v2045 = vpop.f32.mrb[0].mxu0
      %v2046 = vadd.f32 %v1566, %v2045
      %v2047 = vpop.f32.mrb[0].mxu0
      %2048 = vdwg.mxu0
      %2049 = vmatprep.subr.bf16.mxu0 0
      %2050 = vmatpush1.bf16.msra.mxu0 %v1872
      %2051 = vmatprep.subr.bf16.mxu0 0
      %2052 = vmatpush1.bf16.msra.mxu0 %v1873
      %2053 = vmatprep.subr.bf16.mxu0 0
      %2054 = vmatpush1.bf16.msra.mxu0 %v1874
      %2055 = vmatprep.subr.bf16.mxu0 0
      %2056 = vmatpush1.bf16.msra.mxu0 %v1875
      %2057 = vmatprep.subr.bf16.mxu0 0
      %2058 = vmatpush1.bf16.msra.mxu0 %v1876
      %2059 = vmatprep.subr.bf16.mxu0 0
      %2060 = vmatpush1.bf16.msra.mxu0 %v1877
      %2061 = vmatprep.subr.bf16.mxu0 0
      %2062 = vmatpush1.bf16.msra.mxu0 %v1878
      %2063 = vmatprep.subr.bf16.mxu0 0
      %2064 = vmatpush1.bf16.msra.mxu0 %v1879
      %2065 = vmatprep.subr.bf16.mxu0 0
      %2066 = vmatpush1.bf16.msra.mxu0 %v1880
      %2067 = vmatprep.subr.bf16.mxu0 0
      %2068 = vmatpush1.bf16.msra.mxu0 %v1881
      %2069 = vmatprep.subr.bf16.mxu0 0
      %2070 = vmatpush1.bf16.msra.mxu0 %v1882
      %2071 = vmatprep.subr.bf16.mxu0 0
      %2072 = vmatpush1.bf16.msra.mxu0 %v1883
      %2073 = vmatprep.subr.bf16.mxu0 0
      %2074 = vmatpush1.bf16.msra.mxu0 %v1884
      %2075 = vmatprep.subr.bf16.mxu0 0
      %2076 = vmatpush1.bf16.msra.mxu0 %v1885
      %2077 = vmatprep.subr.bf16.mxu0 0
      %2078 = vmatpush1.bf16.msra.mxu0 %v1886
      %2079 = vmatprep.subr.bf16.mxu0 0
      %2080 = vmatpush1.bf16.msra.mxu0 %v1887
      %2081 = vmatprep.mubr.bf16.mxu0 %v1523
      %2082 = vmatmul.mubr.bf16.gmra.mrb[0].mxu0 %v1517
      %v2083 = vpop.f32.mrb[0].mxu0
      %v2084 = vadd.f32 %v2035, %v2083
      %v2085 = vpop.f32.mrb[0].mxu0
      %v2086 = vpop.f32.mrb[0].mxu0
      %v2087 = vadd.f32 %v2038, %v2086
      %v2088 = vpop.f32.mrb[0].mxu0
      %2089 = vmatprep.mubr.bf16.mxu0 %v1525
      %2090 = vmatmul.mubr.bf16.gmra.mrb[0].mxu0 %v1516
      %v2091 = vpop.f32.mrb[0].mxu0
      %v2092 = vadd.f32 %v2043, %v2091
      %v2093 = vpop.f32.mrb[0].mxu0
      %v2094 = vpop.f32.mrb[0].mxu0
      %v2095 = vadd.f32 %v2046, %v2094
      %v2096 = vpop.f32.mrb[0].mxu0
      %2097 = vdwg.mxu0
      %2098 = vmatprep.subr.bf16.mxu0 0
      %2099 = vmatpush1.bf16.msra.mxu0 %v1888
      %2100 = vmatprep.subr.bf16.mxu0 0
      %2101 = vmatpush1.bf16.msra.mxu0 %v1889
      %2102 = vmatprep.subr.bf16.mxu0 0
      %2103 = vmatpush1.bf16.msra.mxu0 %v1890
      %2104 = vmatprep.subr.bf16.mxu0 0
      %2105 = vmatpush1.bf16.msra.mxu0 %v1891
      %2106 = vmatprep.subr.bf16.mxu0 0
      %2107 = vmatpush1.bf16.msra.mxu0 %v1892
      %2108 = vmatprep.subr.bf16.mxu0 0
      %2109 = vmatpush1.bf16.msra.mxu0 %v1893
      %2110 = vmatprep.subr.bf16.mxu0 0
      %2111 = vmatpush1.bf16.msra.mxu0 %v1894
      %2112 = vmatprep.subr.bf16.mxu0 0
      %2113 = vmatpush1.bf16.msra.mxu0 %v1895
      %2114 = vmatprep.subr.bf16.mxu0 0
      %2115 = vmatpush1.bf16.msra.mxu0 %v1896
      %2116 = vmatprep.subr.bf16.mxu0 0
      %2117 = vmatpush1.bf16.msra.mxu0 %v1897
      %2118 = vmatprep.subr.bf16.mxu0 0
      %2119 = vmatpush1.bf16.msra.mxu0 %v1898
      %2120 = vmatprep.subr.bf16.mxu0 0
      %2121 = vmatpush1.bf16.msra.mxu0 %v1899
      %2122 = vmatprep.subr.bf16.mxu0 0
      %2123 = vmatpush1.bf16.msra.mxu0 %v1900
      %2124 = vmatprep.subr.bf16.mxu0 0
      %2125 = vmatpush1.bf16.msra.mxu0 %v1901
      %2126 = vmatprep.subr.bf16.mxu0 0
      %2127 = vmatpush1.bf16.msra.mxu0 %v1902
      %2128 = vmatprep.subr.bf16.mxu0 0
      %2129 = vmatpush1.bf16.msra.mxu0 %v1903
      %2130 = vmatprep.mubr.bf16.mxu0 %v1548
      %2131 = vmatmul.mubr.bf16.gmra.mrb[0].mxu0 %v1534
      %v2132 = vpop.f32.mrb[0].mxu0
      %v2133 = vadd.f32 %v2084, %v2132
      %v2134 = vpop.f32.mrb[0].mxu0
      %v2135 = vpop.f32.mrb[0].mxu0
      %v2136 = vadd.f32 %v2087, %v2135
      %v2137 = vpop.f32.mrb[0].mxu0
      %2138 = vmatprep.mubr.bf16.mxu0 %v1550
      %2139 = vmatmul.mubr.bf16.gmra.mrb[0].mxu0 %v1543
      %v2140 = vpop.f32.mrb[0].mxu0
      %v2141 = vadd.f32 %v2092, %v2140
      %v2142 = vpop.f32.mrb[0].mxu0
      %v2143 = vpop.f32.mrb[0].mxu0
      %v2144 = vadd.f32 %v2095, %v2143
      %v2145 = vpop.f32.mrb[0].mxu0
      %2146 = vdwg.mxu0
      %2147 = vmatprep.subr.bf16.mxu0 0
      %2148 = vmatpush1.bf16.msra.mxu0 %v1904
      %2149 = vmatprep.subr.bf16.mxu0 0
      %2150 = vmatpush1.bf16.msra.mxu0 %v1905
      %2151 = vmatprep.subr.bf16.mxu0 0
      %2152 = vmatpush1.bf16.msra.mxu0 %v1906
      %2153 = vmatprep.subr.bf16.mxu0 0
      %2154 = vmatpush1.bf16.msra.mxu0 %v1907
      %2155 = vmatprep.subr.bf16.mxu0 0
      %2156 = vmatpush1.bf16.msra.mxu0 %v1908
      %2157 = vmatprep.subr.bf16.mxu0 0
      %2158 = vmatpush1.bf16.msra.mxu0 %v1909
      %2159 = vmatprep.subr.bf16.mxu0 0
      %2160 = vmatpush1.bf16.msra.mxu0 %v1910
      %2161 = vmatprep.subr.bf16.mxu0 0
      %2162 = vmatpush1.bf16.msra.mxu0 %v1911
      %2163 = vmatprep.subr.bf16.mxu0 0
      %2164 = vmatpush1.bf16.msra.mxu0 %v1912
      %2165 = vmatprep.subr.bf16.mxu0 0
      %2166 = vmatpush1.bf16.msra.mxu0 %v1913
      %2167 = vmatprep.subr.bf16.mxu0 0
      %2168 = vmatpush1.bf16.msra.mxu0 %v1914
      %2169 = vmatprep.subr.bf16.mxu0 0
      %2170 = vmatpush1.bf16.msra.mxu0 %v1915
      %2171 = vmatprep.subr.bf16.mxu0 0
      %2172 = vmatpush1.bf16.msra.mxu0 %v1916
      %2173 = vmatprep.subr.bf16.mxu0 0
      %2174 = vmatpush1.bf16.msra.mxu0 %v1917
      %2175 = vmatprep.subr.bf16.mxu0 0
      %2176 = vmatpush1.bf16.msra.mxu0 %v1918
      %2177 = vmatprep.subr.bf16.mxu0 0
      %2178 = vmatpush1.bf16.msra.mxu0 %v1919
      %2179 = vmatprep.mubr.bf16.mxu0 %v1554
      %2180 = vmatmul.mubr.bf16.gmra.mrb[0].mxu0 %v1349
      %v2181 = vpop.f32.mrb[0].mxu0
      %v2182 = vadd.f32 %v2133, %v2181
      %v2183 = vpop.f32.mrb[0].mxu0
      %v2184 = vpop.f32.mrb[0].mxu0
      %v2185 = vadd.f32 %v2136, %v2184
      %v2186 = vpop.f32.mrb[0].mxu0
      %2187 = vmatprep.mubr.bf16.mxu0 %v1555
      %2188 = vmatmul.mubr.bf16.gmra.mrb[0].mxu0 %v1350
      %v2189 = vpop.f32.mrb[0].mxu0
      %v2190 = vadd.f32 %v2141, %v2189
      %v2191 = vpop.f32.mrb[0].mxu0
      %v2192 = vpop.f32.mrb[0].mxu0
      %v2193 = vadd.f32 %v2144, %v2192
      %v2194 = vpop.f32.mrb[0].mxu0
      %2195 = vdwg.mxu0
      %2196 = vmatprep.subr.bf16.mxu0 0
      %2197 = vmatpush1.bf16.msra.mxu0 %v1920
      %2198 = vmatprep.subr.bf16.mxu0 0
      %2199 = vmatpush1.bf16.msra.mxu0 %v1921
      %2200 = vmatprep.subr.bf16.mxu0 0
      %2201 = vmatpush1.bf16.msra.mxu0 %v1922
      %2202 = vmatprep.subr.bf16.mxu0 0
      %2203 = vmatpush1.bf16.msra.mxu0 %v1923
      %2204 = vmatprep.subr.bf16.mxu0 0
      %2205 = vmatpush1.bf16.msra.mxu0 %v1924
      %2206 = vmatprep.subr.bf16.mxu0 0
      %2207 = vmatpush1.bf16.msra.mxu0 %v1925
      %2208 = vmatprep.subr.bf16.mxu0 0
      %2209 = vmatpush1.bf16.msra.mxu0 %v1926
      %2210 = vmatprep.subr.bf16.mxu0 0
      %2211 = vmatpush1.bf16.msra.mxu0 %v1927
      %2212 = vmatprep.subr.bf16.mxu0 0
      %2213 = vmatpush1.bf16.msra.mxu0 0
      %2214 = vmatprep.subr.bf16.mxu0 0
      %2215 = vmatpush1.bf16.msra.mxu0 0
      %2216 = vmatprep.subr.bf16.mxu0 0
      %2217 = vmatpush1.bf16.msra.mxu0 0
      %2218 = vmatprep.subr.bf16.mxu0 0
      %2219 = vmatpush1.bf16.msra.mxu0 0
      %2220 = vmatprep.subr.bf16.mxu0 0
      %2221 = vmatpush1.bf16.msra.mxu0 0
      %2222 = vmatprep.subr.bf16.mxu0 0
      %2223 = vmatpush1.bf16.msra.mxu0 0
      %2224 = vmatprep.subr.bf16.mxu0 0
      %2225 = vmatpush1.bf16.msra.mxu0 0
      %2226 = vmatprep.subr.bf16.mxu0 0
      %2227 = vmatpush1.bf16.msra.mxu0 0
      %2228 = vmatprep.mubr.bf16.mxu0 0
      %2229 = vmatmul.mubr.bf16.gmra.mrb[0].mxu0 %v1559
      %v2230 = vpop.f32.mrb[0].mxu0
      %v2231 = vadd.f32 %v2182, %v2230
      %v2232 = vpop.f32.mrb[0].mxu0
      %v2233 = vpop.f32.mrb[0].mxu0
      %v2234 = vadd.f32 %v2185, %v2233
      %v2235 = vpop.f32.mrb[0].mxu0
      %2236 = vmatprep.mubr.bf16.mxu0 0
      %2237 = vmatmul.mubr.bf16.gmra.mrb[0].mxu0 %v1558
      %v2238 = vpop.f32.mrb[0].mxu0
      %v2239 = vadd.f32 %v2190, %v2238
      %v2240 = vpop.f32.mrb[0].mxu0
      %v2241 = vpop.f32.mrb[0].mxu0
      %v2242 = vadd.f32 %v2193, %v2241
      %v2243 = vpop.f32.mrb[0].mxu0
      %2244 = vdwg.mxu0
      %vm2245 = vcmp.ge.f32.partialorder %v2231, 0.0
      %vm2246 = vcmp.ge.f32.partialorder %v2234, 0.0
      %vm2247 = vcmp.ge.f32.partialorder %v2239, 0.0
      %vm2248 = vcmp.ge.f32.partialorder %v2242, 0.0
      %v2249 = vmul.f32 %v2231, 0.1
      %v2250 = vmul.f32 %v2234, 0.1
      %v2251 = vmul.f32 %v2239, 0.1
      %v2252 = vmul.f32 %v2242, 0.1
      %v2253 = vsel %vm2245, %v2231, %v2249
      %v2254 = vsel %vm2246, %v2234, %v2250
      %v2255 = vsel %vm2247, %v2239, %v2251
      %v2256 = vsel %vm2248, %v2242, %v2252
      %v2257 = vlaneseq
      %v2258 = vshrl.u32 %v2257, 7
      %v2259 = vadd.s32 %v2258, 8
      %v2260 = vadd.s32 %v2258, 16
      %v2261 = vadd.s32 %v2258, 24
      %vm2262 = vcmp.lt.s32.totalorder %v2258, 0
      %v2263 = vsub.s32 0, %v2258
      %v2264 = vsel %vm2262, %v2263, %v2258
      %v2265 = vshrl.u32 %v2264, 3
      %v2266 = vand.u32 %v2264, 7
      %v2267 = vsub.s32 0, %v2266
      %v2268 = vsel %vm2262, %v2267, %v2266
      %vm2269 = vcmp.lt.s32.totalorder %v2259, 0
      %v2270 = vsub.s32 0, %v2259
      %v2271 = vsel %vm2269, %v2270, %v2259
      %v2272 = vshrl.u32 %v2271, 3
      %v2273 = vand.u32 %v2271, 7
      %v2274 = vsub.s32 0, %v2273
      %v2275 = vsel %vm2269, %v2274, %v2273
      %vm2276 = vcmp.lt.s32.totalorder %v2260, 0
      %v2277 = vsub.s32 0, %v2260
      %v2278 = vsel %vm2276, %v2277, %v2260
      %v2279 = vshrl.u32 %v2278, 3
      %v2280 = vand.u32 %v2278, 7
      %v2281 = vsub.s32 0, %v2280
      %v2282 = vsel %vm2276, %v2281, %v2280
      %vm2283 = vcmp.lt.s32.totalorder %v2261, 0
      %v2284 = vsub.s32 0, %v2261
      %v2285 = vsel %vm2283, %v2284, %v2261
      %v2286 = vshrl.u32 %v2285, 3
      %v2287 = vand.u32 %v2285, 7
      %v2288 = vsub.s32 0, %v2287
      %v2289 = vsel %vm2283, %v2288, %v2287
      %vm2290 = vcmp.ne.s32.totalorder %v2268, 0
      %vm2291 = vcmp.ne.s32.totalorder %v2275, 0
      %vm2292 = vcmp.ne.s32.totalorder %v2282, 0
      %vm2293 = vcmp.ne.s32.totalorder %v2289, 0
      %vm2294 = vcmp.lt.s32.totalorder %v2268, 0
      %vm2295 = vcmp.lt.s32.totalorder %v2275, 0
      %vm2296 = vcmp.lt.s32.totalorder %v2282, 0
      %vm2297 = vcmp.lt.s32.totalorder %v2289, 0
      %vm2298 = vmand %vm2294, %vm2290
      %vm2299 = vmand %vm2295, %vm2291
      %vm2300 = vmand %vm2296, %vm2292
      %vm2301 = vmand %vm2297, %vm2293
      %v2302 = vadd.s32 %v2268, 8
      %v2303 = vadd.s32 %v2275, 8
      %v2304 = vadd.s32 %v2282, 8
      %v2305 = vadd.s32 %v2289, 8
      %v2306 = vsel %vm2298, %v2302, %v2268
      %v2307 = vsel %vm2299, %v2303, %v2275
      %v2308 = vsel %vm2300, %v2304, %v2282
      %v2309 = vsel %vm2301, %v2305, %v2289
      %vm2310 = vcmp.lt.s32.totalorder %v2306, 4
      %vm2311 = vcmp.lt.s32.totalorder %v2307, 4
      %vm2312 = vcmp.lt.s32.totalorder %v2308, 4
      %vm2313 = vcmp.lt.s32.totalorder %v2309, 4
      %v2314 = vsel %vm2310, 1, 0
      %v2315 = vsel %vm2311, 1, 0
      %v2316 = vsel %vm2312, 1, 0
      %v2317 = vsel %vm2313, 1, 0
      %v2318 = vcvt.s32.f32 %v2314
      %v2319 = vcvt.s32.f32 %v2315
      %v2320 = vcvt.s32.f32 %v2316
      %v2321 = vcvt.s32.f32 %v2317
      %v2322 = vmul.f32 %v2253, %v2318
      %v2323 = vmul.f32 %v2254, %v2319
      %v2324 = vmul.f32 %v2255, %v2320
      %v2325 = vmul.f32 %v2256, %v2321
      %v2326 = vsel %vm889, %v2322, 0.0
      %v2327 = vsel %vm889, %v2323, 0.0
      %v2328 = vadd.f32 %v2326, %v2327
      %v2329 = vsel %vm889, %v2324, 0.0
      %v2330 = vadd.f32 %v2328, %v2329
      %vm2331 = vcmask 519168
      %v2332 = vsel %vm2331, %v2325, 0.0
      %v2333 = vadd.f32 %v2330, %v2332
      %v2334 = vrot.slane %v2333, 4
      %v2335 = vadd.f32 %v2333, %v2334
      %v2336 = vrot.slane %v2335, 2
      %v2337 = vadd.f32 %v2335, %v2336
      %v2338 = vrot.slane %v2337, 1
      %v2339 = vadd.f32 %v2337, %v2338
      %v2340 = vmul.f32 %v2339, 0.0625
      %v2341 = vld [vmem:[%s7] sm:$0xff]
      %v2342 = vld [vmem:[%s7 + $0x8] sm:$0xff]
      %v2343 = vld [vmem:[%s7 + $0x10] sm:$0xff]
      %v2344 = vld [vmem:[%s7 + $0x18] sm:$0xff]
      %v2345 = vld [vmem:[%s7 + $0x20] sm:$0xff]
      %v2346 = vld [vmem:[%s7 + $0x28] sm:$0xff]
      %v2347 = vld [vmem:[%s7 + $0x30] sm:$0xff]
      %v2348 = vld [vmem:[%s7 + $0x38] sm:$0xff]
      %v2349 = vld [vmem:[%s8] sm:$0x1]
      %v2351 = vsel %vm889, %v2340, 0
      %2353 = vmatprep.subr.mxu0 0.0
      %2354 = vmatpush1.msra.mxu0 %v2341
      %2355 = vmatprep.subr.mxu0 0.0
      %2356 = vmatpush1.msra.mxu0 %v2342
      %2357 = vmatprep.subr.mxu0 0.0
      %2358 = vmatpush1.msra.mxu0 %v2343
      %2359 = vmatprep.subr.mxu0 0.0
      %2360 = vmatpush1.msra.mxu0 %v2344
      %2361 = vmatprep.subr.mxu0 0.0
      %2362 = vmatpush1.msra.mxu0 %v2345
      %2363 = vmatprep.subr.mxu0 0.0
      %2364 = vmatpush1.msra.mxu0 %v2346
      %2365 = vmatprep.subr.mxu0 0.0
      %2366 = vmatpush1.msra.mxu0 %v2347
      %2367 = vmatprep.subr.mxu0 0.0
      %2368 = vmatpush1.msra.mxu0 %v2348
      %2369 = vmatprep.subr.mxu0 0.0
      %2370 = vmatpush1.msra.mxu0 0.0
      %2371 = vmatprep.subr.mxu0 0.0
      %2372 = vmatpush1.msra.mxu0 0.0
      %2373 = vmatprep.subr.mxu0 0.0
      %2374 = vmatpush1.msra.mxu0 0.0
      %2375 = vmatprep.subr.mxu0 0.0
      %2376 = vmatpush1.msra.mxu0 0.0
      %2377 = vmatprep.subr.mxu0 0.0
      %2378 = vmatpush1.msra.mxu0 0.0
      %2379 = vmatprep.subr.mxu0 0.0
      %2380 = vmatpush1.msra.mxu0 0.0
      %2381 = vmatprep.subr.mxu0 0.0
      %2382 = vmatpush1.msra.mxu0 0.0
      %2383 = vmatprep.subr.mxu0 0.0
      %2384 = vmatpush1.msra.mxu0 0.0
      %2385 = vmatprep.subr.mxu0 0.0
      %2386 = vmatpush1.msra.mxu0 0.0
      %2387 = vmatprep.subr.mxu0 0.0
      %2388 = vmatpush1.msra.mxu0 0.0
      %2389 = vmatprep.subr.mxu0 0.0
      %2390 = vmatpush1.msra.mxu0 0.0
      %2391 = vmatprep.subr.mxu0 0.0
      %2392 = vmatpush1.msra.mxu0 0.0
      %2393 = vmatprep.subr.mxu0 0.0
      %2394 = vmatpush1.msra.mxu0 0.0
      %2395 = vmatprep.subr.mxu0 0.0
      %2396 = vmatpush1.msra.mxu0 0.0
      %2397 = vmatprep.subr.mxu0 0.0
      %2398 = vmatpush1.msra.mxu0 0.0
      %2399 = vmatprep.subr.mxu0 0.0
      %2400 = vmatpush1.msra.mxu0 0.0
      %2401 = vmatprep.subr.mxu0 0.0
      %2402 = vmatpush1.msra.mxu0 0.0
      %2403 = vmatprep.subr.mxu0 0.0
      %2404 = vmatpush1.msra.mxu0 0.0
      %2405 = vmatprep.subr.mxu0 0.0
      %2406 = vmatpush1.msra.mxu0 0.0
      %2407 = vmatprep.subr.mxu0 0.0
      %2408 = vmatpush1.msra.mxu0 0.0
      %2409 = vmatprep.subr.mxu0 0.0
      %2410 = vmatpush1.msra.mxu0 0.0
      %2411 = vmatprep.subr.mxu0 0.0
      %2412 = vmatpush1.msra.mxu0 0.0
      %2413 = vmatprep.subr.mxu0 0.0
      %2414 = vmatpush1.msra.mxu0 0.0
      %2415 = vmatprep.subr.mxu0 0.0
      %2416 = vmatpush1.msra.mxu0 0.0
      %2417 = vmatprep.mubr.f32.mxu0 0.0
      %2418 = vmatmul.mubr.f32.gmra.mrb[0].mxu0 %v2351
      %v2419 = vpop.f32.mrb[0].mxu0
      %v2420 = vadd.f32 %v2349, %v2419
      %v2421 = vpop.f32.mrb[0].mxu0
      %2422 = vdwg.mxu0
      %v2423 = vmax.f32 %v2420, 0.0
      %v2424 = vld [vmem:[%s9] sm:$0xff]
      %v2425 = vld [vmem:[%s10] sm:$0x1]
      %vm2426 = vcmask 64512
      %v2428 = vsel %vm2426, %v2423, 0
      %2430 = vmatprep.subr.mxu0 0.0
      %2431 = vmatpush1.msra.mxu0 %v2424
      %2432 = vmatprep.subr.mxu0 0.0
      %2433 = vmatpush1.msra.mxu0 0.0
      %2434 = vmatprep.subr.mxu0 0.0
      %2435 = vmatpush1.msra.mxu0 0.0
      %2436 = vmatprep.subr.mxu0 0.0
      %2437 = vmatpush1.msra.mxu0 0.0
      %2438 = vmatprep.subr.mxu0 0.0
      %2439 = vmatpush1.msra.mxu0 0.0
      %2440 = vmatprep.subr.mxu0 0.0
      %2441 = vmatpush1.msra.mxu0 0.0
      %2442 = vmatprep.subr.mxu0 0.0
      %2443 = vmatpush1.msra.mxu0 0.0
      %2444 = vmatprep.subr.mxu0 0.0
      %2445 = vmatpush1.msra.mxu0 0.0
      %2446 = vmatprep.subr.mxu0 0.0
      %2447 = vmatpush1.msra.mxu0 0.0
      %2448 = vmatprep.subr.mxu0 0.0
      %2449 = vmatpush1.msra.mxu0 0.0
      %2450 = vmatprep.subr.mxu0 0.0
      %2451 = vmatpush1.msra.mxu0 0.0
      %2452 = vmatprep.subr.mxu0 0.0
      %2453 = vmatpush1.msra.mxu0 0.0
      %2454 = vmatprep.subr.mxu0 0.0
      %2455 = vmatpush1.msra.mxu0 0.0
      %2456 = vmatprep.subr.mxu0 0.0
      %2457 = vmatpush1.msra.mxu0 0.0
      %2458 = vmatprep.subr.mxu0 0.0
      %2459 = vmatpush1.msra.mxu0 0.0
      %2460 = vmatprep.subr.mxu0 0.0
      %2461 = vmatpush1.msra.mxu0 0.0
      %2462 = vmatprep.subr.mxu0 0.0
      %2463 = vmatpush1.msra.mxu0 0.0
      %2464 = vmatprep.subr.mxu0 0.0
      %2465 = vmatpush1.msra.mxu0 0.0
      %2466 = vmatprep.subr.mxu0 0.0
      %2467 = vmatpush1.msra.mxu0 0.0
      %2468 = vmatprep.subr.mxu0 0.0
      %2469 = vmatpush1.msra.mxu0 0.0
      %2470 = vmatprep.subr.mxu0 0.0
      %2471 = vmatpush1.msra.mxu0 0.0
      %2472 = vmatprep.subr.mxu0 0.0
      %2473 = vmatpush1.msra.mxu0 0.0
      %2474 = vmatprep.subr.mxu0 0.0
      %2475 = vmatpush1.msra.mxu0 0.0
      %2476 = vmatprep.subr.mxu0 0.0
      %2477 = vmatpush1.msra.mxu0 0.0
      %2478 = vmatprep.subr.mxu0 0.0
      %2479 = vmatpush1.msra.mxu0 0.0
      %2480 = vmatprep.subr.mxu0 0.0
      %2481 = vmatpush1.msra.mxu0 0.0
      %2482 = vmatprep.subr.mxu0 0.0
      %2483 = vmatpush1.msra.mxu0 0.0
      %2484 = vmatprep.subr.mxu0 0.0
      %2485 = vmatpush1.msra.mxu0 0.0
      %2486 = vmatprep.subr.mxu0 0.0
      %2487 = vmatpush1.msra.mxu0 0.0
      %2488 = vmatprep.subr.mxu0 0.0
      %2489 = vmatpush1.msra.mxu0 0.0
      %2490 = vmatprep.subr.mxu0 0.0
      %2491 = vmatpush1.msra.mxu0 0.0
      %2492 = vmatprep.subr.mxu0 0.0
      %2493 = vmatpush1.msra.mxu0 0.0
      %2494 = vmatprep.mubr.f32.mxu0 0.0
      %2495 = vmatmul.mubr.f32.gmra.mrb[0].mxu0 %v2428
      %v2496 = vpop.f32.mrb[0].mxu0
      %v2497 = vadd.f32 %v2425, %v2496
      %v2498 = vpop.f32.mrb[0].mxu0
      %2499 = vdwg.mxu0
      %v2500 = vsub.f32 0.0, %v2497
      %v2501 = vmul.f32 %v2500, 1.442695
      %v2502 = vpow.pop %v2501
      %v2503 = vadd.f32 %v2502, 1.0
      %v2504 = vrcp.pop %v2503
      %v2505 = vmul.f32 1.0, %v2504
      %v2506 = vlaneseq
      %v2507 = vshrl.u32 %v2506, 7
      %v2508 = vsub.s32 0, %v2507
      %v2509 = vrot.slane %v2505, %v2508
      %v2510 = vmul.f32 %v2253, %v2509
      %v2511 = vmul.f32 %v2254, %v2509
      %v2512 = vmul.f32 %v2255, %v2509
      %v2513 = vmul.f32 %v2256, %v2509
      %v2514 = vpack.c.bf16 %v2511, %v2510
      %v2515 = vpack.c.bf16 %v2513, %v2512
      %v2516 = vld [vmem:[%s11] sm:$0xff]
      %v2517 = vld [vmem:[%s11 + $0x8] sm:$0xff]
      %v2518 = vld [vmem:[%s11 + $0x10] sm:$0xff]
      %v2519 = vld [vmem:[%s11 + $0x18] sm:$0xff]
      %v2520 = vld [vmem:[%s11 + $0x20] sm:$0xff]
      %v2521 = vld [vmem:[%s11 + $0x28] sm:$0xff]
      %v2522 = vld [vmem:[%s11 + $0x30] sm:$0xff]
      %v2523 = vld [vmem:[%s11 + $0x38] sm:$0xff]
      %v2524 = vld [vmem:[%s12] sm:$0x3]
      %v2526 = vlaneseq
      %v2527 = vshrl.u32 %v2526, 7
      %v2528 = vsub.s32 0, %v2527
      %v2529 = vrot.slane %v2524, %v2528
      %v2530 = vlaneseq
      %v2531 = vshrl.u32 %v2530, 7
      %v2532 = vsub.s32 1, %v2531
      %v2533 = vrot.slane %v2524, %v2532
      %v2544 = vunpack.c.l.b16 %v2516
      %v2545 = vunpack.c.h.b16 %v2516
      %v2546 = vunpack.c.l.b16 %v2517
      %v2547 = vunpack.c.h.b16 %v2517
      %v2548 = vunpack.c.l.b16 %v2518
      %v2549 = vunpack.c.h.b16 %v2518
      %v2550 = vunpack.c.l.b16 %v2519
      %v2551 = vunpack.c.h.b16 %v2519
      %v2552 = vunpack.c.l.b16 %v2520
      %v2553 = vunpack.c.h.b16 %v2520
      %v2554 = vunpack.c.l.b16 %v2521
      %v2555 = vunpack.c.h.b16 %v2521
      %v2556 = vunpack.c.l.b16 %v2522
      %v2557 = vunpack.c.h.b16 %v2522
      %v2558 = vunpack.c.l.b16 %v2523
      %v2559 = vunpack.c.h.b16 %v2523
      %v2560 = vpack.c.b16 %v2546, %v2544
      %v2561 = vpack.c.b16 %v2547, %v2545
      %v2562 = vpack.c.b16 %v2550, %v2548
      %v2563 = vpack.c.b16 %v2551, %v2549
      %v2564 = vpack.c.b16 %v2554, %v2552
      %v2565 = vpack.c.b16 %v2555, %v2553
      %v2566 = vpack.c.b16 %v2558, %v2556
      %v2567 = vpack.c.b16 %v2559, %v2557
      %v2577 = vsel %vm889, %v2514, 0
      %v2580 = vsel %vm889, %v2515, 0
      %2582 = vmatprep.subr.bf16.mxu0 %v2561
      %2583 = vmatpush1.bf16.msra.mxu0 %v2560
      %2584 = vmatprep.subr.bf16.mxu0 %v2563
      %2585 = vmatpush1.bf16.msra.mxu0 %v2562
      %2586 = vmatprep.subr.bf16.mxu0 %v2565
      %2587 = vmatpush1.bf16.msra.mxu0 %v2564
      %2588 = vmatprep.subr.bf16.mxu0 %v2567
      %2589 = vmatpush1.bf16.msra.mxu0 %v2566
      %2590 = vmatprep.subr.bf16.mxu0 0
      %2591 = vmatpush1.bf16.msra.mxu0 0
      %2592 = vmatprep.subr.bf16.mxu0 0
      %2593 = vmatpush1.bf16.msra.mxu0 0
      %2594 = vmatprep.subr.bf16.mxu0 0
      %2595 = vmatpush1.bf16.msra.mxu0 0
      %2596 = vmatprep.subr.bf16.mxu0 0
      %2597 = vmatpush1.bf16.msra.mxu0 0
      %2598 = vmatprep.subr.bf16.mxu0 0
      %2599 = vmatpush1.bf16.msra.mxu0 0
      %2600 = vmatprep.subr.bf16.mxu0 0
      %2601 = vmatpush1.bf16.msra.mxu0 0
      %2602 = vmatprep.subr.bf16.mxu0 0
      %2603 = vmatpush1.bf16.msra.mxu0 0
      %2604 = vmatprep.subr.bf16.mxu0 0
      %2605 = vmatpush1.bf16.msra.mxu0 0
      %2606 = vmatprep.subr.bf16.mxu0 0
      %2607 = vmatpush1.bf16.msra.mxu0 0
      %2608 = vmatprep.subr.bf16.mxu0 0
      %2609 = vmatpush1.bf16.msra.mxu0 0
      %2610 = vmatprep.subr.bf16.mxu0 0
      %2611 = vmatpush1.bf16.msra.mxu0 0
      %2612 = vmatprep.subr.bf16.mxu0 0
      %2613 = vmatpush1.bf16.msra.mxu0 0
      %2614 = vmatprep.mubr.bf16.mxu0 0
      %2615 = vmatmul.mubr.bf16.gmra.mrb[0].mxu0 %v2577
      %v2616 = vpop.f32.mrb[0].mxu0
      %v2617 = vadd.f32 %v2529, %v2616
      %v2618 = vpop.f32.mrb[0].mxu0
      %v2619 = vadd.f32 %v2533, %v2618
      %v2620 = vpop.f32.mrb[0].mxu0
      %v2621 = vadd.f32 %v2529, %v2620
      %v2622 = vpop.f32.mrb[0].mxu0
      %v2623 = vadd.f32 %v2533, %v2622
      %2624 = vmatprep.mubr.bf16.mxu0 0
      %2625 = vmatmul.mubr.bf16.gmra.mrb[0].mxu0 %v2580
      %v2626 = vpop.f32.mrb[0].mxu0
      %v2627 = vadd.f32 %v2529, %v2626
      %v2628 = vpop.f32.mrb[0].mxu0
      %v2629 = vadd.f32 %v2533, %v2628
      %v2630 = vpop.f32.mrb[0].mxu0
      %v2631 = vadd.f32 %v2529, %v2630
      %v2632 = vpop.f32.mrb[0].mxu0
      %v2633 = vadd.f32 %v2533, %v2632
      %2634 = vdwg.mxu0
      %vm2635 = vcmp.ge.f32.partialorder %v2617, 0.0
      %vm2636 = vcmp.ge.f32.partialorder %v2619, 0.0
      %vm2637 = vcmp.ge.f32.partialorder %v2621, 0.0
      %vm2638 = vcmp.ge.f32.partialorder %v2623, 0.0
      %vm2639 = vcmp.ge.f32.partialorder %v2627, 0.0
      %vm2640 = vcmp.ge.f32.partialorder %v2629, 0.0
      %vm2641 = vcmp.ge.f32.partialorder %v2631, 0.0
      %vm2642 = vcmp.ge.f32.partialorder %v2633, 0.0
      %v2643 = vmul.f32 %v2617, 0.1
      %v2644 = vmul.f32 %v2619, 0.1
      %v2645 = vmul.f32 %v2621, 0.1
      %v2646 = vmul.f32 %v2623, 0.1
      %v2647 = vmul.f32 %v2627, 0.1
      %v2648 = vmul.f32 %v2629, 0.1
      %v2649 = vmul.f32 %v2631, 0.1
      %v2650 = vmul.f32 %v2633, 0.1
      %v2651 = vsel %vm2635, %v2617, %v2643
      %v2652 = vsel %vm2636, %v2619, %v2644
      %v2653 = vsel %vm2637, %v2621, %v2645
      %v2654 = vsel %vm2638, %v2623, %v2646
      %v2655 = vsel %vm2639, %v2627, %v2647
      %v2656 = vsel %vm2640, %v2629, %v2648
      %v2657 = vsel %vm2641, %v2631, %v2649
      %v2658 = vsel %vm2642, %v2633, %v2650
      %v2659 = vpack.c.bf16 %v2653, %v2651
      %v2660 = vpack.c.bf16 %v2654, %v2652
      %v2661 = vpack.c.bf16 %v2657, %v2655
      %v2662 = vpack.c.bf16 %v2658, %v2656
      %v2667 = vunpack.c.l.b16 %v2659
      %v2668 = vunpack.c.l.b16 %v2660
      %v2669 = vunpack.c.h.b16 %v2659
      %v2670 = vunpack.c.h.b16 %v2660
      %v2671 = vunpack.c.l.b16 %v2661
      %v2672 = vunpack.c.l.b16 %v2662
      %v2673 = vunpack.c.h.b16 %v2661
      %v2674 = vunpack.c.h.b16 %v2662
      %v2675 = vpack.c.b16 %v2668, %v2667
      %v2676 = vpack.c.b16 %v2670, %v2669
      %v2677 = vpack.c.b16 %v2672, %v2671
      %v2678 = vpack.c.b16 %v2674, %v2673
      %2683 = vst [vmem:[%s440] sm:$0xff] %v2675
      %2684 = vst [vmem:[%s440 + $0x8] sm:$0xff] %v2676
      %2685 = vst [vmem:[%s440 + $0x10] sm:$0xff] %v2677
      %2686 = vst [vmem:[%s440 + $0x18] sm:$0x33] %v2678
      %p2687 = scmp.lt.s32.totalorder %s24, 1
      %s2688 = scalar_select %p2687, %s24, 1
      %s2689 = smul.addr %s2688, 8
      %s2690 = smul.addr %s2689, 4
      %s2691 = scalar_lea.vmem %s13, %s2690
      // Predicated region
      $region73: #{unet1_forward.4} parent=71 // pred_check
        %p2692 = pneg %p320
      $region74: #{unet1_forward.4} parent=71 // pred_check_branch
        %2694 = sbr.rel (%p2692) target = $region76
      $region75: #{unet1_forward.4} parent=71 // pred_region
        _
      $region76: #{unet1_forward.4} parent=71 // pred_fallthru
        _
    $region72: #{unet1_forward.4} parent=5 // pred_fallthru
      _
    %p2695 = scmp.le.s32.totalorder 2, %s19
    // Predicated region
    $region77: #{unet1_forward.4} parent=5 // pred_check
      %p2696 = pneg %p2695
    $region78: #{unet1_forward.4} parent=5 // pred_check_branch
      %2698 = sbr.rel (%p2696) target = $region80
    $region79: #{unet1_forward.4} parent=5 // pred_region
      %s2699 = ssub.s32 %s19, 2
      // Predicated region
      $region81: #{unet1_forward.4} parent=79 // pred_check
        %p2700 = pneg %p326
      $region82: #{unet1_forward.4} parent=79 // pred_check_branch
        %2702 = sbr.rel (%p2700) target = $region84
      $region83: #{unet1_forward.4} parent=79 // pred_region
        %p2703 = scmp.lt.s32.totalorder %s25, 1
        %s2704 = scalar_select %p2703, %s25, 1
        %s2705 = smul.addr %s2704, 8
        %s2706 = smul.addr %s2705, 4
        %s2707 = scalar_lea.vmem %s13, %s2706
      $region84: #{unet1_forward.4} parent=79 // pred_fallthru
        _
    $region80: #{unet1_forward.4} parent=5 // pred_fallthru
      _
  $region6: #{unet1_forward.4} parent=0 // loop_footer
    %s23 = sadd.s32 1, %s19
  $region7: #{unet1_forward.4} parent=0 // loop_footer_branch
    %18 = sbr.rel target = $region3
  $region8: #{unet1_forward.4} parent=0 // loop_exit
    _

// kernel: unet1_forward.5
$region0: #{unet1_forward.5}
  #allocation0 [shape = 'u32[]', space=smem, size = 0x4, offset = 0x4, fixed_abs, tag = 'smem constant byte address 0x4 - core index']
  #allocation1 [shape = 'u32[144,128]{1,0:T(1,128)}', space=vmem, size = 0x12000, scoped, tag = 'internal scratch']
  %s0 = inlined_call_operand.vmem [shape: bf16[2,64,64], index: 0, kind: input, shape index: {}]
  %s1 = inlined_call_operand.vmem [shape: bf16[2,64,64], index: 1, kind: input, shape index: {}]
  %s2 = inlined_call_operand.vmem [shape: bf16[576,64], index: 2, kind: input, shape index: {}]
  %s3 = inlined_call_operand.vmem [shape: f32[1,64], index: 3, kind: input, shape index: {}]
  %s4 = inlined_call_operand.vmem [shape: bf16[576,12], index: 4, kind: input, shape index: {}]
  %s5 = inlined_call_operand.vmem [shape: f32[1,12], index: 5, kind: input, shape index: {}]
  %s6 = inlined_call_operand.vmem [shape: bf16[2,28,12], index: 6, kind: output, shape index: {}]
  %s7 = sld [smem:[#allocation0]]
  $region57: #{unet1_forward.5} parent=0
    _
  %s9 = ssub.s32 1, %s7
  %s10 = scalar_select 0, %s9, %s7
  loop: start=0, step=1, limit=4
  $region2: #{unet1_forward.5} parent=0 // loop_pre_header
    _
  $region3: #{unet1_forward.5} parent=0 // loop_header
    %s12 = sphi 0, %s16
    %p13 = scmp.ge.s32.totalorder %s12, 4
    %s22 = sphi 0, %s24
    %s25 = sphi 0, %s22
    %s26 = sphi 0, %s25
    %s42 = sphi 0, %s26
    %s48 = sphi 0, %s50
    %s51 = sphi 0, %s48
    %s52 = sphi 0, %s51
    %s68 = sphi 0, %s52
    %s72 = sphi 0, %s72
    %s74 = sphi 0, %s72
    %s75 = sphi 0, %s74
    %s89 = sphi 0, %s75
    %s93 = sphi 0, %s93
    %s95 = sphi 0, %s93
    %s96 = sphi 0, %s95
    %s110 = sphi 0, %s96
    %s114 = sphi 0, %s114
    %s116 = sphi 0, %s114
    %s117 = sphi 0, %s116
    %s131 = sphi 0, %s117
    %s135 = sphi 0, %s135
    %s137 = sphi 0, %s135
    %s138 = sphi 0, %s137
    %s152 = sphi 0, %s138
    %s158 = sphi 0, %s160
    %s161 = sphi 0, %s158
    %s162 = sphi 0, %s161
    %s178 = sphi 0, %s162
  $region4: #{unet1_forward.5} parent=0 // loop_header_branch
    %15 = sbr.rel (%p13) target = $region8
  $region5: #{unet1_forward.5} parent=0 // loop_body
    %s17 = ssub.s32 %s12, 1
    %s18 = ssub.s32 %s12, 2
    %s19 = sadd.s32 %s12, 1
    %s20 = ssub.s32 %s12, %s19
    %p21 = scmp.eq.s32.totalorder %s20, 0
    %s23 = sadd.s32 %s22, 1
    %s24 = scalar_select %p21, %s22, %s23
    %p27 = pneg %p21
    %p28 = scmp.eq.s32.totalorder %s12, 1
    %p29 = por %p27, %p28
    %p30 = scmp.ne.s32.totalorder %s22, %s25
    %p31 = scmp.eq.s32.totalorder %s12, 0
    %p32 = por %p30, %p31
    %p33 = scmp.ne.s32.totalorder %s22, %s25
    %p34 = scmp.eq.s32.totalorder %s17, 1
    %p35 = por %p33, %p34
    %p36 = scmp.ne.s32.totalorder %s25, %s26
    %p37 = scmp.eq.s32.totalorder %s17, 0
    %p38 = por %p36, %p37
    %p39 = scmp.ne.s32.totalorder %s25, %s26
    %p40 = scmp.eq.s32.totalorder %s18, 1
    %p41 = por %p39, %p40
    %p43 = scmp.ne.s32.totalorder %s26, %s42
    %p44 = scmp.eq.s32.totalorder %s18, 0
    %p45 = por %p43, %p44
    %s46 = ssub.s32 %s12, %s19
    %p47 = scmp.eq.s32.totalorder %s46, 0
    %s49 = sadd.s32 %s48, 1
    %s50 = scalar_select %p47, %s48, %s49
    %p53 = pneg %p47
    %p54 = scmp.eq.s32.totalorder %s12, 1
    %p55 = por %p53, %p54
    %p56 = scmp.ne.s32.totalorder %s48, %s51
    %p57 = scmp.eq.s32.totalorder %s12, 0
    %p58 = por %p56, %p57
    %p59 = scmp.ne.s32.totalorder %s48, %s51
    %p60 = scmp.eq.s32.totalorder %s17, 1
    %p61 = por %p59, %p60
    %p62 = scmp.ne.s32.totalorder %s51, %s52
    %p63 = scmp.eq.s32.totalorder %s17, 0
    %p64 = por %p62, %p63
    %p65 = scmp.ne.s32.totalorder %s51, %s52
    %p66 = scmp.eq.s32.totalorder %s18, 1
    %p67 = por %p65, %p66
    %p69 = scmp.ne.s32.totalorder %s52, %s68
    %p70 = scmp.eq.s32.totalorder %s18, 0
    %p71 = por %p69, %p70
    %s73 = sadd.s32 %s72, 1
    %p76 = scmp.eq.s32.totalorder %s12, 1
    %p77 = scmp.ne.s32.totalorder %s72, %s74
    %p78 = scmp.eq.s32.totalorder %s12, 0
    %p79 = por %p77, %p78
    %p80 = scmp.ne.s32.totalorder %s72, %s74
    %p81 = scmp.eq.s32.totalorder %s17, 1
    %p82 = por %p80, %p81
    %p83 = scmp.ne.s32.totalorder %s74, %s75
    %p84 = scmp.eq.s32.totalorder %s17, 0
    %p85 = por %p83, %p84
    %p86 = scmp.ne.s32.totalorder %s74, %s75
    %p87 = scmp.eq.s32.totalorder %s18, 1
    %p88 = por %p86, %p87
    %p90 = scmp.ne.s32.totalorder %s75, %s89
    %p91 = scmp.eq.s32.totalorder %s18, 0
    %p92 = por %p90, %p91
    %s94 = sadd.s32 %s93, 1
    %p97 = scmp.eq.s32.totalorder %s12, 1
    %p98 = scmp.ne.s32.totalorder %s93, %s95
    %p99 = scmp.eq.s32.totalorder %s12, 0
    %p100 = por %p98, %p99
    %p101 = scmp.ne.s32.totalorder %s93, %s95
    %p102 = scmp.eq.s32.totalorder %s17, 1
    %p103 = por %p101, %p102
    %p104 = scmp.ne.s32.totalorder %s95, %s96
    %p105 = scmp.eq.s32.totalorder %s17, 0
    %p106 = por %p104, %p105
    %p107 = scmp.ne.s32.totalorder %s95, %s96
    %p108 = scmp.eq.s32.totalorder %s18, 1
    %p109 = por %p107, %p108
    %p111 = scmp.ne.s32.totalorder %s96, %s110
    %p112 = scmp.eq.s32.totalorder %s18, 0
    %p113 = por %p111, %p112
    %s115 = sadd.s32 %s114, 1
    %p118 = scmp.eq.s32.totalorder %s12, 1
    %p119 = scmp.ne.s32.totalorder %s114, %s116
    %p120 = scmp.eq.s32.totalorder %s12, 0
    %p121 = por %p119, %p120
    %p122 = scmp.ne.s32.totalorder %s114, %s116
    %p123 = scmp.eq.s32.totalorder %s17, 1
    %p124 = por %p122, %p123
    %p125 = scmp.ne.s32.totalorder %s116, %s117
    %p126 = scmp.eq.s32.totalorder %s17, 0
    %p127 = por %p125, %p126
    %p128 = scmp.ne.s32.totalorder %s116, %s117
    %p129 = scmp.eq.s32.totalorder %s18, 1
    %p130 = por %p128, %p129
    %p132 = scmp.ne.s32.totalorder %s117, %s131
    %p133 = scmp.eq.s32.totalorder %s18, 0
    %p134 = por %p132, %p133
    %s136 = sadd.s32 %s135, 1
    %p139 = scmp.eq.s32.totalorder %s12, 1
    %p140 = scmp.ne.s32.totalorder %s135, %s137
    %p141 = scmp.eq.s32.totalorder %s12, 0
    %p142 = por %p140, %p141
    %p143 = scmp.ne.s32.totalorder %s135, %s137
    %p144 = scmp.eq.s32.totalorder %s17, 1
    %p145 = por %p143, %p144
    %p146 = scmp.ne.s32.totalorder %s137, %s138
    %p147 = scmp.eq.s32.totalorder %s17, 0
    %p148 = por %p146, %p147
    %p149 = scmp.ne.s32.totalorder %s137, %s138
    %p150 = scmp.eq.s32.totalorder %s18, 1
    %p151 = por %p149, %p150
    %p153 = scmp.ne.s32.totalorder %s138, %s152
    %p154 = scmp.eq.s32.totalorder %s18, 0
    %p155 = por %p153, %p154
    %s156 = ssub.s32 %s12, %s19
    %p157 = scmp.eq.s32.totalorder %s156, 0
    %s159 = sadd.s32 %s158, 1
    %s160 = scalar_select %p157, %s158, %s159
    %p163 = pneg %p157
    %p164 = scmp.eq.s32.totalorder %s12, 1
    %p165 = por %p163, %p164
    %p166 = scmp.ne.s32.totalorder %s158, %s161
    %p167 = scmp.eq.s32.totalorder %s12, 0
    %p168 = por %p166, %p167
    %p169 = scmp.ne.s32.totalorder %s158, %s161
    %p170 = scmp.eq.s32.totalorder %s17, 1
    %p171 = por %p169, %p170
    %p172 = scmp.ne.s32.totalorder %s161, %s162
    %p173 = scmp.eq.s32.totalorder %s17, 0
    %p174 = por %p172, %p173
    %p175 = scmp.ne.s32.totalorder %s161, %s162
    %p176 = scmp.eq.s32.totalorder %s18, 1
    %p177 = por %p175, %p176
    %p179 = scmp.ne.s32.totalorder %s162, %s178
    %p180 = scmp.eq.s32.totalorder %s18, 0
    %p181 = por %p179, %p180
    %p182 = scmp.le.s32.totalorder 1, %s12
    %p183 = scmp.lt.s32.totalorder %s12, 3
    %p184 = pnand %p182, %p183
    %p185 = pneg %p184
    // Predicated region
    $region9: #{unet1_forward.5} parent=5 // pred_check
      _
    $region10: #{unet1_forward.5} parent=5 // pred_check_branch
      %187 = sbr.rel (%p184) target = $region12
    $region11: #{unet1_forward.5} parent=5 // pred_region
      %s188 = ssub.s32 %s12, 1
      // Predicated region
      $region13: #{unet1_forward.5} parent=11 // pred_check
        %p189 = pneg %p85
      $region14: #{unet1_forward.5} parent=11 // pred_check_branch
        %191 = sbr.rel (%p189) target = $region16
      $region15: #{unet1_forward.5} parent=11 // pred_region
        _
      $region16: #{unet1_forward.5} parent=11 // pred_fallthru
        _
      // Predicated region
      $region17: #{unet1_forward.5} parent=11 // pred_check
        %p192 = pneg %p106
      $region18: #{unet1_forward.5} parent=11 // pred_check_branch
        %194 = sbr.rel (%p192) target = $region20
      $region19: #{unet1_forward.5} parent=11 // pred_region
        _
      $region20: #{unet1_forward.5} parent=11 // pred_fallthru
        _
      // Predicated region
      $region21: #{unet1_forward.5} parent=11 // pred_check
        %p195 = pneg %p127
      $region22: #{unet1_forward.5} parent=11 // pred_check_branch
        %197 = sbr.rel (%p195) target = $region24
      $region23: #{unet1_forward.5} parent=11 // pred_region
        _
      $region24: #{unet1_forward.5} parent=11 // pred_fallthru
        _
      // Predicated region
      $region25: #{unet1_forward.5} parent=11 // pred_check
        %p198 = pneg %p148
      $region26: #{unet1_forward.5} parent=11 // pred_check_branch
        %200 = sbr.rel (%p198) target = $region28
      $region27: #{unet1_forward.5} parent=11 // pred_region
        _
      $region28: #{unet1_forward.5} parent=11 // pred_fallthru
        _
    $region12: #{unet1_forward.5} parent=5 // pred_fallthru
      _
    %p201 = scmp.lt.s32.totalorder %s12, 2
    // Predicated region
    $region29: #{unet1_forward.5} parent=5 // pred_check
      %p202 = pneg %p201
    $region30: #{unet1_forward.5} parent=5 // pred_check_branch
      %204 = sbr.rel (%p202) target = $region32
    $region31: #{unet1_forward.5} parent=5 // pred_region
      // Predicated region
      $region33: #{unet1_forward.5} parent=31 // pred_check
        %p205 = pneg %p32
      $region34: #{unet1_forward.5} parent=31 // pred_check_branch
        %207 = sbr.rel (%p205) target = $region36
      $region35: #{unet1_forward.5} parent=31 // pred_region
        %p208 = scmp.lt.s32.totalorder %s12, 1
        %s209 = scalar_select %p208, %s12, 1
        %s210 = smul.addr %s209, 8
        %s211 = smul.addr %s210, 4
        %s212 = scalar_lea.vmem %s0, %s211
      $region36: #{unet1_forward.5} parent=31 // pred_fallthru
        _
      // Predicated region
      $region37: #{unet1_forward.5} parent=31 // pred_check
        %p213 = pneg %p58
      $region38: #{unet1_forward.5} parent=31 // pred_check_branch
        %215 = sbr.rel (%p213) target = $region40
      $region39: #{unet1_forward.5} parent=31 // pred_region
        %p216 = scmp.lt.s32.totalorder %s12, 1
        %s217 = scalar_select %p216, %s12, 1
        %s218 = smul.addr %s217, 8
        %s219 = smul.addr %s218, 4
        %s220 = scalar_lea.vmem %s1, %s219
      $region40: #{unet1_forward.5} parent=31 // pred_fallthru
        _
    $region32: #{unet1_forward.5} parent=5 // pred_fallthru
      _
    %p221 = scmp.le.s32.totalorder 1, %s12
    %p222 = scmp.lt.s32.totalorder %s12, 3
    %p223 = pnand %p221, %p222
    %p224 = pneg %p223
    // Predicated region
    $region41: #{unet1_forward.5} parent=5 // pred_check
      _
    $region42: #{unet1_forward.5} parent=5 // pred_check_branch
      %226 = sbr.rel (%p223) target = $region44
    $region43: #{unet1_forward.5} parent=5 // pred_region
      %s227 = ssub.s32 %s12, 1
      %p228 = scmp.lt.s32.totalorder %s17, 1
      %s229 = scalar_select %p228, %s17, 1
      %s230 = smul.addr %s229, 8
      %s231 = smul.addr %s230, 4
      %s232 = scalar_lea.vmem %s0, %s231
      %p233 = pneg %p38
      %p234 = pneg %p35
      %p235 = scmp.lt.s32.totalorder %s17, 1
      %s236 = scalar_select %p235, %s17, 1
      %s237 = smul.addr %s236, 8
      %s238 = smul.addr %s237, 4
      %s239 = scalar_lea.vmem %s1, %s238
      %p240 = pneg %p64
      %p241 = pneg %p61
      %p242 = pneg %p85
      %p243 = pneg %p82
      %p244 = pneg %p106
      %p245 = pneg %p103
      %p246 = pneg %p127
      %p247 = pneg %p124
      %p248 = pneg %p148
      %p249 = pneg %p145
      %p250 = pneg %p174
      %p251 = pneg %p171
      %p252 = scmp.lt.s32.totalorder %s17, 1
      %s253 = scalar_select %p252, %s17, 1
      %s254 = smul.addr %s253, 4
      %s255 = smul.addr %s254, 4
      %s256 = scalar_lea.vmem %s6, %s255
      %p257 = scmp.lt.s32.totalorder %s17, 1
      %s258 = scalar_select %p257, %s17, 1
      %s259 = smul.addr %s258, 8
      %s260 = smul.addr %s259, 4
      %s261 = scalar_lea.vmem %s0, %s260
      %p262 = scmp.lt.s32.totalorder %s17, 1
      %s263 = scalar_select %p262, %s17, 1
      %s264 = smul.addr %s263, 8
      %s265 = smul.addr %s264, 4
      %s266 = scalar_lea.vmem %s1, %s265
      %p267 = scmp.lt.s32.totalorder %s17, 1
      %s268 = scalar_select %p267, %s17, 1
      %s269 = smul.addr %s268, 4
      %s270 = smul.addr %s269, 4
      %s271 = scalar_lea.vmem %s6, %s270
      %v273 = vld [vmem:[%s261] sm:$0xf]
      %v274 = vld [vmem:[%s261 + $0x4] sm:$0xf]
      %v275 = vld [vmem:[%s261 + $0x8] sm:$0xf]
      %v276 = vld [vmem:[%s261 + $0xc] sm:$0xf]
      %v277 = vld [vmem:[%s261 + $0x10] sm:$0xf]
      %v278 = vld [vmem:[%s261 + $0x14] sm:$0xf]
      %v279 = vld [vmem:[%s261 + $0x18] sm:$0xf]
      %v280 = vld [vmem:[%s261 + $0x1c] sm:$0xf]
      %v281 = vld [vmem:[%s266] sm:$0xf]
      %v282 = vld [vmem:[%s266 + $0x4] sm:$0xf]
      %v283 = vld [vmem:[%s266 + $0x8] sm:$0xf]
      %v284 = vld [vmem:[%s266 + $0xc] sm:$0xf]
      %v285 = vld [vmem:[%s266 + $0x10] sm:$0xf]
      %v286 = vld [vmem:[%s266 + $0x14] sm:$0xf]
      %v287 = vld [vmem:[%s266 + $0x18] sm:$0xf]
      %v288 = vld [vmem:[%s266 + $0x1c] sm:$0xf]
      %v289 = vadd.bf16 %v273, %v281
      %v290 = vadd.bf16 %v274, %v282
      %v291 = vadd.bf16 %v275, %v283
      %v292 = vadd.bf16 %v276, %v284
      %v293 = vadd.bf16 %v277, %v285
      %v294 = vadd.bf16 %v278, %v286
      %v295 = vadd.bf16 %v279, %v287
      %v296 = vadd.bf16 %v280, %v288
      %v297 = vld [vmem:[%s2] sm:$0xf]
      %v298 = vld [vmem:[%s2 + $0x4] sm:$0xf]
      %v299 = vld [vmem:[%s2 + $0x8] sm:$0xf]
      %v300 = vld [vmem:[%s2 + $0xc] sm:$0xf]
      %v301 = vld [vmem:[%s2 + $0x10] sm:$0xf]
      %v302 = vld [vmem:[%s2 + $0x14] sm:$0xf]
      %v303 = vld [vmem:[%s2 + $0x18] sm:$0xf]
      %v304 = vld [vmem:[%s2 + $0x1c] sm:$0xf]
      %v305 = vld [vmem:[%s2 + $0x20] sm:$0xf]
      %v306 = vld [vmem:[%s2 + $0x24] sm:$0xf]
      %v307 = vld [vmem:[%s2 + $0x28] sm:$0xf]
      %v308 = vld [vmem:[%s2 + $0x2c] sm:$0xf]
      %v309 = vld [vmem:[%s2 + $0x30] sm:$0xf]
      %v310 = vld [vmem:[%s2 + $0x34] sm:$0xf]
      %v311 = vld [vmem:[%s2 + $0x38] sm:$0xf]
      %v312 = vld [vmem:[%s2 + $0x3c] sm:$0xf]
      %v313 = vld [vmem:[%s2 + $0x40] sm:$0xf]
      %v314 = vld [vmem:[%s2 + $0x44] sm:$0xf]
      %v315 = vld [vmem:[%s2 + $0x48] sm:$0xf]
      %v316 = vld [vmem:[%s2 + $0x4c] sm:$0xf]
      %v317 = vld [vmem:[%s2 + $0x50] sm:$0xf]
      %v318 = vld [vmem:[%s2 + $0x54] sm:$0xf]
      %v319 = vld [vmem:[%s2 + $0x58] sm:$0xf]
      %v320 = vld [vmem:[%s2 + $0x5c] sm:$0xf]
      %v321 = vld [vmem:[%s2 + $0x60] sm:$0xf]
      %v322 = vld [vmem:[%s2 + $0x64] sm:$0xf]
      %v323 = vld [vmem:[%s2 + $0x68] sm:$0xf]
      %v324 = vld [vmem:[%s2 + $0x6c] sm:$0xf]
      %v325 = vld [vmem:[%s2 + $0x70] sm:$0xf]
      %v326 = vld [vmem:[%s2 + $0x74] sm:$0xf]
      %v327 = vld [vmem:[%s2 + $0x78] sm:$0xf]
      %v328 = vld [vmem:[%s2 + $0x7c] sm:$0xf]
      %v329 = vld [vmem:[%s2 + $0x80] sm:$0xf]
      %v330 = vld [vmem:[%s2 + $0x84] sm:$0xf]
      %v331 = vld [vmem:[%s2 + $0x88] sm:$0xf]
      %v332 = vld [vmem:[%s2 + $0x8c] sm:$0xf]
      %v333 = vld [vmem:[%s2 + $0x90] sm:$0xf]
      %v334 = vld [vmem:[%s2 + $0x94] sm:$0xf]
      %v335 = vld [vmem:[%s2 + $0x98] sm:$0xf]
      %v336 = vld [vmem:[%s2 + $0x9c] sm:$0xf]
      %v337 = vld [vmem:[%s2 + $0xa0] sm:$0xf]
      %v338 = vld [vmem:[%s2 + $0xa4] sm:$0xf]
      %v339 = vld [vmem:[%s2 + $0xa8] sm:$0xf]
      %v340 = vld [vmem:[%s2 + $0xac] sm:$0xf]
      %v341 = vld [vmem:[%s2 + $0xb0] sm:$0xf]
      %v342 = vld [vmem:[%s2 + $0xb4] sm:$0xf]
      %v343 = vld [vmem:[%s2 + $0xb8] sm:$0xf]
      %v344 = vld [vmem:[%s2 + $0xbc] sm:$0xf]
      %v345 = vld [vmem:[%s2 + $0xc0] sm:$0xf]
      %v346 = vld [vmem:[%s2 + $0xc4] sm:$0xf]
      %v347 = vld [vmem:[%s2 + $0xc8] sm:$0xf]
      %v348 = vld [vmem:[%s2 + $0xcc] sm:$0xf]
      %v349 = vld [vmem:[%s2 + $0xd0] sm:$0xf]
      %v350 = vld [vmem:[%s2 + $0xd4] sm:$0xf]
      %v351 = vld [vmem:[%s2 + $0xd8] sm:$0xf]
      %v352 = vld [vmem:[%s2 + $0xdc] sm:$0xf]
      %v353 = vld [vmem:[%s2 + $0xe0] sm:$0xf]
      %v354 = vld [vmem:[%s2 + $0xe4] sm:$0xf]
      %v355 = vld [vmem:[%s2 + $0xe8] sm:$0xf]
      %v356 = vld [vmem:[%s2 + $0xec] sm:$0xf]
      %v357 = vld [vmem:[%s2 + $0xf0] sm:$0xf]
      %v358 = vld [vmem:[%s2 + $0xf4] sm:$0xf]
      %v359 = vld [vmem:[%s2 + $0xf8] sm:$0xf]
      %v360 = vld [vmem:[%s2 + $0xfc] sm:$0xf]
      %v361 = vld [vmem:[%s2 + $0x100] sm:$0xf]
      %v362 = vld [vmem:[%s2 + $0x104] sm:$0xf]
      %v363 = vld [vmem:[%s2 + $0x108] sm:$0xf]
      %v364 = vld [vmem:[%s2 + $0x10c] sm:$0xf]
      %v365 = vld [vmem:[%s2 + $0x110] sm:$0xf]
      %v366 = vld [vmem:[%s2 + $0x114] sm:$0xf]
      %v367 = vld [vmem:[%s2 + $0x118] sm:$0xf]
      %v368 = vld [vmem:[%s2 + $0x11c] sm:$0xf]
      %v369 = vld [vmem:[%s3] sm:$0x1]
      %v376 = vunpack.c.l.b16 %v289
      %v377 = vunpack.c.l.b16 %v290
      %v378 = vunpack.c.l.b16 %v291
      %v379 = vunpack.c.l.b16 %v292
      %v380 = vunpack.c.l.b16 %v293
      %v381 = vunpack.c.l.b16 %v294
      %v382 = vpack.c.b16 %v377, %v376
      %v383 = vpack.c.b16 %v379, %v378
      %v384 = vpack.c.b16 %v381, %v380
      %vm385 = vsmask.f32 7424
      %v387 = vshrl.u32 %v382, 16
      %v389 = vshll.u32 %v382, 16
      %v391 = vrot.slane %v389, 1
      %v392 = vor.u32 %v387, %v391
      %v394 = vshll.u32 %v383, 16
      %v396 = vrot.slane %v394, 1
      %v397 = vsel %vm385, %v392, %v396
      %v398 = vshrl.u32 %v383, 16
      %v400 = vor.u32 %v398, %v396
      %v402 = vshll.u32 %v384, 16
      %v404 = vrot.slane %v402, 1
      %v405 = vsel %vm385, %v400, %v404
      %v406 = vshrl.u32 %v384, 16
      %v408 = vor.u32 %v406, %v404
      %409 = vrot.lane.b32.xlu0 %v397, 64
      %v410 = vpop.permute.xlu0 %409
      %411 = vrot.lane.b32.xlu0 %v405, 64
      %v412 = vpop.permute.xlu0 %411
      %413 = vrot.lane.b32.xlu0 %v408, 64
      %v414 = vpop.permute.xlu0 %413
      %vm415 = vcmask 1046528
      %v416 = vrot.slane %v382, 1
      %v417 = vrot.slane %v383, 1
      %v418 = vsel %vm415, %v416, %v417
      %v419 = vrot.slane %v384, 1
      %v420 = vsel %vm415, %v417, %v419
      %v422 = vunpack.c.l.b16 %v295
      %v423 = vpack.c.b16 %v378, %v377
      %v424 = vpack.c.b16 %v380, %v379
      %v425 = vpack.c.b16 %v422, %v381
      %426 = vrot.lane.b32.xlu0 %v423, 64
      %v427 = vpop.permute.xlu0 %426
      %428 = vrot.lane.b32.xlu0 %v424, 64
      %v429 = vpop.permute.xlu0 %428
      %430 = vrot.lane.b32.xlu0 %v425, 64
      %v431 = vpop.permute.xlu0 %430
      %v433 = vshrl.u32 %v423, 16
      %v435 = vshll.u32 %v423, 16
      %v437 = vrot.slane %v435, 1
      %v438 = vor.u32 %v433, %v437
      %v440 = vshll.u32 %v424, 16
      %v442 = vrot.slane %v440, 1
      %v443 = vsel %vm385, %v438, %v442
      %v444 = vshrl.u32 %v424, 16
      %v446 = vor.u32 %v444, %v442
      %v448 = vshll.u32 %v425, 16
      %v450 = vrot.slane %v448, 1
      %v451 = vsel %vm385, %v446, %v450
      %v452 = vshrl.u32 %v425, 16
      %v454 = vor.u32 %v452, %v450
      %v455 = vrot.slane %v423, 1
      %v456 = vrot.slane %v424, 1
      %v457 = vsel %vm415, %v455, %v456
      %v458 = vrot.slane %v425, 1
      %v459 = vsel %vm415, %v456, %v458
      %460 = vrot.lane.b32.xlu0 %v457, 64
      %v461 = vpop.permute.xlu0 %460
      %462 = vrot.lane.b32.xlu0 %v459, 64
      %v463 = vpop.permute.xlu0 %462
      %464 = vrot.lane.b32.xlu0 %v458, 64
      %v465 = vpop.permute.xlu0 %464
      %v467 = vunpack.c.l.b16 %v296
      %v468 = vpack.c.b16 %v467, %v422
      %v470 = vshll.u32 %v468, 16
      %v472 = vrot.slane %v470, 1
      %v473 = vsel %vm385, %v408, %v472
      %v474 = vshrl.u32 %v468, 16
      %v476 = vor.u32 %v474, %v472
      %477 = vrot.lane.b32.xlu0 %v473, 64
      %v478 = vpop.permute.xlu0 %477
      %479 = vrot.lane.b32.xlu0 %v476, 64
      %v480 = vpop.permute.xlu0 %479
      %v481 = vrot.slane %v468, 1
      %v482 = vsel %vm415, %v419, %v481
      %vm483 = vcmask 523264
      %v485 = vsel %vm483, %v382, %v410
      %v488 = vsel %vm483, %v383, %v412
      %v491 = vsel %vm483, %v384, %v414
      %v495 = vsel %vm483, %v418, %v427
      %v499 = vsel %vm483, %v420, %v429
      %v503 = vsel %vm483, %v419, %v431
      %v507 = vsel %vm483, %v443, %v461
      %v511 = vsel %vm483, %v451, %v463
      %v515 = vsel %vm483, %v454, %v465
      %v518 = vsel %vm483, %v384, %v478
      %v521 = vsel %vm483, %v468, %v480
      %v524 = vlaneseq
      %v525 = vshrl.u32 %v524, 7
      %v526 = vsub.s32 0, %v525
      %v527 = vrot.slane %v369, %v526
      %v601 = vunpack.c.l.b16 %v297
      %v602 = vunpack.c.l.b16 %v298
      %v603 = vunpack.c.l.b16 %v299
      %v604 = vunpack.c.l.b16 %v300
      %v605 = vunpack.c.l.b16 %v301
      %v606 = vunpack.c.l.b16 %v302
      %v607 = vunpack.c.l.b16 %v303
      %v608 = vunpack.c.l.b16 %v304
      %v609 = vunpack.c.l.b16 %v305
      %v610 = vunpack.c.l.b16 %v306
      %v611 = vunpack.c.l.b16 %v307
      %v612 = vunpack.c.l.b16 %v308
      %v613 = vunpack.c.l.b16 %v309
      %v614 = vunpack.c.l.b16 %v310
      %v615 = vunpack.c.l.b16 %v311
      %v616 = vunpack.c.l.b16 %v312
      %v617 = vunpack.c.l.b16 %v313
      %v618 = vunpack.c.l.b16 %v314
      %v619 = vunpack.c.l.b16 %v315
      %v620 = vunpack.c.l.b16 %v316
      %v621 = vunpack.c.l.b16 %v317
      %v622 = vunpack.c.l.b16 %v318
      %v623 = vunpack.c.l.b16 %v319
      %v624 = vunpack.c.l.b16 %v320
      %v625 = vunpack.c.l.b16 %v321
      %v626 = vunpack.c.l.b16 %v322
      %v627 = vunpack.c.l.b16 %v323
      %v628 = vunpack.c.l.b16 %v324
      %v629 = vunpack.c.l.b16 %v325
      %v630 = vunpack.c.l.b16 %v326
      %v631 = vunpack.c.l.b16 %v327
      %v632 = vunpack.c.l.b16 %v328
      %v633 = vunpack.c.l.b16 %v329
      %v634 = vunpack.c.l.b16 %v330
      %v635 = vunpack.c.l.b16 %v331
      %v636 = vunpack.c.l.b16 %v332
      %v637 = vunpack.c.l.b16 %v333
      %v638 = vunpack.c.l.b16 %v334
      %v639 = vunpack.c.l.b16 %v335
      %v640 = vunpack.c.l.b16 %v336
      %v641 = vunpack.c.l.b16 %v337
      %v642 = vunpack.c.l.b16 %v338
      %v643 = vunpack.c.l.b16 %v339
      %v644 = vunpack.c.l.b16 %v340
      %v645 = vunpack.c.l.b16 %v341
      %v646 = vunpack.c.l.b16 %v342
      %v647 = vunpack.c.l.b16 %v343
      %v648 = vunpack.c.l.b16 %v344
      %v649 = vunpack.c.l.b16 %v345
      %v650 = vunpack.c.l.b16 %v346
      %v651 = vunpack.c.l.b16 %v347
      %v652 = vunpack.c.l.b16 %v348
      %v653 = vunpack.c.l.b16 %v349
      %v654 = vunpack.c.l.b16 %v350
      %v655 = vunpack.c.l.b16 %v351
      %v656 = vunpack.c.l.b16 %v352
      %v657 = vunpack.c.l.b16 %v353
      %v658 = vunpack.c.l.b16 %v354
      %v659 = vunpack.c.l.b16 %v355
      %v660 = vunpack.c.l.b16 %v356
      %v661 = vunpack.c.l.b16 %v357
      %v662 = vunpack.c.l.b16 %v358
      %v663 = vunpack.c.l.b16 %v359
      %v664 = vunpack.c.l.b16 %v360
      %v665 = vunpack.c.l.b16 %v361
      %v666 = vunpack.c.l.b16 %v362
      %v667 = vunpack.c.l.b16 %v363
      %v668 = vunpack.c.l.b16 %v364
      %v669 = vunpack.c.l.b16 %v365
      %v670 = vunpack.c.l.b16 %v366
      %v671 = vunpack.c.l.b16 %v367
      %v672 = vunpack.c.l.b16 %v368
      %v673 = vpack.c.b16 %v602, %v601
      %v674 = vpack.c.b16 %v604, %v603
      %v675 = vpack.c.b16 %v606, %v605
      %v676 = vpack.c.b16 %v608, %v607
      %v677 = vpack.c.b16 %v610, %v609
      %v678 = vpack.c.b16 %v612, %v611
      %v679 = vpack.c.b16 %v614, %v613
      %v680 = vpack.c.b16 %v616, %v615
      %v681 = vpack.c.b16 %v618, %v617
      %v682 = vpack.c.b16 %v620, %v619
      %v683 = vpack.c.b16 %v622, %v621
      %v684 = vpack.c.b16 %v624, %v623
      %v685 = vpack.c.b16 %v626, %v625
      %v686 = vpack.c.b16 %v628, %v627
      %v687 = vpack.c.b16 %v630, %v629
      %v688 = vpack.c.b16 %v632, %v631
      %v689 = vpack.c.b16 %v634, %v633
      %v690 = vpack.c.b16 %v636, %v635
      %v691 = vpack.c.b16 %v638, %v637
      %v692 = vpack.c.b16 %v640, %v639
      %v693 = vpack.c.b16 %v642, %v641
      %v694 = vpack.c.b16 %v644, %v643
      %v695 = vpack.c.b16 %v646, %v645
      %v696 = vpack.c.b16 %v648, %v647
      %v697 = vpack.c.b16 %v650, %v649
      %v698 = vpack.c.b16 %v652, %v651
      %v699 = vpack.c.b16 %v654, %v653
      %v700 = vpack.c.b16 %v656, %v655
      %v701 = vpack.c.b16 %v658, %v657
      %v702 = vpack.c.b16 %v660, %v659
      %v703 = vpack.c.b16 %v662, %v661
      %v704 = vpack.c.b16 %v664, %v663
      %v705 = vpack.c.b16 %v666, %v665
      %v706 = vpack.c.b16 %v668, %v667
      %v707 = vpack.c.b16 %v670, %v669
      %v708 = vpack.c.b16 %v672, %v671
      %v745 = vsel %vm483, %v420, 0
      %v748 = vsel %vm483, %v482, 0
      %v751 = vsel %vm483, %v481, 0
      %753 = vmatprep.subr.bf16.mxu0 0
      %754 = vmatpush1.bf16.msra.mxu0 %v673
      %755 = vmatprep.subr.bf16.mxu0 0
      %756 = vmatpush1.bf16.msra.mxu0 %v674
      %757 = vmatprep.subr.bf16.mxu0 0
      %758 = vmatpush1.bf16.msra.mxu0 %v675
      %759 = vmatprep.subr.bf16.mxu0 0
      %760 = vmatpush1.bf16.msra.mxu0 %v676
      %761 = vmatprep.subr.bf16.mxu0 0
      %762 = vmatpush1.bf16.msra.mxu0 %v677
      %763 = vmatprep.subr.bf16.mxu0 0
      %764 = vmatpush1.bf16.msra.mxu0 %v678
      %765 = vmatprep.subr.bf16.mxu0 0
      %766 = vmatpush1.bf16.msra.mxu0 %v679
      %767 = vmatprep.subr.bf16.mxu0 0
      %768 = vmatpush1.bf16.msra.mxu0 %v680
      %769 = vmatprep.subr.bf16.mxu0 0
      %770 = vmatpush1.bf16.msra.mxu0 %v681
      %771 = vmatprep.subr.bf16.mxu0 0
      %772 = vmatpush1.bf16.msra.mxu0 %v682
      %773 = vmatprep.subr.bf16.mxu0 0
      %774 = vmatpush1.bf16.msra.mxu0 %v683
      %775 = vmatprep.subr.bf16.mxu0 0
      %776 = vmatpush1.bf16.msra.mxu0 %v684
      %777 = vmatprep.subr.bf16.mxu0 0
      %778 = vmatpush1.bf16.msra.mxu0 %v685
      %779 = vmatprep.subr.bf16.mxu0 0
      %780 = vmatpush1.bf16.msra.mxu0 %v686
      %781 = vmatprep.subr.bf16.mxu0 0
      %782 = vmatpush1.bf16.msra.mxu0 %v687
      %783 = vmatprep.subr.bf16.mxu0 0
      %784 = vmatpush1.bf16.msra.mxu0 %v688
      %785 = vmatprep.mubr.bf16.mxu0 %v495
      %786 = vmatmul.mubr.bf16.gmra.mrb[0].mxu0 %v485
      %v787 = vpop.f32.mrb[0].mxu0
      %v788 = vadd.f32 %v527, %v787
      %v789 = vpop.f32.mrb[0].mxu0
      %v790 = vpop.f32.mrb[0].mxu0
      %v791 = vadd.f32 %v527, %v790
      %v792 = vpop.f32.mrb[0].mxu0
      %793 = vmatprep.mubr.bf16.mxu0 %v499
      %794 = vmatmul.mubr.bf16.gmra.mrb[0].mxu0 %v488
      %v795 = vpop.f32.mrb[0].mxu0
      %v796 = vadd.f32 %v527, %v795
      %v797 = vpop.f32.mrb[0].mxu0
      %v798 = vpop.f32.mrb[0].mxu0
      %v799 = vadd.f32 %v527, %v798
      %v800 = vpop.f32.mrb[0].mxu0
      %801 = vmatprep.mubr.bf16.mxu0 %v503
      %802 = vmatmul.mubr.bf16.gmra.mrb[0].mxu0 %v491
      %v803 = vpop.f32.mrb[0].mxu0
      %v804 = vadd.f32 %v527, %v803
      %v805 = vpop.f32.mrb[0].mxu0
      %v806 = vpop.f32.mrb[0].mxu0
      %v807 = vadd.f32 %v527, %v806
      %v808 = vpop.f32.mrb[0].mxu0
      %809 = vdwg.mxu0
      %810 = vmatprep.subr.bf16.mxu0 0
      %811 = vmatpush1.bf16.msra.mxu0 %v689
      %812 = vmatprep.subr.bf16.mxu0 0
      %813 = vmatpush1.bf16.msra.mxu0 %v690
      %814 = vmatprep.subr.bf16.mxu0 0
      %815 = vmatpush1.bf16.msra.mxu0 %v691
      %816 = vmatprep.subr.bf16.mxu0 0
      %817 = vmatpush1.bf16.msra.mxu0 %v692
      %818 = vmatprep.subr.bf16.mxu0 0
      %819 = vmatpush1.bf16.msra.mxu0 %v693
      %820 = vmatprep.subr.bf16.mxu0 0
      %821 = vmatpush1.bf16.msra.mxu0 %v694
      %822 = vmatprep.subr.bf16.mxu0 0
      %823 = vmatpush1.bf16.msra.mxu0 %v695
      %824 = vmatprep.subr.bf16.mxu0 0
      %825 = vmatpush1.bf16.msra.mxu0 %v696
      %826 = vmatprep.subr.bf16.mxu0 0
      %827 = vmatpush1.bf16.msra.mxu0 %v697
      %828 = vmatprep.subr.bf16.mxu0 0
      %829 = vmatpush1.bf16.msra.mxu0 %v698
      %830 = vmatprep.subr.bf16.mxu0 0
      %831 = vmatpush1.bf16.msra.mxu0 %v699
      %832 = vmatprep.subr.bf16.mxu0 0
      %833 = vmatpush1.bf16.msra.mxu0 %v700
      %834 = vmatprep.subr.bf16.mxu0 0
      %835 = vmatpush1.bf16.msra.mxu0 %v701
      %836 = vmatprep.subr.bf16.mxu0 0
      %837 = vmatpush1.bf16.msra.mxu0 %v702
      %838 = vmatprep.subr.bf16.mxu0 0
      %839 = vmatpush1.bf16.msra.mxu0 %v703
      %840 = vmatprep.subr.bf16.mxu0 0
      %841 = vmatpush1.bf16.msra.mxu0 %v704
      %842 = vmatprep.mubr.bf16.mxu0 %v488
      %843 = vmatmul.mubr.bf16.gmra.mrb[0].mxu0 %v507
      %v844 = vpop.f32.mrb[0].mxu0
      %v845 = vadd.f32 %v788, %v844
      %v846 = vpop.f32.mrb[0].mxu0
      %v847 = vpop.f32.mrb[0].mxu0
      %v848 = vadd.f32 %v791, %v847
      %v849 = vpop.f32.mrb[0].mxu0
      %850 = vmatprep.mubr.bf16.mxu0 %v518
      %851 = vmatmul.mubr.bf16.gmra.mrb[0].mxu0 %v511
      %v852 = vpop.f32.mrb[0].mxu0
      %v853 = vadd.f32 %v796, %v852
      %v854 = vpop.f32.mrb[0].mxu0
      %v855 = vpop.f32.mrb[0].mxu0
      %v856 = vadd.f32 %v799, %v855
      %v857 = vpop.f32.mrb[0].mxu0
      %858 = vmatprep.mubr.bf16.mxu0 %v521
      %859 = vmatmul.mubr.bf16.gmra.mrb[0].mxu0 %v515
      %v860 = vpop.f32.mrb[0].mxu0
      %v861 = vadd.f32 %v804, %v860
      %v862 = vpop.f32.mrb[0].mxu0
      %v863 = vpop.f32.mrb[0].mxu0
      %v864 = vadd.f32 %v807, %v863
      %v865 = vpop.f32.mrb[0].mxu0
      %866 = vdwg.mxu0
      %867 = vmatprep.subr.bf16.mxu0 0
      %868 = vmatpush1.bf16.msra.mxu0 %v705
      %869 = vmatprep.subr.bf16.mxu0 0
      %870 = vmatpush1.bf16.msra.mxu0 %v706
      %871 = vmatprep.subr.bf16.mxu0 0
      %872 = vmatpush1.bf16.msra.mxu0 %v707
      %873 = vmatprep.subr.bf16.mxu0 0
      %874 = vmatpush1.bf16.msra.mxu0 %v708
      %875 = vmatprep.subr.bf16.mxu0 0
      %876 = vmatpush1.bf16.msra.mxu0 0
      %877 = vmatprep.subr.bf16.mxu0 0
      %878 = vmatpush1.bf16.msra.mxu0 0
      %879 = vmatprep.subr.bf16.mxu0 0
      %880 = vmatpush1.bf16.msra.mxu0 0
      %881 = vmatprep.subr.bf16.mxu0 0
      %882 = vmatpush1.bf16.msra.mxu0 0
      %883 = vmatprep.subr.bf16.mxu0 0
      %884 = vmatpush1.bf16.msra.mxu0 0
      %885 = vmatprep.subr.bf16.mxu0 0
      %886 = vmatpush1.bf16.msra.mxu0 0
      %887 = vmatprep.subr.bf16.mxu0 0
      %888 = vmatpush1.bf16.msra.mxu0 0
      %889 = vmatprep.subr.bf16.mxu0 0
      %890 = vmatpush1.bf16.msra.mxu0 0
      %891 = vmatprep.subr.bf16.mxu0 0
      %892 = vmatpush1.bf16.msra.mxu0 0
      %893 = vmatprep.subr.bf16.mxu0 0
      %894 = vmatpush1.bf16.msra.mxu0 0
      %895 = vmatprep.subr.bf16.mxu0 0
      %896 = vmatpush1.bf16.msra.mxu0 0
      %897 = vmatprep.subr.bf16.mxu0 0
      %898 = vmatpush1.bf16.msra.mxu0 0
      %899 = vmatprep.mubr.bf16.mxu0 0
      %900 = vmatmul.mubr.bf16.gmra.mrb[0].mxu0 %v745
      %v901 = vpop.f32.mrb[0].mxu0
      %v902 = vadd.f32 %v845, %v901
      %v903 = vpop.f32.mrb[0].mxu0
      %v904 = vpop.f32.mrb[0].mxu0
      %v905 = vadd.f32 %v848, %v904
      %v906 = vpop.f32.mrb[0].mxu0
      %907 = vmatprep.mubr.bf16.mxu0 0
      %908 = vmatmul.mubr.bf16.gmra.mrb[0].mxu0 %v748
      %v909 = vpop.f32.mrb[0].mxu0
      %v910 = vadd.f32 %v853, %v909
      %v911 = vpop.f32.mrb[0].mxu0
      %v912 = vpop.f32.mrb[0].mxu0
      %v913 = vadd.f32 %v856, %v912
      %v914 = vpop.f32.mrb[0].mxu0
      %915 = vmatprep.mubr.bf16.mxu0 0
      %916 = vmatmul.mubr.bf16.gmra.mrb[0].mxu0 %v751
      %v917 = vpop.f32.mrb[0].mxu0
      %v918 = vadd.f32 %v861, %v917
      %v919 = vpop.f32.mrb[0].mxu0
      %v920 = vpop.f32.mrb[0].mxu0
      %v921 = vadd.f32 %v864, %v920
      %v922 = vpop.f32.mrb[0].mxu0
      %923 = vdwg.mxu0
      %vm924 = vcmp.ge.f32.partialorder %v902, 0.0
      %vm925 = vcmp.ge.f32.partialorder %v905, 0.0
      %vm926 = vcmp.ge.f32.partialorder %v910, 0.0
      %vm927 = vcmp.ge.f32.partialorder %v913, 0.0
      %vm928 = vcmp.ge.f32.partialorder %v918, 0.0
      %vm929 = vcmp.ge.f32.partialorder %v921, 0.0
      %v930 = vmul.f32 %v902, 0.1
      %v931 = vmul.f32 %v905, 0.1
      %v932 = vmul.f32 %v910, 0.1
      %v933 = vmul.f32 %v913, 0.1
      %v934 = vmul.f32 %v918, 0.1
      %v935 = vmul.f32 %v921, 0.1
      %v936 = vsel %vm924, %v902, %v930
      %v937 = vsel %vm925, %v905, %v931
      %v938 = vsel %vm926, %v910, %v932
      %v939 = vsel %vm927, %v913, %v933
      %v940 = vsel %vm928, %v918, %v934
      %v941 = vsel %vm929, %v921, %v935
      %v942 = vpack.c.bf16 %v937, %v936
      %v943 = vpack.c.bf16 %v939, %v938
      %v944 = vpack.c.bf16 %v941, %v940
      %v945 = vld [vmem:[%s4] sm:$0xf]
      %v946 = vld [vmem:[%s4 + $0x4] sm:$0xf]
      %v947 = vld [vmem:[%s4 + $0x8] sm:$0xf]
      %v948 = vld [vmem:[%s4 + $0xc] sm:$0xf]
      %v949 = vld [vmem:[%s4 + $0x10] sm:$0xf]
      %v950 = vld [vmem:[%s4 + $0x14] sm:$0xf]
      %v951 = vld [vmem:[%s4 + $0x18] sm:$0xf]
      %v952 = vld [vmem:[%s4 + $0x1c] sm:$0xf]
      %v953 = vld [vmem:[%s4 + $0x20] sm:$0xf]
      %v954 = vld [vmem:[%s4 + $0x24] sm:$0xf]
      %v955 = vld [vmem:[%s4 + $0x28] sm:$0xf]
      %v956 = vld [vmem:[%s4 + $0x2c] sm:$0xf]
      %v957 = vld [vmem:[%s4 + $0x30] sm:$0xf]
      %v958 = vld [vmem:[%s4 + $0x34] sm:$0xf]
      %v959 = vld [vmem:[%s4 + $0x38] sm:$0xf]
      %v960 = vld [vmem:[%s4 + $0x3c] sm:$0xf]
      %v961 = vld [vmem:[%s4 + $0x40] sm:$0xf]
      %v962 = vld [vmem:[%s4 + $0x44] sm:$0xf]
      %v963 = vld [vmem:[%s4 + $0x48] sm:$0xf]
      %v964 = vld [vmem:[%s4 + $0x4c] sm:$0xf]
      %v965 = vld [vmem:[%s4 + $0x50] sm:$0xf]
      %v966 = vld [vmem:[%s4 + $0x54] sm:$0xf]
      %v967 = vld [vmem:[%s4 + $0x58] sm:$0xf]
      %v968 = vld [vmem:[%s4 + $0x5c] sm:$0xf]
      %v969 = vld [vmem:[%s4 + $0x60] sm:$0xf]
      %v970 = vld [vmem:[%s4 + $0x64] sm:$0xf]
      %v971 = vld [vmem:[%s4 + $0x68] sm:$0xf]
      %v972 = vld [vmem:[%s4 + $0x6c] sm:$0xf]
      %v973 = vld [vmem:[%s4 + $0x70] sm:$0xf]
      %v974 = vld [vmem:[%s4 + $0x74] sm:$0xf]
      %v975 = vld [vmem:[%s4 + $0x78] sm:$0xf]
      %v976 = vld [vmem:[%s4 + $0x7c] sm:$0xf]
      %v977 = vld [vmem:[%s4 + $0x80] sm:$0xf]
      %v978 = vld [vmem:[%s4 + $0x84] sm:$0xf]
      %v979 = vld [vmem:[%s4 + $0x88] sm:$0xf]
      %v980 = vld [vmem:[%s4 + $0x8c] sm:$0xf]
      %v981 = vld [vmem:[%s4 + $0x90] sm:$0xf]
      %v982 = vld [vmem:[%s4 + $0x94] sm:$0xf]
      %v983 = vld [vmem:[%s4 + $0x98] sm:$0xf]
      %v984 = vld [vmem:[%s4 + $0x9c] sm:$0xf]
      %v985 = vld [vmem:[%s4 + $0xa0] sm:$0xf]
      %v986 = vld [vmem:[%s4 + $0xa4] sm:$0xf]
      %v987 = vld [vmem:[%s4 + $0xa8] sm:$0xf]
      %v988 = vld [vmem:[%s4 + $0xac] sm:$0xf]
      %v989 = vld [vmem:[%s4 + $0xb0] sm:$0xf]
      %v990 = vld [vmem:[%s4 + $0xb4] sm:$0xf]
      %v991 = vld [vmem:[%s4 + $0xb8] sm:$0xf]
      %v992 = vld [vmem:[%s4 + $0xbc] sm:$0xf]
      %v993 = vld [vmem:[%s4 + $0xc0] sm:$0xf]
      %v994 = vld [vmem:[%s4 + $0xc4] sm:$0xf]
      %v995 = vld [vmem:[%s4 + $0xc8] sm:$0xf]
      %v996 = vld [vmem:[%s4 + $0xcc] sm:$0xf]
      %v997 = vld [vmem:[%s4 + $0xd0] sm:$0xf]
      %v998 = vld [vmem:[%s4 + $0xd4] sm:$0xf]
      %v999 = vld [vmem:[%s4 + $0xd8] sm:$0xf]
      %v1000 = vld [vmem:[%s4 + $0xdc] sm:$0xf]
      %v1001 = vld [vmem:[%s4 + $0xe0] sm:$0xf]
      %v1002 = vld [vmem:[%s4 + $0xe4] sm:$0xf]
      %v1003 = vld [vmem:[%s4 + $0xe8] sm:$0xf]
      %v1004 = vld [vmem:[%s4 + $0xec] sm:$0xf]
      %v1005 = vld [vmem:[%s4 + $0xf0] sm:$0xf]
      %v1006 = vld [vmem:[%s4 + $0xf4] sm:$0xf]
      %v1007 = vld [vmem:[%s4 + $0xf8] sm:$0xf]
      %v1008 = vld [vmem:[%s4 + $0xfc] sm:$0xf]
      %v1009 = vld [vmem:[%s4 + $0x100] sm:$0xf]
      %v1010 = vld [vmem:[%s4 + $0x104] sm:$0xf]
      %v1011 = vld [vmem:[%s4 + $0x108] sm:$0xf]
      %v1012 = vld [vmem:[%s4 + $0x10c] sm:$0xf]
      %v1013 = vld [vmem:[%s4 + $0x110] sm:$0xf]
      %v1014 = vld [vmem:[%s4 + $0x114] sm:$0xf]
      %v1015 = vld [vmem:[%s4 + $0x118] sm:$0xf]
      %v1016 = vld [vmem:[%s4 + $0x11c] sm:$0xf]
      %v1017 = vld [vmem:[%s5] sm:$0x1]
      %v1019 = vshrl.u32 %v942, 16
      %v1021 = vshll.u32 %v942, 16
      %v1023 = vrot.slane %v1021, 1
      %v1024 = vor.u32 %v1019, %v1023
      %v1026 = vshll.u32 %v943, 16
      %v1028 = vrot.slane %v1026, 1
      %v1029 = vsel %vm385, %v1024, %v1028
      %v1030 = vshrl.u32 %v943, 16
      %v1032 = vor.u32 %v1030, %v1028
      %1033 = vrot.lane.b32.xlu0 %v1029, 64
      %v1034 = vpop.permute.xlu0 %1033
      %1035 = vrot.lane.b32.xlu0 %v1032, 64
      %v1036 = vpop.permute.xlu0 %1035
      %v1039 = vrot.slane %v942, 1
      %v1040 = vrot.slane %v943, 1
      %v1041 = vsel %vm415, %v1039, %v1040
      %vm1043 = vcmask 1043456
      %v1044 = vrot.slane %v942, 4
      %v1045 = vrot.slane %v943, 4
      %v1046 = vsel %vm1043, %v1044, %v1045
      %v1047 = vrot.slane %v944, 4
      %v1048 = vsel %vm1043, %v1045, %v1047
      %1049 = vrot.lane.b32.xlu0 %v1046, 64
      %v1050 = vpop.permute.xlu0 %1049
      %1051 = vrot.lane.b32.xlu0 %v1048, 64
      %v1052 = vpop.permute.xlu0 %1051
      %vm1053 = vsmask.f32 3328
      %v1054 = vrot.slane %v1019, 4
      %v1055 = vrot.slane %v1021, 5
      %v1056 = vor.u32 %v1054, %v1055
      %v1057 = vrot.slane %v1030, 4
      %v1058 = vrot.slane %v1026, 5
      %v1059 = vor.u32 %v1057, %v1058
      %v1060 = vsel %vm1053, %v1056, %v1059
      %v1062 = vshrl.u32 %v944, 16
      %v1064 = vrot.slane %v1062, 4
      %v1065 = vshll.u32 %v944, 16
      %v1067 = vrot.slane %v1065, 5
      %v1068 = vor.u32 %v1064, %v1067
      %v1069 = vsel %vm1053, %v1059, %v1068
      %vm1070 = vcmask 1042432
      %v1071 = vrot.slane %v942, 5
      %v1072 = vrot.slane %v943, 5
      %v1073 = vsel %vm1070, %v1071, %v1072
      %v1074 = vrot.slane %v944, 5
      %v1075 = vsel %vm1070, %v1072, %v1074
      %1076 = vrot.lane.b32.xlu0 %v1073, 64
      %v1077 = vpop.permute.xlu0 %1076
      %1078 = vrot.lane.b32.xlu0 %v1075, 64
      %v1079 = vpop.permute.xlu0 %1078
      %v1080 = vrot.slane %v1065, 1
      %v1081 = vsel %vm385, %v1032, %v1080
      %v1082 = vor.u32 %v1062, %v1080
      %1083 = vrot.lane.b32.xlu0 %v1081, 64
      %v1084 = vpop.permute.xlu0 %1083
      %1085 = vrot.lane.b32.xlu0 %v1082, 64
      %v1086 = vpop.permute.xlu0 %1085
      %v1087 = vrot.slane %v944, 1
      %v1088 = vsel %vm415, %v1040, %v1087
      %v1090 = vsel %vm483, %v942, %v1034
      %v1093 = vsel %vm483, %v943, %v1036
      %v1097 = vsel %vm483, %v1041, %v1050
      %v1101 = vsel %vm483, %v1040, %v1052
      %v1105 = vsel %vm483, %v1060, %v1077
      %v1109 = vsel %vm483, %v1069, %v1079
      %v1112 = vsel %vm483, %v943, %v1084
      %v1115 = vsel %vm483, %v944, %v1086
      %v1118 = vlaneseq
      %v1119 = vshrl.u32 %v1118, 7
      %v1120 = vsub.s32 0, %v1119
      %v1121 = vrot.slane %v1017, %v1120
      %v1195 = vunpack.c.l.b16 %v945
      %v1196 = vunpack.c.l.b16 %v946
      %v1197 = vunpack.c.l.b16 %v947
      %v1198 = vunpack.c.l.b16 %v948
      %v1199 = vunpack.c.l.b16 %v949
      %v1200 = vunpack.c.l.b16 %v950
      %v1201 = vunpack.c.l.b16 %v951
      %v1202 = vunpack.c.l.b16 %v952
      %v1203 = vunpack.c.l.b16 %v953
      %v1204 = vunpack.c.l.b16 %v954
      %v1205 = vunpack.c.l.b16 %v955
      %v1206 = vunpack.c.l.b16 %v956
      %v1207 = vunpack.c.l.b16 %v957
      %v1208 = vunpack.c.l.b16 %v958
      %v1209 = vunpack.c.l.b16 %v959
      %v1210 = vunpack.c.l.b16 %v960
      %v1211 = vunpack.c.l.b16 %v961
      %v1212 = vunpack.c.l.b16 %v962
      %v1213 = vunpack.c.l.b16 %v963
      %v1214 = vunpack.c.l.b16 %v964
      %v1215 = vunpack.c.l.b16 %v965
      %v1216 = vunpack.c.l.b16 %v966
      %v1217 = vunpack.c.l.b16 %v967
      %v1218 = vunpack.c.l.b16 %v968
      %v1219 = vunpack.c.l.b16 %v969
      %v1220 = vunpack.c.l.b16 %v970
      %v1221 = vunpack.c.l.b16 %v971
      %v1222 = vunpack.c.l.b16 %v972
      %v1223 = vunpack.c.l.b16 %v973
      %v1224 = vunpack.c.l.b16 %v974
      %v1225 = vunpack.c.l.b16 %v975
      %v1226 = vunpack.c.l.b16 %v976
      %v1227 = vunpack.c.l.b16 %v977
      %v1228 = vunpack.c.l.b16 %v978
      %v1229 = vunpack.c.l.b16 %v979
      %v1230 = vunpack.c.l.b16 %v980
      %v1231 = vunpack.c.l.b16 %v981
      %v1232 = vunpack.c.l.b16 %v982
      %v1233 = vunpack.c.l.b16 %v983
      %v1234 = vunpack.c.l.b16 %v984
      %v1235 = vunpack.c.l.b16 %v985
      %v1236 = vunpack.c.l.b16 %v986
      %v1237 = vunpack.c.l.b16 %v987
      %v1238 = vunpack.c.l.b16 %v988
      %v1239 = vunpack.c.l.b16 %v989
      %v1240 = vunpack.c.l.b16 %v990
      %v1241 = vunpack.c.l.b16 %v991
      %v1242 = vunpack.c.l.b16 %v992
      %v1243 = vunpack.c.l.b16 %v993
      %v1244 = vunpack.c.l.b16 %v994
      %v1245 = vunpack.c.l.b16 %v995
      %v1246 = vunpack.c.l.b16 %v996
      %v1247 = vunpack.c.l.b16 %v997
      %v1248 = vunpack.c.l.b16 %v998
      %v1249 = vunpack.c.l.b16 %v999
      %v1250 = vunpack.c.l.b16 %v1000
      %v1251 = vunpack.c.l.b16 %v1001
      %v1252 = vunpack.c.l.b16 %v1002
      %v1253 = vunpack.c.l.b16 %v1003
      %v1254 = vunpack.c.l.b16 %v1004
      %v1255 = vunpack.c.l.b16 %v1005
      %v1256 = vunpack.c.l.b16 %v1006
      %v1257 = vunpack.c.l.b16 %v1007
      %v1258 = vunpack.c.l.b16 %v1008
      %v1259 = vunpack.c.l.b16 %v1009
      %v1260 = vunpack.c.l.b16 %v1010
      %v1261 = vunpack.c.l.b16 %v1011
      %v1262 = vunpack.c.l.b16 %v1012
      %v1263 = vunpack.c.l.b16 %v1013
      %v1264 = vunpack.c.l.b16 %v1014
      %v1265 = vunpack.c.l.b16 %v1015
      %v1266 = vunpack.c.l.b16 %v1016
      %v1267 = vpack.c.b16 %v1196, %v1195
      %v1268 = vpack.c.b16 %v1198, %v1197
      %v1269 = vpack.c.b16 %v1200, %v1199
      %v1270 = vpack.c.b16 %v1202, %v1201
      %v1271 = vpack.c.b16 %v1204, %v1203
      %v1272 = vpack.c.b16 %v1206, %v1205
      %v1273 = vpack.c.b16 %v1208, %v1207
      %v1274 = vpack.c.b16 %v1210, %v1209
      %v1275 = vpack.c.b16 %v1212, %v1211
      %v1276 = vpack.c.b16 %v1214, %v1213
      %v1277 = vpack.c.b16 %v1216, %v1215
      %v1278 = vpack.c.b16 %v1218, %v1217
      %v1279 = vpack.c.b16 %v1220, %v1219
      %v1280 = vpack.c.b16 %v1222, %v1221
      %v1281 = vpack.c.b16 %v1224, %v1223
      %v1282 = vpack.c.b16 %v1226, %v1225
      %v1283 = vpack.c.b16 %v1228, %v1227
      %v1284 = vpack.c.b16 %v1230, %v1229
      %v1285 = vpack.c.b16 %v1232, %v1231
      %v1286 = vpack.c.b16 %v1234, %v1233
      %v1287 = vpack.c.b16 %v1236, %v1235
      %v1288 = vpack.c.b16 %v1238, %v1237
      %v1289 = vpack.c.b16 %v1240, %v1239
      %v1290 = vpack.c.b16 %v1242, %v1241
      %v1291 = vpack.c.b16 %v1244, %v1243
      %v1292 = vpack.c.b16 %v1246, %v1245
      %v1293 = vpack.c.b16 %v1248, %v1247
      %v1294 = vpack.c.b16 %v1250, %v1249
      %v1295 = vpack.c.b16 %v1252, %v1251
      %v1296 = vpack.c.b16 %v1254, %v1253
      %v1297 = vpack.c.b16 %v1256, %v1255
      %v1298 = vpack.c.b16 %v1258, %v1257
      %v1299 = vpack.c.b16 %v1260, %v1259
      %v1300 = vpack.c.b16 %v1262, %v1261
      %v1301 = vpack.c.b16 %v1264, %v1263
      %v1302 = vpack.c.b16 %v1266, %v1265
      %v1340 = vsel %vm483, %v1088, 0
      %v1343 = vsel %vm483, %v1087, 0
      %1345 = vmatprep.subr.bf16.mxu0 0
      %1346 = vmatpush1.bf16.msra.mxu0 %v1267
      %1347 = vmatprep.subr.bf16.mxu0 0
      %1348 = vmatpush1.bf16.msra.mxu0 %v1268
      %1349 = vmatprep.subr.bf16.mxu0 0
      %1350 = vmatpush1.bf16.msra.mxu0 %v1269
      %1351 = vmatprep.subr.bf16.mxu0 0
      %1352 = vmatpush1.bf16.msra.mxu0 %v1270
      %1353 = vmatprep.subr.bf16.mxu0 0
      %1354 = vmatpush1.bf16.msra.mxu0 %v1271
      %1355 = vmatprep.subr.bf16.mxu0 0
      %1356 = vmatpush1.bf16.msra.mxu0 %v1272
      %1357 = vmatprep.subr.bf16.mxu0 0
      %1358 = vmatpush1.bf16.msra.mxu0 %v1273
      %1359 = vmatprep.subr.bf16.mxu0 0
      %1360 = vmatpush1.bf16.msra.mxu0 %v1274
      %1361 = vmatprep.subr.bf16.mxu0 0
      %1362 = vmatpush1.bf16.msra.mxu0 %v1275
      %1363 = vmatprep.subr.bf16.mxu0 0
      %1364 = vmatpush1.bf16.msra.mxu0 %v1276
      %1365 = vmatprep.subr.bf16.mxu0 0
      %1366 = vmatpush1.bf16.msra.mxu0 %v1277
      %1367 = vmatprep.subr.bf16.mxu0 0
      %1368 = vmatpush1.bf16.msra.mxu0 %v1278
      %1369 = vmatprep.subr.bf16.mxu0 0
      %1370 = vmatpush1.bf16.msra.mxu0 %v1279
      %1371 = vmatprep.subr.bf16.mxu0 0
      %1372 = vmatpush1.bf16.msra.mxu0 %v1280
      %1373 = vmatprep.subr.bf16.mxu0 0
      %1374 = vmatpush1.bf16.msra.mxu0 %v1281
      %1375 = vmatprep.subr.bf16.mxu0 0
      %1376 = vmatpush1.bf16.msra.mxu0 %v1282
      %1377 = vmatprep.mubr.bf16.mxu0 %v1097
      %1378 = vmatmul.mubr.bf16.gmra.mrb[0].mxu0 %v1090
      %v1379 = vpop.f32.mrb[0].mxu0
      %v1380 = vadd.f32 %v1121, %v1379
      %v1381 = vpop.f32.mrb[0].mxu0
      %v1382 = vpop.f32.mrb[0].mxu0
      %v1383 = vadd.f32 %v1121, %v1382
      %v1384 = vpop.f32.mrb[0].mxu0
      %1385 = vmatprep.mubr.bf16.mxu0 %v1101
      %1386 = vmatmul.mubr.bf16.gmra.mrb[0].mxu0 %v1093
      %v1387 = vpop.f32.mrb[0].mxu0
      %v1388 = vadd.f32 %v1121, %v1387
      %v1389 = vpop.f32.mrb[0].mxu0
      %v1390 = vpop.f32.mrb[0].mxu0
      %v1391 = vadd.f32 %v1121, %v1390
      %v1392 = vpop.f32.mrb[0].mxu0
      %1393 = vdwg.mxu0
      %1394 = vmatprep.subr.bf16.mxu0 0
      %1395 = vmatpush1.bf16.msra.mxu0 %v1283
      %1396 = vmatprep.subr.bf16.mxu0 0
      %1397 = vmatpush1.bf16.msra.mxu0 %v1284
      %1398 = vmatprep.subr.bf16.mxu0 0
      %1399 = vmatpush1.bf16.msra.mxu0 %v1285
      %1400 = vmatprep.subr.bf16.mxu0 0
      %1401 = vmatpush1.bf16.msra.mxu0 %v1286
      %1402 = vmatprep.subr.bf16.mxu0 0
      %1403 = vmatpush1.bf16.msra.mxu0 %v1287
      %1404 = vmatprep.subr.bf16.mxu0 0
      %1405 = vmatpush1.bf16.msra.mxu0 %v1288
      %1406 = vmatprep.subr.bf16.mxu0 0
      %1407 = vmatpush1.bf16.msra.mxu0 %v1289
      %1408 = vmatprep.subr.bf16.mxu0 0
      %1409 = vmatpush1.bf16.msra.mxu0 %v1290
      %1410 = vmatprep.subr.bf16.mxu0 0
      %1411 = vmatpush1.bf16.msra.mxu0 %v1291
      %1412 = vmatprep.subr.bf16.mxu0 0
      %1413 = vmatpush1.bf16.msra.mxu0 %v1292
      %1414 = vmatprep.subr.bf16.mxu0 0
      %1415 = vmatpush1.bf16.msra.mxu0 %v1293
      %1416 = vmatprep.subr.bf16.mxu0 0
      %1417 = vmatpush1.bf16.msra.mxu0 %v1294
      %1418 = vmatprep.subr.bf16.mxu0 0
      %1419 = vmatpush1.bf16.msra.mxu0 %v1295
      %1420 = vmatprep.subr.bf16.mxu0 0
      %1421 = vmatpush1.bf16.msra.mxu0 %v1296
      %1422 = vmatprep.subr.bf16.mxu0 0
      %1423 = vmatpush1.bf16.msra.mxu0 %v1297
      %1424 = vmatprep.subr.bf16.mxu0 0
      %1425 = vmatpush1.bf16.msra.mxu0 %v1298
      %1426 = vmatprep.mubr.bf16.mxu0 %v1112
      %1427 = vmatmul.mubr.bf16.gmra.mrb[0].mxu0 %v1105
      %v1428 = vpop.f32.mrb[0].mxu0
      %v1429 = vadd.f32 %v1380, %v1428
      %v1430 = vpop.f32.mrb[0].mxu0
      %v1431 = vpop.f32.mrb[0].mxu0
      %v1432 = vadd.f32 %v1383, %v1431
      %v1433 = vpop.f32.mrb[0].mxu0
      %1434 = vmatprep.mubr.bf16.mxu0 %v1115
      %1435 = vmatmul.mubr.bf16.gmra.mrb[0].mxu0 %v1109
      %v1436 = vpop.f32.mrb[0].mxu0
      %v1437 = vadd.f32 %v1388, %v1436
      %v1438 = vpop.f32.mrb[0].mxu0
      %v1439 = vpop.f32.mrb[0].mxu0
      %v1440 = vadd.f32 %v1391, %v1439
      %v1441 = vpop.f32.mrb[0].mxu0
      %1442 = vdwg.mxu0
      %1443 = vmatprep.subr.bf16.mxu0 0
      %1444 = vmatpush1.bf16.msra.mxu0 %v1299
      %1445 = vmatprep.subr.bf16.mxu0 0
      %1446 = vmatpush1.bf16.msra.mxu0 %v1300
      %1447 = vmatprep.subr.bf16.mxu0 0
      %1448 = vmatpush1.bf16.msra.mxu0 %v1301
      %1449 = vmatprep.subr.bf16.mxu0 0
      %1450 = vmatpush1.bf16.msra.mxu0 %v1302
      %1451 = vmatprep.subr.bf16.mxu0 0
      %1452 = vmatpush1.bf16.msra.mxu0 0
      %1453 = vmatprep.subr.bf16.mxu0 0
      %1454 = vmatpush1.bf16.msra.mxu0 0
      %1455 = vmatprep.subr.bf16.mxu0 0
      %1456 = vmatpush1.bf16.msra.mxu0 0
      %1457 = vmatprep.subr.bf16.mxu0 0
      %1458 = vmatpush1.bf16.msra.mxu0 0
      %1459 = vmatprep.subr.bf16.mxu0 0
      %1460 = vmatpush1.bf16.msra.mxu0 0
      %1461 = vmatprep.subr.bf16.mxu0 0
      %1462 = vmatpush1.bf16.msra.mxu0 0
      %1463 = vmatprep.subr.bf16.mxu0 0
      %1464 = vmatpush1.bf16.msra.mxu0 0
      %1465 = vmatprep.subr.bf16.mxu0 0
      %1466 = vmatpush1.bf16.msra.mxu0 0
      %1467 = vmatprep.subr.bf16.mxu0 0
      %1468 = vmatpush1.bf16.msra.mxu0 0
      %1469 = vmatprep.subr.bf16.mxu0 0
      %1470 = vmatpush1.bf16.msra.mxu0 0
      %1471 = vmatprep.subr.bf16.mxu0 0
      %1472 = vmatpush1.bf16.msra.mxu0 0
      %1473 = vmatprep.subr.bf16.mxu0 0
      %1474 = vmatpush1.bf16.msra.mxu0 0
      %1475 = vmatprep.mubr.bf16.mxu0 0
      %1476 = vmatmul.mubr.bf16.gmra.mrb[0].mxu0 %v1340
      %v1477 = vpop.f32.mrb[0].mxu0
      %v1478 = vadd.f32 %v1429, %v1477
      %v1479 = vpop.f32.mrb[0].mxu0
      %v1480 = vpop.f32.mrb[0].mxu0
      %v1481 = vadd.f32 %v1432, %v1480
      %v1482 = vpop.f32.mrb[0].mxu0
      %1483 = vmatprep.mubr.bf16.mxu0 0
      %1484 = vmatmul.mubr.bf16.gmra.mrb[0].mxu0 %v1343
      %v1485 = vpop.f32.mrb[0].mxu0
      %v1486 = vadd.f32 %v1437, %v1485
      %v1487 = vpop.f32.mrb[0].mxu0
      %v1488 = vpop.f32.mrb[0].mxu0
      %v1489 = vadd.f32 %v1440, %v1488
      %v1490 = vpop.f32.mrb[0].mxu0
      %1491 = vdwg.mxu0
      %v1492 = vpack.c.bf16 %v1481, %v1478
      %v1493 = vpack.c.bf16 %v1489, %v1486
      %v1496 = vunpack.c.l.b16 %v1492
      %v1497 = vunpack.c.h.b16 %v1492
      %v1498 = vunpack.c.l.b16 %v1493
      %v1499 = vunpack.c.h.b16 %v1493
      %v1500 = vpack.c.b16 %v1496, %v1496
      %v1501 = vpack.c.b16 %v1497, %v1497
      %v1502 = vpack.c.b16 %v1498, %v1498
      %v1503 = vpack.c.b16 %v1499, %v1499
      %vm1508 = vcmask 93184
      %1509 = vst.msk [vmem:[%s271] sm:$0xf] %vm1508, %v1500
      %1510 = vst.msk [vmem:[%s271 + $0x4] sm:$0xf] %vm1508, %v1501
      %1511 = vst.msk [vmem:[%s271 + $0x8] sm:$0xf] %vm1508, %v1502
      %vm1512 = vcmask 91136
      %1513 = vst.msk [vmem:[%s271 + $0xc] sm:$0x3] %vm1512, %v1503
      %p1514 = scmp.lt.s32.totalorder %s17, 1
      %s1515 = scalar_select %p1514, %s17, 1
      %s1516 = smul.addr %s1515, 4
      %s1517 = smul.addr %s1516, 4
      %s1518 = scalar_lea.vmem %s6, %s1517
      // Predicated region
      $region45: #{unet1_forward.5} parent=43 // pred_check
        %p1519 = pneg %p171
      $region46: #{unet1_forward.5} parent=43 // pred_check_branch
        %1521 = sbr.rel (%p1519) target = $region48
      $region47: #{unet1_forward.5} parent=43 // pred_region
        _
      $region48: #{unet1_forward.5} parent=43 // pred_fallthru
        _
    $region44: #{unet1_forward.5} parent=5 // pred_fallthru
      _
    %p1522 = scmp.le.s32.totalorder 2, %s12
    // Predicated region
    $region49: #{unet1_forward.5} parent=5 // pred_check
      %p1523 = pneg %p1522
    $region50: #{unet1_forward.5} parent=5 // pred_check_branch
      %1525 = sbr.rel (%p1523) target = $region52
    $region51: #{unet1_forward.5} parent=5 // pred_region
      %s1526 = ssub.s32 %s12, 2
      // Predicated region
      $region53: #{unet1_forward.5} parent=51 // pred_check
        %p1527 = pneg %p177
      $region54: #{unet1_forward.5} parent=51 // pred_check_branch
        %1529 = sbr.rel (%p1527) target = $region56
      $region55: #{unet1_forward.5} parent=51 // pred_region
        %p1530 = scmp.lt.s32.totalorder %s18, 1
        %s1531 = scalar_select %p1530, %s18, 1
        %s1532 = smul.addr %s1531, 4
        %s1533 = smul.addr %s1532, 4
        %s1534 = scalar_lea.vmem %s6, %s1533
      $region56: #{unet1_forward.5} parent=51 // pred_fallthru
        _
    $region52: #{unet1_forward.5} parent=5 // pred_fallthru
      _
  $region6: #{unet1_forward.5} parent=0 // loop_footer
    %s16 = sadd.s32 1, %s12
  $region7: #{unet1_forward.5} parent=0 // loop_footer_branch
    %11 = sbr.rel target = $region3
  $region8: #{unet1_forward.5} parent=0 // loop_exit
    _

</llo_original>
